<compile_context>
chip_gen: v5e
topology: v5e:2x2
jax: 0.10.0
libtpu: 0.0.40
codegen_flags: <defaults>
</compile_context>

<pallas_src>
import functools
import math

import jax
import jax.numpy as jnp
from jax.experimental import pallas as pl
from jax.experimental.pallas import tpu as pltpu

LN_EPS = 1e-5
BN_EPS = 1e-5
# Scoped-VMEM request: safe on v7x (64 MiB physical) with headroom for compiler scratch;
# raise toward ~100 MiB on v5e/v6e (128 MiB physical) when sweeping tile sizes.
_VMEM_LIMIT = 48 * 1024 * 1024


def _full_spec(a):
    """Whole-array block (weights / biases), constant index map (1-D grids)."""
    return pl.BlockSpec(a.shape, lambda i, _nd=a.ndim: (0,) * _nd)


def _row_block(total, T, target=512):
    """Row-block size: multiple of 8 (sublanes) and of T (clip boundary)."""
    if total <= 1024:
        return total                      # single full block (block == full dim is legal)
    m = 8 * T // math.gcd(8, T)           # lcm(8, T)
    return max(m, (target // m) * m)


def _attn_batch(NT):
    """Batch elements per attention grid step (multiple of 8 for the sublane dim)."""
    return 8 if NT % 8 == 0 else NT


def _temporal_conv(h1, t, w2, b2, T):
    """Depthwise temporal conv (kernel 3, zero padding 1) as a 3-tap row stencil.

    Rows are t-minor (frame index t); every row block starts at a multiple of T, so the
    zero rows introduced by the shifts coincide with (and are additionally masked by)
    the t == 0 / t == T-1 clip boundaries.
    """
    zrow = jnp.zeros((1, h1.shape[1]), h1.dtype)
    prev = jnp.concatenate([zrow, h1[:-1, :]], axis=0)    # row r -> h1[r - 1]
    nxt = jnp.concatenate([h1[1:, :], zrow], axis=0)      # row r -> h1[r + 1]
    prev = jnp.where(t == 0, 0.0, prev)
    nxt = jnp.where(t == T - 1, 0.0, nxt)
    return prev * w2[0:1, :] + h1 * w2[1:2, :] + nxt * w2[2:3, :] + b2


# ---------------------------------------------------------------------------
# Kernel 1: Local_MHRA #1  (eval-BN folded -> 1x1x1 conv -> depthwise temporal conv
# k=3,pad=1 -> 1x1x1 conv) + residual, CLS-row passthrough folded in.
# Flat (S*NT, C) rows; row r = s*NT + n*T + t, so temporal neighbours are rows r-1/r+1.
# ---------------------------------------------------------------------------
def lmhra_kernel(x_ref, w1_ref, b1_ref, w2_ref, b2_ref, w3_ref, b3_ref, o_ref, *, T, NT):
    x = x_ref[...].astype(jnp.float32)                               # (Rb, C)
    Rb = x.shape[0]
    r = pl.program_id(0) * Rb + jax.lax.broadcasted_iota(jnp.int32, (Rb, 1), 0)
    t = r % T                                                        # frame index (NT = N*T)

    h1 = jnp.dot(x.astype(jnp.bfloat16), w1_ref[...],
                 preferred_element_type=jnp.float32) + b1_ref[...]   # (Rb, reP)
    z = _temporal_conv(h1, t, w2_ref[...], b2_ref[...], T)
    y = jnp.dot(z.astype(jnp.bfloat16), w3_ref[...],
                preferred_element_type=jnp.float32) + b3_ref[...]    # (Rb, C)
    y = jnp.where(r >= NT, y, 0.0)                                   # CLS rows (s == 0) untouched
    o_ref[...] = (x + y).astype(o_ref.dtype)


def lmhra1(x, p, *, T):
    S, NT, C = x.shape
    total = S * NT
    xf = x.reshape(total, C)                                         # free, contiguous
    Rb = _row_block(total, T)
    reP = p["w1"].shape[1]
    args = (xf, p["w1"], p["b1"], p["w2"], p["b2"], p["w3"], p["b3"])
    in_specs = [pl.BlockSpec((Rb, C), lambda i: (i, 0))] + [_full_spec(a) for a in args[1:]]
    out = pl.pallas_call(
        functools.partial(lmhra_kernel, T=T, NT=NT),
        out_shape=jax.ShapeDtypeStruct((total, C), x.dtype),
        grid=(pl.cdiv(total, Rb),),
        in_specs=in_specs,
        out_specs=pl.BlockSpec((Rb, C), lambda i: (i, 0)),
        compiler_params=pltpu.CompilerParams(
            dimension_semantics=("parallel",), vmem_limit_bytes=_VMEM_LIMIT),
        cost_estimate=pl.CostEstimate(
            flops=int(4 * total * C * reP + 8 * total * reP),
            transcendentals=0,
            bytes_accessed=int(8 * total * C + 4 * C * reP)),
    )(*args)
    return out.reshape(S, NT, C)


# ---------------------------------------------------------------------------
# Kernel 2: LayerNorm + MultiheadAttention + residual, Nb batch elements per grid
# step, directly on the native (S, NT, C) layout (no wrapper transposes).
# ---------------------------------------------------------------------------
def attn_kernel(x_ref, g_ref, b_ref, wqkv_ref, bqkv_ref, wo_ref, bo_ref, o_ref, *, n_head):
    x = x_ref[...].astype(jnp.float32)                               # (S, Nb, C) seq-major
    S, Nb, C = x.shape
    hd = C // n_head

    # ln_1 (f32 VPU math)
    mu = jnp.mean(x, axis=-1, keepdims=True)
    xc = x - mu
    var = jnp.mean(xc * xc, axis=-1, keepdims=True)
    xn = xc * jax.lax.rsqrt(var + LN_EPS) * g_ref[...] + b_ref[...]

    # fused Q|K|V projection over all Nb*S rows (1/sqrt(hd) folded into the Q columns)
    qkv = jnp.dot(xn.reshape(S * Nb, C).astype(jnp.bfloat16), wqkv_ref[...],
                  preferred_element_type=jnp.float32) + bqkv_ref[...]        # (S*Nb, 3C)
    qkv = qkv.astype(jnp.bfloat16).reshape(S, Nb, 3 * C)
    # one reorder to batch-major for the per-head attention matmuls
    qkv_b = jnp.stack([qkv[:, b, :] for b in range(Nb)], axis=0)             # (Nb, S, 3C)

    ctx_heads = []
    for h in range(n_head):                                          # short static head loop
        lo = h * hd
        qh = qkv_b[:, :, lo:lo + hd]
        kh = qkv_b[:, :, C + lo:C + lo + hd]
        vh = qkv_b[:, :, 2 * C + lo:2 * C + lo + hd]
        s = jax.lax.dot_general(qh, kh, (((2,), (2,)), ((0,), (0,))),
                                preferred_element_type=jnp.float32)          # (Nb, S, S)
        s = s - jnp.max(s, axis=-1, keepdims=True)
        e = jnp.exp(s)
        p = e / jnp.sum(e, axis=-1, keepdims=True)
        ctx_heads.append(jax.lax.dot_general(p.astype(jnp.bfloat16), vh,
                                             (((2,), (1,)), ((0,), (0,))),
                                             preferred_element_type=jnp.float32))
    ctx = jnp.concatenate(ctx_heads, axis=-1)                                # (Nb, S, C)

    # single output-projection GEMM over all Nb*S rows
    attn = jnp.dot(ctx.reshape(Nb * S, C).astype(jnp.bfloat16), wo_ref[...],
                   preferred_element_type=jnp.float32) + bo_ref[...]
    attn = attn.reshape(Nb, S, C)
    # back to seq-major layout for the residual add / lane-dense store
    y = x + jnp.stack([attn[b] for b in range(Nb)], axis=1)                  # (S, Nb, C)
    o_ref[...] = y.astype(o_ref.dtype)


def attn_block(x, attn_p, ln_p, *, n_head):
    S, NT, C = x.shape
    Nb = _attn_batch(NT)
    hd = C // n_head
    args = (x, ln_p["gamma"], ln_p["beta"],
            attn_p["wqkv"], attn_p["bqkv"], attn_p["wo"], attn_p["bo"])
    in_specs = [pl.BlockSpec((S, Nb, C), lambda n: (0, n, 0))] + \
               [_full_spec(a) for a in args[1:]]
    return pl.pallas_call(
        functools.partial(attn_kernel, n_head=n_head),
        out_shape=jax.ShapeDtypeStruct(x.shape, x.dtype),
        grid=(NT // Nb,),
        in_specs=in_specs,
        out_specs=pl.BlockSpec((S, Nb, C), lambda n: (0, n, 0)),
        compiler_params=pltpu.CompilerParams(
            dimension_semantics=("parallel",), vmem_limit_bytes=_VMEM_LIMIT),
        cost_estimate=pl.CostEstimate(
            flops=int(NT * S * 8 * C * C + NT * n_head * 4 * S * S * hd),
            transcendentals=int(NT * n_head * S * S),
            bytes_accessed=int(8 * S * NT * C + 8 * C * C)),
    )(*args)


# ---------------------------------------------------------------------------
# Kernel 3 (fused): Local_MHRA #2 + residual, then LayerNorm + MLP (Linear ->
# QuickGELU -> Linear) + residual, on flat (S*NT, C) rows.
# ---------------------------------------------------------------------------
def lmhra_mlp_kernel(x_ref, w1_ref, b1_ref, w2_ref, b2_ref, w3_ref, b3_ref,
                     g_ref, bt_ref, wfc_ref, bfc_ref, wpr_ref, bpr_ref, o_ref, *, T, NT):
    x = x_ref[...].astype(jnp.float32)                               # (Rb, C)
    Rb = x.shape[0]
    r = pl.program_id(0) * Rb + jax.lax.broadcasted_iota(jnp.int32, (Rb, 1), 0)
    t = r % T

    # Local_MHRA #2 (+ residual, CLS passthrough)
    h1 = jnp.dot(x.astype(jnp.bfloat16), w1_ref[...],
                 preferred_element_type=jnp.float32) + b1_ref[...]
    z = _temporal_conv(h1, t, w2_ref[...], b2_ref[...], T)
    y = jnp.dot(z.astype(jnp.bfloat16), w3_ref[...],
                preferred_element_type=jnp.float32) + b3_ref[...]
    x = x + jnp.where(r >= NT, y, 0.0)

    # ln_2 + MLP (QuickGELU) + residual
    mu = jnp.mean(x, axis=-1, keepdims=True)
    xc = x - mu
    var = jnp.mean(xc * xc, axis=-1, keepdims=True)
    xn = xc * jax.lax.rsqrt(var + LN_EPS) * g_ref[...] + bt_ref[...]
    h = jnp.dot(xn.astype(jnp.bfloat16), wfc_ref[...],
                preferred_element_type=jnp.float32) + bfc_ref[...]
    h = (h * jax.nn.sigmoid(1.702 * h)).astype(jnp.bfloat16)         # QuickGELU, kept bf16
    y2 = jnp.dot(h, wpr_ref[...],
                 preferred_element_type=jnp.float32) + bpr_ref[...]
    o_ref[...] = (x + y2).astype(o_ref.dtype)


def lmhra2_mlp(x, lp, ln_p, mlp_p, *, T):
    S, NT, C = x.shape
    total = S * NT
    xf = x.reshape(total, C)
    Rb = _row_block(total, T)
    reP = lp["w1"].shape[1]
    Cf = mlp_p["w_fc"].shape[1]
    args = (xf, lp["w1"], lp["b1"], lp["w2"], lp["b2"], lp["w3"], lp["b3"],
            ln_p["gamma"], ln_p["beta"],
            mlp_p["w_fc"], mlp_p["b_fc"], mlp_p["w_proj"], mlp_p["b_proj"])
    in_specs = [pl.BlockSpec((Rb, C), lambda i: (i, 0))] + [_full_spec(a) for a in args[1:]]
    out = pl.pallas_call(
        functools.partial(lmhra_mlp_kernel, T=T, NT=NT),
        out_shape=jax.ShapeDtypeStruct((total, C), x.dtype),
        grid=(pl.cdiv(total, Rb),),
        in_specs=in_specs,
        out_specs=pl.BlockSpec((Rb, C), lambda i: (i, 0)),
        compiler_params=pltpu.CompilerParams(
            dimension_semantics=("parallel",), vmem_limit_bytes=_VMEM_LIMIT),
        cost_estimate=pl.CostEstimate(
            flops=int(4 * total * C * (reP + Cf) + 8 * total * (reP + Cf)),
            transcendentals=int(total * Cf),
            bytes_accessed=int(8 * total * C + 4 * C * (reP + Cf))),
    )(*args)
    return out.reshape(S, NT, C)


# ---------------------------------------------------------------------------
# Full ResidualAttentionBlock forward.
# ---------------------------------------------------------------------------
def residual_attention_block(x, kparams, *, T, n_head):
    # x = cat(cls, patches + lmhra1(patches))   (CLS passthrough handled in-kernel)
    x = lmhra1(x, kparams["lmhra1"], T=T)
    # x = x + attn(ln_1(x))
    x = attn_block(x, kparams["attn"], kparams["ln_1"], n_head=n_head)
    # x = cat(cls, patches + lmhra2(patches));  x = x + mlp(ln_2(x))   (fused kernel)
    x = lmhra2_mlp(x, kparams["lmhra2"], kparams["ln_2"], kparams["mlp"], T=T)
    return x


# ---------------------------------------------------------------------------
# Parameters.  init_params mirrors the PyTorch module layout (f32); prepare_params
# folds eval-mode BN into the first conv, fuses Q|K|V with the 1/sqrt(hd) scale,
# zero-pads the lmhra hidden width to a lane-dense multiple of 128 and casts matmul
# weights to bf16 (f32 accumulation in-kernel).
# ---------------------------------------------------------------------------
def init_params(C, key):
    reC = int(C // 1.5)
    keys = iter(jax.random.split(key, 64))

    def rnd(shape, scale=0.05):
        return (scale * jax.random.normal(next(keys), shape)).astype(jnp.float32)

    def lmhra_p():
        return dict(
            bn_gamma=1.0 + rnd((C,)), bn_beta=rnd((C,)),
            bn_mean=rnd((C,)), bn_var=jnp.ones((C,), jnp.float32),
            w1t=rnd((C, reC)), b1=rnd((reC,)),          # Conv3d 1x1x1, C -> reC
            w2=rnd((3, reC)), b2=rnd((reC,)),           # depthwise (3,1,1) conv, tap-major
            # NOTE: PyTorch zero-inits this last conv; random here so the path is exercised.
            w3t=rnd((reC, C)), b3=rnd((C,)),            # Conv3d 1x1x1, reC -> C
        )

    return dict(
        lmhra1=lmhra_p(), lmhra2=lmhra_p(),
        ln_1=dict(gamma=1.0 + rnd((C,)), beta=rnd((C,))),
        ln_2=dict(gamma=1.0 + rnd((C,)), beta=rnd((C,))),
        attn=dict(wq=rnd((C, C)), wk=rnd((C, C)), wv=rnd((C, C)),
                  bq=rnd((C,)), bk=rnd((C,)), bv=rnd((C,)),
                  wo=rnd((C, C)), bo=rnd((C,))),
        mlp=dict(w_fc=rnd((C, 4 * C)), b_fc=rnd((4 * C,)),
                 w_proj=rnd((4 * C, C)), b_proj=rnd((C,))),
    )


def prepare_params(p, n_head):
    C = p["attn"]["wq"].shape[0]
    hd = C // n_head

    def prep_lmhra(q):
        # TODO(synk): BatchNorm3d is folded assuming eval mode; training-mode batch
        # statistics are not implemented.
        reC = q["w1t"].shape[1]
        reP = ((reC + 127) // 128) * 128               # lane-dense hidden width
        pad = reP - reC
        inv = jax.lax.rsqrt(q["bn_var"] + BN_EPS)
        a = q["bn_gamma"] * inv                        # per-channel scale
        c = q["bn_beta"] - q["bn_mean"] * a            # per-channel shift
        w1 = a[:, None] * q["w1t"]                     # BN folded into the 1x1x1 conv
        b1 = q["b1"] + c @ q["w1t"]
        w1 = jnp.pad(w1, ((0, 0), (0, pad)))           # padded channels stay exactly zero
        b1 = jnp.pad(b1, (0, pad))
        w2 = jnp.pad(q["w2"], ((0, 0), (0, pad)))
        b2 = jnp.pad(q["b2"], (0, pad))
        w3 = jnp.pad(q["w3t"], ((0, pad), (0, 0)))
        return dict(w1=w1.astype(jnp.bfloat16), b1=b1.reshape(1, -1),
                    w2=w2, b2=b2.reshape(1, -1),
                    w3=w3.astype(jnp.bfloat16), b3=q["b3"].reshape(1, -1))

    a = p["attn"]
    scale = 1.0 / float(hd) ** 0.5
    wqkv = jnp.concatenate([a["wq"] * scale, a["wk"], a["wv"]], axis=1)   # (C, 3C)
    bqkv = jnp.concatenate([a["bq"] * scale, a["bk"], a["bv"]])           # (3C,)

    return dict(
        lmhra1=prep_lmhra(p["lmhra1"]), lmhra2=prep_lmhra(p["lmhra2"]),
        ln_1=dict(gamma=p["ln_1"]["gamma"].reshape(1, -1),
                  beta=p["ln_1"]["beta"].reshape(1, -1)),
        ln_2=dict(gamma=p["ln_2"]["gamma"].reshape(1, -1),
                  beta=p["ln_2"]["beta"].reshape(1, -1)),
        attn=dict(wqkv=wqkv.astype(jnp.bfloat16), bqkv=bqkv.reshape(1, -1),
                  wo=a["wo"].astype(jnp.bfloat16), bo=a["bo"].reshape(1, -1)),
        mlp=dict(w_fc=p["mlp"]["w_fc"].astype(jnp.bfloat16),
                 b_fc=p["mlp"]["b_fc"].reshape(1, -1),
                 w_proj=p["mlp"]["w_proj"].astype(jnp.bfloat16),
                 b_proj=p["mlp"]["b_proj"].reshape(1, -1)),
    )


if __name__ == "__main__":
    # small shapes: d_model C=32, n_head=4, N=2 videos, T=4 frames, 4x4 spatial grid
    C, n_head = 32, 4
    N, T, H, W = 2, 4, 4, 4
    L = H * W
    S = L + 1                    # [CLS] + L patch tokens
    NT = N * T

    key = jax.random.PRNGKey(0)
    kx, kp = jax.random.split(key)
    x = jax.random.normal(kx, (S, NT, C), dtype=jnp.float32)
    params = prepare_params(init_params(C, kp), n_head)

    fwd = jax.jit(functools.partial(residual_attention_block, T=T, n_head=n_head))
    out = fwd(x, params)
    jax.block_until_ready(out)
    assert out.shape == (S, NT, C) and out.dtype == jnp.float32
    assert bool(jnp.all(jnp.isfinite(out)))
    print("KERNEL_OK")
</pallas_src>

<mosaic_0001>
module attributes {stable_mosaic.version = 11 : i64} {
  func.func @lmhra_kernel(%arg0: i32, %arg1: memref<136x32xf32, #tpu.memory_space<vmem>>, %arg2: memref<32x128xbf16, #tpu.memory_space<vmem>>, %arg3: memref<1x128xf32, #tpu.memory_space<vmem>>, %arg4: memref<3x128xf32, #tpu.memory_space<vmem>>, %arg5: memref<1x128xf32, #tpu.memory_space<vmem>>, %arg6: memref<128x32xbf16, #tpu.memory_space<vmem>>, %arg7: memref<1x32xf32, #tpu.memory_space<vmem>>, %arg8: memref<136x32xf32, #tpu.memory_space<vmem>>) attributes {dimension_semantics = [#tpu.dimension_semantics<parallel>], iteration_bounds = array<i64: 1>, scalar_prefetch = 0 : i64, scratch_operands = 0 : i64, tpu.core_type = #tpu.core_type<tc>, window_params = [{transform_indices = @transform_0, window_bounds = array<i64: 136, 32>}, {pipeline_mode = #tpu.pipeline_mode<synchronous>, transform_indices = @transform_1, window_bounds = array<i64: 32, 128>}, {pipeline_mode = #tpu.pipeline_mode<synchronous>, transform_indices = @transform_2, window_bounds = array<i64: 1, 128>}, {pipeline_mode = #tpu.pipeline_mode<synchronous>, transform_indices = @transform_3, window_bounds = array<i64: 3, 128>}, {pipeline_mode = #tpu.pipeline_mode<synchronous>, transform_indices = @transform_4, window_bounds = array<i64: 1, 128>}, {pipeline_mode = #tpu.pipeline_mode<synchronous>, transform_indices = @transform_5, window_bounds = array<i64: 128, 32>}, {pipeline_mode = #tpu.pipeline_mode<synchronous>, transform_indices = @transform_6, window_bounds = array<i64: 1, 32>}, {transform_indices = @transform_7, window_bounds = array<i64: 136, 32>}]} {
    %c0 = arith.constant 0 : index
    %c0_0 = arith.constant 0 : index
    %0 = vector.load %arg1[%c0, %c0_0] : memref<136x32xf32, #tpu.memory_space<vmem>>, vector<136x32xf32>
    %c136_i32 = arith.constant 136 : i32
    %1 = arith.muli %arg0, %c136_i32 : i32
    %2 = tpu.iota {dimensions = array<i32: 0>} : vector<136x1xi32>
    %3 = vector.broadcast %1 : i32 to vector<136x1xi32>
    %4 = arith.addi %3, %2 : vector<136x1xi32>
    %c4_i32 = arith.constant 4 : i32
    %c0_i32 = arith.constant 0 : i32
    %5 = arith.cmpi eq, %c4_i32, %c0_i32 : i32
    %c1_i32 = arith.constant 1 : i32
    %6 = arith.select %5, %c1_i32, %c4_i32 : i32
    %7 = vector.broadcast %6 : i32 to vector<136x1xi32>
    %8 = arith.remsi %4, %7 : vector<136x1xi32>
    %c0_i32_1 = arith.constant 0 : i32
    %9 = vector.broadcast %c0_i32_1 : i32 to vector<136x1xi32>
    %10 = arith.cmpi ne, %8, %9 : vector<136x1xi32>
    %c0_i32_2 = arith.constant 0 : i32
    %11 = vector.broadcast %c0_i32_2 : i32 to vector<136x1xi32>
    %12 = arith.cmpi slt, %8, %11 : vector<136x1xi32>
    %c0_i32_3 = arith.constant 0 : i32
    %13 = arith.cmpi slt, %6, %c0_i32_3 : i32
    %14 = vector.broadcast %13 : i1 to vector<136x1xi1>
    %15 = vector.broadcast %14 : vector<136x1xi1> to vector<136x1xi1>
    %16 = arith.xori %12, %15 : vector<136x1xi1>
    %17 = arith.andi %16, %10 : vector<136x1xi1>
    %18 = vector.broadcast %6 : i32 to vector<136x1xi32>
    %19 = arith.addi %8, %18 : vector<136x1xi32>
    %20 = arith.select %17, %19, %8 : vector<136x1xi1>, vector<136x1xi32>
    %21 = arith.truncf %0 : vector<136x32xf32> to vector<136x32xbf16>
    %c0_4 = arith.constant 0 : index
    %c0_5 = arith.constant 0 : index
    %22 = vector.load %arg2[%c0_4, %c0_5] : memref<32x128xbf16, #tpu.memory_space<vmem>>, vector<32x128xbf16>
    %cst = arith.constant dense<0.000000e+00> : vector<136x128xf32>
    %23 = tpu.matmul %21, %22, %cst {dimension_numbers = #tpu.dot_dimension_numbers<[1], [0], [0], [1], [0, 0, 1, 1], [], []>} : vector<136x32xbf16>, vector<32x128xbf16>, vector<136x128xf32> -> vector<136x128xf32>
    %c0_6 = arith.constant 0 : index
    %c0_7 = arith.constant 0 : index
    %24 = vector.load %arg3[%c0_6, %c0_7] : memref<1x128xf32, #tpu.memory_space<vmem>>, vector<1x128xf32>
    %25 = vector.broadcast %24 : vector<1x128xf32> to vector<136x128xf32>
    %26 = arith.addf %23, %25 : vector<136x128xf32>
    %c0_8 = arith.constant 0 : index
    %c0_9 = arith.constant 0 : index
    %27 = vector.load %arg4[%c0_8, %c0_9] : memref<3x128xf32, #tpu.memory_space<vmem>>, vector<3x128xf32>
    %c0_10 = arith.constant 0 : index
    %c0_11 = arith.constant 0 : index
    %28 = vector.load %arg5[%c0_10, %c0_11] : memref<1x128xf32, #tpu.memory_space<vmem>>, vector<1x128xf32>
    %cst_12 = arith.constant 0.000000e+00 : f32
    %29 = vector.broadcast %cst_12 : f32 to vector<1x128xf32>
    %30 = vector.extract_strided_slice %26 {offsets = [0, 0], sizes = [135, 128], strides = [1, 1]} : vector<136x128xf32> to vector<135x128xf32>
    %31 = tpu.concatenate %29, %30 in 0 : vector<1x128xf32>, vector<135x128xf32> -> vector<136x128xf32>
    %32 = vector.extract_strided_slice %26 {offsets = [1, 0], sizes = [135, 128], strides = [1, 1]} : vector<136x128xf32> to vector<135x128xf32>
    %33 = tpu.concatenate %32, %29 in 0 : vector<135x128xf32>, vector<1x128xf32> -> vector<136x128xf32>
    %c0_i32_13 = arith.constant 0 : i32
    %34 = vector.broadcast %c0_i32_13 : i32 to vector<136x1xi32>
    %35 = arith.cmpi eq, %20, %34 : vector<136x1xi32>
    %cst_14 = arith.constant 0.000000e+00 : f32
    %36 = vector.shape_cast %35 : vector<136x1xi1> to vector<136x1xi1>
    %37 = vector.broadcast %36 : vector<136x1xi1> to vector<136x128xi1>
    %38 = vector.broadcast %cst_14 : f32 to vector<136x128xf32>
    %39 = arith.select %37, %38, %31 : vector<136x128xi1>, vector<136x128xf32>
    %c3_i32 = arith.constant 3 : i32
    %40 = vector.broadcast %c3_i32 : i32 to vector<136x1xi32>
    %41 = arith.cmpi eq, %20, %40 : vector<136x1xi32>
    %cst_15 = arith.constant 0.000000e+00 : f32
    %42 = vector.shape_cast %41 : vector<136x1xi1> to vector<136x1xi1>
    %43 = vector.broadcast %42 : vector<136x1xi1> to vector<136x128xi1>
    %44 = vector.broadcast %cst_15 : f32 to vector<136x128xf32>
    %45 = arith.select %43, %44, %33 : vector<136x128xi1>, vector<136x128xf32>
    %46 = vector.extract_strided_slice %27 {offsets = [0, 0], sizes = [1, 128], strides = [1, 1]} : vector<3x128xf32> to vector<1x128xf32>
    %47 = vector.broadcast %46 : vector<1x128xf32> to vector<136x128xf32>
    %48 = arith.mulf %39, %47 : vector<136x128xf32>
    %49 = vector.extract_strided_slice %27 {offsets = [1, 0], sizes = [1, 128], strides = [1, 1]} : vector<3x128xf32> to vector<1x128xf32>
    %50 = vector.broadcast %49 : vector<1x128xf32> to vector<136x128xf32>
    %51 = arith.mulf %26, %50 : vector<136x128xf32>
    %52 = arith.addf %48, %51 : vector<136x128xf32>
    %53 = vector.extract_strided_slice %27 {offsets = [2, 0], sizes = [1, 128], strides = [1, 1]} : vector<3x128xf32> to vector<1x128xf32>
    %54 = vector.broadcast %53 : vector<1x128xf32> to vector<136x128xf32>
    %55 = arith.mulf %45, %54 : vector<136x128xf32>
    %56 = arith.addf %52, %55 : vector<136x128xf32>
    %57 = vector.broadcast %28 : vector<1x128xf32> to vector<136x128xf32>
    %58 = arith.addf %56, %57 : vector<136x128xf32>
    %59 = arith.truncf %58 : vector<136x128xf32> to vector<136x128xbf16>
    %c0_16 = arith.constant 0 : index
    %c0_17 = arith.constant 0 : index
    %60 = vector.load %arg6[%c0_16, %c0_17] : memref<128x32xbf16, #tpu.memory_space<vmem>>, vector<128x32xbf16>
    %cst_18 = arith.constant dense<0.000000e+00> : vector<136x32xf32>
    %61 = tpu.matmul %59, %60, %cst_18 {dimension_numbers = #tpu.dot_dimension_numbers<[1], [0], [0], [1], [0, 0, 1, 1], [], []>} : vector<136x128xbf16>, vector<128x32xbf16>, vector<136x32xf32> -> vector<136x32xf32>
    %c0_19 = arith.constant 0 : index
    %c0_20 = arith.constant 0 : index
    %62 = vector.load %arg7[%c0_19, %c0_20] : memref<1x32xf32, #tpu.memory_space<vmem>>, vector<1x32xf32>
    %63 = vector.broadcast %62 : vector<1x32xf32> to vector<136x32xf32>
    %64 = arith.addf %61, %63 : vector<136x32xf32>
    %c8_i32 = arith.constant 8 : i32
    %65 = vector.broadcast %c8_i32 : i32 to vector<136x1xi32>
    %66 = arith.cmpi sge, %4, %65 : vector<136x1xi32>
    %cst_21 = arith.constant 0.000000e+00 : f32
    %67 = vector.shape_cast %66 : vector<136x1xi1> to vector<136x1xi1>
    %68 = vector.broadcast %67 : vector<136x1xi1> to vector<136x32xi1>
    %69 = vector.broadcast %cst_21 : f32 to vector<136x32xf32>
    %70 = arith.select %68, %64, %69 : vector<136x32xi1>, vector<136x32xf32>
    %71 = arith.addf %0, %70 : vector<136x32xf32>
    %c0_22 = arith.constant 0 : index
    %c0_23 = arith.constant 0 : index
    %72 = vector.load %arg8[%c0_22, %c0_23] : memref<136x32xf32, #tpu.memory_space<vmem>>, vector<136x32xf32>
    tpu.vector_store %arg8[%c0_22, %c0_23], %71 {strides = array<i32>} : memref<136x32xf32, #tpu.memory_space<vmem>>, vector<136x32xf32>,
    return
  }
  func.func @transform_0(%arg0: i32) -> (i32, i32) {
    %c0_i32 = arith.constant 0 : i32
    %c0_i32_0 = arith.constant 0 : i32
    return %arg0, %c0_i32 : i32, i32
  }
  func.func @transform_1(%arg0: i32) -> (i32, i32) {
    %c0_i32 = arith.constant 0 : i32
    %c0_i32_0 = arith.constant 0 : i32
    %c0_i32_1 = arith.constant 0 : i32
    return %c0_i32, %c0_i32_0 : i32, i32
  }
  func.func @transform_2(%arg0: i32) -> (i32, i32) {
    %c0_i32 = arith.constant 0 : i32
    %c0_i32_0 = arith.constant 0 : i32
    %c0_i32_1 = arith.constant 0 : i32
    return %c0_i32, %c0_i32_0 : i32, i32
  }
  func.func @transform_3(%arg0: i32) -> (i32, i32) {
    %c0_i32 = arith.constant 0 : i32
    %c0_i32_0 = arith.constant 0 : i32
    %c0_i32_1 = arith.constant 0 : i32
    return %c0_i32, %c0_i32_0 : i32, i32
  }
  func.func @transform_4(%arg0: i32) -> (i32, i32) {
    %c0_i32 = arith.constant 0 : i32
    %c0_i32_0 = arith.constant 0 : i32
    %c0_i32_1 = arith.constant 0 : i32
    return %c0_i32, %c0_i32_0 : i32, i32
  }
  func.func @transform_5(%arg0: i32) -> (i32, i32) {
    %c0_i32 = arith.constant 0 : i32
    %c0_i32_0 = arith.constant 0 : i32
    %c0_i32_1 = arith.constant 0 : i32
    return %c0_i32, %c0_i32_0 : i32, i32
  }
  func.func @transform_6(%arg0: i32) -> (i32, i32) {
    %c0_i32 = arith.constant 0 : i32
    %c0_i32_0 = arith.constant 0 : i32
    %c0_i32_1 = arith.constant 0 : i32
    return %c0_i32, %c0_i32_0 : i32, i32
  }
  func.func @transform_7(%arg0: i32) -> (i32, i32) {
    %c0_i32 = arith.constant 0 : i32
    %c0_i32_0 = arith.constant 0 : i32
    return %arg0, %c0_i32 : i32, i32
  }
}

module attributes {stable_mosaic.version = 11 : i64} {
  func.func @attn_kernel(%arg0: i32, %arg1: memref<17x8x32xf32, #tpu.memory_space<vmem>>, %arg2: memref<1x32xf32, #tpu.memory_space<vmem>>, %arg3: memref<1x32xf32, #tpu.memory_space<vmem>>, %arg4: memref<32x96xbf16, #tpu.memory_space<vmem>>, %arg5: memref<1x96xf32, #tpu.memory_space<vmem>>, %arg6: memref<32x32xbf16, #tpu.memory_space<vmem>>, %arg7: memref<1x32xf32, #tpu.memory_space<vmem>>, %arg8: memref<17x8x32xf32, #tpu.memory_space<vmem>>) attributes {dimension_semantics = [#tpu.dimension_semantics<parallel>], iteration_bounds = array<i64: 1>, scalar_prefetch = 0 : i64, scratch_operands = 0 : i64, tpu.core_type = #tpu.core_type<tc>, window_params = [{transform_indices = @transform_0, window_bounds = array<i64: 17, 8, 32>}, {pipeline_mode = #tpu.pipeline_mode<synchronous>, transform_indices = @transform_1, window_bounds = array<i64: 1, 32>}, {pipeline_mode = #tpu.pipeline_mode<synchronous>, transform_indices = @transform_2, window_bounds = array<i64: 1, 32>}, {pipeline_mode = #tpu.pipeline_mode<synchronous>, transform_indices = @transform_3, window_bounds = array<i64: 32, 96>}, {pipeline_mode = #tpu.pipeline_mode<synchronous>, transform_indices = @transform_4, window_bounds = array<i64: 1, 96>}, {pipeline_mode = #tpu.pipeline_mode<synchronous>, transform_indices = @transform_5, window_bounds = array<i64: 32, 32>}, {pipeline_mode = #tpu.pipeline_mode<synchronous>, transform_indices = @transform_6, window_bounds = array<i64: 1, 32>}, {transform_indices = @transform_7, window_bounds = array<i64: 17, 8, 32>}]} {
    %c0 = arith.constant 0 : index
    %c0_0 = arith.constant 0 : index
    %c0_1 = arith.constant 0 : index
    %0 = vector.load %arg1[%c0, %c0_0, %c0_1] : memref<17x8x32xf32, #tpu.memory_space<vmem>>, vector<17x8x32xf32>
    %cst = arith.constant dense<0.000000e+00> : vector<17x8xf32>
    %1 = vector.multi_reduction <add>, %0, %cst [2] : vector<17x8x32xf32> to vector<17x8xf32>
    %2 = vector.shape_cast %1 : vector<17x8xf32> to vector<17x8x1xf32>
    %cst_2 = arith.constant 3.200000e+01 : f32
    %3 = vector.broadcast %cst_2 : f32 to vector<17x8x1xf32>
    %4 = arith.divf %2, %3 : vector<17x8x1xf32>
    %5 = vector.broadcast %4 : vector<17x8x1xf32> to vector<17x8x32xf32>
    %6 = arith.subf %0, %5 : vector<17x8x32xf32>
    %7 = arith.mulf %6, %6 : vector<17x8x32xf32>
    %cst_3 = arith.constant dense<0.000000e+00> : vector<17x8xf32>
    %8 = vector.multi_reduction <add>, %7, %cst_3 [2] : vector<17x8x32xf32> to vector<17x8xf32>
    %9 = vector.shape_cast %8 : vector<17x8xf32> to vector<17x8x1xf32>
    %cst_4 = arith.constant 3.200000e+01 : f32
    %10 = vector.broadcast %cst_4 : f32 to vector<17x8x1xf32>
    %11 = arith.divf %9, %10 : vector<17x8x1xf32>
    %cst_5 = arith.constant 9.99999974E-6 : f32
    %12 = vector.broadcast %cst_5 : f32 to vector<17x8x1xf32>
    %13 = arith.addf %11, %12 : vector<17x8x1xf32>
    %14 = math.rsqrt %13 : vector<17x8x1xf32>
    %15 = vector.broadcast %14 : vector<17x8x1xf32> to vector<17x8x32xf32>
    %16 = arith.mulf %6, %15 : vector<17x8x32xf32>
    %c0_6 = arith.constant 0 : index
    %c0_7 = arith.constant 0 : index
    %17 = vector.load %arg2[%c0_6, %c0_7] : memref<1x32xf32, #tpu.memory_space<vmem>>, vector<1x32xf32>
    %18 = vector.shape_cast %17 : vector<1x32xf32> to vector<1x1x32xf32>
    %19 = vector.broadcast %18 : vector<1x1x32xf32> to vector<17x8x32xf32>
    %20 = arith.mulf %16, %19 : vector<17x8x32xf32>
    %c0_8 = arith.constant 0 : index
    %c0_9 = arith.constant 0 : index
    %21 = vector.load %arg3[%c0_8, %c0_9] : memref<1x32xf32, #tpu.memory_space<vmem>>, vector<1x32xf32>
    %22 = vector.shape_cast %21 : vector<1x32xf32> to vector<1x1x32xf32>
    %23 = vector.broadcast %22 : vector<1x1x32xf32> to vector<17x8x32xf32>
    %24 = arith.addf %20, %23 : vector<17x8x32xf32>
    %25 = vector.shape_cast %24 : vector<17x8x32xf32> to vector<136x32xf32>
    %26 = arith.truncf %25 : vector<136x32xf32> to vector<136x32xbf16>
    %c0_10 = arith.constant 0 : index
    %c0_11 = arith.constant 0 : index
    %27 = vector.load %arg4[%c0_10, %c0_11] : memref<32x96xbf16, #tpu.memory_space<vmem>>, vector<32x96xbf16>
    %cst_12 = arith.constant dense<0.000000e+00> : vector<136x96xf32>
    %28 = tpu.matmul %26, %27, %cst_12 {dimension_numbers = #tpu.dot_dimension_numbers<[1], [0], [0], [1], [0, 0, 1, 1], [], []>} : vector<136x32xbf16>, vector<32x96xbf16>, vector<136x96xf32> -> vector<136x96xf32>
    %c0_13 = arith.constant 0 : index
    %c0_14 = arith.constant 0 : index
    %29 = vector.load %arg5[%c0_13, %c0_14] : memref<1x96xf32, #tpu.memory_space<vmem>>, vector<1x96xf32>
    %30 = vector.broadcast %29 : vector<1x96xf32> to vector<136x96xf32>
    %31 = arith.addf %28, %30 : vector<136x96xf32>
    %32 = arith.truncf %31 : vector<136x96xf32> to vector<136x96xbf16>
    %33 = vector.shape_cast %32 : vector<136x96xbf16> to vector<17x8x96xbf16>
    %34 = vector.extract_strided_slice %33 {offsets = [0, 0, 0], sizes = [17, 1, 96], strides = [1, 1, 1]} : vector<17x8x96xbf16> to vector<17x1x96xbf16>
    %35 = vector.shape_cast %34 : vector<17x1x96xbf16> to vector<17x96xbf16>
    %36 = vector.extract_strided_slice %33 {offsets = [0, 1, 0], sizes = [17, 1, 96], strides = [1, 1, 1]} : vector<17x8x96xbf16> to vector<17x1x96xbf16>
    %37 = vector.shape_cast %36 : vector<17x1x96xbf16> to vector<17x96xbf16>
    %38 = vector.extract_strided_slice %33 {offsets = [0, 2, 0], sizes = [17, 1, 96], strides = [1, 1, 1]} : vector<17x8x96xbf16> to vector<17x1x96xbf16>
    %39 = vector.shape_cast %38 : vector<17x1x96xbf16> to vector<17x96xbf16>
    %40 = vector.extract_strided_slice %33 {offsets = [0, 3, 0], sizes = [17, 1, 96], strides = [1, 1, 1]} : vector<17x8x96xbf16> to vector<17x1x96xbf16>
    %41 = vector.shape_cast %40 : vector<17x1x96xbf16> to vector<17x96xbf16>
    %42 = vector.extract_strided_slice %33 {offsets = [0, 4, 0], sizes = [17, 1, 96], strides = [1, 1, 1]} : vector<17x8x96xbf16> to vector<17x1x96xbf16>
    %43 = vector.shape_cast %42 : vector<17x1x96xbf16> to vector<17x96xbf16>
    %44 = vector.extract_strided_slice %33 {offsets = [0, 5, 0], sizes = [17, 1, 96], strides = [1, 1, 1]} : vector<17x8x96xbf16> to vector<17x1x96xbf16>
    %45 = vector.shape_cast %44 : vector<17x1x96xbf16> to vector<17x96xbf16>
    %46 = vector.extract_strided_slice %33 {offsets = [0, 6, 0], sizes = [17, 1, 96], strides = [1, 1, 1]} : vector<17x8x96xbf16> to vector<17x1x96xbf16>
    %47 = vector.shape_cast %46 : vector<17x1x96xbf16> to vector<17x96xbf16>
    %48 = vector.extract_strided_slice %33 {offsets = [0, 7, 0], sizes = [17, 1, 96], strides = [1, 1, 1]} : vector<17x8x96xbf16> to vector<17x1x96xbf16>
    %49 = vector.shape_cast %48 : vector<17x1x96xbf16> to vector<17x96xbf16>
    %50 = vector.shape_cast %35 : vector<17x96xbf16> to vector<1x17x96xbf16>
    %51 = vector.shape_cast %37 : vector<17x96xbf16> to vector<1x17x96xbf16>
    %52 = vector.shape_cast %39 : vector<17x96xbf16> to vector<1x17x96xbf16>
    %53 = vector.shape_cast %41 : vector<17x96xbf16> to vector<1x17x96xbf16>
    %54 = vector.shape_cast %43 : vector<17x96xbf16> to vector<1x17x96xbf16>
    %55 = vector.shape_cast %45 : vector<17x96xbf16> to vector<1x17x96xbf16>
    %56 = vector.shape_cast %47 : vector<17x96xbf16> to vector<1x17x96xbf16>
    %57 = vector.shape_cast %49 : vector<17x96xbf16> to vector<1x17x96xbf16>
    %58 = tpu.concatenate %50, %51, %52, %53, %54, %55, %56, %57 in 0 : vector<1x17x96xbf16>, vector<1x17x96xbf16>, vector<1x17x96xbf16>, vector<1x17x96xbf16>, vector<1x17x96xbf16>, vector<1x17x96xbf16>, vector<1x17x96xbf16>, vector<1x17x96xbf16> -> vector<8x17x96xbf16>
    %59 = vector.extract_strided_slice %58 {offsets = [0, 0, 0], sizes = [8, 17, 8], strides = [1, 1, 1]} : vector<8x17x96xbf16> to vector<8x17x8xbf16>
    %60 = vector.extract_strided_slice %58 {offsets = [0, 0, 32], sizes = [8, 17, 8], strides = [1, 1, 1]} : vector<8x17x96xbf16> to vector<8x17x8xbf16>
    %61 = vector.extract_strided_slice %58 {offsets = [0, 0, 64], sizes = [8, 17, 8], strides = [1, 1, 1]} : vector<8x17x96xbf16> to vector<8x17x8xbf16>
    %cst_15 = arith.constant dense<0.000000e+00> : vector<8x17x17xf32>
    %62 = tpu.matmul %59, %60, %cst_15 {dimension_numbers = #tpu.dot_dimension_numbers<[2], [2], [1], [1], [0, 0, 0, 1, 1, 1], [0], [0]>} : vector<8x17x8xbf16>, vector<8x17x8xbf16>, vector<8x17x17xf32> -> vector<8x17x17xf32>
    %cst_16 = arith.constant dense<0xFF800000> : vector<8x17xf32>
    %63 = vector.multi_reduction <maximumf>, %62, %cst_16 [2] : vector<8x17x17xf32> to vector<8x17xf32>
    %64 = vector.shape_cast %63 : vector<8x17xf32> to vector<8x17x1xf32>
    %65 = vector.broadcast %64 : vector<8x17x1xf32> to vector<8x17x17xf32>
    %66 = arith.subf %62, %65 : vector<8x17x17xf32>
    %67 = math.exp %66 : vector<8x17x17xf32>
    %cst_17 = arith.constant dense<0.000000e+00> : vector<8x17xf32>
    %68 = vector.multi_reduction <add>, %67, %cst_17 [2] : vector<8x17x17xf32> to vector<8x17xf32>
    %69 = vector.shape_cast %68 : vector<8x17xf32> to vector<8x17x1xf32>
    %70 = vector.broadcast %69 : vector<8x17x1xf32> to vector<8x17x17xf32>
    %71 = arith.divf %67, %70 : vector<8x17x17xf32>
    %72 = arith.truncf %71 : vector<8x17x17xf32> to vector<8x17x17xbf16>
    %cst_18 = arith.constant dense<0.000000e+00> : vector<8x17x8xf32>
    %73 = tpu.matmul %72, %61, %cst_18 {dimension_numbers = #tpu.dot_dimension_numbers<[2], [1], [1], [2], [0, 0, 0, 1, 1, 2], [0], [0]>} : vector<8x17x17xbf16>, vector<8x17x8xbf16>, vector<8x17x8xf32> -> vector<8x17x8xf32>
    %74 = vector.extract_strided_slice %58 {offsets = [0, 0, 8], sizes = [8, 17, 8], strides = [1, 1, 1]} : vector<8x17x96xbf16> to vector<8x17x8xbf16>
    %75 = vector.extract_strided_slice %58 {offsets = [0, 0, 40], sizes = [8, 17, 8], strides = [1, 1, 1]} : vector<8x17x96xbf16> to vector<8x17x8xbf16>
    %76 = vector.extract_strided_slice %58 {offsets = [0, 0, 72], sizes = [8, 17, 8], strides = [1, 1, 1]} : vector<8x17x96xbf16> to vector<8x17x8xbf16>
    %cst_19 = arith.constant dense<0.000000e+00> : vector<8x17x17xf32>
    %77 = tpu.matmul %74, %75, %cst_19 {dimension_numbers = #tpu.dot_dimension_numbers<[2], [2], [1], [1], [0, 0, 0, 1, 1, 1], [0], [0]>} : vector<8x17x8xbf16>, vector<8x17x8xbf16>, vector<8x17x17xf32> -> vector<8x17x17xf32>
    %cst_20 = arith.constant dense<0xFF800000> : vector<8x17xf32>
    %78 = vector.multi_reduction <maximumf>, %77, %cst_20 [2] : vector<8x17x17xf32> to vector<8x17xf32>
    %79 = vector.shape_cast %78 : vector<8x17xf32> to vector<8x17x1xf32>
    %80 = vector.broadcast %79 : vector<8x17x1xf32> to vector<8x17x17xf32>
    %81 = arith.subf %77, %80 : vector<8x17x17xf32>
    %82 = math.exp %81 : vector<8x17x17xf32>
    %cst_21 = arith.constant dense<0.000000e+00> : vector<8x17xf32>
    %83 = vector.multi_reduction <add>, %82, %cst_21 [2] : vector<8x17x17xf32> to vector<8x17xf32>
    %84 = vector.shape_cast %83 : vector<8x17xf32> to vector<8x17x1xf32>
    %85 = vector.broadcast %84 : vector<8x17x1xf32> to vector<8x17x17xf32>
    %86 = arith.divf %82, %85 : vector<8x17x17xf32>
    %87 = arith.truncf %86 : vector<8x17x17xf32> to vector<8x17x17xbf16>
    %cst_22 = arith.constant dense<0.000000e+00> : vector<8x17x8xf32>
    %88 = tpu.matmul %87, %76, %cst_22 {dimension_numbers = #tpu.dot_dimension_numbers<[2], [1], [1], [2], [0, 0, 0, 1, 1, 2], [0], [0]>} : vector<8x17x17xbf16>, vector<8x17x8xbf16>, vector<8x17x8xf32> -> vector<8x17x8xf32>
    %89 = vector.extract_strided_slice %58 {offsets = [0, 0, 16], sizes = [8, 17, 8], strides = [1, 1, 1]} : vector<8x17x96xbf16> to vector<8x17x8xbf16>
    %90 = vector.extract_strided_slice %58 {offsets = [0, 0, 48], sizes = [8, 17, 8], strides = [1, 1, 1]} : vector<8x17x96xbf16> to vector<8x17x8xbf16>
    %91 = vector.extract_strided_slice %58 {offsets = [0, 0, 80], sizes = [8, 17, 8], strides = [1, 1, 1]} : vector<8x17x96xbf16> to vector<8x17x8xbf16>
    %cst_23 = arith.constant dense<0.000000e+00> : vector<8x17x17xf32>
    %92 = tpu.matmul %89, %90, %cst_23 {dimension_numbers = #tpu.dot_dimension_numbers<[2], [2], [1], [1], [0, 0, 0, 1, 1, 1], [0], [0]>} : vector<8x17x8xbf16>, vector<8x17x8xbf16>, vector<8x17x17xf32> -> vector<8x17x17xf32>
    %cst_24 = arith.constant dense<0xFF800000> : vector<8x17xf32>
    %93 = vector.multi_reduction <maximumf>, %92, %cst_24 [2] : vector<8x17x17xf32> to vector<8x17xf32>
    %94 = vector.shape_cast %93 : vector<8x17xf32> to vector<8x17x1xf32>
    %95 = vector.broadcast %94 : vector<8x17x1xf32> to vector<8x17x17xf32>
    %96 = arith.subf %92, %95 : vector<8x17x17xf32>
    %97 = math.exp %96 : vector<8x17x17xf32>
    %cst_25 = arith.constant dense<0.000000e+00> : vector<8x17xf32>
    %98 = vector.multi_reduction <add>, %97, %cst_25 [2] : vector<8x17x17xf32> to vector<8x17xf32>
    %99 = vector.shape_cast %98 : vector<8x17xf32> to vector<8x17x1xf32>
    %100 = vector.broadcast %99 : vector<8x17x1xf32> to vector<8x17x17xf32>
    %101 = arith.divf %97, %100 : vector<8x17x17xf32>
    %102 = arith.truncf %101 : vector<8x17x17xf32> to vector<8x17x17xbf16>
    %cst_26 = arith.constant dense<0.000000e+00> : vector<8x17x8xf32>
    %103 = tpu.matmul %102, %91, %cst_26 {dimension_numbers = #tpu.dot_dimension_numbers<[2], [1], [1], [2], [0, 0, 0, 1, 1, 2], [0], [0]>} : vector<8x17x17xbf16>, vector<8x17x8xbf16>, vector<8x17x8xf32> -> vector<8x17x8xf32>
    %104 = vector.extract_strided_slice %58 {offsets = [0, 0, 24], sizes = [8, 17, 8], strides = [1, 1, 1]} : vector<8x17x96xbf16> to vector<8x17x8xbf16>
    %105 = vector.extract_strided_slice %58 {offsets = [0, 0, 56], sizes = [8, 17, 8], strides = [1, 1, 1]} : vector<8x17x96xbf16> to vector<8x17x8xbf16>
    %106 = vector.extract_strided_slice %58 {offsets = [0, 0, 88], sizes = [8, 17, 8], strides = [1, 1, 1]} : vector<8x17x96xbf16> to vector<8x17x8xbf16>
    %cst_27 = arith.constant dense<0.000000e+00> : vector<8x17x17xf32>
    %107 = tpu.matmul %104, %105, %cst_27 {dimension_numbers = #tpu.dot_dimension_numbers<[2], [2], [1], [1], [0, 0, 0, 1, 1, 1], [0], [0]>} : vector<8x17x8xbf16>, vector<8x17x8xbf16>, vector<8x17x17xf32> -> vector<8x17x17xf32>
    %cst_28 = arith.constant dense<0xFF800000> : vector<8x17xf32>
    %108 = vector.multi_reduction <maximumf>, %107, %cst_28 [2] : vector<8x17x17xf32> to vector<8x17xf32>
    %109 = vector.shape_cast %108 : vector<8x17xf32> to vector<8x17x1xf32>
    %110 = vector.broadcast %109 : vector<8x17x1xf32> to vector<8x17x17xf32>
    %111 = arith.subf %107, %110 : vector<8x17x17xf32>
    %112 = math.exp %111 : vector<8x17x17xf32>
    %cst_29 = arith.constant dense<0.000000e+00> : vector<8x17xf32>
    %113 = vector.multi_reduction <add>, %112, %cst_29 [2] : vector<8x17x17xf32> to vector<8x17xf32>
    %114 = vector.shape_cast %113 : vector<8x17xf32> to vector<8x17x1xf32>
    %115 = vector.broadcast %114 : vector<8x17x1xf32> to vector<8x17x17xf32>
    %116 = arith.divf %112, %115 : vector<8x17x17xf32>
    %117 = arith.truncf %116 : vector<8x17x17xf32> to vector<8x17x17xbf16>
    %cst_30 = arith.constant dense<0.000000e+00> : vector<8x17x8xf32>
    %118 = tpu.matmul %117, %106, %cst_30 {dimension_numbers = #tpu.dot_dimension_numbers<[2], [1], [1], [2], [0, 0, 0, 1, 1, 2], [0], [0]>} : vector<8x17x17xbf16>, vector<8x17x8xbf16>, vector<8x17x8xf32> -> vector<8x17x8xf32>
    %119 = tpu.concatenate %73, %88, %103, %118 in 2 : vector<8x17x8xf32>, vector<8x17x8xf32>, vector<8x17x8xf32>, vector<8x17x8xf32> -> vector<8x17x32xf32>
    %120 = vector.shape_cast %119 : vector<8x17x32xf32> to vector<136x32xf32>
    %121 = arith.truncf %120 : vector<136x32xf32> to vector<136x32xbf16>
    %c0_31 = arith.constant 0 : index
    %c0_32 = arith.constant 0 : index
    %122 = vector.load %arg6[%c0_31, %c0_32] : memref<32x32xbf16, #tpu.memory_space<vmem>>, vector<32x32xbf16>
    %cst_33 = arith.constant dense<0.000000e+00> : vector<136x32xf32>
    %123 = tpu.matmul %121, %122, %cst_33 {dimension_numbers = #tpu.dot_dimension_numbers<[1], [0], [0], [1], [0, 0, 1, 1], [], []>} : vector<136x32xbf16>, vector<32x32xbf16>, vector<136x32xf32> -> vector<136x32xf32>
    %c0_34 = arith.constant 0 : index
    %c0_35 = arith.constant 0 : index
    %124 = vector.load %arg7[%c0_34, %c0_35] : memref<1x32xf32, #tpu.memory_space<vmem>>, vector<1x32xf32>
    %125 = vector.broadcast %124 : vector<1x32xf32> to vector<136x32xf32>
    %126 = arith.addf %123, %125 : vector<136x32xf32>
    %127 = vector.shape_cast %126 : vector<136x32xf32> to vector<8x17x32xf32>
    %128 = vector.extract_strided_slice %127 {offsets = [0, 0, 0], sizes = [1, 17, 32], strides = [1, 1, 1]} : vector<8x17x32xf32> to vector<1x17x32xf32>
    %129 = vector.shape_cast %128 : vector<1x17x32xf32> to vector<17x32xf32>
    %130 = vector.extract_strided_slice %127 {offsets = [1, 0, 0], sizes = [1, 17, 32], strides = [1, 1, 1]} : vector<8x17x32xf32> to vector<1x17x32xf32>
    %131 = vector.shape_cast %130 : vector<1x17x32xf32> to vector<17x32xf32>
    %132 = vector.extract_strided_slice %127 {offsets = [2, 0, 0], sizes = [1, 17, 32], strides = [1, 1, 1]} : vector<8x17x32xf32> to vector<1x17x32xf32>
    %133 = vector.shape_cast %132 : vector<1x17x32xf32> to vector<17x32xf32>
    %134 = vector.extract_strided_slice %127 {offsets = [3, 0, 0], sizes = [1, 17, 32], strides = [1, 1, 1]} : vector<8x17x32xf32> to vector<1x17x32xf32>
    %135 = vector.shape_cast %134 : vector<1x17x32xf32> to vector<17x32xf32>
    %136 = vector.extract_strided_slice %127 {offsets = [4, 0, 0], sizes = [1, 17, 32], strides = [1, 1, 1]} : vector<8x17x32xf32> to vector<1x17x32xf32>
    %137 = vector.shape_cast %136 : vector<1x17x32xf32> to vector<17x32xf32>
    %138 = vector.extract_strided_slice %127 {offsets = [5, 0, 0], sizes = [1, 17, 32], strides = [1, 1, 1]} : vector<8x17x32xf32> to vector<1x17x32xf32>
    %139 = vector.shape_cast %138 : vector<1x17x32xf32> to vector<17x32xf32>
    %140 = vector.extract_strided_slice %127 {offsets = [6, 0, 0], sizes = [1, 17, 32], strides = [1, 1, 1]} : vector<8x17x32xf32> to vector<1x17x32xf32>
    %141 = vector.shape_cast %140 : vector<1x17x32xf32> to vector<17x32xf32>
    %142 = vector.extract_strided_slice %127 {offsets = [7, 0, 0], sizes = [1, 17, 32], strides = [1, 1, 1]} : vector<8x17x32xf32> to vector<1x17x32xf32>
    %143 = vector.shape_cast %142 : vector<1x17x32xf32> to vector<17x32xf32>
    %144 = vector.shape_cast %129 : vector<17x32xf32> to vector<17x1x32xf32>
    %145 = vector.shape_cast %131 : vector<17x32xf32> to vector<17x1x32xf32>
    %146 = vector.shape_cast %133 : vector<17x32xf32> to vector<17x1x32xf32>
    %147 = vector.shape_cast %135 : vector<17x32xf32> to vector<17x1x32xf32>
    %148 = vector.shape_cast %137 : vector<17x32xf32> to vector<17x1x32xf32>
    %149 = vector.shape_cast %139 : vector<17x32xf32> to vector<17x1x32xf32>
    %150 = vector.shape_cast %141 : vector<17x32xf32> to vector<17x1x32xf32>
    %151 = vector.shape_cast %143 : vector<17x32xf32> to vector<17x1x32xf32>
    %152 = tpu.concatenate %144, %145, %146, %147, %148, %149, %150, %151 in 1 : vector<17x1x32xf32>, vector<17x1x32xf32>, vector<17x1x32xf32>, vector<17x1x32xf32>, vector<17x1x32xf32>, vector<17x1x32xf32>, vector<17x1x32xf32>, vector<17x1x32xf32> -> vector<17x8x32xf32>
    %153 = arith.addf %0, %152 : vector<17x8x32xf32>
    %c0_36 = arith.constant 0 : index
    %c0_37 = arith.constant 0 : index
    %c0_38 = arith.constant 0 : index
    %154 = vector.load %arg8[%c0_36, %c0_37, %c0_38] : memref<17x8x32xf32, #tpu.memory_space<vmem>>, vector<17x8x32xf32>
    tpu.vector_store %arg8[%c0_36, %c0_37, %c0_38], %153 {strides = array<i32>} : memref<17x8x32xf32, #tpu.memory_space<vmem>>, vector<17x8x32xf32>,
    return
  }
  func.func @transform_0(%arg0: i32) -> (i32, i32, i32) {
    %c0_i32 = arith.constant 0 : i32
    %c0_i32_0 = arith.constant 0 : i32
    %c0_i32_1 = arith.constant 0 : i32
    return %c0_i32, %arg0, %c0_i32_0 : i32, i32, i32
  }
  func.func @transform_1(%arg0: i32) -> (i32, i32) {
    %c0_i32 = arith.constant 0 : i32
    %c0_i32_0 = arith.constant 0 : i32
    %c0_i32_1 = arith.constant 0 : i32
    return %c0_i32, %c0_i32_0 : i32, i32
  }
  func.func @transform_2(%arg0: i32) -> (i32, i32) {
    %c0_i32 = arith.constant 0 : i32
    %c0_i32_0 = arith.constant 0 : i32
    %c0_i32_1 = arith.constant 0 : i32
    return %c0_i32, %c0_i32_0 : i32, i32
  }
  func.func @transform_3(%arg0: i32) -> (i32, i32) {
    %c0_i32 = arith.constant 0 : i32
    %c0_i32_0 = arith.constant 0 : i32
    %c0_i32_1 = arith.constant 0 : i32
    return %c0_i32, %c0_i32_0 : i32, i32
  }
  func.func @transform_4(%arg0: i32) -> (i32, i32) {
    %c0_i32 = arith.constant 0 : i32
    %c0_i32_0 = arith.constant 0 : i32
    %c0_i32_1 = arith.constant 0 : i32
    return %c0_i32, %c0_i32_0 : i32, i32
  }
  func.func @transform_5(%arg0: i32) -> (i32, i32) {
    %c0_i32 = arith.constant 0 : i32
    %c0_i32_0 = arith.constant 0 : i32
    %c0_i32_1 = arith.constant 0 : i32
    return %c0_i32, %c0_i32_0 : i32, i32
  }
  func.func @transform_6(%arg0: i32) -> (i32, i32) {
    %c0_i32 = arith.constant 0 : i32
    %c0_i32_0 = arith.constant 0 : i32
    %c0_i32_1 = arith.constant 0 : i32
    return %c0_i32, %c0_i32_0 : i32, i32
  }
  func.func @transform_7(%arg0: i32) -> (i32, i32, i32) {
    %c0_i32 = arith.constant 0 : i32
    %c0_i32_0 = arith.constant 0 : i32
    %c0_i32_1 = arith.constant 0 : i32
    return %c0_i32, %arg0, %c0_i32_0 : i32, i32, i32
  }
}

module attributes {stable_mosaic.version = 11 : i64} {
  func.func @lmhra_mlp_kernel(%arg0: i32, %arg1: memref<136x32xf32, #tpu.memory_space<vmem>>, %arg2: memref<32x128xbf16, #tpu.memory_space<vmem>>, %arg3: memref<1x128xf32, #tpu.memory_space<vmem>>, %arg4: memref<3x128xf32, #tpu.memory_space<vmem>>, %arg5: memref<1x128xf32, #tpu.memory_space<vmem>>, %arg6: memref<128x32xbf16, #tpu.memory_space<vmem>>, %arg7: memref<1x32xf32, #tpu.memory_space<vmem>>, %arg8: memref<1x32xf32, #tpu.memory_space<vmem>>, %arg9: memref<1x32xf32, #tpu.memory_space<vmem>>, %arg10: memref<32x128xbf16, #tpu.memory_space<vmem>>, %arg11: memref<1x128xf32, #tpu.memory_space<vmem>>, %arg12: memref<128x32xbf16, #tpu.memory_space<vmem>>, %arg13: memref<1x32xf32, #tpu.memory_space<vmem>>, %arg14: memref<136x32xf32, #tpu.memory_space<vmem>>) attributes {dimension_semantics = [#tpu.dimension_semantics<parallel>], iteration_bounds = array<i64: 1>, scalar_prefetch = 0 : i64, scratch_operands = 0 : i64, tpu.core_type = #tpu.core_type<tc>, window_params = [{transform_indices = @transform_0, window_bounds = array<i64: 136, 32>}, {pipeline_mode = #tpu.pipeline_mode<synchronous>, transform_indices = @transform_1, window_bounds = array<i64: 32, 128>}, {pipeline_mode = #tpu.pipeline_mode<synchronous>, transform_indices = @transform_2, window_bounds = array<i64: 1, 128>}, {pipeline_mode = #tpu.pipeline_mode<synchronous>, transform_indices = @transform_3, window_bounds = array<i64: 3, 128>}, {pipeline_mode = #tpu.pipeline_mode<synchronous>, transform_indices = @transform_4, window_bounds = array<i64: 1, 128>}, {pipeline_mode = #tpu.pipeline_mode<synchronous>, transform_indices = @transform_5, window_bounds = array<i64: 128, 32>}, {pipeline_mode = #tpu.pipeline_mode<synchronous>, transform_indices = @transform_6, window_bounds = array<i64: 1, 32>}, {pipeline_mode = #tpu.pipeline_mode<synchronous>, transform_indices = @transform_7, window_bounds = array<i64: 1, 32>}, {pipeline_mode = #tpu.pipeline_mode<synchronous>, transform_indices = @transform_8, window_bounds = array<i64: 1, 32>}, {pipeline_mode = #tpu.pipeline_mode<synchronous>, transform_indices = @transform_9, window_bounds = array<i64: 32, 128>}, {pipeline_mode = #tpu.pipeline_mode<synchronous>, transform_indices = @transform_10, window_bounds = array<i64: 1, 128>}, {pipeline_mode = #tpu.pipeline_mode<synchronous>, transform_indices = @transform_11, window_bounds = array<i64: 128, 32>}, {pipeline_mode = #tpu.pipeline_mode<synchronous>, transform_indices = @transform_12, window_bounds = array<i64: 1, 32>}, {transform_indices = @transform_13, window_bounds = array<i64: 136, 32>}]} {
    %c0 = arith.constant 0 : index
    %c0_0 = arith.constant 0 : index
    %0 = vector.load %arg1[%c0, %c0_0] : memref<136x32xf32, #tpu.memory_space<vmem>>, vector<136x32xf32>
    %c136_i32 = arith.constant 136 : i32
    %1 = arith.muli %arg0, %c136_i32 : i32
    %2 = tpu.iota {dimensions = array<i32: 0>} : vector<136x1xi32>
    %3 = vector.broadcast %1 : i32 to vector<136x1xi32>
    %4 = arith.addi %3, %2 : vector<136x1xi32>
    %c4_i32 = arith.constant 4 : i32
    %c0_i32 = arith.constant 0 : i32
    %5 = arith.cmpi eq, %c4_i32, %c0_i32 : i32
    %c1_i32 = arith.constant 1 : i32
    %6 = arith.select %5, %c1_i32, %c4_i32 : i32
    %7 = vector.broadcast %6 : i32 to vector<136x1xi32>
    %8 = arith.remsi %4, %7 : vector<136x1xi32>
    %c0_i32_1 = arith.constant 0 : i32
    %9 = vector.broadcast %c0_i32_1 : i32 to vector<136x1xi32>
    %10 = arith.cmpi ne, %8, %9 : vector<136x1xi32>
    %c0_i32_2 = arith.constant 0 : i32
    %11 = vector.broadcast %c0_i32_2 : i32 to vector<136x1xi32>
    %12 = arith.cmpi slt, %8, %11 : vector<136x1xi32>
    %c0_i32_3 = arith.constant 0 : i32
    %13 = arith.cmpi slt, %6, %c0_i32_3 : i32
    %14 = vector.broadcast %13 : i1 to vector<136x1xi1>
    %15 = vector.broadcast %14 : vector<136x1xi1> to vector<136x1xi1>
    %16 = arith.xori %12, %15 : vector<136x1xi1>
    %17 = arith.andi %16, %10 : vector<136x1xi1>
    %18 = vector.broadcast %6 : i32 to vector<136x1xi32>
    %19 = arith.addi %8, %18 : vector<136x1xi32>
    %20 = arith.select %17, %19, %8 : vector<136x1xi1>, vector<136x1xi32>
    %21 = arith.truncf %0 : vector<136x32xf32> to vector<136x32xbf16>
    %c0_4 = arith.constant 0 : index
    %c0_5 = arith.constant 0 : index
    %22 = vector.load %arg2[%c0_4, %c0_5] : memref<32x128xbf16, #tpu.memory_space<vmem>>, vector<32x128xbf16>
    %cst = arith.constant dense<0.000000e+00> : vector<136x128xf32>
    %23 = tpu.matmul %21, %22, %cst {dimension_numbers = #tpu.dot_dimension_numbers<[1], [0], [0], [1], [0, 0, 1, 1], [], []>} : vector<136x32xbf16>, vector<32x128xbf16>, vector<136x128xf32> -> vector<136x128xf32>
    %c0_6 = arith.constant 0 : index
    %c0_7 = arith.constant 0 : index
    %24 = vector.load %arg3[%c0_6, %c0_7] : memref<1x128xf32, #tpu.memory_space<vmem>>, vector<1x128xf32>
    %25 = vector.broadcast %24 : vector<1x128xf32> to vector<136x128xf32>
    %26 = arith.addf %23, %25 : vector<136x128xf32>
    %c0_8 = arith.constant 0 : index
    %c0_9 = arith.constant 0 : index
    %27 = vector.load %arg4[%c0_8, %c0_9] : memref<3x128xf32, #tpu.memory_space<vmem>>, vector<3x128xf32>
    %c0_10 = arith.constant 0 : index
    %c0_11 = arith.constant 0 : index
    %28 = vector.load %arg5[%c0_10, %c0_11] : memref<1x128xf32, #tpu.memory_space<vmem>>, vector<1x128xf32>
    %cst_12 = arith.constant 0.000000e+00 : f32
    %29 = vector.broadcast %cst_12 : f32 to vector<1x128xf32>
    %30 = vector.extract_strided_slice %26 {offsets = [0, 0], sizes = [135, 128], strides = [1, 1]} : vector<136x128xf32> to vector<135x128xf32>
    %31 = tpu.concatenate %29, %30 in 0 : vector<1x128xf32>, vector<135x128xf32> -> vector<136x128xf32>
    %32 = vector.extract_strided_slice %26 {offsets = [1, 0], sizes = [135, 128], strides = [1, 1]} : vector<136x128xf32> to vector<135x128xf32>
    %33 = tpu.concatenate %32, %29 in 0 : vector<135x128xf32>, vector<1x128xf32> -> vector<136x128xf32>
    %c0_i32_13 = arith.constant 0 : i32
    %34 = vector.broadcast %c0_i32_13 : i32 to vector<136x1xi32>
    %35 = arith.cmpi eq, %20, %34 : vector<136x1xi32>
    %cst_14 = arith.constant 0.000000e+00 : f32
    %36 = vector.shape_cast %35 : vector<136x1xi1> to vector<136x1xi1>
    %37 = vector.broadcast %36 : vector<136x1xi1> to vector<136x128xi1>
    %38 = vector.broadcast %cst_14 : f32 to vector<136x128xf32>
    %39 = arith.select %37, %38, %31 : vector<136x128xi1>, vector<136x128xf32>
    %c3_i32 = arith.constant 3 : i32
    %40 = vector.broadcast %c3_i32 : i32 to vector<136x1xi32>
    %41 = arith.cmpi eq, %20, %40 : vector<136x1xi32>
    %cst_15 = arith.constant 0.000000e+00 : f32
    %42 = vector.shape_cast %41 : vector<136x1xi1> to vector<136x1xi1>
    %43 = vector.broadcast %42 : vector<136x1xi1> to vector<136x128xi1>
    %44 = vector.broadcast %cst_15 : f32 to vector<136x128xf32>
    %45 = arith.select %43, %44, %33 : vector<136x128xi1>, vector<136x128xf32>
    %46 = vector.extract_strided_slice %27 {offsets = [0, 0], sizes = [1, 128], strides = [1, 1]} : vector<3x128xf32> to vector<1x128xf32>
    %47 = vector.broadcast %46 : vector<1x128xf32> to vector<136x128xf32>
    %48 = arith.mulf %39, %47 : vector<136x128xf32>
    %49 = vector.extract_strided_slice %27 {offsets = [1, 0], sizes = [1, 128], strides = [1, 1]} : vector<3x128xf32> to vector<1x128xf32>
    %50 = vector.broadcast %49 : vector<1x128xf32> to vector<136x128xf32>
    %51 = arith.mulf %26, %50 : vector<136x128xf32>
    %52 = arith.addf %48, %51 : vector<136x128xf32>
    %53 = vector.extract_strided_slice %27 {offsets = [2, 0], sizes = [1, 128], strides = [1, 1]} : vector<3x128xf32> to vector<1x128xf32>
    %54 = vector.broadcast %53 : vector<1x128xf32> to vector<136x128xf32>
    %55 = arith.mulf %45, %54 : vector<136x128xf32>
    %56 = arith.addf %52, %55 : vector<136x128xf32>
    %57 = vector.broadcast %28 : vector<1x128xf32> to vector<136x128xf32>
    %58 = arith.addf %56, %57 : vector<136x128xf32>
    %59 = arith.truncf %58 : vector<136x128xf32> to vector<136x128xbf16>
    %c0_16 = arith.constant 0 : index
    %c0_17 = arith.constant 0 : index
    %60 = vector.load %arg6[%c0_16, %c0_17] : memref<128x32xbf16, #tpu.memory_space<vmem>>, vector<128x32xbf16>
    %cst_18 = arith.constant dense<0.000000e+00> : vector<136x32xf32>
    %61 = tpu.matmul %59, %60, %cst_18 {dimension_numbers = #tpu.dot_dimension_numbers<[1], [0], [0], [1], [0, 0, 1, 1], [], []>} : vector<136x128xbf16>, vector<128x32xbf16>, vector<136x32xf32> -> vector<136x32xf32>
    %c0_19 = arith.constant 0 : index
    %c0_20 = arith.constant 0 : index
    %62 = vector.load %arg7[%c0_19, %c0_20] : memref<1x32xf32, #tpu.memory_space<vmem>>, vector<1x32xf32>
    %63 = vector.broadcast %62 : vector<1x32xf32> to vector<136x32xf32>
    %64 = arith.addf %61, %63 : vector<136x32xf32>
    %c8_i32 = arith.constant 8 : i32
    %65 = vector.broadcast %c8_i32 : i32 to vector<136x1xi32>
    %66 = arith.cmpi sge, %4, %65 : vector<136x1xi32>
    %cst_21 = arith.constant 0.000000e+00 : f32
    %67 = vector.shape_cast %66 : vector<136x1xi1> to vector<136x1xi1>
    %68 = vector.broadcast %67 : vector<136x1xi1> to vector<136x32xi1>
    %69 = vector.broadcast %cst_21 : f32 to vector<136x32xf32>
    %70 = arith.select %68, %64, %69 : vector<136x32xi1>, vector<136x32xf32>
    %71 = arith.addf %0, %70 : vector<136x32xf32>
    %cst_22 = arith.constant dense<0.000000e+00> : vector<136xf32>
    %72 = vector.multi_reduction <add>, %71, %cst_22 [1] : vector<136x32xf32> to vector<136xf32>
    %73 = vector.shape_cast %72 : vector<136xf32> to vector<136x1xf32>
    %cst_23 = arith.constant 3.200000e+01 : f32
    %74 = vector.broadcast %cst_23 : f32 to vector<136x1xf32>
    %75 = arith.divf %73, %74 : vector<136x1xf32>
    %76 = vector.broadcast %75 : vector<136x1xf32> to vector<136x32xf32>
    %77 = arith.subf %71, %76 : vector<136x32xf32>
    %78 = arith.mulf %77, %77 : vector<136x32xf32>
    %cst_24 = arith.constant dense<0.000000e+00> : vector<136xf32>
    %79 = vector.multi_reduction <add>, %78, %cst_24 [1] : vector<136x32xf32> to vector<136xf32>
    %80 = vector.shape_cast %79 : vector<136xf32> to vector<136x1xf32>
    %cst_25 = arith.constant 3.200000e+01 : f32
    %81 = vector.broadcast %cst_25 : f32 to vector<136x1xf32>
    %82 = arith.divf %80, %81 : vector<136x1xf32>
    %cst_26 = arith.constant 9.99999974E-6 : f32
    %83 = vector.broadcast %cst_26 : f32 to vector<136x1xf32>
    %84 = arith.addf %82, %83 : vector<136x1xf32>
    %85 = math.rsqrt %84 : vector<136x1xf32>
    %86 = vector.broadcast %85 : vector<136x1xf32> to vector<136x32xf32>
    %87 = arith.mulf %77, %86 : vector<136x32xf32>
    %c0_27 = arith.constant 0 : index
    %c0_28 = arith.constant 0 : index
    %88 = vector.load %arg8[%c0_27, %c0_28] : memref<1x32xf32, #tpu.memory_space<vmem>>, vector<1x32xf32>
    %89 = vector.broadcast %88 : vector<1x32xf32> to vector<136x32xf32>
    %90 = arith.mulf %87, %89 : vector<136x32xf32>
    %c0_29 = arith.constant 0 : index
    %c0_30 = arith.constant 0 : index
    %91 = vector.load %arg9[%c0_29, %c0_30] : memref<1x32xf32, #tpu.memory_space<vmem>>, vector<1x32xf32>
    %92 = vector.broadcast %91 : vector<1x32xf32> to vector<136x32xf32>
    %93 = arith.addf %90, %92 : vector<136x32xf32>
    %94 = arith.truncf %93 : vector<136x32xf32> to vector<136x32xbf16>
    %c0_31 = arith.constant 0 : index
    %c0_32 = arith.constant 0 : index
    %95 = vector.load %arg10[%c0_31, %c0_32] : memref<32x128xbf16, #tpu.memory_space<vmem>>, vector<32x128xbf16>
    %cst_33 = arith.constant dense<0.000000e+00> : vector<136x128xf32>
    %96 = tpu.matmul %94, %95, %cst_33 {dimension_numbers = #tpu.dot_dimension_numbers<[1], [0], [0], [1], [0, 0, 1, 1], [], []>} : vector<136x32xbf16>, vector<32x128xbf16>, vector<136x128xf32> -> vector<136x128xf32>
    %c0_34 = arith.constant 0 : index
    %c0_35 = arith.constant 0 : index
    %97 = vector.load %arg11[%c0_34, %c0_35] : memref<1x128xf32, #tpu.memory_space<vmem>>, vector<1x128xf32>
    %98 = vector.broadcast %97 : vector<1x128xf32> to vector<136x128xf32>
    %99 = arith.addf %96, %98 : vector<136x128xf32>
    %cst_36 = arith.constant 1.702000e+00 : f32
    %100 = vector.broadcast %cst_36 : f32 to vector<136x128xf32>
    %101 = arith.mulf %100, %99 : vector<136x128xf32>
    %102 = arith.negf %101 : vector<136x128xf32>
    %103 = math.exp %102 : vector<136x128xf32>
    %cst_37 = arith.constant 1.000000e+00 : f32
    %104 = vector.broadcast %cst_37 : f32 to vector<136x128xf32>
    %105 = arith.addf %104, %103 : vector<136x128xf32>
    %106 = arith.divf %104, %105 : vector<136x128xf32>
    %107 = arith.mulf %99, %106 : vector<136x128xf32>
    %108 = arith.truncf %107 : vector<136x128xf32> to vector<136x128xbf16>
    %c0_38 = arith.constant 0 : index
    %c0_39 = arith.constant 0 : index
    %109 = vector.load %arg12[%c0_38, %c0_39] : memref<128x32xbf16, #tpu.memory_space<vmem>>, vector<128x32xbf16>
    %cst_40 = arith.constant dense<0.000000e+00> : vector<136x32xf32>
    %110 = tpu.matmul %108, %109, %cst_40 {dimension_numbers = #tpu.dot_dimension_numbers<[1], [0], [0], [1], [0, 0, 1, 1], [], []>} : vector<136x128xbf16>, vector<128x32xbf16>, vector<136x32xf32> -> vector<136x32xf32>
    %c0_41 = arith.constant 0 : index
    %c0_42 = arith.constant 0 : index
    %111 = vector.load %arg13[%c0_41, %c0_42] : memref<1x32xf32, #tpu.memory_space<vmem>>, vector<1x32xf32>
    %112 = vector.broadcast %111 : vector<1x32xf32> to vector<136x32xf32>
    %113 = arith.addf %110, %112 : vector<136x32xf32>
    %114 = arith.addf %71, %113 : vector<136x32xf32>
    %c0_43 = arith.constant 0 : index
    %c0_44 = arith.constant 0 : index
    %115 = vector.load %arg14[%c0_43, %c0_44] : memref<136x32xf32, #tpu.memory_space<vmem>>, vector<136x32xf32>
    tpu.vector_store %arg14[%c0_43, %c0_44], %114 {strides = array<i32>} : memref<136x32xf32, #tpu.memory_space<vmem>>, vector<136x32xf32>,
    return
  }
  func.func @transform_0(%arg0: i32) -> (i32, i32) {
    %c0_i32 = arith.constant 0 : i32
    %c0_i32_0 = arith.constant 0 : i32
    return %arg0, %c0_i32 : i32, i32
  }
  func.func @transform_1(%arg0: i32) -> (i32, i32) {
    %c0_i32 = arith.constant 0 : i32
    %c0_i32_0 = arith.constant 0 : i32
    %c0_i32_1 = arith.constant 0 : i32
    return %c0_i32, %c0_i32_0 : i32, i32
  }
  func.func @transform_2(%arg0: i32) -> (i32, i32) {
    %c0_i32 = arith.constant 0 : i32
    %c0_i32_0 = arith.constant 0 : i32
    %c0_i32_1 = arith.constant 0 : i32
    return %c0_i32, %c0_i32_0 : i32, i32
  }
  func.func @transform_3(%arg0: i32) -> (i32, i32) {
    %c0_i32 = arith.constant 0 : i32
    %c0_i32_0 = arith.constant 0 : i32
    %c0_i32_1 = arith.constant 0 : i32
    return %c0_i32, %c0_i32_0 : i32, i32
  }
  func.func @transform_4(%arg0: i32) -> (i32, i32) {
    %c0_i32 = arith.constant 0 : i32
    %c0_i32_0 = arith.constant 0 : i32
    %c0_i32_1 = arith.constant 0 : i32
    return %c0_i32, %c0_i32_0 : i32, i32
  }
  func.func @transform_5(%arg0: i32) -> (i32, i32) {
    %c0_i32 = arith.constant 0 : i32
    %c0_i32_0 = arith.constant 0 : i32
    %c0_i32_1 = arith.constant 0 : i32
    return %c0_i32, %c0_i32_0 : i32, i32
  }
  func.func @transform_6(%arg0: i32) -> (i32, i32) {
    %c0_i32 = arith.constant 0 : i32
    %c0_i32_0 = arith.constant 0 : i32
    %c0_i32_1 = arith.constant 0 : i32
    return %c0_i32, %c0_i32_0 : i32, i32
  }
  func.func @transform_7(%arg0: i32) -> (i32, i32) {
    %c0_i32 = arith.constant 0 : i32
    %c0_i32_0 = arith.constant 0 : i32
    %c0_i32_1 = arith.constant 0 : i32
    return %c0_i32, %c0_i32_0 : i32, i32
  }
  func.func @transform_8(%arg0: i32) -> (i32, i32) {
    %c0_i32 = arith.constant 0 : i32
    %c0_i32_0 = arith.constant 0 : i32
    %c0_i32_1 = arith.constant 0 : i32
    return %c0_i32, %c0_i32_0 : i32, i32
  }
  func.func @transform_9(%arg0: i32) -> (i32, i32) {
    %c0_i32 = arith.constant 0 : i32
    %c0_i32_0 = arith.constant 0 : i32
    %c0_i32_1 = arith.constant 0 : i32
    return %c0_i32, %c0_i32_0 : i32, i32
  }
  func.func @transform_10(%arg0: i32) -> (i32, i32) {
    %c0_i32 = arith.constant 0 : i32
    %c0_i32_0 = arith.constant 0 : i32
    %c0_i32_1 = arith.constant 0 : i32
    return %c0_i32, %c0_i32_0 : i32, i32
  }
  func.func @transform_11(%arg0: i32) -> (i32, i32) {
    %c0_i32 = arith.constant 0 : i32
    %c0_i32_0 = arith.constant 0 : i32
    %c0_i32_1 = arith.constant 0 : i32
    return %c0_i32, %c0_i32_0 : i32, i32
  }
  func.func @transform_12(%arg0: i32) -> (i32, i32) {
    %c0_i32 = arith.constant 0 : i32
    %c0_i32_0 = arith.constant 0 : i32
    %c0_i32_1 = arith.constant 0 : i32
    return %c0_i32, %c0_i32_0 : i32, i32
  }
  func.func @transform_13(%arg0: i32) -> (i32, i32) {
    %c0_i32 = arith.constant 0 : i32
    %c0_i32_0 = arith.constant 0 : i32
    return %arg0, %c0_i32 : i32, i32
  }
}

</mosaic_0001>

<llo_original>
// kernel: residual_attention_block.3
$region0: #{residual_attention_block.3}
  #allocation0 [shape = 'u32[]', space=smem, size = 0x4, offset = 0x4, fixed_abs, tag = 'smem constant byte address 0x4 - core index']
  #allocation1 [shape = 'u32[72,128]{1,0:T(1,128)}', space=vmem, size = 0x9000, scoped, tag = 'internal scratch']
  %s0 = inlined_call_operand.vmem [shape: f32[136,32], index: 0, kind: input, shape index: {}]
  %s1 = inlined_call_operand.vmem [shape: bf16[32,128], index: 1, kind: input, shape index: {}]
  %s2 = inlined_call_operand.vmem [shape: f32[1,128], index: 2, kind: input, shape index: {}]
  %s3 = inlined_call_operand.vmem [shape: f32[3,128], index: 3, kind: input, shape index: {}]
  %s4 = inlined_call_operand.vmem [shape: f32[1,128], index: 4, kind: input, shape index: {}]
  %s5 = inlined_call_operand.vmem [shape: bf16[128,32], index: 5, kind: input, shape index: {}]
  %s6 = inlined_call_operand.vmem [shape: f32[1,32], index: 6, kind: input, shape index: {}]
  %s7 = inlined_call_operand.vmem [shape: f32[136,32], index: 7, kind: output, shape index: {}]
  %s8 = sld [smem:[#allocation0]]
  $region38: #{residual_attention_block.3} parent=0
    _
  %s10 = ssub.s32 1, %s8
  %s11 = scalar_select 0, %s10, %s8
  // Predicated region
  $region2: #{residual_attention_block.3} parent=0 // pred_check
    _
  $region3: #{residual_attention_block.3} parent=0 // pred_check_branch
    %13 = sbr.rel (0) target = $region5
  $region4: #{residual_attention_block.3} parent=0 // pred_region
    _
  $region5: #{residual_attention_block.3} parent=0 // pred_fallthru
    _
  // Predicated region
  $region6: #{residual_attention_block.3} parent=0 // pred_check
    _
  $region7: #{residual_attention_block.3} parent=0 // pred_check_branch
    %15 = sbr.rel (0) target = $region9
  $region8: #{residual_attention_block.3} parent=0 // pred_region
    _
  $region9: #{residual_attention_block.3} parent=0 // pred_fallthru
    _
  // Predicated region
  $region10: #{residual_attention_block.3} parent=0 // pred_check
    _
  $region11: #{residual_attention_block.3} parent=0 // pred_check_branch
    %17 = sbr.rel (0) target = $region13
  $region12: #{residual_attention_block.3} parent=0 // pred_region
    _
  $region13: #{residual_attention_block.3} parent=0 // pred_fallthru
    _
  // Predicated region
  $region14: #{residual_attention_block.3} parent=0 // pred_check
    _
  $region15: #{residual_attention_block.3} parent=0 // pred_check_branch
    %19 = sbr.rel (0) target = $region17
  $region16: #{residual_attention_block.3} parent=0 // pred_region
    _
  $region17: #{residual_attention_block.3} parent=0 // pred_fallthru
    _
  // Predicated region
  $region18: #{residual_attention_block.3} parent=0 // pred_check
    _
  $region19: #{residual_attention_block.3} parent=0 // pred_check_branch
    %21 = sbr.rel (0) target = $region21
  $region20: #{residual_attention_block.3} parent=0 // pred_region
    _
  $region21: #{residual_attention_block.3} parent=0 // pred_fallthru
    _
  // Predicated region
  $region22: #{residual_attention_block.3} parent=0 // pred_check
    _
  $region23: #{residual_attention_block.3} parent=0 // pred_check_branch
    %23 = sbr.rel (0) target = $region25
  $region24: #{residual_attention_block.3} parent=0 // pred_region
    _
  $region25: #{residual_attention_block.3} parent=0 // pred_fallthru
    _
  // Predicated region
  $region26: #{residual_attention_block.3} parent=0 // pred_check
    _
  $region27: #{residual_attention_block.3} parent=0 // pred_check_branch
    %25 = sbr.rel (0) target = $region29
  $region28: #{residual_attention_block.3} parent=0 // pred_region
    _
  $region29: #{residual_attention_block.3} parent=0 // pred_fallthru
    _
  %v27 = vld [vmem:[%s0] sm:$0xff]
  %v28 = vld [vmem:[%s0 + $0x8] sm:$0xff]
  %v29 = vld [vmem:[%s0 + $0x10] sm:$0xff]
  %v30 = vld [vmem:[%s0 + $0x18] sm:$0xff]
  %v31 = vld [vmem:[%s0 + $0x20] sm:$0xff]
  %v32 = vld [vmem:[%s0 + $0x28] sm:$0xff]
  %v33 = vld [vmem:[%s0 + $0x30] sm:$0xff]
  %v34 = vld [vmem:[%s0 + $0x38] sm:$0xff]
  %v35 = vld [vmem:[%s0 + $0x40] sm:$0xff]
  %v36 = vld [vmem:[%s0 + $0x48] sm:$0xff]
  %v37 = vld [vmem:[%s0 + $0x50] sm:$0xff]
  %v38 = vld [vmem:[%s0 + $0x58] sm:$0xff]
  %v39 = vld [vmem:[%s0 + $0x60] sm:$0xff]
  %v40 = vld [vmem:[%s0 + $0x68] sm:$0xff]
  %v41 = vld [vmem:[%s0 + $0x70] sm:$0xff]
  %v42 = vld [vmem:[%s0 + $0x78] sm:$0xff]
  %v43 = vld [vmem:[%s0 + $0x80] sm:$0xff]
  %s44 = smul.u32 0, 136
  %v45 = vlaneseq
  %v46 = vshrl.u32 %v45, 7
  %v47 = vadd.s32 %v46, 8
  %v48 = vadd.s32 %v46, 16
  %v49 = vadd.s32 %v46, 24
  %v50 = vadd.s32 %v46, 32
  %v51 = vadd.s32 %v46, 40
  %v52 = vadd.s32 %v46, 48
  %v53 = vadd.s32 %v46, 56
  %v54 = vadd.s32 %v46, 64
  %v55 = vadd.s32 %v46, 72
  %v56 = vadd.s32 %v46, 80
  %v57 = vadd.s32 %v46, 88
  %v58 = vadd.s32 %v46, 96
  %v59 = vadd.s32 %v46, 104
  %v60 = vadd.s32 %v46, 112
  %v61 = vadd.s32 %v46, 120
  %v62 = vadd.s32 %v46, 128
  %v63 = vstv %s44
  %v64 = vadd.s32 %v63, %v46
  %v65 = vadd.s32 %v63, %v47
  %v66 = vadd.s32 %v63, %v48
  %v67 = vadd.s32 %v63, %v49
  %v68 = vadd.s32 %v63, %v50
  %v69 = vadd.s32 %v63, %v51
  %v70 = vadd.s32 %v63, %v52
  %v71 = vadd.s32 %v63, %v53
  %v72 = vadd.s32 %v63, %v54
  %v73 = vadd.s32 %v63, %v55
  %v74 = vadd.s32 %v63, %v56
  %v75 = vadd.s32 %v63, %v57
  %v76 = vadd.s32 %v63, %v58
  %v77 = vadd.s32 %v63, %v59
  %v78 = vadd.s32 %v63, %v60
  %v79 = vadd.s32 %v63, %v61
  %v80 = vadd.s32 %v63, %v62
  %vm81 = vcmp.lt.s32.totalorder %v64, 0
  %v82 = vsub.s32 0, %v64
  %v83 = vsel %vm81, %v82, %v64
  %v84 = vshrl.u32 %v83, 2
  %v85 = vand.u32 %v83, 3
  %v86 = vsub.s32 0, %v85
  %v87 = vsel %vm81, %v86, %v85
  %vm88 = vcmp.lt.s32.totalorder %v65, 0
  %v89 = vsub.s32 0, %v65
  %v90 = vsel %vm88, %v89, %v65
  %v91 = vshrl.u32 %v90, 2
  %v92 = vand.u32 %v90, 3
  %v93 = vsub.s32 0, %v92
  %v94 = vsel %vm88, %v93, %v92
  %vm95 = vcmp.lt.s32.totalorder %v66, 0
  %v96 = vsub.s32 0, %v66
  %v97 = vsel %vm95, %v96, %v66
  %v98 = vshrl.u32 %v97, 2
  %v99 = vand.u32 %v97, 3
  %v100 = vsub.s32 0, %v99
  %v101 = vsel %vm95, %v100, %v99
  %vm102 = vcmp.lt.s32.totalorder %v67, 0
  %v103 = vsub.s32 0, %v67
  %v104 = vsel %vm102, %v103, %v67
  %v105 = vshrl.u32 %v104, 2
  %v106 = vand.u32 %v104, 3
  %v107 = vsub.s32 0, %v106
  %v108 = vsel %vm102, %v107, %v106
  %vm109 = vcmp.lt.s32.totalorder %v68, 0
  %v110 = vsub.s32 0, %v68
  %v111 = vsel %vm109, %v110, %v68
  %v112 = vshrl.u32 %v111, 2
  %v113 = vand.u32 %v111, 3
  %v114 = vsub.s32 0, %v113
  %v115 = vsel %vm109, %v114, %v113
  %vm116 = vcmp.lt.s32.totalorder %v69, 0
  %v117 = vsub.s32 0, %v69
  %v118 = vsel %vm116, %v117, %v69
  %v119 = vshrl.u32 %v118, 2
  %v120 = vand.u32 %v118, 3
  %v121 = vsub.s32 0, %v120
  %v122 = vsel %vm116, %v121, %v120
  %vm123 = vcmp.lt.s32.totalorder %v70, 0
  %v124 = vsub.s32 0, %v70
  %v125 = vsel %vm123, %v124, %v70
  %v126 = vshrl.u32 %v125, 2
  %v127 = vand.u32 %v125, 3
  %v128 = vsub.s32 0, %v127
  %v129 = vsel %vm123, %v128, %v127
  %vm130 = vcmp.lt.s32.totalorder %v71, 0
  %v131 = vsub.s32 0, %v71
  %v132 = vsel %vm130, %v131, %v71
  %v133 = vshrl.u32 %v132, 2
  %v134 = vand.u32 %v132, 3
  %v135 = vsub.s32 0, %v134
  %v136 = vsel %vm130, %v135, %v134
  %vm137 = vcmp.lt.s32.totalorder %v72, 0
  %v138 = vsub.s32 0, %v72
  %v139 = vsel %vm137, %v138, %v72
  %v140 = vshrl.u32 %v139, 2
  %v141 = vand.u32 %v139, 3
  %v142 = vsub.s32 0, %v141
  %v143 = vsel %vm137, %v142, %v141
  %vm144 = vcmp.lt.s32.totalorder %v73, 0
  %v145 = vsub.s32 0, %v73
  %v146 = vsel %vm144, %v145, %v73
  %v147 = vshrl.u32 %v146, 2
  %v148 = vand.u32 %v146, 3
  %v149 = vsub.s32 0, %v148
  %v150 = vsel %vm144, %v149, %v148
  %vm151 = vcmp.lt.s32.totalorder %v74, 0
  %v152 = vsub.s32 0, %v74
  %v153 = vsel %vm151, %v152, %v74
  %v154 = vshrl.u32 %v153, 2
  %v155 = vand.u32 %v153, 3
  %v156 = vsub.s32 0, %v155
  %v157 = vsel %vm151, %v156, %v155
  %vm158 = vcmp.lt.s32.totalorder %v75, 0
  %v159 = vsub.s32 0, %v75
  %v160 = vsel %vm158, %v159, %v75
  %v161 = vshrl.u32 %v160, 2
  %v162 = vand.u32 %v160, 3
  %v163 = vsub.s32 0, %v162
  %v164 = vsel %vm158, %v163, %v162
  %vm165 = vcmp.lt.s32.totalorder %v76, 0
  %v166 = vsub.s32 0, %v76
  %v167 = vsel %vm165, %v166, %v76
  %v168 = vshrl.u32 %v167, 2
  %v169 = vand.u32 %v167, 3
  %v170 = vsub.s32 0, %v169
  %v171 = vsel %vm165, %v170, %v169
  %vm172 = vcmp.lt.s32.totalorder %v77, 0
  %v173 = vsub.s32 0, %v77
  %v174 = vsel %vm172, %v173, %v77
  %v175 = vshrl.u32 %v174, 2
  %v176 = vand.u32 %v174, 3
  %v177 = vsub.s32 0, %v176
  %v178 = vsel %vm172, %v177, %v176
  %vm179 = vcmp.lt.s32.totalorder %v78, 0
  %v180 = vsub.s32 0, %v78
  %v181 = vsel %vm179, %v180, %v78
  %v182 = vshrl.u32 %v181, 2
  %v183 = vand.u32 %v181, 3
  %v184 = vsub.s32 0, %v183
  %v185 = vsel %vm179, %v184, %v183
  %vm186 = vcmp.lt.s32.totalorder %v79, 0
  %v187 = vsub.s32 0, %v79
  %v188 = vsel %vm186, %v187, %v79
  %v189 = vshrl.u32 %v188, 2
  %v190 = vand.u32 %v188, 3
  %v191 = vsub.s32 0, %v190
  %v192 = vsel %vm186, %v191, %v190
  %vm193 = vcmp.lt.s32.totalorder %v80, 0
  %v194 = vsub.s32 0, %v80
  %v195 = vsel %vm193, %v194, %v80
  %v196 = vshrl.u32 %v195, 2
  %v197 = vand.u32 %v195, 3
  %v198 = vsub.s32 0, %v197
  %v199 = vsel %vm193, %v198, %v197
  %vm200 = vcmp.ne.s32.totalorder %v87, 0
  %vm201 = vcmp.ne.s32.totalorder %v94, 0
  %vm202 = vcmp.ne.s32.totalorder %v101, 0
  %vm203 = vcmp.ne.s32.totalorder %v108, 0
  %vm204 = vcmp.ne.s32.totalorder %v115, 0
  %vm205 = vcmp.ne.s32.totalorder %v122, 0
  %vm206 = vcmp.ne.s32.totalorder %v129, 0
  %vm207 = vcmp.ne.s32.totalorder %v136, 0
  %vm208 = vcmp.ne.s32.totalorder %v143, 0
  %vm209 = vcmp.ne.s32.totalorder %v150, 0
  %vm210 = vcmp.ne.s32.totalorder %v157, 0
  %vm211 = vcmp.ne.s32.totalorder %v164, 0
  %vm212 = vcmp.ne.s32.totalorder %v171, 0
  %vm213 = vcmp.ne.s32.totalorder %v178, 0
  %vm214 = vcmp.ne.s32.totalorder %v185, 0
  %vm215 = vcmp.ne.s32.totalorder %v192, 0
  %vm216 = vcmp.ne.s32.totalorder %v199, 0
  %vm217 = vcmp.lt.s32.totalorder %v87, 0
  %vm218 = vcmp.lt.s32.totalorder %v94, 0
  %vm219 = vcmp.lt.s32.totalorder %v101, 0
  %vm220 = vcmp.lt.s32.totalorder %v108, 0
  %vm221 = vcmp.lt.s32.totalorder %v115, 0
  %vm222 = vcmp.lt.s32.totalorder %v122, 0
  %vm223 = vcmp.lt.s32.totalorder %v129, 0
  %vm224 = vcmp.lt.s32.totalorder %v136, 0
  %vm225 = vcmp.lt.s32.totalorder %v143, 0
  %vm226 = vcmp.lt.s32.totalorder %v150, 0
  %vm227 = vcmp.lt.s32.totalorder %v157, 0
  %vm228 = vcmp.lt.s32.totalorder %v164, 0
  %vm229 = vcmp.lt.s32.totalorder %v171, 0
  %vm230 = vcmp.lt.s32.totalorder %v178, 0
  %vm231 = vcmp.lt.s32.totalorder %v185, 0
  %vm232 = vcmp.lt.s32.totalorder %v192, 0
  %vm233 = vcmp.lt.s32.totalorder %v199, 0
  %vm234 = vmand %vm217, %vm200
  %vm235 = vmand %vm218, %vm201
  %vm236 = vmand %vm219, %vm202
  %vm237 = vmand %vm220, %vm203
  %vm238 = vmand %vm221, %vm204
  %vm239 = vmand %vm222, %vm205
  %vm240 = vmand %vm223, %vm206
  %vm241 = vmand %vm224, %vm207
  %vm242 = vmand %vm225, %vm208
  %vm243 = vmand %vm226, %vm209
  %vm244 = vmand %vm227, %vm210
  %vm245 = vmand %vm228, %vm211
  %vm246 = vmand %vm229, %vm212
  %vm247 = vmand %vm230, %vm213
  %vm248 = vmand %vm231, %vm214
  %vm249 = vmand %vm232, %vm215
  %vm250 = vmand %vm233, %vm216
  %v251 = vadd.s32 %v87, 4
  %v252 = vadd.s32 %v94, 4
  %v253 = vadd.s32 %v101, 4
  %v254 = vadd.s32 %v108, 4
  %v255 = vadd.s32 %v115, 4
  %v256 = vadd.s32 %v122, 4
  %v257 = vadd.s32 %v129, 4
  %v258 = vadd.s32 %v136, 4
  %v259 = vadd.s32 %v143, 4
  %v260 = vadd.s32 %v150, 4
  %v261 = vadd.s32 %v157, 4
  %v262 = vadd.s32 %v164, 4
  %v263 = vadd.s32 %v171, 4
  %v264 = vadd.s32 %v178, 4
  %v265 = vadd.s32 %v185, 4
  %v266 = vadd.s32 %v192, 4
  %v267 = vadd.s32 %v199, 4
  %v268 = vsel %vm234, %v251, %v87
  %v269 = vsel %vm235, %v252, %v94
  %v270 = vsel %vm236, %v253, %v101
  %v271 = vsel %vm237, %v254, %v108
  %v272 = vsel %vm238, %v255, %v115
  %v273 = vsel %vm239, %v256, %v122
  %v274 = vsel %vm240, %v257, %v129
  %v275 = vsel %vm241, %v258, %v136
  %v276 = vsel %vm242, %v259, %v143
  %v277 = vsel %vm243, %v260, %v150
  %v278 = vsel %vm244, %v261, %v157
  %v279 = vsel %vm245, %v262, %v164
  %v280 = vsel %vm246, %v263, %v171
  %v281 = vsel %vm247, %v264, %v178
  %v282 = vsel %vm248, %v265, %v185
  %v283 = vsel %vm249, %v266, %v192
  %v284 = vsel %vm250, %v267, %v199
  %v285 = vpack.c.bf16 %v28, %v27
  %v286 = vpack.c.bf16 %v30, %v29
  %v287 = vpack.c.bf16 %v32, %v31
  %v288 = vpack.c.bf16 %v34, %v33
  %v289 = vpack.c.bf16 %v36, %v35
  %v290 = vpack.c.bf16 %v38, %v37
  %v291 = vpack.c.bf16 %v40, %v39
  %v292 = vpack.c.bf16 %v42, %v41
  %v293 = vpack.c.bf16 %v43, %v43
  %v294 = vld [vmem:[%s1] sm:$0xf]
  %v295 = vld [vmem:[%s1 + $0x4] sm:$0xf]
  %v296 = vld [vmem:[%s1 + $0x8] sm:$0xf]
  %v297 = vld [vmem:[%s1 + $0xc] sm:$0xf]
  %v298 = vld [vmem:[%s2] sm:$0x1]
  %v300 = vperm.slane %v298, 0
  %v306 = vunpack.c.l.b16 %v294
  %v307 = vunpack.c.l.b16 %v295
  %v308 = vunpack.c.l.b16 %v296
  %v309 = vunpack.c.l.b16 %v297
  %v310 = vpack.c.b16 %v307, %v306
  %v311 = vpack.c.b16 %v309, %v308
  %vm314 = vcmask 261120
  %v316 = vsel %vm314, %v285, 0
  %v319 = vsel %vm314, %v286, 0
  %v322 = vsel %vm314, %v287, 0
  %v325 = vsel %vm314, %v288, 0
  %v328 = vsel %vm314, %v289, 0
  %v331 = vsel %vm314, %v290, 0
  %v334 = vsel %vm314, %v291, 0
  %v337 = vsel %vm314, %v292, 0
  %v340 = vsel %vm314, %v293, 0
  %342 = vmatpush.bf16.msra.mxu0 0
  %343 = vmatpush.bf16.msra.mxu0 0
  %344 = vmatpush.bf16.msra.mxu0 0
  %345 = vmatpush.bf16.msra.mxu0 0
  %346 = vmatpush.bf16.msra.mxu0 0
  %347 = vmatpush.bf16.msra.mxu0 0
  %348 = vmatpush.bf16.msra.mxu0 %v311
  %349 = vmatpush.bf16.msra.mxu0 %v310
  %350 = vmatmul.bf16.gmra.mxu0 %v316
  %v351 = vpop.f32.mrf.mxu0
  %v352 = vadd.f32 %v300, %v351
  %v353 = vpop.f32.mrf.mxu0
  %v354 = vadd.f32 %v300, %v353
  %355 = vmatmul.bf16.gmra.mxu0 %v319
  %v356 = vpop.f32.mrf.mxu0
  %v357 = vadd.f32 %v300, %v356
  %v358 = vpop.f32.mrf.mxu0
  %v359 = vadd.f32 %v300, %v358
  %360 = vmatmul.bf16.gmra.mxu0 %v322
  %v361 = vpop.f32.mrf.mxu0
  %v362 = vadd.f32 %v300, %v361
  %v363 = vpop.f32.mrf.mxu0
  %v364 = vadd.f32 %v300, %v363
  %365 = vmatmul.bf16.gmra.mxu0 %v325
  %v366 = vpop.f32.mrf.mxu0
  %v367 = vadd.f32 %v300, %v366
  %v368 = vpop.f32.mrf.mxu0
  %v369 = vadd.f32 %v300, %v368
  %370 = vmatmul.bf16.gmra.mxu0 %v328
  %v371 = vpop.f32.mrf.mxu0
  %v372 = vadd.f32 %v300, %v371
  %v373 = vpop.f32.mrf.mxu0
  %v374 = vadd.f32 %v300, %v373
  %375 = vmatmul.bf16.gmra.mxu0 %v331
  %v376 = vpop.f32.mrf.mxu0
  %v377 = vadd.f32 %v300, %v376
  %v378 = vpop.f32.mrf.mxu0
  %v379 = vadd.f32 %v300, %v378
  %380 = vmatmul.bf16.gmra.mxu0 %v334
  %v381 = vpop.f32.mrf.mxu0
  %v382 = vadd.f32 %v300, %v381
  %v383 = vpop.f32.mrf.mxu0
  %v384 = vadd.f32 %v300, %v383
  %385 = vmatmul.bf16.gmra.mxu0 %v337
  %v386 = vpop.f32.mrf.mxu0
  %v387 = vadd.f32 %v300, %v386
  %v388 = vpop.f32.mrf.mxu0
  %v389 = vadd.f32 %v300, %v388
  %390 = vmatmul.bf16.gmra.mxu0 %v340
  %v391 = vpop.f32.mrf.mxu0
  %v392 = vadd.f32 %v300, %v391
  %v393 = vpop.f32.mrf.mxu0
  %394 = vdwg.mxu0
  %v395 = vld [vmem:[%s3] sm:$0x7]
  %v396 = vld [vmem:[%s4] sm:$0x1]
  %vm414 = vcmask 1040384
  %v415 = vrot.slane %v352, 7
  %v416 = vrot.slane %v354, 7
  %v417 = vsel %vm414, %v415, %v416
  %v418 = vrot.slane %v357, 7
  %v419 = vsel %vm414, %v416, %v418
  %v420 = vrot.slane %v359, 7
  %v421 = vsel %vm414, %v418, %v420
  %v422 = vrot.slane %v362, 7
  %v423 = vsel %vm414, %v420, %v422
  %v424 = vrot.slane %v364, 7
  %v425 = vsel %vm414, %v422, %v424
  %v426 = vrot.slane %v367, 7
  %v427 = vsel %vm414, %v424, %v426
  %v428 = vrot.slane %v369, 7
  %v429 = vsel %vm414, %v426, %v428
  %v430 = vrot.slane %v372, 7
  %v431 = vsel %vm414, %v428, %v430
  %v432 = vrot.slane %v374, 7
  %v433 = vsel %vm414, %v430, %v432
  %v434 = vrot.slane %v377, 7
  %v435 = vsel %vm414, %v432, %v434
  %v436 = vrot.slane %v379, 7
  %v437 = vsel %vm414, %v434, %v436
  %v438 = vrot.slane %v382, 7
  %v439 = vsel %vm414, %v436, %v438
  %v440 = vrot.slane %v384, 7
  %v441 = vsel %vm414, %v438, %v440
  %v442 = vrot.slane %v387, 7
  %v443 = vsel %vm414, %v440, %v442
  %v444 = vrot.slane %v389, 7
  %v445 = vsel %vm414, %v442, %v444
  %v446 = vrot.slane %v392, 7
  %v447 = vsel %vm414, %v444, %v446
  %v465 = vsel %vm414, 0.0, %v415
  %vm466 = vcmask 1046528
  %v467 = vrot.slane %v352, 1
  %v468 = vrot.slane %v354, 1
  %v469 = vsel %vm466, %v467, %v468
  %v470 = vrot.slane %v357, 1
  %v471 = vsel %vm466, %v468, %v470
  %v472 = vrot.slane %v359, 1
  %v473 = vsel %vm466, %v470, %v472
  %v474 = vrot.slane %v362, 1
  %v475 = vsel %vm466, %v472, %v474
  %v476 = vrot.slane %v364, 1
  %v477 = vsel %vm466, %v474, %v476
  %v478 = vrot.slane %v367, 1
  %v479 = vsel %vm466, %v476, %v478
  %v480 = vrot.slane %v369, 1
  %v481 = vsel %vm466, %v478, %v480
  %v482 = vrot.slane %v372, 1
  %v483 = vsel %vm466, %v480, %v482
  %v484 = vrot.slane %v374, 1
  %v485 = vsel %vm466, %v482, %v484
  %v486 = vrot.slane %v377, 1
  %v487 = vsel %vm466, %v484, %v486
  %v488 = vrot.slane %v379, 1
  %v489 = vsel %vm466, %v486, %v488
  %v490 = vrot.slane %v382, 1
  %v491 = vsel %vm466, %v488, %v490
  %v492 = vrot.slane %v384, 1
  %v493 = vsel %vm466, %v490, %v492
  %v494 = vrot.slane %v387, 1
  %v495 = vsel %vm466, %v492, %v494
  %v496 = vrot.slane %v389, 1
  %v497 = vsel %vm466, %v494, %v496
  %v498 = vrot.slane %v392, 1
  %v499 = vsel %vm466, %v496, %v498
  %v517 = vsel %vm466, %v498, 0.0
  %vm518 = vcmp.eq.s32.totalorder %v268, 0
  %vm519 = vcmp.eq.s32.totalorder %v269, 0
  %vm520 = vcmp.eq.s32.totalorder %v270, 0
  %vm521 = vcmp.eq.s32.totalorder %v271, 0
  %vm522 = vcmp.eq.s32.totalorder %v272, 0
  %vm523 = vcmp.eq.s32.totalorder %v273, 0
  %vm524 = vcmp.eq.s32.totalorder %v274, 0
  %vm525 = vcmp.eq.s32.totalorder %v275, 0
  %vm526 = vcmp.eq.s32.totalorder %v276, 0
  %vm527 = vcmp.eq.s32.totalorder %v277, 0
  %vm528 = vcmp.eq.s32.totalorder %v278, 0
  %vm529 = vcmp.eq.s32.totalorder %v279, 0
  %vm530 = vcmp.eq.s32.totalorder %v280, 0
  %vm531 = vcmp.eq.s32.totalorder %v281, 0
  %vm532 = vcmp.eq.s32.totalorder %v282, 0
  %vm533 = vcmp.eq.s32.totalorder %v283, 0
  %vm534 = vcmp.eq.s32.totalorder %v284, 0
  %v535 = vsel %vm518, 1, 0
  %v536 = vsel %vm519, 1, 0
  %v537 = vsel %vm520, 1, 0
  %v538 = vsel %vm521, 1, 0
  %v539 = vsel %vm522, 1, 0
  %v540 = vsel %vm523, 1, 0
  %v541 = vsel %vm524, 1, 0
  %v542 = vsel %vm525, 1, 0
  %v543 = vsel %vm526, 1, 0
  %v544 = vsel %vm527, 1, 0
  %v545 = vsel %vm528, 1, 0
  %v546 = vsel %vm529, 1, 0
  %v547 = vsel %vm530, 1, 0
  %v548 = vsel %vm531, 1, 0
  %v549 = vsel %vm532, 1, 0
  %v550 = vsel %vm533, 1, 0
  %v551 = vsel %vm534, 1, 0
  %vm552 = vcmp.eq.s32.totalorder %v535, 1
  %vm553 = vcmp.eq.s32.totalorder %v536, 1
  %vm554 = vcmp.eq.s32.totalorder %v537, 1
  %vm555 = vcmp.eq.s32.totalorder %v538, 1
  %vm556 = vcmp.eq.s32.totalorder %v539, 1
  %vm557 = vcmp.eq.s32.totalorder %v540, 1
  %vm558 = vcmp.eq.s32.totalorder %v541, 1
  %vm559 = vcmp.eq.s32.totalorder %v542, 1
  %vm560 = vcmp.eq.s32.totalorder %v543, 1
  %vm561 = vcmp.eq.s32.totalorder %v544, 1
  %vm562 = vcmp.eq.s32.totalorder %v545, 1
  %vm563 = vcmp.eq.s32.totalorder %v546, 1
  %vm564 = vcmp.eq.s32.totalorder %v547, 1
  %vm565 = vcmp.eq.s32.totalorder %v548, 1
  %vm566 = vcmp.eq.s32.totalorder %v549, 1
  %vm567 = vcmp.eq.s32.totalorder %v550, 1
  %vm568 = vcmp.eq.s32.totalorder %v551, 1
  %v569 = vsel %vm552, 0.0, %v465
  %v570 = vsel %vm553, 0.0, %v417
  %v571 = vsel %vm554, 0.0, %v419
  %v572 = vsel %vm555, 0.0, %v421
  %v573 = vsel %vm556, 0.0, %v423
  %v574 = vsel %vm557, 0.0, %v425
  %v575 = vsel %vm558, 0.0, %v427
  %v576 = vsel %vm559, 0.0, %v429
  %v577 = vsel %vm560, 0.0, %v431
  %v578 = vsel %vm561, 0.0, %v433
  %v579 = vsel %vm562, 0.0, %v435
  %v580 = vsel %vm563, 0.0, %v437
  %v581 = vsel %vm564, 0.0, %v439
  %v582 = vsel %vm565, 0.0, %v441
  %v583 = vsel %vm566, 0.0, %v443
  %v584 = vsel %vm567, 0.0, %v445
  %v585 = vsel %vm568, 0.0, %v447
  %vm586 = vcmp.eq.s32.totalorder %v268, 3
  %vm587 = vcmp.eq.s32.totalorder %v269, 3
  %vm588 = vcmp.eq.s32.totalorder %v270, 3
  %vm589 = vcmp.eq.s32.totalorder %v271, 3
  %vm590 = vcmp.eq.s32.totalorder %v272, 3
  %vm591 = vcmp.eq.s32.totalorder %v273, 3
  %vm592 = vcmp.eq.s32.totalorder %v274, 3
  %vm593 = vcmp.eq.s32.totalorder %v275, 3
  %vm594 = vcmp.eq.s32.totalorder %v276, 3
  %vm595 = vcmp.eq.s32.totalorder %v277, 3
  %vm596 = vcmp.eq.s32.totalorder %v278, 3
  %vm597 = vcmp.eq.s32.totalorder %v279, 3
  %vm598 = vcmp.eq.s32.totalorder %v280, 3
  %vm599 = vcmp.eq.s32.totalorder %v281, 3
  %vm600 = vcmp.eq.s32.totalorder %v282, 3
  %vm601 = vcmp.eq.s32.totalorder %v283, 3
  %vm602 = vcmp.eq.s32.totalorder %v284, 3
  %v603 = vsel %vm586, 1, 0
  %v604 = vsel %vm587, 1, 0
  %v605 = vsel %vm588, 1, 0
  %v606 = vsel %vm589, 1, 0
  %v607 = vsel %vm590, 1, 0
  %v608 = vsel %vm591, 1, 0
  %v609 = vsel %vm592, 1, 0
  %v610 = vsel %vm593, 1, 0
  %v611 = vsel %vm594, 1, 0
  %v612 = vsel %vm595, 1, 0
  %v613 = vsel %vm596, 1, 0
  %v614 = vsel %vm597, 1, 0
  %v615 = vsel %vm598, 1, 0
  %v616 = vsel %vm599, 1, 0
  %v617 = vsel %vm600, 1, 0
  %v618 = vsel %vm601, 1, 0
  %v619 = vsel %vm602, 1, 0
  %vm620 = vcmp.eq.s32.totalorder %v603, 1
  %vm621 = vcmp.eq.s32.totalorder %v604, 1
  %vm622 = vcmp.eq.s32.totalorder %v605, 1
  %vm623 = vcmp.eq.s32.totalorder %v606, 1
  %vm624 = vcmp.eq.s32.totalorder %v607, 1
  %vm625 = vcmp.eq.s32.totalorder %v608, 1
  %vm626 = vcmp.eq.s32.totalorder %v609, 1
  %vm627 = vcmp.eq.s32.totalorder %v610, 1
  %vm628 = vcmp.eq.s32.totalorder %v611, 1
  %vm629 = vcmp.eq.s32.totalorder %v612, 1
  %vm630 = vcmp.eq.s32.totalorder %v613, 1
  %vm631 = vcmp.eq.s32.totalorder %v614, 1
  %vm632 = vcmp.eq.s32.totalorder %v615, 1
  %vm633 = vcmp.eq.s32.totalorder %v616, 1
  %vm634 = vcmp.eq.s32.totalorder %v617, 1
  %vm635 = vcmp.eq.s32.totalorder %v618, 1
  %vm636 = vcmp.eq.s32.totalorder %v619, 1
  %v637 = vsel %vm620, 0.0, %v469
  %v638 = vsel %vm621, 0.0, %v471
  %v639 = vsel %vm622, 0.0, %v473
  %v640 = vsel %vm623, 0.0, %v475
  %v641 = vsel %vm624, 0.0, %v477
  %v642 = vsel %vm625, 0.0, %v479
  %v643 = vsel %vm626, 0.0, %v481
  %v644 = vsel %vm627, 0.0, %v483
  %v645 = vsel %vm628, 0.0, %v485
  %v646 = vsel %vm629, 0.0, %v487
  %v647 = vsel %vm630, 0.0, %v489
  %v648 = vsel %vm631, 0.0, %v491
  %v649 = vsel %vm632, 0.0, %v493
  %v650 = vsel %vm633, 0.0, %v495
  %v651 = vsel %vm634, 0.0, %v497
  %v652 = vsel %vm635, 0.0, %v499
  %v653 = vsel %vm636, 0.0, %v517
  %v654 = vperm.slane %v395, 0
  %v655 = vmul.f32 %v569, %v654
  %v656 = vmul.f32 %v570, %v654
  %v657 = vmul.f32 %v571, %v654
  %v658 = vmul.f32 %v572, %v654
  %v659 = vmul.f32 %v573, %v654
  %v660 = vmul.f32 %v574, %v654
  %v661 = vmul.f32 %v575, %v654
  %v662 = vmul.f32 %v576, %v654
  %v663 = vmul.f32 %v577, %v654
  %v664 = vmul.f32 %v578, %v654
  %v665 = vmul.f32 %v579, %v654
  %v666 = vmul.f32 %v580, %v654
  %v667 = vmul.f32 %v581, %v654
  %v668 = vmul.f32 %v582, %v654
  %v669 = vmul.f32 %v583, %v654
  %v670 = vmul.f32 %v584, %v654
  %v671 = vmul.f32 %v585, %v654
  %v672 = vperm.slane %v395, 1
  %v673 = vmul.f32 %v352, %v672
  %v674 = vmul.f32 %v354, %v672
  %v675 = vmul.f32 %v357, %v672
  %v676 = vmul.f32 %v359, %v672
  %v677 = vmul.f32 %v362, %v672
  %v678 = vmul.f32 %v364, %v672
  %v679 = vmul.f32 %v367, %v672
  %v680 = vmul.f32 %v369, %v672
  %v681 = vmul.f32 %v372, %v672
  %v682 = vmul.f32 %v374, %v672
  %v683 = vmul.f32 %v377, %v672
  %v684 = vmul.f32 %v379, %v672
  %v685 = vmul.f32 %v382, %v672
  %v686 = vmul.f32 %v384, %v672
  %v687 = vmul.f32 %v387, %v672
  %v688 = vmul.f32 %v389, %v672
  %v689 = vmul.f32 %v392, %v672
  %v690 = vadd.f32 %v655, %v673
  %v691 = vadd.f32 %v656, %v674
  %v692 = vadd.f32 %v657, %v675
  %v693 = vadd.f32 %v658, %v676
  %v694 = vadd.f32 %v659, %v677
  %v695 = vadd.f32 %v660, %v678
  %v696 = vadd.f32 %v661, %v679
  %v697 = vadd.f32 %v662, %v680
  %v698 = vadd.f32 %v663, %v681
  %v699 = vadd.f32 %v664, %v682
  %v700 = vadd.f32 %v665, %v683
  %v701 = vadd.f32 %v666, %v684
  %v702 = vadd.f32 %v667, %v685
  %v703 = vadd.f32 %v668, %v686
  %v704 = vadd.f32 %v669, %v687
  %v705 = vadd.f32 %v670, %v688
  %v706 = vadd.f32 %v671, %v689
  %v707 = vperm.slane %v395, 2
  %v708 = vmul.f32 %v637, %v707
  %v709 = vmul.f32 %v638, %v707
  %v710 = vmul.f32 %v639, %v707
  %v711 = vmul.f32 %v640, %v707
  %v712 = vmul.f32 %v641, %v707
  %v713 = vmul.f32 %v642, %v707
  %v714 = vmul.f32 %v643, %v707
  %v715 = vmul.f32 %v644, %v707
  %v716 = vmul.f32 %v645, %v707
  %v717 = vmul.f32 %v646, %v707
  %v718 = vmul.f32 %v647, %v707
  %v719 = vmul.f32 %v648, %v707
  %v720 = vmul.f32 %v649, %v707
  %v721 = vmul.f32 %v650, %v707
  %v722 = vmul.f32 %v651, %v707
  %v723 = vmul.f32 %v652, %v707
  %v724 = vmul.f32 %v653, %v707
  %v725 = vadd.f32 %v690, %v708
  %v726 = vadd.f32 %v691, %v709
  %v727 = vadd.f32 %v692, %v710
  %v728 = vadd.f32 %v693, %v711
  %v729 = vadd.f32 %v694, %v712
  %v730 = vadd.f32 %v695, %v713
  %v731 = vadd.f32 %v696, %v714
  %v732 = vadd.f32 %v697, %v715
  %v733 = vadd.f32 %v698, %v716
  %v734 = vadd.f32 %v699, %v717
  %v735 = vadd.f32 %v700, %v718
  %v736 = vadd.f32 %v701, %v719
  %v737 = vadd.f32 %v702, %v720
  %v738 = vadd.f32 %v703, %v721
  %v739 = vadd.f32 %v704, %v722
  %v740 = vadd.f32 %v705, %v723
  %v741 = vadd.f32 %v706, %v724
  %v743 = vperm.slane %v396, 0
  %v745 = vadd.f32 %v725, %v743
  %v746 = vadd.f32 %v726, %v743
  %v747 = vadd.f32 %v727, %v743
  %v748 = vadd.f32 %v728, %v743
  %v749 = vadd.f32 %v729, %v743
  %v750 = vadd.f32 %v730, %v743
  %v751 = vadd.f32 %v731, %v743
  %v752 = vadd.f32 %v732, %v743
  %v753 = vadd.f32 %v733, %v743
  %v754 = vadd.f32 %v734, %v743
  %v755 = vadd.f32 %v735, %v743
  %v756 = vadd.f32 %v736, %v743
  %v757 = vadd.f32 %v737, %v743
  %v758 = vadd.f32 %v738, %v743
  %v759 = vadd.f32 %v739, %v743
  %v760 = vadd.f32 %v740, %v743
  %v761 = vadd.f32 %v741, %v743
  %v762 = vpack.c.bf16 %v746, %v745
  %v763 = vpack.c.bf16 %v748, %v747
  %v764 = vpack.c.bf16 %v750, %v749
  %v765 = vpack.c.bf16 %v752, %v751
  %v766 = vpack.c.bf16 %v754, %v753
  %v767 = vpack.c.bf16 %v756, %v755
  %v768 = vpack.c.bf16 %v758, %v757
  %v769 = vpack.c.bf16 %v760, %v759
  %v770 = vpack.c.bf16 %v761, %v761
  %v771 = vld [vmem:[%s5] sm:$0xf]
  %v772 = vld [vmem:[%s5 + $0x4] sm:$0xf]
  %v773 = vld [vmem:[%s5 + $0x8] sm:$0xf]
  %v774 = vld [vmem:[%s5 + $0xc] sm:$0xf]
  %v775 = vld [vmem:[%s5 + $0x10] sm:$0xf]
  %v776 = vld [vmem:[%s5 + $0x14] sm:$0xf]
  %v777 = vld [vmem:[%s5 + $0x18] sm:$0xf]
  %v778 = vld [vmem:[%s5 + $0x1c] sm:$0xf]
  %v779 = vld [vmem:[%s5 + $0x20] sm:$0xf]
  %v780 = vld [vmem:[%s5 + $0x24] sm:$0xf]
  %v781 = vld [vmem:[%s5 + $0x28] sm:$0xf]
  %v782 = vld [vmem:[%s5 + $0x2c] sm:$0xf]
  %v783 = vld [vmem:[%s5 + $0x30] sm:$0xf]
  %v784 = vld [vmem:[%s5 + $0x34] sm:$0xf]
  %v785 = vld [vmem:[%s5 + $0x38] sm:$0xf]
  %v786 = vld [vmem:[%s5 + $0x3c] sm:$0xf]
  %v787 = vld [vmem:[%s6] sm:$0x1]
  %v789 = vperm.slane %v787, 0
  %v807 = vunpack.c.l.b16 %v771
  %v808 = vunpack.c.l.b16 %v772
  %v809 = vunpack.c.l.b16 %v773
  %v810 = vunpack.c.l.b16 %v774
  %v811 = vunpack.c.l.b16 %v775
  %v812 = vunpack.c.l.b16 %v776
  %v813 = vunpack.c.l.b16 %v777
  %v814 = vunpack.c.l.b16 %v778
  %v815 = vunpack.c.l.b16 %v779
  %v816 = vunpack.c.l.b16 %v780
  %v817 = vunpack.c.l.b16 %v781
  %v818 = vunpack.c.l.b16 %v782
  %v819 = vunpack.c.l.b16 %v783
  %v820 = vunpack.c.l.b16 %v784
  %v821 = vunpack.c.l.b16 %v785
  %v822 = vunpack.c.l.b16 %v786
  %v823 = vpack.c.b16 %v808, %v807
  %v824 = vpack.c.b16 %v810, %v809
  %v825 = vpack.c.b16 %v812, %v811
  %v826 = vpack.c.b16 %v814, %v813
  %v827 = vpack.c.b16 %v816, %v815
  %v828 = vpack.c.b16 %v818, %v817
  %v829 = vpack.c.b16 %v820, %v819
  %v830 = vpack.c.b16 %v822, %v821
  %839 = vmatpush.bf16.msra.mxu0 %v830
  %840 = vmatpush.bf16.msra.mxu0 %v829
  %841 = vmatpush.bf16.msra.mxu0 %v828
  %842 = vmatpush.bf16.msra.mxu0 %v827
  %843 = vmatpush.bf16.msra.mxu0 %v826
  %844 = vmatpush.bf16.msra.mxu0 %v825
  %845 = vmatpush.bf16.msra.mxu0 %v824
  %846 = vmatpush.bf16.msra.mxu0 %v823
  %847 = vmatmul.bf16.gmra.mxu0 %v762
  %v848 = vpop.f32.mrf.mxu0
  %v849 = vadd.f32 %v789, %v848
  %v850 = vpop.f32.mrf.mxu0
  %v851 = vadd.f32 %v789, %v850
  %852 = vmatmul.bf16.gmra.mxu0 %v763
  %v853 = vpop.f32.mrf.mxu0
  %v854 = vadd.f32 %v789, %v853
  %v855 = vpop.f32.mrf.mxu0
  %v856 = vadd.f32 %v789, %v855
  %857 = vmatmul.bf16.gmra.mxu0 %v764
  %v858 = vpop.f32.mrf.mxu0
  %v859 = vadd.f32 %v789, %v858
  %v860 = vpop.f32.mrf.mxu0
  %v861 = vadd.f32 %v789, %v860
  %862 = vmatmul.bf16.gmra.mxu0 %v765
  %v863 = vpop.f32.mrf.mxu0
  %v864 = vadd.f32 %v789, %v863
  %v865 = vpop.f32.mrf.mxu0
  %v866 = vadd.f32 %v789, %v865
  %867 = vmatmul.bf16.gmra.mxu0 %v766
  %v868 = vpop.f32.mrf.mxu0
  %v869 = vadd.f32 %v789, %v868
  %v870 = vpop.f32.mrf.mxu0
  %v871 = vadd.f32 %v789, %v870
  %872 = vmatmul.bf16.gmra.mxu0 %v767
  %v873 = vpop.f32.mrf.mxu0
  %v874 = vadd.f32 %v789, %v873
  %v875 = vpop.f32.mrf.mxu0
  %v876 = vadd.f32 %v789, %v875
  %877 = vmatmul.bf16.gmra.mxu0 %v768
  %v878 = vpop.f32.mrf.mxu0
  %v879 = vadd.f32 %v789, %v878
  %v880 = vpop.f32.mrf.mxu0
  %v881 = vadd.f32 %v789, %v880
  %882 = vmatmul.bf16.gmra.mxu0 %v769
  %v883 = vpop.f32.mrf.mxu0
  %v884 = vadd.f32 %v789, %v883
  %v885 = vpop.f32.mrf.mxu0
  %v886 = vadd.f32 %v789, %v885
  %887 = vmatmul.bf16.gmra.mxu0 %v770
  %v888 = vpop.f32.mrf.mxu0
  %v889 = vadd.f32 %v789, %v888
  %v890 = vpop.f32.mrf.mxu0
  %891 = vdwg.mxu0
  %vm892 = vcmp.ge.s32.totalorder %v64, 8
  %vm893 = vcmp.ge.s32.totalorder %v65, 8
  %vm894 = vcmp.ge.s32.totalorder %v66, 8
  %vm895 = vcmp.ge.s32.totalorder %v67, 8
  %vm896 = vcmp.ge.s32.totalorder %v68, 8
  %vm897 = vcmp.ge.s32.totalorder %v69, 8
  %vm898 = vcmp.ge.s32.totalorder %v70, 8
  %vm899 = vcmp.ge.s32.totalorder %v71, 8
  %vm900 = vcmp.ge.s32.totalorder %v72, 8
  %vm901 = vcmp.ge.s32.totalorder %v73, 8
  %vm902 = vcmp.ge.s32.totalorder %v74, 8
  %vm903 = vcmp.ge.s32.totalorder %v75, 8
  %vm904 = vcmp.ge.s32.totalorder %v76, 8
  %vm905 = vcmp.ge.s32.totalorder %v77, 8
  %vm906 = vcmp.ge.s32.totalorder %v78, 8
  %vm907 = vcmp.ge.s32.totalorder %v79, 8
  %vm908 = vcmp.ge.s32.totalorder %v80, 8
  %v909 = vsel %vm892, 1, 0
  %v910 = vsel %vm893, 1, 0
  %v911 = vsel %vm894, 1, 0
  %v912 = vsel %vm895, 1, 0
  %v913 = vsel %vm896, 1, 0
  %v914 = vsel %vm897, 1, 0
  %v915 = vsel %vm898, 1, 0
  %v916 = vsel %vm899, 1, 0
  %v917 = vsel %vm900, 1, 0
  %v918 = vsel %vm901, 1, 0
  %v919 = vsel %vm902, 1, 0
  %v920 = vsel %vm903, 1, 0
  %v921 = vsel %vm904, 1, 0
  %v922 = vsel %vm905, 1, 0
  %v923 = vsel %vm906, 1, 0
  %v924 = vsel %vm907, 1, 0
  %v925 = vsel %vm908, 1, 0
  %vm926 = vcmp.eq.s32.totalorder %v909, 1
  %vm927 = vcmp.eq.s32.totalorder %v910, 1
  %vm928 = vcmp.eq.s32.totalorder %v911, 1
  %vm929 = vcmp.eq.s32.totalorder %v912, 1
  %vm930 = vcmp.eq.s32.totalorder %v913, 1
  %vm931 = vcmp.eq.s32.totalorder %v914, 1
  %vm932 = vcmp.eq.s32.totalorder %v915, 1
  %vm933 = vcmp.eq.s32.totalorder %v916, 1
  %vm934 = vcmp.eq.s32.totalorder %v917, 1
  %vm935 = vcmp.eq.s32.totalorder %v918, 1
  %vm936 = vcmp.eq.s32.totalorder %v919, 1
  %vm937 = vcmp.eq.s32.totalorder %v920, 1
  %vm938 = vcmp.eq.s32.totalorder %v921, 1
  %vm939 = vcmp.eq.s32.totalorder %v922, 1
  %vm940 = vcmp.eq.s32.totalorder %v923, 1
  %vm941 = vcmp.eq.s32.totalorder %v924, 1
  %vm942 = vcmp.eq.s32.totalorder %v925, 1
  %v943 = vsel %vm926, %v849, 0.0
  %v944 = vsel %vm927, %v851, 0.0
  %v945 = vsel %vm928, %v854, 0.0
  %v946 = vsel %vm929, %v856, 0.0
  %v947 = vsel %vm930, %v859, 0.0
  %v948 = vsel %vm931, %v861, 0.0
  %v949 = vsel %vm932, %v864, 0.0
  %v950 = vsel %vm933, %v866, 0.0
  %v951 = vsel %vm934, %v869, 0.0
  %v952 = vsel %vm935, %v871, 0.0
  %v953 = vsel %vm936, %v874, 0.0
  %v954 = vsel %vm937, %v876, 0.0
  %v955 = vsel %vm938, %v879, 0.0
  %v956 = vsel %vm939, %v881, 0.0
  %v957 = vsel %vm940, %v884, 0.0
  %v958 = vsel %vm941, %v886, 0.0
  %v959 = vsel %vm942, %v889, 0.0
  %v960 = vadd.f32 %v27, %v943
  %v961 = vadd.f32 %v28, %v944
  %v962 = vadd.f32 %v29, %v945
  %v963 = vadd.f32 %v30, %v946
  %v964 = vadd.f32 %v31, %v947
  %v965 = vadd.f32 %v32, %v948
  %v966 = vadd.f32 %v33, %v949
  %v967 = vadd.f32 %v34, %v950
  %v968 = vadd.f32 %v35, %v951
  %v969 = vadd.f32 %v36, %v952
  %v970 = vadd.f32 %v37, %v953
  %v971 = vadd.f32 %v38, %v954
  %v972 = vadd.f32 %v39, %v955
  %v973 = vadd.f32 %v40, %v956
  %v974 = vadd.f32 %v41, %v957
  %v975 = vadd.f32 %v42, %v958
  %v976 = vadd.f32 %v43, %v959
  %977 = vst.msk [vmem:[%s7] sm:$0xff] %vm314, %v960
  %978 = vst.msk [vmem:[%s7 + $0x8] sm:$0xff] %vm314, %v961
  %979 = vst.msk [vmem:[%s7 + $0x10] sm:$0xff] %vm314, %v962
  %980 = vst.msk [vmem:[%s7 + $0x18] sm:$0xff] %vm314, %v963
  %981 = vst.msk [vmem:[%s7 + $0x20] sm:$0xff] %vm314, %v964
  %982 = vst.msk [vmem:[%s7 + $0x28] sm:$0xff] %vm314, %v965
  %983 = vst.msk [vmem:[%s7 + $0x30] sm:$0xff] %vm314, %v966
  %984 = vst.msk [vmem:[%s7 + $0x38] sm:$0xff] %vm314, %v967
  %985 = vst.msk [vmem:[%s7 + $0x40] sm:$0xff] %vm314, %v968
  %986 = vst.msk [vmem:[%s7 + $0x48] sm:$0xff] %vm314, %v969
  %987 = vst.msk [vmem:[%s7 + $0x50] sm:$0xff] %vm314, %v970
  %988 = vst.msk [vmem:[%s7 + $0x58] sm:$0xff] %vm314, %v971
  %989 = vst.msk [vmem:[%s7 + $0x60] sm:$0xff] %vm314, %v972
  %990 = vst.msk [vmem:[%s7 + $0x68] sm:$0xff] %vm314, %v973
  %991 = vst.msk [vmem:[%s7 + $0x70] sm:$0xff] %vm314, %v974
  %992 = vst.msk [vmem:[%s7 + $0x78] sm:$0xff] %vm314, %v975
  %993 = vst.msk [vmem:[%s7 + $0x80] sm:$0xff] %vm314, %v976
  // Predicated region
  $region30: #{residual_attention_block.3} parent=0 // pred_check
    _
  $region31: #{residual_attention_block.3} parent=0 // pred_check_branch
    %995 = sbr.rel (0) target = $region33
  $region32: #{residual_attention_block.3} parent=0 // pred_region
    _
  $region33: #{residual_attention_block.3} parent=0 // pred_fallthru
    _
  // Predicated region
  $region34: #{residual_attention_block.3} parent=0 // pred_check
    _
  $region35: #{residual_attention_block.3} parent=0 // pred_check_branch
    %997 = sbr.rel (0) target = $region37
  $region36: #{residual_attention_block.3} parent=0 // pred_region
    _
  $region37: #{residual_attention_block.3} parent=0 // pred_fallthru
    _

// kernel: residual_attention_block.5
$region0: #{residual_attention_block.5}
  #allocation0 [shape = 'u32[]', space=smem, size = 0x4, offset = 0x4, fixed_abs, tag = 'smem constant byte address 0x4 - core index']
  #allocation1 [shape = 'u32[72,128]{1,0:T(1,128)}', space=vmem, size = 0x9000, scoped, tag = 'internal scratch']
  %s0 = inlined_call_operand.vmem [shape: f32[136,32], index: 0, kind: input, shape index: {}]
  %s1 = inlined_call_operand.vmem [shape: bf16[32,128], index: 1, kind: input, shape index: {}]
  %s2 = inlined_call_operand.vmem [shape: f32[1,128], index: 2, kind: input, shape index: {}]
  %s3 = inlined_call_operand.vmem [shape: f32[3,128], index: 3, kind: input, shape index: {}]
  %s4 = inlined_call_operand.vmem [shape: f32[1,128], index: 4, kind: input, shape index: {}]
  %s5 = inlined_call_operand.vmem [shape: bf16[128,32], index: 5, kind: input, shape index: {}]
  %s6 = inlined_call_operand.vmem [shape: f32[1,32], index: 6, kind: input, shape index: {}]
  %s7 = inlined_call_operand.vmem [shape: f32[1,32], index: 7, kind: input, shape index: {}]
  %s8 = inlined_call_operand.vmem [shape: f32[1,32], index: 8, kind: input, shape index: {}]
  %s9 = inlined_call_operand.vmem [shape: bf16[32,128], index: 9, kind: input, shape index: {}]
  %s10 = inlined_call_operand.vmem [shape: f32[1,128], index: 10, kind: input, shape index: {}]
  %s11 = inlined_call_operand.vmem [shape: bf16[128,32], index: 11, kind: input, shape index: {}]
  %s12 = inlined_call_operand.vmem [shape: f32[1,32], index: 12, kind: input, shape index: {}]
  %s13 = inlined_call_operand.hbm [shape: f32[136,32], index: 13, kind: output, shape index: {}]
  %s14 = sld [smem:[#allocation0]]
  $region62: #{residual_attention_block.5} parent=0
    _
  %s16 = ssub.s32 1, %s14
  %s17 = scalar_select 0, %s16, %s14
  $region1: #{residual_attention_block.5} parent=0
    #allocation2 [shape = 'u8[69632]{0}', space=vmem, size = 0x11000, scoped, tag = 'output window, operand 0, single buffered']
    #allocation3 [shape = 's32[1]{0}', space=sflag, size = 0x4, scoped, tag = 'scoped memory for residual_attention_block.5']
    %18 = vsyncpa [#allocation3], 0
    // Predicated region
    $region2: #{residual_attention_block.5} parent=1 // pred_check
      _
    $region3: #{residual_attention_block.5} parent=1 // pred_check_branch
      %20 = sbr.rel (0) target = $region5
    $region4: #{residual_attention_block.5} parent=1 // pred_region
      _
    $region5: #{residual_attention_block.5} parent=1 // pred_fallthru
      _
    // Predicated region
    $region6: #{residual_attention_block.5} parent=1 // pred_check
      _
    $region7: #{residual_attention_block.5} parent=1 // pred_check_branch
      %22 = sbr.rel (0) target = $region9
    $region8: #{residual_attention_block.5} parent=1 // pred_region
      _
    $region9: #{residual_attention_block.5} parent=1 // pred_fallthru
      _
    // Predicated region
    $region10: #{residual_attention_block.5} parent=1 // pred_check
      _
    $region11: #{residual_attention_block.5} parent=1 // pred_check_branch
      %24 = sbr.rel (0) target = $region13
    $region12: #{residual_attention_block.5} parent=1 // pred_region
      _
    $region13: #{residual_attention_block.5} parent=1 // pred_fallthru
      _
    // Predicated region
    $region14: #{residual_attention_block.5} parent=1 // pred_check
      _
    $region15: #{residual_attention_block.5} parent=1 // pred_check_branch
      %26 = sbr.rel (0) target = $region17
    $region16: #{residual_attention_block.5} parent=1 // pred_region
      _
    $region17: #{residual_attention_block.5} parent=1 // pred_fallthru
      _
    // Predicated region
    $region18: #{residual_attention_block.5} parent=1 // pred_check
      _
    $region19: #{residual_attention_block.5} parent=1 // pred_check_branch
      %28 = sbr.rel (0) target = $region21
    $region20: #{residual_attention_block.5} parent=1 // pred_region
      _
    $region21: #{residual_attention_block.5} parent=1 // pred_fallthru
      _
    // Predicated region
    $region22: #{residual_attention_block.5} parent=1 // pred_check
      _
    $region23: #{residual_attention_block.5} parent=1 // pred_check_branch
      %30 = sbr.rel (0) target = $region25
    $region24: #{residual_attention_block.5} parent=1 // pred_region
      _
    $region25: #{residual_attention_block.5} parent=1 // pred_fallthru
      _
    // Predicated region
    $region26: #{residual_attention_block.5} parent=1 // pred_check
      _
    $region27: #{residual_attention_block.5} parent=1 // pred_check_branch
      %32 = sbr.rel (0) target = $region29
    $region28: #{residual_attention_block.5} parent=1 // pred_region
      _
    $region29: #{residual_attention_block.5} parent=1 // pred_fallthru
      _
    // Predicated region
    $region30: #{residual_attention_block.5} parent=1 // pred_check
      _
    $region31: #{residual_attention_block.5} parent=1 // pred_check_branch
      %34 = sbr.rel (0) target = $region33
    $region32: #{residual_attention_block.5} parent=1 // pred_region
      _
    $region33: #{residual_attention_block.5} parent=1 // pred_fallthru
      _
    // Predicated region
    $region34: #{residual_attention_block.5} parent=1 // pred_check
      _
    $region35: #{residual_attention_block.5} parent=1 // pred_check_branch
      %36 = sbr.rel (0) target = $region37
    $region36: #{residual_attention_block.5} parent=1 // pred_region
      _
    $region37: #{residual_attention_block.5} parent=1 // pred_fallthru
      _
    // Predicated region
    $region38: #{residual_attention_block.5} parent=1 // pred_check
      _
    $region39: #{residual_attention_block.5} parent=1 // pred_check_branch
      %38 = sbr.rel (0) target = $region41
    $region40: #{residual_attention_block.5} parent=1 // pred_region
      _
    $region41: #{residual_attention_block.5} parent=1 // pred_fallthru
      _
    // Predicated region
    $region42: #{residual_attention_block.5} parent=1 // pred_check
      _
    $region43: #{residual_attention_block.5} parent=1 // pred_check_branch
      %40 = sbr.rel (0) target = $region45
    $region44: #{residual_attention_block.5} parent=1 // pred_region
      _
    $region45: #{residual_attention_block.5} parent=1 // pred_fallthru
      _
    // Predicated region
    $region46: #{residual_attention_block.5} parent=1 // pred_check
      _
    $region47: #{residual_attention_block.5} parent=1 // pred_check_branch
      %42 = sbr.rel (0) target = $region49
    $region48: #{residual_attention_block.5} parent=1 // pred_region
      _
    $region49: #{residual_attention_block.5} parent=1 // pred_fallthru
      _
    // Predicated region
    $region50: #{residual_attention_block.5} parent=1 // pred_check
      _
    $region51: #{residual_attention_block.5} parent=1 // pred_check_branch
      %44 = sbr.rel (0) target = $region53
    $region52: #{residual_attention_block.5} parent=1 // pred_region
      _
    $region53: #{residual_attention_block.5} parent=1 // pred_fallthru
      _
    %v46 = vld [vmem:[%s0] sm:$0xff]
    %v47 = vld [vmem:[%s0 + $0x8] sm:$0xff]
    %v48 = vld [vmem:[%s0 + $0x10] sm:$0xff]
    %v49 = vld [vmem:[%s0 + $0x18] sm:$0xff]
    %v50 = vld [vmem:[%s0 + $0x20] sm:$0xff]
    %v51 = vld [vmem:[%s0 + $0x28] sm:$0xff]
    %v52 = vld [vmem:[%s0 + $0x30] sm:$0xff]
    %v53 = vld [vmem:[%s0 + $0x38] sm:$0xff]
    %v54 = vld [vmem:[%s0 + $0x40] sm:$0xff]
    %v55 = vld [vmem:[%s0 + $0x48] sm:$0xff]
    %v56 = vld [vmem:[%s0 + $0x50] sm:$0xff]
    %v57 = vld [vmem:[%s0 + $0x58] sm:$0xff]
    %v58 = vld [vmem:[%s0 + $0x60] sm:$0xff]
    %v59 = vld [vmem:[%s0 + $0x68] sm:$0xff]
    %v60 = vld [vmem:[%s0 + $0x70] sm:$0xff]
    %v61 = vld [vmem:[%s0 + $0x78] sm:$0xff]
    %v62 = vld [vmem:[%s0 + $0x80] sm:$0xff]
    %s63 = smul.u32 0, 136
    %v64 = vlaneseq
    %v65 = vshrl.u32 %v64, 7
    %v66 = vadd.s32 %v65, 8
    %v67 = vadd.s32 %v65, 16
    %v68 = vadd.s32 %v65, 24
    %v69 = vadd.s32 %v65, 32
    %v70 = vadd.s32 %v65, 40
    %v71 = vadd.s32 %v65, 48
    %v72 = vadd.s32 %v65, 56
    %v73 = vadd.s32 %v65, 64
    %v74 = vadd.s32 %v65, 72
    %v75 = vadd.s32 %v65, 80
    %v76 = vadd.s32 %v65, 88
    %v77 = vadd.s32 %v65, 96
    %v78 = vadd.s32 %v65, 104
    %v79 = vadd.s32 %v65, 112
    %v80 = vadd.s32 %v65, 120
    %v81 = vadd.s32 %v65, 128
    %v82 = vstv %s63
    %v83 = vadd.s32 %v82, %v65
    %v84 = vadd.s32 %v82, %v66
    %v85 = vadd.s32 %v82, %v67
    %v86 = vadd.s32 %v82, %v68
    %v87 = vadd.s32 %v82, %v69
    %v88 = vadd.s32 %v82, %v70
    %v89 = vadd.s32 %v82, %v71
    %v90 = vadd.s32 %v82, %v72
    %v91 = vadd.s32 %v82, %v73
    %v92 = vadd.s32 %v82, %v74
    %v93 = vadd.s32 %v82, %v75
    %v94 = vadd.s32 %v82, %v76
    %v95 = vadd.s32 %v82, %v77
    %v96 = vadd.s32 %v82, %v78
    %v97 = vadd.s32 %v82, %v79
    %v98 = vadd.s32 %v82, %v80
    %v99 = vadd.s32 %v82, %v81
    %vm100 = vcmp.lt.s32.totalorder %v83, 0
    %v101 = vsub.s32 0, %v83
    %v102 = vsel %vm100, %v101, %v83
    %v103 = vshrl.u32 %v102, 2
    %v104 = vand.u32 %v102, 3
    %v105 = vsub.s32 0, %v104
    %v106 = vsel %vm100, %v105, %v104
    %vm107 = vcmp.lt.s32.totalorder %v84, 0
    %v108 = vsub.s32 0, %v84
    %v109 = vsel %vm107, %v108, %v84
    %v110 = vshrl.u32 %v109, 2
    %v111 = vand.u32 %v109, 3
    %v112 = vsub.s32 0, %v111
    %v113 = vsel %vm107, %v112, %v111
    %vm114 = vcmp.lt.s32.totalorder %v85, 0
    %v115 = vsub.s32 0, %v85
    %v116 = vsel %vm114, %v115, %v85
    %v117 = vshrl.u32 %v116, 2
    %v118 = vand.u32 %v116, 3
    %v119 = vsub.s32 0, %v118
    %v120 = vsel %vm114, %v119, %v118
    %vm121 = vcmp.lt.s32.totalorder %v86, 0
    %v122 = vsub.s32 0, %v86
    %v123 = vsel %vm121, %v122, %v86
    %v124 = vshrl.u32 %v123, 2
    %v125 = vand.u32 %v123, 3
    %v126 = vsub.s32 0, %v125
    %v127 = vsel %vm121, %v126, %v125
    %vm128 = vcmp.lt.s32.totalorder %v87, 0
    %v129 = vsub.s32 0, %v87
    %v130 = vsel %vm128, %v129, %v87
    %v131 = vshrl.u32 %v130, 2
    %v132 = vand.u32 %v130, 3
    %v133 = vsub.s32 0, %v132
    %v134 = vsel %vm128, %v133, %v132
    %vm135 = vcmp.lt.s32.totalorder %v88, 0
    %v136 = vsub.s32 0, %v88
    %v137 = vsel %vm135, %v136, %v88
    %v138 = vshrl.u32 %v137, 2
    %v139 = vand.u32 %v137, 3
    %v140 = vsub.s32 0, %v139
    %v141 = vsel %vm135, %v140, %v139
    %vm142 = vcmp.lt.s32.totalorder %v89, 0
    %v143 = vsub.s32 0, %v89
    %v144 = vsel %vm142, %v143, %v89
    %v145 = vshrl.u32 %v144, 2
    %v146 = vand.u32 %v144, 3
    %v147 = vsub.s32 0, %v146
    %v148 = vsel %vm142, %v147, %v146
    %vm149 = vcmp.lt.s32.totalorder %v90, 0
    %v150 = vsub.s32 0, %v90
    %v151 = vsel %vm149, %v150, %v90
    %v152 = vshrl.u32 %v151, 2
    %v153 = vand.u32 %v151, 3
    %v154 = vsub.s32 0, %v153
    %v155 = vsel %vm149, %v154, %v153
    %vm156 = vcmp.lt.s32.totalorder %v91, 0
    %v157 = vsub.s32 0, %v91
    %v158 = vsel %vm156, %v157, %v91
    %v159 = vshrl.u32 %v158, 2
    %v160 = vand.u32 %v158, 3
    %v161 = vsub.s32 0, %v160
    %v162 = vsel %vm156, %v161, %v160
    %vm163 = vcmp.lt.s32.totalorder %v92, 0
    %v164 = vsub.s32 0, %v92
    %v165 = vsel %vm163, %v164, %v92
    %v166 = vshrl.u32 %v165, 2
    %v167 = vand.u32 %v165, 3
    %v168 = vsub.s32 0, %v167
    %v169 = vsel %vm163, %v168, %v167
    %vm170 = vcmp.lt.s32.totalorder %v93, 0
    %v171 = vsub.s32 0, %v93
    %v172 = vsel %vm170, %v171, %v93
    %v173 = vshrl.u32 %v172, 2
    %v174 = vand.u32 %v172, 3
    %v175 = vsub.s32 0, %v174
    %v176 = vsel %vm170, %v175, %v174
    %vm177 = vcmp.lt.s32.totalorder %v94, 0
    %v178 = vsub.s32 0, %v94
    %v179 = vsel %vm177, %v178, %v94
    %v180 = vshrl.u32 %v179, 2
    %v181 = vand.u32 %v179, 3
    %v182 = vsub.s32 0, %v181
    %v183 = vsel %vm177, %v182, %v181
    %vm184 = vcmp.lt.s32.totalorder %v95, 0
    %v185 = vsub.s32 0, %v95
    %v186 = vsel %vm184, %v185, %v95
    %v187 = vshrl.u32 %v186, 2
    %v188 = vand.u32 %v186, 3
    %v189 = vsub.s32 0, %v188
    %v190 = vsel %vm184, %v189, %v188
    %vm191 = vcmp.lt.s32.totalorder %v96, 0
    %v192 = vsub.s32 0, %v96
    %v193 = vsel %vm191, %v192, %v96
    %v194 = vshrl.u32 %v193, 2
    %v195 = vand.u32 %v193, 3
    %v196 = vsub.s32 0, %v195
    %v197 = vsel %vm191, %v196, %v195
    %vm198 = vcmp.lt.s32.totalorder %v97, 0
    %v199 = vsub.s32 0, %v97
    %v200 = vsel %vm198, %v199, %v97
    %v201 = vshrl.u32 %v200, 2
    %v202 = vand.u32 %v200, 3
    %v203 = vsub.s32 0, %v202
    %v204 = vsel %vm198, %v203, %v202
    %vm205 = vcmp.lt.s32.totalorder %v98, 0
    %v206 = vsub.s32 0, %v98
    %v207 = vsel %vm205, %v206, %v98
    %v208 = vshrl.u32 %v207, 2
    %v209 = vand.u32 %v207, 3
    %v210 = vsub.s32 0, %v209
    %v211 = vsel %vm205, %v210, %v209
    %vm212 = vcmp.lt.s32.totalorder %v99, 0
    %v213 = vsub.s32 0, %v99
    %v214 = vsel %vm212, %v213, %v99
    %v215 = vshrl.u32 %v214, 2
    %v216 = vand.u32 %v214, 3
    %v217 = vsub.s32 0, %v216
    %v218 = vsel %vm212, %v217, %v216
    %vm219 = vcmp.ne.s32.totalorder %v106, 0
    %vm220 = vcmp.ne.s32.totalorder %v113, 0
    %vm221 = vcmp.ne.s32.totalorder %v120, 0
    %vm222 = vcmp.ne.s32.totalorder %v127, 0
    %vm223 = vcmp.ne.s32.totalorder %v134, 0
    %vm224 = vcmp.ne.s32.totalorder %v141, 0
    %vm225 = vcmp.ne.s32.totalorder %v148, 0
    %vm226 = vcmp.ne.s32.totalorder %v155, 0
    %vm227 = vcmp.ne.s32.totalorder %v162, 0
    %vm228 = vcmp.ne.s32.totalorder %v169, 0
    %vm229 = vcmp.ne.s32.totalorder %v176, 0
    %vm230 = vcmp.ne.s32.totalorder %v183, 0
    %vm231 = vcmp.ne.s32.totalorder %v190, 0
    %vm232 = vcmp.ne.s32.totalorder %v197, 0
    %vm233 = vcmp.ne.s32.totalorder %v204, 0
    %vm234 = vcmp.ne.s32.totalorder %v211, 0
    %vm235 = vcmp.ne.s32.totalorder %v218, 0
    %vm236 = vcmp.lt.s32.totalorder %v106, 0
    %vm237 = vcmp.lt.s32.totalorder %v113, 0
    %vm238 = vcmp.lt.s32.totalorder %v120, 0
    %vm239 = vcmp.lt.s32.totalorder %v127, 0
    %vm240 = vcmp.lt.s32.totalorder %v134, 0
    %vm241 = vcmp.lt.s32.totalorder %v141, 0
    %vm242 = vcmp.lt.s32.totalorder %v148, 0
    %vm243 = vcmp.lt.s32.totalorder %v155, 0
    %vm244 = vcmp.lt.s32.totalorder %v162, 0
    %vm245 = vcmp.lt.s32.totalorder %v169, 0
    %vm246 = vcmp.lt.s32.totalorder %v176, 0
    %vm247 = vcmp.lt.s32.totalorder %v183, 0
    %vm248 = vcmp.lt.s32.totalorder %v190, 0
    %vm249 = vcmp.lt.s32.totalorder %v197, 0
    %vm250 = vcmp.lt.s32.totalorder %v204, 0
    %vm251 = vcmp.lt.s32.totalorder %v211, 0
    %vm252 = vcmp.lt.s32.totalorder %v218, 0
    %vm253 = vmand %vm236, %vm219
    %vm254 = vmand %vm237, %vm220
    %vm255 = vmand %vm238, %vm221
    %vm256 = vmand %vm239, %vm222
    %vm257 = vmand %vm240, %vm223
    %vm258 = vmand %vm241, %vm224
    %vm259 = vmand %vm242, %vm225
    %vm260 = vmand %vm243, %vm226
    %vm261 = vmand %vm244, %vm227
    %vm262 = vmand %vm245, %vm228
    %vm263 = vmand %vm246, %vm229
    %vm264 = vmand %vm247, %vm230
    %vm265 = vmand %vm248, %vm231
    %vm266 = vmand %vm249, %vm232
    %vm267 = vmand %vm250, %vm233
    %vm268 = vmand %vm251, %vm234
    %vm269 = vmand %vm252, %vm235
    %v270 = vadd.s32 %v106, 4
    %v271 = vadd.s32 %v113, 4
    %v272 = vadd.s32 %v120, 4
    %v273 = vadd.s32 %v127, 4
    %v274 = vadd.s32 %v134, 4
    %v275 = vadd.s32 %v141, 4
    %v276 = vadd.s32 %v148, 4
    %v277 = vadd.s32 %v155, 4
    %v278 = vadd.s32 %v162, 4
    %v279 = vadd.s32 %v169, 4
    %v280 = vadd.s32 %v176, 4
    %v281 = vadd.s32 %v183, 4
    %v282 = vadd.s32 %v190, 4
    %v283 = vadd.s32 %v197, 4
    %v284 = vadd.s32 %v204, 4
    %v285 = vadd.s32 %v211, 4
    %v286 = vadd.s32 %v218, 4
    %v287 = vsel %vm253, %v270, %v106
    %v288 = vsel %vm254, %v271, %v113
    %v289 = vsel %vm255, %v272, %v120
    %v290 = vsel %vm256, %v273, %v127
    %v291 = vsel %vm257, %v274, %v134
    %v292 = vsel %vm258, %v275, %v141
    %v293 = vsel %vm259, %v276, %v148
    %v294 = vsel %vm260, %v277, %v155
    %v295 = vsel %vm261, %v278, %v162
    %v296 = vsel %vm262, %v279, %v169
    %v297 = vsel %vm263, %v280, %v176
    %v298 = vsel %vm264, %v281, %v183
    %v299 = vsel %vm265, %v282, %v190
    %v300 = vsel %vm266, %v283, %v197
    %v301 = vsel %vm267, %v284, %v204
    %v302 = vsel %vm268, %v285, %v211
    %v303 = vsel %vm269, %v286, %v218
    %v304 = vpack.c.bf16 %v47, %v46
    %v305 = vpack.c.bf16 %v49, %v48
    %v306 = vpack.c.bf16 %v51, %v50
    %v307 = vpack.c.bf16 %v53, %v52
    %v308 = vpack.c.bf16 %v55, %v54
    %v309 = vpack.c.bf16 %v57, %v56
    %v310 = vpack.c.bf16 %v59, %v58
    %v311 = vpack.c.bf16 %v61, %v60
    %v312 = vpack.c.bf16 %v62, %v62
    %v313 = vld [vmem:[%s1] sm:$0xf]
    %v314 = vld [vmem:[%s1 + $0x4] sm:$0xf]
    %v315 = vld [vmem:[%s1 + $0x8] sm:$0xf]
    %v316 = vld [vmem:[%s1 + $0xc] sm:$0xf]
    %v317 = vld [vmem:[%s2] sm:$0x1]
    %v319 = vperm.slane %v317, 0
    %v325 = vunpack.c.l.b16 %v313
    %v326 = vunpack.c.l.b16 %v314
    %v327 = vunpack.c.l.b16 %v315
    %v328 = vunpack.c.l.b16 %v316
    %v329 = vpack.c.b16 %v326, %v325
    %v330 = vpack.c.b16 %v328, %v327
    %vm333 = vcmask 261120
    %v335 = vsel %vm333, %v304, 0
    %v338 = vsel %vm333, %v305, 0
    %v341 = vsel %vm333, %v306, 0
    %v344 = vsel %vm333, %v307, 0
    %v347 = vsel %vm333, %v308, 0
    %v350 = vsel %vm333, %v309, 0
    %v353 = vsel %vm333, %v310, 0
    %v356 = vsel %vm333, %v311, 0
    %v359 = vsel %vm333, %v312, 0
    %361 = vmatpush.bf16.msra.mxu0 0
    %362 = vmatpush.bf16.msra.mxu0 0
    %363 = vmatpush.bf16.msra.mxu0 0
    %364 = vmatpush.bf16.msra.mxu0 0
    %365 = vmatpush.bf16.msra.mxu0 0
    %366 = vmatpush.bf16.msra.mxu0 0
    %367 = vmatpush.bf16.msra.mxu0 %v330
    %368 = vmatpush.bf16.msra.mxu0 %v329
    %369 = vmatmul.bf16.gmra.mxu0 %v335
    %v370 = vpop.f32.mrf.mxu0
    %v371 = vadd.f32 %v319, %v370
    %v372 = vpop.f32.mrf.mxu0
    %v373 = vadd.f32 %v319, %v372
    %374 = vmatmul.bf16.gmra.mxu0 %v338
    %v375 = vpop.f32.mrf.mxu0
    %v376 = vadd.f32 %v319, %v375
    %v377 = vpop.f32.mrf.mxu0
    %v378 = vadd.f32 %v319, %v377
    %379 = vmatmul.bf16.gmra.mxu0 %v341
    %v380 = vpop.f32.mrf.mxu0
    %v381 = vadd.f32 %v319, %v380
    %v382 = vpop.f32.mrf.mxu0
    %v383 = vadd.f32 %v319, %v382
    %384 = vmatmul.bf16.gmra.mxu0 %v344
    %v385 = vpop.f32.mrf.mxu0
    %v386 = vadd.f32 %v319, %v385
    %v387 = vpop.f32.mrf.mxu0
    %v388 = vadd.f32 %v319, %v387
    %389 = vmatmul.bf16.gmra.mxu0 %v347
    %v390 = vpop.f32.mrf.mxu0
    %v391 = vadd.f32 %v319, %v390
    %v392 = vpop.f32.mrf.mxu0
    %v393 = vadd.f32 %v319, %v392
    %394 = vmatmul.bf16.gmra.mxu0 %v350
    %v395 = vpop.f32.mrf.mxu0
    %v396 = vadd.f32 %v319, %v395
    %v397 = vpop.f32.mrf.mxu0
    %v398 = vadd.f32 %v319, %v397
    %399 = vmatmul.bf16.gmra.mxu0 %v353
    %v400 = vpop.f32.mrf.mxu0
    %v401 = vadd.f32 %v319, %v400
    %v402 = vpop.f32.mrf.mxu0
    %v403 = vadd.f32 %v319, %v402
    %404 = vmatmul.bf16.gmra.mxu0 %v356
    %v405 = vpop.f32.mrf.mxu0
    %v406 = vadd.f32 %v319, %v405
    %v407 = vpop.f32.mrf.mxu0
    %v408 = vadd.f32 %v319, %v407
    %409 = vmatmul.bf16.gmra.mxu0 %v359
    %v410 = vpop.f32.mrf.mxu0
    %v411 = vadd.f32 %v319, %v410
    %v412 = vpop.f32.mrf.mxu0
    %413 = vdwg.mxu0
    %v414 = vld [vmem:[%s3] sm:$0x7]
    %v415 = vld [vmem:[%s4] sm:$0x1]
    %vm433 = vcmask 1040384
    %v434 = vrot.slane %v371, 7
    %v435 = vrot.slane %v373, 7
    %v436 = vsel %vm433, %v434, %v435
    %v437 = vrot.slane %v376, 7
    %v438 = vsel %vm433, %v435, %v437
    %v439 = vrot.slane %v378, 7
    %v440 = vsel %vm433, %v437, %v439
    %v441 = vrot.slane %v381, 7
    %v442 = vsel %vm433, %v439, %v441
    %v443 = vrot.slane %v383, 7
    %v444 = vsel %vm433, %v441, %v443
    %v445 = vrot.slane %v386, 7
    %v446 = vsel %vm433, %v443, %v445
    %v447 = vrot.slane %v388, 7
    %v448 = vsel %vm433, %v445, %v447
    %v449 = vrot.slane %v391, 7
    %v450 = vsel %vm433, %v447, %v449
    %v451 = vrot.slane %v393, 7
    %v452 = vsel %vm433, %v449, %v451
    %v453 = vrot.slane %v396, 7
    %v454 = vsel %vm433, %v451, %v453
    %v455 = vrot.slane %v398, 7
    %v456 = vsel %vm433, %v453, %v455
    %v457 = vrot.slane %v401, 7
    %v458 = vsel %vm433, %v455, %v457
    %v459 = vrot.slane %v403, 7
    %v460 = vsel %vm433, %v457, %v459
    %v461 = vrot.slane %v406, 7
    %v462 = vsel %vm433, %v459, %v461
    %v463 = vrot.slane %v408, 7
    %v464 = vsel %vm433, %v461, %v463
    %v465 = vrot.slane %v411, 7
    %v466 = vsel %vm433, %v463, %v465
    %v484 = vsel %vm433, 0.0, %v434
    %vm485 = vcmask 1046528
    %v486 = vrot.slane %v371, 1
    %v487 = vrot.slane %v373, 1
    %v488 = vsel %vm485, %v486, %v487
    %v489 = vrot.slane %v376, 1
    %v490 = vsel %vm485, %v487, %v489
    %v491 = vrot.slane %v378, 1
    %v492 = vsel %vm485, %v489, %v491
    %v493 = vrot.slane %v381, 1
    %v494 = vsel %vm485, %v491, %v493
    %v495 = vrot.slane %v383, 1
    %v496 = vsel %vm485, %v493, %v495
    %v497 = vrot.slane %v386, 1
    %v498 = vsel %vm485, %v495, %v497
    %v499 = vrot.slane %v388, 1
    %v500 = vsel %vm485, %v497, %v499
    %v501 = vrot.slane %v391, 1
    %v502 = vsel %vm485, %v499, %v501
    %v503 = vrot.slane %v393, 1
    %v504 = vsel %vm485, %v501, %v503
    %v505 = vrot.slane %v396, 1
    %v506 = vsel %vm485, %v503, %v505
    %v507 = vrot.slane %v398, 1
    %v508 = vsel %vm485, %v505, %v507
    %v509 = vrot.slane %v401, 1
    %v510 = vsel %vm485, %v507, %v509
    %v511 = vrot.slane %v403, 1
    %v512 = vsel %vm485, %v509, %v511
    %v513 = vrot.slane %v406, 1
    %v514 = vsel %vm485, %v511, %v513
    %v515 = vrot.slane %v408, 1
    %v516 = vsel %vm485, %v513, %v515
    %v517 = vrot.slane %v411, 1
    %v518 = vsel %vm485, %v515, %v517
    %v536 = vsel %vm485, %v517, 0.0
    %vm537 = vcmp.eq.s32.totalorder %v287, 0
    %vm538 = vcmp.eq.s32.totalorder %v288, 0
    %vm539 = vcmp.eq.s32.totalorder %v289, 0
    %vm540 = vcmp.eq.s32.totalorder %v290, 0
    %vm541 = vcmp.eq.s32.totalorder %v291, 0
    %vm542 = vcmp.eq.s32.totalorder %v292, 0
    %vm543 = vcmp.eq.s32.totalorder %v293, 0
    %vm544 = vcmp.eq.s32.totalorder %v294, 0
    %vm545 = vcmp.eq.s32.totalorder %v295, 0
    %vm546 = vcmp.eq.s32.totalorder %v296, 0
    %vm547 = vcmp.eq.s32.totalorder %v297, 0
    %vm548 = vcmp.eq.s32.totalorder %v298, 0
    %vm549 = vcmp.eq.s32.totalorder %v299, 0
    %vm550 = vcmp.eq.s32.totalorder %v300, 0
    %vm551 = vcmp.eq.s32.totalorder %v301, 0
    %vm552 = vcmp.eq.s32.totalorder %v302, 0
    %vm553 = vcmp.eq.s32.totalorder %v303, 0
    %v554 = vsel %vm537, 1, 0
    %v555 = vsel %vm538, 1, 0
    %v556 = vsel %vm539, 1, 0
    %v557 = vsel %vm540, 1, 0
    %v558 = vsel %vm541, 1, 0
    %v559 = vsel %vm542, 1, 0
    %v560 = vsel %vm543, 1, 0
    %v561 = vsel %vm544, 1, 0
    %v562 = vsel %vm545, 1, 0
    %v563 = vsel %vm546, 1, 0
    %v564 = vsel %vm547, 1, 0
    %v565 = vsel %vm548, 1, 0
    %v566 = vsel %vm549, 1, 0
    %v567 = vsel %vm550, 1, 0
    %v568 = vsel %vm551, 1, 0
    %v569 = vsel %vm552, 1, 0
    %v570 = vsel %vm553, 1, 0
    %vm571 = vcmp.eq.s32.totalorder %v554, 1
    %vm572 = vcmp.eq.s32.totalorder %v555, 1
    %vm573 = vcmp.eq.s32.totalorder %v556, 1
    %vm574 = vcmp.eq.s32.totalorder %v557, 1
    %vm575 = vcmp.eq.s32.totalorder %v558, 1
    %vm576 = vcmp.eq.s32.totalorder %v559, 1
    %vm577 = vcmp.eq.s32.totalorder %v560, 1
    %vm578 = vcmp.eq.s32.totalorder %v561, 1
    %vm579 = vcmp.eq.s32.totalorder %v562, 1
    %vm580 = vcmp.eq.s32.totalorder %v563, 1
    %vm581 = vcmp.eq.s32.totalorder %v564, 1
    %vm582 = vcmp.eq.s32.totalorder %v565, 1
    %vm583 = vcmp.eq.s32.totalorder %v566, 1
    %vm584 = vcmp.eq.s32.totalorder %v567, 1
    %vm585 = vcmp.eq.s32.totalorder %v568, 1
    %vm586 = vcmp.eq.s32.totalorder %v569, 1
    %vm587 = vcmp.eq.s32.totalorder %v570, 1
    %v588 = vsel %vm571, 0.0, %v484
    %v589 = vsel %vm572, 0.0, %v436
    %v590 = vsel %vm573, 0.0, %v438
    %v591 = vsel %vm574, 0.0, %v440
    %v592 = vsel %vm575, 0.0, %v442
    %v593 = vsel %vm576, 0.0, %v444
    %v594 = vsel %vm577, 0.0, %v446
    %v595 = vsel %vm578, 0.0, %v448
    %v596 = vsel %vm579, 0.0, %v450
    %v597 = vsel %vm580, 0.0, %v452
    %v598 = vsel %vm581, 0.0, %v454
    %v599 = vsel %vm582, 0.0, %v456
    %v600 = vsel %vm583, 0.0, %v458
    %v601 = vsel %vm584, 0.0, %v460
    %v602 = vsel %vm585, 0.0, %v462
    %v603 = vsel %vm586, 0.0, %v464
    %v604 = vsel %vm587, 0.0, %v466
    %vm605 = vcmp.eq.s32.totalorder %v287, 3
    %vm606 = vcmp.eq.s32.totalorder %v288, 3
    %vm607 = vcmp.eq.s32.totalorder %v289, 3
    %vm608 = vcmp.eq.s32.totalorder %v290, 3
    %vm609 = vcmp.eq.s32.totalorder %v291, 3
    %vm610 = vcmp.eq.s32.totalorder %v292, 3
    %vm611 = vcmp.eq.s32.totalorder %v293, 3
    %vm612 = vcmp.eq.s32.totalorder %v294, 3
    %vm613 = vcmp.eq.s32.totalorder %v295, 3
    %vm614 = vcmp.eq.s32.totalorder %v296, 3
    %vm615 = vcmp.eq.s32.totalorder %v297, 3
    %vm616 = vcmp.eq.s32.totalorder %v298, 3
    %vm617 = vcmp.eq.s32.totalorder %v299, 3
    %vm618 = vcmp.eq.s32.totalorder %v300, 3
    %vm619 = vcmp.eq.s32.totalorder %v301, 3
    %vm620 = vcmp.eq.s32.totalorder %v302, 3
    %vm621 = vcmp.eq.s32.totalorder %v303, 3
    %v622 = vsel %vm605, 1, 0
    %v623 = vsel %vm606, 1, 0
    %v624 = vsel %vm607, 1, 0
    %v625 = vsel %vm608, 1, 0
    %v626 = vsel %vm609, 1, 0
    %v627 = vsel %vm610, 1, 0
    %v628 = vsel %vm611, 1, 0
    %v629 = vsel %vm612, 1, 0
    %v630 = vsel %vm613, 1, 0
    %v631 = vsel %vm614, 1, 0
    %v632 = vsel %vm615, 1, 0
    %v633 = vsel %vm616, 1, 0
    %v634 = vsel %vm617, 1, 0
    %v635 = vsel %vm618, 1, 0
    %v636 = vsel %vm619, 1, 0
    %v637 = vsel %vm620, 1, 0
    %v638 = vsel %vm621, 1, 0
    %vm639 = vcmp.eq.s32.totalorder %v622, 1
    %vm640 = vcmp.eq.s32.totalorder %v623, 1
    %vm641 = vcmp.eq.s32.totalorder %v624, 1
    %vm642 = vcmp.eq.s32.totalorder %v625, 1
    %vm643 = vcmp.eq.s32.totalorder %v626, 1
    %vm644 = vcmp.eq.s32.totalorder %v627, 1
    %vm645 = vcmp.eq.s32.totalorder %v628, 1
    %vm646 = vcmp.eq.s32.totalorder %v629, 1
    %vm647 = vcmp.eq.s32.totalorder %v630, 1
    %vm648 = vcmp.eq.s32.totalorder %v631, 1
    %vm649 = vcmp.eq.s32.totalorder %v632, 1
    %vm650 = vcmp.eq.s32.totalorder %v633, 1
    %vm651 = vcmp.eq.s32.totalorder %v634, 1
    %vm652 = vcmp.eq.s32.totalorder %v635, 1
    %vm653 = vcmp.eq.s32.totalorder %v636, 1
    %vm654 = vcmp.eq.s32.totalorder %v637, 1
    %vm655 = vcmp.eq.s32.totalorder %v638, 1
    %v656 = vsel %vm639, 0.0, %v488
    %v657 = vsel %vm640, 0.0, %v490
    %v658 = vsel %vm641, 0.0, %v492
    %v659 = vsel %vm642, 0.0, %v494
    %v660 = vsel %vm643, 0.0, %v496
    %v661 = vsel %vm644, 0.0, %v498
    %v662 = vsel %vm645, 0.0, %v500
    %v663 = vsel %vm646, 0.0, %v502
    %v664 = vsel %vm647, 0.0, %v504
    %v665 = vsel %vm648, 0.0, %v506
    %v666 = vsel %vm649, 0.0, %v508
    %v667 = vsel %vm650, 0.0, %v510
    %v668 = vsel %vm651, 0.0, %v512
    %v669 = vsel %vm652, 0.0, %v514
    %v670 = vsel %vm653, 0.0, %v516
    %v671 = vsel %vm654, 0.0, %v518
    %v672 = vsel %vm655, 0.0, %v536
    %v673 = vperm.slane %v414, 0
    %v674 = vmul.f32 %v588, %v673
    %v675 = vmul.f32 %v589, %v673
    %v676 = vmul.f32 %v590, %v673
    %v677 = vmul.f32 %v591, %v673
    %v678 = vmul.f32 %v592, %v673
    %v679 = vmul.f32 %v593, %v673
    %v680 = vmul.f32 %v594, %v673
    %v681 = vmul.f32 %v595, %v673
    %v682 = vmul.f32 %v596, %v673
    %v683 = vmul.f32 %v597, %v673
    %v684 = vmul.f32 %v598, %v673
    %v685 = vmul.f32 %v599, %v673
    %v686 = vmul.f32 %v600, %v673
    %v687 = vmul.f32 %v601, %v673
    %v688 = vmul.f32 %v602, %v673
    %v689 = vmul.f32 %v603, %v673
    %v690 = vmul.f32 %v604, %v673
    %v691 = vperm.slane %v414, 1
    %v692 = vmul.f32 %v371, %v691
    %v693 = vmul.f32 %v373, %v691
    %v694 = vmul.f32 %v376, %v691
    %v695 = vmul.f32 %v378, %v691
    %v696 = vmul.f32 %v381, %v691
    %v697 = vmul.f32 %v383, %v691
    %v698 = vmul.f32 %v386, %v691
    %v699 = vmul.f32 %v388, %v691
    %v700 = vmul.f32 %v391, %v691
    %v701 = vmul.f32 %v393, %v691
    %v702 = vmul.f32 %v396, %v691
    %v703 = vmul.f32 %v398, %v691
    %v704 = vmul.f32 %v401, %v691
    %v705 = vmul.f32 %v403, %v691
    %v706 = vmul.f32 %v406, %v691
    %v707 = vmul.f32 %v408, %v691
    %v708 = vmul.f32 %v411, %v691
    %v709 = vadd.f32 %v674, %v692
    %v710 = vadd.f32 %v675, %v693
    %v711 = vadd.f32 %v676, %v694
    %v712 = vadd.f32 %v677, %v695
    %v713 = vadd.f32 %v678, %v696
    %v714 = vadd.f32 %v679, %v697
    %v715 = vadd.f32 %v680, %v698
    %v716 = vadd.f32 %v681, %v699
    %v717 = vadd.f32 %v682, %v700
    %v718 = vadd.f32 %v683, %v701
    %v719 = vadd.f32 %v684, %v702
    %v720 = vadd.f32 %v685, %v703
    %v721 = vadd.f32 %v686, %v704
    %v722 = vadd.f32 %v687, %v705
    %v723 = vadd.f32 %v688, %v706
    %v724 = vadd.f32 %v689, %v707
    %v725 = vadd.f32 %v690, %v708
    %v726 = vperm.slane %v414, 2
    %v727 = vmul.f32 %v656, %v726
    %v728 = vmul.f32 %v657, %v726
    %v729 = vmul.f32 %v658, %v726
    %v730 = vmul.f32 %v659, %v726
    %v731 = vmul.f32 %v660, %v726
    %v732 = vmul.f32 %v661, %v726
    %v733 = vmul.f32 %v662, %v726
    %v734 = vmul.f32 %v663, %v726
    %v735 = vmul.f32 %v664, %v726
    %v736 = vmul.f32 %v665, %v726
    %v737 = vmul.f32 %v666, %v726
    %v738 = vmul.f32 %v667, %v726
    %v739 = vmul.f32 %v668, %v726
    %v740 = vmul.f32 %v669, %v726
    %v741 = vmul.f32 %v670, %v726
    %v742 = vmul.f32 %v671, %v726
    %v743 = vmul.f32 %v672, %v726
    %v744 = vadd.f32 %v709, %v727
    %v745 = vadd.f32 %v710, %v728
    %v746 = vadd.f32 %v711, %v729
    %v747 = vadd.f32 %v712, %v730
    %v748 = vadd.f32 %v713, %v731
    %v749 = vadd.f32 %v714, %v732
    %v750 = vadd.f32 %v715, %v733
    %v751 = vadd.f32 %v716, %v734
    %v752 = vadd.f32 %v717, %v735
    %v753 = vadd.f32 %v718, %v736
    %v754 = vadd.f32 %v719, %v737
    %v755 = vadd.f32 %v720, %v738
    %v756 = vadd.f32 %v721, %v739
    %v757 = vadd.f32 %v722, %v740
    %v758 = vadd.f32 %v723, %v741
    %v759 = vadd.f32 %v724, %v742
    %v760 = vadd.f32 %v725, %v743
    %v762 = vperm.slane %v415, 0
    %v764 = vadd.f32 %v744, %v762
    %v765 = vadd.f32 %v745, %v762
    %v766 = vadd.f32 %v746, %v762
    %v767 = vadd.f32 %v747, %v762
    %v768 = vadd.f32 %v748, %v762
    %v769 = vadd.f32 %v749, %v762
    %v770 = vadd.f32 %v750, %v762
    %v771 = vadd.f32 %v751, %v762
    %v772 = vadd.f32 %v752, %v762
    %v773 = vadd.f32 %v753, %v762
    %v774 = vadd.f32 %v754, %v762
    %v775 = vadd.f32 %v755, %v762
    %v776 = vadd.f32 %v756, %v762
    %v777 = vadd.f32 %v757, %v762
    %v778 = vadd.f32 %v758, %v762
    %v779 = vadd.f32 %v759, %v762
    %v780 = vadd.f32 %v760, %v762
    %v781 = vpack.c.bf16 %v765, %v764
    %v782 = vpack.c.bf16 %v767, %v766
    %v783 = vpack.c.bf16 %v769, %v768
    %v784 = vpack.c.bf16 %v771, %v770
    %v785 = vpack.c.bf16 %v773, %v772
    %v786 = vpack.c.bf16 %v775, %v774
    %v787 = vpack.c.bf16 %v777, %v776
    %v788 = vpack.c.bf16 %v779, %v778
    %v789 = vpack.c.bf16 %v780, %v780
    %v790 = vld [vmem:[%s5] sm:$0xf]
    %v791 = vld [vmem:[%s5 + $0x4] sm:$0xf]
    %v792 = vld [vmem:[%s5 + $0x8] sm:$0xf]
    %v793 = vld [vmem:[%s5 + $0xc] sm:$0xf]
    %v794 = vld [vmem:[%s5 + $0x10] sm:$0xf]
    %v795 = vld [vmem:[%s5 + $0x14] sm:$0xf]
    %v796 = vld [vmem:[%s5 + $0x18] sm:$0xf]
    %v797 = vld [vmem:[%s5 + $0x1c] sm:$0xf]
    %v798 = vld [vmem:[%s5 + $0x20] sm:$0xf]
    %v799 = vld [vmem:[%s5 + $0x24] sm:$0xf]
    %v800 = vld [vmem:[%s5 + $0x28] sm:$0xf]
    %v801 = vld [vmem:[%s5 + $0x2c] sm:$0xf]
    %v802 = vld [vmem:[%s5 + $0x30] sm:$0xf]
    %v803 = vld [vmem:[%s5 + $0x34] sm:$0xf]
    %v804 = vld [vmem:[%s5 + $0x38] sm:$0xf]
    %v805 = vld [vmem:[%s5 + $0x3c] sm:$0xf]
    %v806 = vld [vmem:[%s6] sm:$0x1]
    %v808 = vperm.slane %v806, 0
    %v826 = vunpack.c.l.b16 %v790
    %v827 = vunpack.c.l.b16 %v791
    %v828 = vunpack.c.l.b16 %v792
    %v829 = vunpack.c.l.b16 %v793
    %v830 = vunpack.c.l.b16 %v794
    %v831 = vunpack.c.l.b16 %v795
    %v832 = vunpack.c.l.b16 %v796
    %v833 = vunpack.c.l.b16 %v797
    %v834 = vunpack.c.l.b16 %v798
    %v835 = vunpack.c.l.b16 %v799
    %v836 = vunpack.c.l.b16 %v800
    %v837 = vunpack.c.l.b16 %v801
    %v838 = vunpack.c.l.b16 %v802
    %v839 = vunpack.c.l.b16 %v803
    %v840 = vunpack.c.l.b16 %v804
    %v841 = vunpack.c.l.b16 %v805
    %v842 = vpack.c.b16 %v827, %v826
    %v843 = vpack.c.b16 %v829, %v828
    %v844 = vpack.c.b16 %v831, %v830
    %v845 = vpack.c.b16 %v833, %v832
    %v846 = vpack.c.b16 %v835, %v834
    %v847 = vpack.c.b16 %v837, %v836
    %v848 = vpack.c.b16 %v839, %v838
    %v849 = vpack.c.b16 %v841, %v840
    %858 = vmatpush.bf16.msra.mxu0 %v849
    %859 = vmatpush.bf16.msra.mxu0 %v848
    %860 = vmatpush.bf16.msra.mxu0 %v847
    %861 = vmatpush.bf16.msra.mxu0 %v846
    %862 = vmatpush.bf16.msra.mxu0 %v845
    %863 = vmatpush.bf16.msra.mxu0 %v844
    %864 = vmatpush.bf16.msra.mxu0 %v843
    %865 = vmatpush.bf16.msra.mxu0 %v842
    %866 = vmatmul.bf16.gmra.mxu0 %v781
    %v867 = vpop.f32.mrf.mxu0
    %v868 = vadd.f32 %v808, %v867
    %v869 = vpop.f32.mrf.mxu0
    %v870 = vadd.f32 %v808, %v869
    %871 = vmatmul.bf16.gmra.mxu0 %v782
    %v872 = vpop.f32.mrf.mxu0
    %v873 = vadd.f32 %v808, %v872
    %v874 = vpop.f32.mrf.mxu0
    %v875 = vadd.f32 %v808, %v874
    %876 = vmatmul.bf16.gmra.mxu0 %v783
    %v877 = vpop.f32.mrf.mxu0
    %v878 = vadd.f32 %v808, %v877
    %v879 = vpop.f32.mrf.mxu0
    %v880 = vadd.f32 %v808, %v879
    %881 = vmatmul.bf16.gmra.mxu0 %v784
    %v882 = vpop.f32.mrf.mxu0
    %v883 = vadd.f32 %v808, %v882
    %v884 = vpop.f32.mrf.mxu0
    %v885 = vadd.f32 %v808, %v884
    %886 = vmatmul.bf16.gmra.mxu0 %v785
    %v887 = vpop.f32.mrf.mxu0
    %v888 = vadd.f32 %v808, %v887
    %v889 = vpop.f32.mrf.mxu0
    %v890 = vadd.f32 %v808, %v889
    %891 = vmatmul.bf16.gmra.mxu0 %v786
    %v892 = vpop.f32.mrf.mxu0
    %v893 = vadd.f32 %v808, %v892
    %v894 = vpop.f32.mrf.mxu0
    %v895 = vadd.f32 %v808, %v894
    %896 = vmatmul.bf16.gmra.mxu0 %v787
    %v897 = vpop.f32.mrf.mxu0
    %v898 = vadd.f32 %v808, %v897
    %v899 = vpop.f32.mrf.mxu0
    %v900 = vadd.f32 %v808, %v899
    %901 = vmatmul.bf16.gmra.mxu0 %v788
    %v902 = vpop.f32.mrf.mxu0
    %v903 = vadd.f32 %v808, %v902
    %v904 = vpop.f32.mrf.mxu0
    %v905 = vadd.f32 %v808, %v904
    %906 = vmatmul.bf16.gmra.mxu0 %v789
    %v907 = vpop.f32.mrf.mxu0
    %v908 = vadd.f32 %v808, %v907
    %v909 = vpop.f32.mrf.mxu0
    %910 = vdwg.mxu0
    %vm911 = vcmp.ge.s32.totalorder %v83, 8
    %vm912 = vcmp.ge.s32.totalorder %v84, 8
    %vm913 = vcmp.ge.s32.totalorder %v85, 8
    %vm914 = vcmp.ge.s32.totalorder %v86, 8
    %vm915 = vcmp.ge.s32.totalorder %v87, 8
    %vm916 = vcmp.ge.s32.totalorder %v88, 8
    %vm917 = vcmp.ge.s32.totalorder %v89, 8
    %vm918 = vcmp.ge.s32.totalorder %v90, 8
    %vm919 = vcmp.ge.s32.totalorder %v91, 8
    %vm920 = vcmp.ge.s32.totalorder %v92, 8
    %vm921 = vcmp.ge.s32.totalorder %v93, 8
    %vm922 = vcmp.ge.s32.totalorder %v94, 8
    %vm923 = vcmp.ge.s32.totalorder %v95, 8
    %vm924 = vcmp.ge.s32.totalorder %v96, 8
    %vm925 = vcmp.ge.s32.totalorder %v97, 8
    %vm926 = vcmp.ge.s32.totalorder %v98, 8
    %vm927 = vcmp.ge.s32.totalorder %v99, 8
    %v928 = vsel %vm911, 1, 0
    %v929 = vsel %vm912, 1, 0
    %v930 = vsel %vm913, 1, 0
    %v931 = vsel %vm914, 1, 0
    %v932 = vsel %vm915, 1, 0
    %v933 = vsel %vm916, 1, 0
    %v934 = vsel %vm917, 1, 0
    %v935 = vsel %vm918, 1, 0
    %v936 = vsel %vm919, 1, 0
    %v937 = vsel %vm920, 1, 0
    %v938 = vsel %vm921, 1, 0
    %v939 = vsel %vm922, 1, 0
    %v940 = vsel %vm923, 1, 0
    %v941 = vsel %vm924, 1, 0
    %v942 = vsel %vm925, 1, 0
    %v943 = vsel %vm926, 1, 0
    %v944 = vsel %vm927, 1, 0
    %vm945 = vcmp.eq.s32.totalorder %v928, 1
    %vm946 = vcmp.eq.s32.totalorder %v929, 1
    %vm947 = vcmp.eq.s32.totalorder %v930, 1
    %vm948 = vcmp.eq.s32.totalorder %v931, 1
    %vm949 = vcmp.eq.s32.totalorder %v932, 1
    %vm950 = vcmp.eq.s32.totalorder %v933, 1
    %vm951 = vcmp.eq.s32.totalorder %v934, 1
    %vm952 = vcmp.eq.s32.totalorder %v935, 1
    %vm953 = vcmp.eq.s32.totalorder %v936, 1
    %vm954 = vcmp.eq.s32.totalorder %v937, 1
    %vm955 = vcmp.eq.s32.totalorder %v938, 1
    %vm956 = vcmp.eq.s32.totalorder %v939, 1
    %vm957 = vcmp.eq.s32.totalorder %v940, 1
    %vm958 = vcmp.eq.s32.totalorder %v941, 1
    %vm959 = vcmp.eq.s32.totalorder %v942, 1
    %vm960 = vcmp.eq.s32.totalorder %v943, 1
    %vm961 = vcmp.eq.s32.totalorder %v944, 1
    %v962 = vsel %vm945, %v868, 0.0
    %v963 = vsel %vm946, %v870, 0.0
    %v964 = vsel %vm947, %v873, 0.0
    %v965 = vsel %vm948, %v875, 0.0
    %v966 = vsel %vm949, %v878, 0.0
    %v967 = vsel %vm950, %v880, 0.0
    %v968 = vsel %vm951, %v883, 0.0
    %v969 = vsel %vm952, %v885, 0.0
    %v970 = vsel %vm953, %v888, 0.0
    %v971 = vsel %vm954, %v890, 0.0
    %v972 = vsel %vm955, %v893, 0.0
    %v973 = vsel %vm956, %v895, 0.0
    %v974 = vsel %vm957, %v898, 0.0
    %v975 = vsel %vm958, %v900, 0.0
    %v976 = vsel %vm959, %v903, 0.0
    %v977 = vsel %vm960, %v905, 0.0
    %v978 = vsel %vm961, %v908, 0.0
    %v979 = vadd.f32 %v46, %v962
    %v980 = vadd.f32 %v47, %v963
    %v981 = vadd.f32 %v48, %v964
    %v982 = vadd.f32 %v49, %v965
    %v983 = vadd.f32 %v50, %v966
    %v984 = vadd.f32 %v51, %v967
    %v985 = vadd.f32 %v52, %v968
    %v986 = vadd.f32 %v53, %v969
    %v987 = vadd.f32 %v54, %v970
    %v988 = vadd.f32 %v55, %v971
    %v989 = vadd.f32 %v56, %v972
    %v990 = vadd.f32 %v57, %v973
    %v991 = vadd.f32 %v58, %v974
    %v992 = vadd.f32 %v59, %v975
    %v993 = vadd.f32 %v60, %v976
    %v994 = vadd.f32 %v61, %v977
    %v995 = vadd.f32 %v62, %v978
    %v996 = vsel %vm333, %v979, 0.0
    %997 = vadd.xlane.f32.xlu0 %v996
    %v998 = vpop.xlane.xlu0 %997
    %v999 = vsel %vm333, %v980, 0.0
    %1000 = vadd.xlane.f32.xlu0 %v999
    %v1001 = vpop.xlane.xlu0 %1000
    %v1002 = vsel %vm333, %v981, 0.0
    %1003 = vadd.xlane.f32.xlu0 %v1002
    %v1004 = vpop.xlane.xlu0 %1003
    %v1005 = vsel %vm333, %v982, 0.0
    %1006 = vadd.xlane.f32.xlu0 %v1005
    %v1007 = vpop.xlane.xlu0 %1006
    %v1008 = vsel %vm333, %v983, 0.0
    %1009 = vadd.xlane.f32.xlu0 %v1008
    %v1010 = vpop.xlane.xlu0 %1009
    %v1011 = vsel %vm333, %v984, 0.0
    %1012 = vadd.xlane.f32.xlu0 %v1011
    %v1013 = vpop.xlane.xlu0 %1012
    %v1014 = vsel %vm333, %v985, 0.0
    %1015 = vadd.xlane.f32.xlu0 %v1014
    %v1016 = vpop.xlane.xlu0 %1015
    %v1017 = vsel %vm333, %v986, 0.0
    %1018 = vadd.xlane.f32.xlu0 %v1017
    %v1019 = vpop.xlane.xlu0 %1018
    %v1020 = vsel %vm333, %v987, 0.0
    %1021 = vadd.xlane.f32.xlu0 %v1020
    %v1022 = vpop.xlane.xlu0 %1021
    %v1023 = vsel %vm333, %v988, 0.0
    %1024 = vadd.xlane.f32.xlu0 %v1023
    %v1025 = vpop.xlane.xlu0 %1024
    %v1026 = vsel %vm333, %v989, 0.0
    %1027 = vadd.xlane.f32.xlu0 %v1026
    %v1028 = vpop.xlane.xlu0 %1027
    %v1029 = vsel %vm333, %v990, 0.0
    %1030 = vadd.xlane.f32.xlu0 %v1029
    %v1031 = vpop.xlane.xlu0 %1030
    %v1032 = vsel %vm333, %v991, 0.0
    %1033 = vadd.xlane.f32.xlu0 %v1032
    %v1034 = vpop.xlane.xlu0 %1033
    %v1035 = vsel %vm333, %v992, 0.0
    %1036 = vadd.xlane.f32.xlu0 %v1035
    %v1037 = vpop.xlane.xlu0 %1036
    %v1038 = vsel %vm333, %v993, 0.0
    %1039 = vadd.xlane.f32.xlu0 %v1038
    %v1040 = vpop.xlane.xlu0 %1039
    %v1041 = vsel %vm333, %v994, 0.0
    %1042 = vadd.xlane.f32.xlu0 %v1041
    %v1043 = vpop.xlane.xlu0 %1042
    %v1044 = vsel %vm333, %v995, 0.0
    %1045 = vadd.xlane.f32.xlu0 %v1044
    %v1046 = vpop.xlane.xlu0 %1045
    %v1047 = vrcp.pop 32.0
    %v1048 = vmul.f32 32.0, %v1047
    %v1049 = vsub.f32 1.0, %v1048
    %v1050 = vmul.f32 %v1047, %v1049
    %v1051 = vadd.f32 %v1047, %v1050
    %vm1052 = vweird.f32 %v1047
    %v1053 = vsel %vm1052, %v1047, %v1051
    %v1054 = vmul.f32 %v998, %v1053
    %v1055 = vmul.f32 %v1001, %v1053
    %v1056 = vmul.f32 %v1004, %v1053
    %v1057 = vmul.f32 %v1007, %v1053
    %v1058 = vmul.f32 %v1010, %v1053
    %v1059 = vmul.f32 %v1013, %v1053
    %v1060 = vmul.f32 %v1016, %v1053
    %v1061 = vmul.f32 %v1019, %v1053
    %v1062 = vmul.f32 %v1022, %v1053
    %v1063 = vmul.f32 %v1025, %v1053
    %v1064 = vmul.f32 %v1028, %v1053
    %v1065 = vmul.f32 %v1031, %v1053
    %v1066 = vmul.f32 %v1034, %v1053
    %v1067 = vmul.f32 %v1037, %v1053
    %v1068 = vmul.f32 %v1040, %v1053
    %v1069 = vmul.f32 %v1043, %v1053
    %v1070 = vmul.f32 %v1046, %v1053
    %v1071 = vsub.f32 %v979, %v1054
    %v1072 = vsub.f32 %v980, %v1055
    %v1073 = vsub.f32 %v981, %v1056
    %v1074 = vsub.f32 %v982, %v1057
    %v1075 = vsub.f32 %v983, %v1058
    %v1076 = vsub.f32 %v984, %v1059
    %v1077 = vsub.f32 %v985, %v1060
    %v1078 = vsub.f32 %v986, %v1061
    %v1079 = vsub.f32 %v987, %v1062
    %v1080 = vsub.f32 %v988, %v1063
    %v1081 = vsub.f32 %v989, %v1064
    %v1082 = vsub.f32 %v990, %v1065
    %v1083 = vsub.f32 %v991, %v1066
    %v1084 = vsub.f32 %v992, %v1067
    %v1085 = vsub.f32 %v993, %v1068
    %v1086 = vsub.f32 %v994, %v1069
    %v1087 = vsub.f32 %v995, %v1070
    %v1088 = vmul.f32 %v1071, %v1071
    %v1089 = vmul.f32 %v1072, %v1072
    %v1090 = vmul.f32 %v1073, %v1073
    %v1091 = vmul.f32 %v1074, %v1074
    %v1092 = vmul.f32 %v1075, %v1075
    %v1093 = vmul.f32 %v1076, %v1076
    %v1094 = vmul.f32 %v1077, %v1077
    %v1095 = vmul.f32 %v1078, %v1078
    %v1096 = vmul.f32 %v1079, %v1079
    %v1097 = vmul.f32 %v1080, %v1080
    %v1098 = vmul.f32 %v1081, %v1081
    %v1099 = vmul.f32 %v1082, %v1082
    %v1100 = vmul.f32 %v1083, %v1083
    %v1101 = vmul.f32 %v1084, %v1084
    %v1102 = vmul.f32 %v1085, %v1085
    %v1103 = vmul.f32 %v1086, %v1086
    %v1104 = vmul.f32 %v1087, %v1087
    %v1105 = vsel %vm333, %v1088, 0.0
    %1106 = vadd.xlane.f32.xlu0 %v1105
    %v1107 = vpop.xlane.xlu0 %1106
    %v1108 = vsel %vm333, %v1089, 0.0
    %1109 = vadd.xlane.f32.xlu0 %v1108
    %v1110 = vpop.xlane.xlu0 %1109
    %v1111 = vsel %vm333, %v1090, 0.0
    %1112 = vadd.xlane.f32.xlu0 %v1111
    %v1113 = vpop.xlane.xlu0 %1112
    %v1114 = vsel %vm333, %v1091, 0.0
    %1115 = vadd.xlane.f32.xlu0 %v1114
    %v1116 = vpop.xlane.xlu0 %1115
    %v1117 = vsel %vm333, %v1092, 0.0
    %1118 = vadd.xlane.f32.xlu0 %v1117
    %v1119 = vpop.xlane.xlu0 %1118
    %v1120 = vsel %vm333, %v1093, 0.0
    %1121 = vadd.xlane.f32.xlu0 %v1120
    %v1122 = vpop.xlane.xlu0 %1121
    %v1123 = vsel %vm333, %v1094, 0.0
    %1124 = vadd.xlane.f32.xlu0 %v1123
    %v1125 = vpop.xlane.xlu0 %1124
    %v1126 = vsel %vm333, %v1095, 0.0
    %1127 = vadd.xlane.f32.xlu0 %v1126
    %v1128 = vpop.xlane.xlu0 %1127
    %v1129 = vsel %vm333, %v1096, 0.0
    %1130 = vadd.xlane.f32.xlu0 %v1129
    %v1131 = vpop.xlane.xlu0 %1130
    %v1132 = vsel %vm333, %v1097, 0.0
    %1133 = vadd.xlane.f32.xlu0 %v1132
    %v1134 = vpop.xlane.xlu0 %1133
    %v1135 = vsel %vm333, %v1098, 0.0
    %1136 = vadd.xlane.f32.xlu0 %v1135
    %v1137 = vpop.xlane.xlu0 %1136
    %v1138 = vsel %vm333, %v1099, 0.0
    %1139 = vadd.xlane.f32.xlu0 %v1138
    %v1140 = vpop.xlane.xlu0 %1139
    %v1141 = vsel %vm333, %v1100, 0.0
    %1142 = vadd.xlane.f32.xlu0 %v1141
    %v1143 = vpop.xlane.xlu0 %1142
    %v1144 = vsel %vm333, %v1101, 0.0
    %1145 = vadd.xlane.f32.xlu0 %v1144
    %v1146 = vpop.xlane.xlu0 %1145
    %v1147 = vsel %vm333, %v1102, 0.0
    %1148 = vadd.xlane.f32.xlu0 %v1147
    %v1149 = vpop.xlane.xlu0 %1148
    %v1150 = vsel %vm333, %v1103, 0.0
    %1151 = vadd.xlane.f32.xlu0 %v1150
    %v1152 = vpop.xlane.xlu0 %1151
    %v1153 = vsel %vm333, %v1104, 0.0
    %1154 = vadd.xlane.f32.xlu0 %v1153
    %v1155 = vpop.xlane.xlu0 %1154
    %v1156 = vmul.f32 %v1107, %v1053
    %v1157 = vmul.f32 %v1110, %v1053
    %v1158 = vmul.f32 %v1113, %v1053
    %v1159 = vmul.f32 %v1116, %v1053
    %v1160 = vmul.f32 %v1119, %v1053
    %v1161 = vmul.f32 %v1122, %v1053
    %v1162 = vmul.f32 %v1125, %v1053
    %v1163 = vmul.f32 %v1128, %v1053
    %v1164 = vmul.f32 %v1131, %v1053
    %v1165 = vmul.f32 %v1134, %v1053
    %v1166 = vmul.f32 %v1137, %v1053
    %v1167 = vmul.f32 %v1140, %v1053
    %v1168 = vmul.f32 %v1143, %v1053
    %v1169 = vmul.f32 %v1146, %v1053
    %v1170 = vmul.f32 %v1149, %v1053
    %v1171 = vmul.f32 %v1152, %v1053
    %v1172 = vmul.f32 %v1155, %v1053
    %v1173 = vadd.f32 %v1156, 1e-05
    %v1174 = vadd.f32 %v1157, 1e-05
    %v1175 = vadd.f32 %v1158, 1e-05
    %v1176 = vadd.f32 %v1159, 1e-05
    %v1177 = vadd.f32 %v1160, 1e-05
    %v1178 = vadd.f32 %v1161, 1e-05
    %v1179 = vadd.f32 %v1162, 1e-05
    %v1180 = vadd.f32 %v1163, 1e-05
    %v1181 = vadd.f32 %v1164, 1e-05
    %v1182 = vadd.f32 %v1165, 1e-05
    %v1183 = vadd.f32 %v1166, 1e-05
    %v1184 = vadd.f32 %v1167, 1e-05
    %v1185 = vadd.f32 %v1168, 1e-05
    %v1186 = vadd.f32 %v1169, 1e-05
    %v1187 = vadd.f32 %v1170, 1e-05
    %v1188 = vadd.f32 %v1171, 1e-05
    %v1189 = vadd.f32 %v1172, 1e-05
    %v1190 = vrsqrt.pop %v1173
    %v1191 = vmul.f32 %v1190, %v1173
    %v1192 = vmul.f32 %v1191, %v1190
    %v1193 = vmul.f32 0.5, %v1192
    %v1194 = vsub.f32 1.5, %v1193
    %v1195 = vmul.f32 %v1190, %v1194
    %vm1196 = vweird.f32 %v1173
    %vm1197 = vweird.f32 %v1190
    %vm1198 = vmor %vm1196, %vm1197
    %v1199 = vsel %vm1198, %v1190, %v1195
    %v1200 = vrsqrt.pop %v1174
    %v1201 = vmul.f32 %v1200, %v1174
    %v1202 = vmul.f32 %v1201, %v1200
    %v1203 = vmul.f32 0.5, %v1202
    %v1204 = vsub.f32 1.5, %v1203
    %v1205 = vmul.f32 %v1200, %v1204
    %vm1206 = vweird.f32 %v1174
    %vm1207 = vweird.f32 %v1200
    %vm1208 = vmor %vm1206, %vm1207
    %v1209 = vsel %vm1208, %v1200, %v1205
    %v1210 = vrsqrt.pop %v1175
    %v1211 = vmul.f32 %v1210, %v1175
    %v1212 = vmul.f32 %v1211, %v1210
    %v1213 = vmul.f32 0.5, %v1212
    %v1214 = vsub.f32 1.5, %v1213
    %v1215 = vmul.f32 %v1210, %v1214
    %vm1216 = vweird.f32 %v1175
    %vm1217 = vweird.f32 %v1210
    %vm1218 = vmor %vm1216, %vm1217
    %v1219 = vsel %vm1218, %v1210, %v1215
    %v1220 = vrsqrt.pop %v1176
    %v1221 = vmul.f32 %v1220, %v1176
    %v1222 = vmul.f32 %v1221, %v1220
    %v1223 = vmul.f32 0.5, %v1222
    %v1224 = vsub.f32 1.5, %v1223
    %v1225 = vmul.f32 %v1220, %v1224
    %vm1226 = vweird.f32 %v1176
    %vm1227 = vweird.f32 %v1220
    %vm1228 = vmor %vm1226, %vm1227
    %v1229 = vsel %vm1228, %v1220, %v1225
    %v1230 = vrsqrt.pop %v1177
    %v1231 = vmul.f32 %v1230, %v1177
    %v1232 = vmul.f32 %v1231, %v1230
    %v1233 = vmul.f32 0.5, %v1232
    %v1234 = vsub.f32 1.5, %v1233
    %v1235 = vmul.f32 %v1230, %v1234
    %vm1236 = vweird.f32 %v1177
    %vm1237 = vweird.f32 %v1230
    %vm1238 = vmor %vm1236, %vm1237
    %v1239 = vsel %vm1238, %v1230, %v1235
    %v1240 = vrsqrt.pop %v1178
    %v1241 = vmul.f32 %v1240, %v1178
    %v1242 = vmul.f32 %v1241, %v1240
    %v1243 = vmul.f32 0.5, %v1242
    %v1244 = vsub.f32 1.5, %v1243
    %v1245 = vmul.f32 %v1240, %v1244
    %vm1246 = vweird.f32 %v1178
    %vm1247 = vweird.f32 %v1240
    %vm1248 = vmor %vm1246, %vm1247
    %v1249 = vsel %vm1248, %v1240, %v1245
    %v1250 = vrsqrt.pop %v1179
    %v1251 = vmul.f32 %v1250, %v1179
    %v1252 = vmul.f32 %v1251, %v1250
    %v1253 = vmul.f32 0.5, %v1252
    %v1254 = vsub.f32 1.5, %v1253
    %v1255 = vmul.f32 %v1250, %v1254
    %vm1256 = vweird.f32 %v1179
    %vm1257 = vweird.f32 %v1250
    %vm1258 = vmor %vm1256, %vm1257
    %v1259 = vsel %vm1258, %v1250, %v1255
    %v1260 = vrsqrt.pop %v1180
    %v1261 = vmul.f32 %v1260, %v1180
    %v1262 = vmul.f32 %v1261, %v1260
    %v1263 = vmul.f32 0.5, %v1262
    %v1264 = vsub.f32 1.5, %v1263
    %v1265 = vmul.f32 %v1260, %v1264
    %vm1266 = vweird.f32 %v1180
    %vm1267 = vweird.f32 %v1260
    %vm1268 = vmor %vm1266, %vm1267
    %v1269 = vsel %vm1268, %v1260, %v1265
    %v1270 = vrsqrt.pop %v1181
    %v1271 = vmul.f32 %v1270, %v1181
    %v1272 = vmul.f32 %v1271, %v1270
    %v1273 = vmul.f32 0.5, %v1272
    %v1274 = vsub.f32 1.5, %v1273
    %v1275 = vmul.f32 %v1270, %v1274
    %vm1276 = vweird.f32 %v1181
    %vm1277 = vweird.f32 %v1270
    %vm1278 = vmor %vm1276, %vm1277
    %v1279 = vsel %vm1278, %v1270, %v1275
    %v1280 = vrsqrt.pop %v1182
    %v1281 = vmul.f32 %v1280, %v1182
    %v1282 = vmul.f32 %v1281, %v1280
    %v1283 = vmul.f32 0.5, %v1282
    %v1284 = vsub.f32 1.5, %v1283
    %v1285 = vmul.f32 %v1280, %v1284
    %vm1286 = vweird.f32 %v1182
    %vm1287 = vweird.f32 %v1280
    %vm1288 = vmor %vm1286, %vm1287
    %v1289 = vsel %vm1288, %v1280, %v1285
    %v1290 = vrsqrt.pop %v1183
    %v1291 = vmul.f32 %v1290, %v1183
    %v1292 = vmul.f32 %v1291, %v1290
    %v1293 = vmul.f32 0.5, %v1292
    %v1294 = vsub.f32 1.5, %v1293
    %v1295 = vmul.f32 %v1290, %v1294
    %vm1296 = vweird.f32 %v1183
    %vm1297 = vweird.f32 %v1290
    %vm1298 = vmor %vm1296, %vm1297
    %v1299 = vsel %vm1298, %v1290, %v1295
    %v1300 = vrsqrt.pop %v1184
    %v1301 = vmul.f32 %v1300, %v1184
    %v1302 = vmul.f32 %v1301, %v1300
    %v1303 = vmul.f32 0.5, %v1302
    %v1304 = vsub.f32 1.5, %v1303
    %v1305 = vmul.f32 %v1300, %v1304
    %vm1306 = vweird.f32 %v1184
    %vm1307 = vweird.f32 %v1300
    %vm1308 = vmor %vm1306, %vm1307
    %v1309 = vsel %vm1308, %v1300, %v1305
    %v1310 = vrsqrt.pop %v1185
    %v1311 = vmul.f32 %v1310, %v1185
    %v1312 = vmul.f32 %v1311, %v1310
    %v1313 = vmul.f32 0.5, %v1312
    %v1314 = vsub.f32 1.5, %v1313
    %v1315 = vmul.f32 %v1310, %v1314
    %vm1316 = vweird.f32 %v1185
    %vm1317 = vweird.f32 %v1310
    %vm1318 = vmor %vm1316, %vm1317
    %v1319 = vsel %vm1318, %v1310, %v1315
    %v1320 = vrsqrt.pop %v1186
    %v1321 = vmul.f32 %v1320, %v1186
    %v1322 = vmul.f32 %v1321, %v1320
    %v1323 = vmul.f32 0.5, %v1322
    %v1324 = vsub.f32 1.5, %v1323
    %v1325 = vmul.f32 %v1320, %v1324
    %vm1326 = vweird.f32 %v1186
    %vm1327 = vweird.f32 %v1320
    %vm1328 = vmor %vm1326, %vm1327
    %v1329 = vsel %vm1328, %v1320, %v1325
    %v1330 = vrsqrt.pop %v1187
    %v1331 = vmul.f32 %v1330, %v1187
    %v1332 = vmul.f32 %v1331, %v1330
    %v1333 = vmul.f32 0.5, %v1332
    %v1334 = vsub.f32 1.5, %v1333
    %v1335 = vmul.f32 %v1330, %v1334
    %vm1336 = vweird.f32 %v1187
    %vm1337 = vweird.f32 %v1330
    %vm1338 = vmor %vm1336, %vm1337
    %v1339 = vsel %vm1338, %v1330, %v1335
    %v1340 = vrsqrt.pop %v1188
    %v1341 = vmul.f32 %v1340, %v1188
    %v1342 = vmul.f32 %v1341, %v1340
    %v1343 = vmul.f32 0.5, %v1342
    %v1344 = vsub.f32 1.5, %v1343
    %v1345 = vmul.f32 %v1340, %v1344
    %vm1346 = vweird.f32 %v1188
    %vm1347 = vweird.f32 %v1340
    %vm1348 = vmor %vm1346, %vm1347
    %v1349 = vsel %vm1348, %v1340, %v1345
    %v1350 = vrsqrt.pop %v1189
    %v1351 = vmul.f32 %v1350, %v1189
    %v1352 = vmul.f32 %v1351, %v1350
    %v1353 = vmul.f32 0.5, %v1352
    %v1354 = vsub.f32 1.5, %v1353
    %v1355 = vmul.f32 %v1350, %v1354
    %vm1356 = vweird.f32 %v1189
    %vm1357 = vweird.f32 %v1350
    %vm1358 = vmor %vm1356, %vm1357
    %v1359 = vsel %vm1358, %v1350, %v1355
    %v1360 = vmul.f32 %v1071, %v1199
    %v1361 = vmul.f32 %v1072, %v1209
    %v1362 = vmul.f32 %v1073, %v1219
    %v1363 = vmul.f32 %v1074, %v1229
    %v1364 = vmul.f32 %v1075, %v1239
    %v1365 = vmul.f32 %v1076, %v1249
    %v1366 = vmul.f32 %v1077, %v1259
    %v1367 = vmul.f32 %v1078, %v1269
    %v1368 = vmul.f32 %v1079, %v1279
    %v1369 = vmul.f32 %v1080, %v1289
    %v1370 = vmul.f32 %v1081, %v1299
    %v1371 = vmul.f32 %v1082, %v1309
    %v1372 = vmul.f32 %v1083, %v1319
    %v1373 = vmul.f32 %v1084, %v1329
    %v1374 = vmul.f32 %v1085, %v1339
    %v1375 = vmul.f32 %v1086, %v1349
    %v1376 = vmul.f32 %v1087, %v1359
    %v1377 = vld [vmem:[%s7] sm:$0x1]
    %v1379 = vperm.slane %v1377, 0
    %v1381 = vmul.f32 %v1360, %v1379
    %v1382 = vmul.f32 %v1361, %v1379
    %v1383 = vmul.f32 %v1362, %v1379
    %v1384 = vmul.f32 %v1363, %v1379
    %v1385 = vmul.f32 %v1364, %v1379
    %v1386 = vmul.f32 %v1365, %v1379
    %v1387 = vmul.f32 %v1366, %v1379
    %v1388 = vmul.f32 %v1367, %v1379
    %v1389 = vmul.f32 %v1368, %v1379
    %v1390 = vmul.f32 %v1369, %v1379
    %v1391 = vmul.f32 %v1370, %v1379
    %v1392 = vmul.f32 %v1371, %v1379
    %v1393 = vmul.f32 %v1372, %v1379
    %v1394 = vmul.f32 %v1373, %v1379
    %v1395 = vmul.f32 %v1374, %v1379
    %v1396 = vmul.f32 %v1375, %v1379
    %v1397 = vmul.f32 %v1376, %v1379
    %v1398 = vld [vmem:[%s8] sm:$0x1]
    %v1400 = vperm.slane %v1398, 0
    %v1402 = vadd.f32 %v1381, %v1400
    %v1403 = vadd.f32 %v1382, %v1400
    %v1404 = vadd.f32 %v1383, %v1400
    %v1405 = vadd.f32 %v1384, %v1400
    %v1406 = vadd.f32 %v1385, %v1400
    %v1407 = vadd.f32 %v1386, %v1400
    %v1408 = vadd.f32 %v1387, %v1400
    %v1409 = vadd.f32 %v1388, %v1400
    %v1410 = vadd.f32 %v1389, %v1400
    %v1411 = vadd.f32 %v1390, %v1400
    %v1412 = vadd.f32 %v1391, %v1400
    %v1413 = vadd.f32 %v1392, %v1400
    %v1414 = vadd.f32 %v1393, %v1400
    %v1415 = vadd.f32 %v1394, %v1400
    %v1416 = vadd.f32 %v1395, %v1400
    %v1417 = vadd.f32 %v1396, %v1400
    %v1418 = vadd.f32 %v1397, %v1400
    %v1419 = vpack.c.bf16 %v1403, %v1402
    %v1420 = vpack.c.bf16 %v1405, %v1404
    %v1421 = vpack.c.bf16 %v1407, %v1406
    %v1422 = vpack.c.bf16 %v1409, %v1408
    %v1423 = vpack.c.bf16 %v1411, %v1410
    %v1424 = vpack.c.bf16 %v1413, %v1412
    %v1425 = vpack.c.bf16 %v1415, %v1414
    %v1426 = vpack.c.bf16 %v1417, %v1416
    %v1427 = vpack.c.bf16 %v1418, %v1418
    %v1428 = vld [vmem:[%s9] sm:$0xf]
    %v1429 = vld [vmem:[%s9 + $0x4] sm:$0xf]
    %v1430 = vld [vmem:[%s9 + $0x8] sm:$0xf]
    %v1431 = vld [vmem:[%s9 + $0xc] sm:$0xf]
    %v1432 = vld [vmem:[%s10] sm:$0x1]
    %v1434 = vperm.slane %v1432, 0
    %v1440 = vunpack.c.l.b16 %v1428
    %v1441 = vunpack.c.l.b16 %v1429
    %v1442 = vunpack.c.l.b16 %v1430
    %v1443 = vunpack.c.l.b16 %v1431
    %v1444 = vpack.c.b16 %v1441, %v1440
    %v1445 = vpack.c.b16 %v1443, %v1442
    %v1449 = vsel %vm333, %v1419, 0
    %v1452 = vsel %vm333, %v1420, 0
    %v1455 = vsel %vm333, %v1421, 0
    %v1458 = vsel %vm333, %v1422, 0
    %v1461 = vsel %vm333, %v1423, 0
    %v1464 = vsel %vm333, %v1424, 0
    %v1467 = vsel %vm333, %v1425, 0
    %v1470 = vsel %vm333, %v1426, 0
    %v1473 = vsel %vm333, %v1427, 0
    %1475 = vmatpush.bf16.msra.mxu0 0
    %1476 = vmatpush.bf16.msra.mxu0 0
    %1477 = vmatpush.bf16.msra.mxu0 0
    %1478 = vmatpush.bf16.msra.mxu0 0
    %1479 = vmatpush.bf16.msra.mxu0 0
    %1480 = vmatpush.bf16.msra.mxu0 0
    %1481 = vmatpush.bf16.msra.mxu0 %v1445
    %1482 = vmatpush.bf16.msra.mxu0 %v1444
    %1483 = vmatmul.bf16.gmra.mxu0 %v1449
    %v1484 = vpop.f32.mrf.mxu0
    %v1485 = vadd.f32 %v1434, %v1484
    %v1486 = vpop.f32.mrf.mxu0
    %v1487 = vadd.f32 %v1434, %v1486
    %1488 = vmatmul.bf16.gmra.mxu0 %v1452
    %v1489 = vpop.f32.mrf.mxu0
    %v1490 = vadd.f32 %v1434, %v1489
    %v1491 = vpop.f32.mrf.mxu0
    %v1492 = vadd.f32 %v1434, %v1491
    %1493 = vmatmul.bf16.gmra.mxu0 %v1455
    %v1494 = vpop.f32.mrf.mxu0
    %v1495 = vadd.f32 %v1434, %v1494
    %v1496 = vpop.f32.mrf.mxu0
    %v1497 = vadd.f32 %v1434, %v1496
    %1498 = vmatmul.bf16.gmra.mxu0 %v1458
    %v1499 = vpop.f32.mrf.mxu0
    %v1500 = vadd.f32 %v1434, %v1499
    %v1501 = vpop.f32.mrf.mxu0
    %v1502 = vadd.f32 %v1434, %v1501
    %1503 = vmatmul.bf16.gmra.mxu0 %v1461
    %v1504 = vpop.f32.mrf.mxu0
    %v1505 = vadd.f32 %v1434, %v1504
    %v1506 = vpop.f32.mrf.mxu0
    %v1507 = vadd.f32 %v1434, %v1506
    %1508 = vmatmul.bf16.gmra.mxu0 %v1464
    %v1509 = vpop.f32.mrf.mxu0
    %v1510 = vadd.f32 %v1434, %v1509
    %v1511 = vpop.f32.mrf.mxu0
    %v1512 = vadd.f32 %v1434, %v1511
    %1513 = vmatmul.bf16.gmra.mxu0 %v1467
    %v1514 = vpop.f32.mrf.mxu0
    %v1515 = vadd.f32 %v1434, %v1514
    %v1516 = vpop.f32.mrf.mxu0
    %v1517 = vadd.f32 %v1434, %v1516
    %1518 = vmatmul.bf16.gmra.mxu0 %v1470
    %v1519 = vpop.f32.mrf.mxu0
    %v1520 = vadd.f32 %v1434, %v1519
    %v1521 = vpop.f32.mrf.mxu0
    %v1522 = vadd.f32 %v1434, %v1521
    %1523 = vmatmul.bf16.gmra.mxu0 %v1473
    %v1524 = vpop.f32.mrf.mxu0
    %v1525 = vadd.f32 %v1434, %v1524
    %v1526 = vpop.f32.mrf.mxu0
    %1527 = vdwg.mxu0
    %v1528 = vmul.f32 %v1485, 1.702
    %v1529 = vmul.f32 %v1487, 1.702
    %v1530 = vmul.f32 %v1490, 1.702
    %v1531 = vmul.f32 %v1492, 1.702
    %v1532 = vmul.f32 %v1495, 1.702
    %v1533 = vmul.f32 %v1497, 1.702
    %v1534 = vmul.f32 %v1500, 1.702
    %v1535 = vmul.f32 %v1502, 1.702
    %v1536 = vmul.f32 %v1505, 1.702
    %v1537 = vmul.f32 %v1507, 1.702
    %v1538 = vmul.f32 %v1510, 1.702
    %v1539 = vmul.f32 %v1512, 1.702
    %v1540 = vmul.f32 %v1515, 1.702
    %v1541 = vmul.f32 %v1517, 1.702
    %v1542 = vmul.f32 %v1520, 1.702
    %v1543 = vmul.f32 %v1522, 1.702
    %v1544 = vmul.f32 %v1525, 1.702
    %v1545 = vxor.u32 %v1528, 2147483648
    %v1546 = vxor.u32 %v1529, 2147483648
    %v1547 = vxor.u32 %v1530, 2147483648
    %v1548 = vxor.u32 %v1531, 2147483648
    %v1549 = vxor.u32 %v1532, 2147483648
    %v1550 = vxor.u32 %v1533, 2147483648
    %v1551 = vxor.u32 %v1534, 2147483648
    %v1552 = vxor.u32 %v1535, 2147483648
    %v1553 = vxor.u32 %v1536, 2147483648
    %v1554 = vxor.u32 %v1537, 2147483648
    %v1555 = vxor.u32 %v1538, 2147483648
    %v1556 = vxor.u32 %v1539, 2147483648
    %v1557 = vxor.u32 %v1540, 2147483648
    %v1558 = vxor.u32 %v1541, 2147483648
    %v1559 = vxor.u32 %v1542, 2147483648
    %v1560 = vxor.u32 %v1543, 2147483648
    %v1561 = vxor.u32 %v1544, 2147483648
    %v1562 = vmul.f32 %v1545, 1.442695
    %v1563 = vpow.pop %v1562
    %v1564 = vmul.f32 %v1546, 1.442695
    %v1565 = vpow.pop %v1564
    %v1566 = vmul.f32 %v1547, 1.442695
    %v1567 = vpow.pop %v1566
    %v1568 = vmul.f32 %v1548, 1.442695
    %v1569 = vpow.pop %v1568
    %v1570 = vmul.f32 %v1549, 1.442695
    %v1571 = vpow.pop %v1570
    %v1572 = vmul.f32 %v1550, 1.442695
    %v1573 = vpow.pop %v1572
    %v1574 = vmul.f32 %v1551, 1.442695
    %v1575 = vpow.pop %v1574
    %v1576 = vmul.f32 %v1552, 1.442695
    %v1577 = vpow.pop %v1576
    %v1578 = vmul.f32 %v1553, 1.442695
    %v1579 = vpow.pop %v1578
    %v1580 = vmul.f32 %v1554, 1.442695
    %v1581 = vpow.pop %v1580
    %v1582 = vmul.f32 %v1555, 1.442695
    %v1583 = vpow.pop %v1582
    %v1584 = vmul.f32 %v1556, 1.442695
    %v1585 = vpow.pop %v1584
    %v1586 = vmul.f32 %v1557, 1.442695
    %v1587 = vpow.pop %v1586
    %v1588 = vmul.f32 %v1558, 1.442695
    %v1589 = vpow.pop %v1588
    %v1590 = vmul.f32 %v1559, 1.442695
    %v1591 = vpow.pop %v1590
    %v1592 = vmul.f32 %v1560, 1.442695
    %v1593 = vpow.pop %v1592
    %v1594 = vmul.f32 %v1561, 1.442695
    %v1595 = vpow.pop %v1594
    %v1596 = vadd.f32 %v1563, 1.0
    %v1597 = vadd.f32 %v1565, 1.0
    %v1598 = vadd.f32 %v1567, 1.0
    %v1599 = vadd.f32 %v1569, 1.0
    %v1600 = vadd.f32 %v1571, 1.0
    %v1601 = vadd.f32 %v1573, 1.0
    %v1602 = vadd.f32 %v1575, 1.0
    %v1603 = vadd.f32 %v1577, 1.0
    %v1604 = vadd.f32 %v1579, 1.0
    %v1605 = vadd.f32 %v1581, 1.0
    %v1606 = vadd.f32 %v1583, 1.0
    %v1607 = vadd.f32 %v1585, 1.0
    %v1608 = vadd.f32 %v1587, 1.0
    %v1609 = vadd.f32 %v1589, 1.0
    %v1610 = vadd.f32 %v1591, 1.0
    %v1611 = vadd.f32 %v1593, 1.0
    %v1612 = vadd.f32 %v1595, 1.0
    %v1613 = vrcp.pop %v1596
    %v1614 = vmul.f32 %v1596, %v1613
    %v1615 = vsub.f32 1.0, %v1614
    %v1616 = vmul.f32 %v1613, %v1615
    %v1617 = vadd.f32 %v1613, %v1616
    %vm1618 = vweird.f32 %v1596
    %vm1619 = vweird.f32 %v1613
    %vm1620 = vmor %vm1618, %vm1619
    %v1621 = vsel %vm1620, %v1613, %v1617
    %v1622 = vand.u32 2147483647, %v1596
    %vm1623 = vcmp.eq.f32.partialorder %v1622, 8.507059e+37
    %v1624 = vand.u32 %v1596, 2147483648
    %v1625 = vor.u32 1.1754944e-38, %v1624
    %v1626 = vsel %vm1623, %v1625, %v1621
    %v1627 = vmul.f32 1.0, %v1626
    %v1628 = vrcp.pop %v1597
    %v1629 = vmul.f32 %v1597, %v1628
    %v1630 = vsub.f32 1.0, %v1629
    %v1631 = vmul.f32 %v1628, %v1630
    %v1632 = vadd.f32 %v1628, %v1631
    %vm1633 = vweird.f32 %v1597
    %vm1634 = vweird.f32 %v1628
    %vm1635 = vmor %vm1633, %vm1634
    %v1636 = vsel %vm1635, %v1628, %v1632
    %v1637 = vand.u32 2147483647, %v1597
    %vm1638 = vcmp.eq.f32.partialorder %v1637, 8.507059e+37
    %v1639 = vand.u32 %v1597, 2147483648
    %v1640 = vor.u32 1.1754944e-38, %v1639
    %v1641 = vsel %vm1638, %v1640, %v1636
    %v1642 = vmul.f32 1.0, %v1641
    %v1643 = vrcp.pop %v1598
    %v1644 = vmul.f32 %v1598, %v1643
    %v1645 = vsub.f32 1.0, %v1644
    %v1646 = vmul.f32 %v1643, %v1645
    %v1647 = vadd.f32 %v1643, %v1646
    %vm1648 = vweird.f32 %v1598
    %vm1649 = vweird.f32 %v1643
    %vm1650 = vmor %vm1648, %vm1649
    %v1651 = vsel %vm1650, %v1643, %v1647
    %v1652 = vand.u32 2147483647, %v1598
    %vm1653 = vcmp.eq.f32.partialorder %v1652, 8.507059e+37
    %v1654 = vand.u32 %v1598, 2147483648
    %v1655 = vor.u32 1.1754944e-38, %v1654
    %v1656 = vsel %vm1653, %v1655, %v1651
    %v1657 = vmul.f32 1.0, %v1656
    %v1658 = vrcp.pop %v1599
    %v1659 = vmul.f32 %v1599, %v1658
    %v1660 = vsub.f32 1.0, %v1659
    %v1661 = vmul.f32 %v1658, %v1660
    %v1662 = vadd.f32 %v1658, %v1661
    %vm1663 = vweird.f32 %v1599
    %vm1664 = vweird.f32 %v1658
    %vm1665 = vmor %vm1663, %vm1664
    %v1666 = vsel %vm1665, %v1658, %v1662
    %v1667 = vand.u32 2147483647, %v1599
    %vm1668 = vcmp.eq.f32.partialorder %v1667, 8.507059e+37
    %v1669 = vand.u32 %v1599, 2147483648
    %v1670 = vor.u32 1.1754944e-38, %v1669
    %v1671 = vsel %vm1668, %v1670, %v1666
    %v1672 = vmul.f32 1.0, %v1671
    %v1673 = vrcp.pop %v1600
    %v1674 = vmul.f32 %v1600, %v1673
    %v1675 = vsub.f32 1.0, %v1674
    %v1676 = vmul.f32 %v1673, %v1675
    %v1677 = vadd.f32 %v1673, %v1676
    %vm1678 = vweird.f32 %v1600
    %vm1679 = vweird.f32 %v1673
    %vm1680 = vmor %vm1678, %vm1679
    %v1681 = vsel %vm1680, %v1673, %v1677
    %v1682 = vand.u32 2147483647, %v1600
    %vm1683 = vcmp.eq.f32.partialorder %v1682, 8.507059e+37
    %v1684 = vand.u32 %v1600, 2147483648
    %v1685 = vor.u32 1.1754944e-38, %v1684
    %v1686 = vsel %vm1683, %v1685, %v1681
    %v1687 = vmul.f32 1.0, %v1686
    %v1688 = vrcp.pop %v1601
    %v1689 = vmul.f32 %v1601, %v1688
    %v1690 = vsub.f32 1.0, %v1689
    %v1691 = vmul.f32 %v1688, %v1690
    %v1692 = vadd.f32 %v1688, %v1691
    %vm1693 = vweird.f32 %v1601
    %vm1694 = vweird.f32 %v1688
    %vm1695 = vmor %vm1693, %vm1694
    %v1696 = vsel %vm1695, %v1688, %v1692
    %v1697 = vand.u32 2147483647, %v1601
    %vm1698 = vcmp.eq.f32.partialorder %v1697, 8.507059e+37
    %v1699 = vand.u32 %v1601, 2147483648
    %v1700 = vor.u32 1.1754944e-38, %v1699
    %v1701 = vsel %vm1698, %v1700, %v1696
    %v1702 = vmul.f32 1.0, %v1701
    %v1703 = vrcp.pop %v1602
    %v1704 = vmul.f32 %v1602, %v1703
    %v1705 = vsub.f32 1.0, %v1704
    %v1706 = vmul.f32 %v1703, %v1705
    %v1707 = vadd.f32 %v1703, %v1706
    %vm1708 = vweird.f32 %v1602
    %vm1709 = vweird.f32 %v1703
    %vm1710 = vmor %vm1708, %vm1709
    %v1711 = vsel %vm1710, %v1703, %v1707
    %v1712 = vand.u32 2147483647, %v1602
    %vm1713 = vcmp.eq.f32.partialorder %v1712, 8.507059e+37
    %v1714 = vand.u32 %v1602, 2147483648
    %v1715 = vor.u32 1.1754944e-38, %v1714
    %v1716 = vsel %vm1713, %v1715, %v1711
    %v1717 = vmul.f32 1.0, %v1716
    %v1718 = vrcp.pop %v1603
    %v1719 = vmul.f32 %v1603, %v1718
    %v1720 = vsub.f32 1.0, %v1719
    %v1721 = vmul.f32 %v1718, %v1720
    %v1722 = vadd.f32 %v1718, %v1721
    %vm1723 = vweird.f32 %v1603
    %vm1724 = vweird.f32 %v1718
    %vm1725 = vmor %vm1723, %vm1724
    %v1726 = vsel %vm1725, %v1718, %v1722
    %v1727 = vand.u32 2147483647, %v1603
    %vm1728 = vcmp.eq.f32.partialorder %v1727, 8.507059e+37
    %v1729 = vand.u32 %v1603, 2147483648
    %v1730 = vor.u32 1.1754944e-38, %v1729
    %v1731 = vsel %vm1728, %v1730, %v1726
    %v1732 = vmul.f32 1.0, %v1731
    %v1733 = vrcp.pop %v1604
    %v1734 = vmul.f32 %v1604, %v1733
    %v1735 = vsub.f32 1.0, %v1734
    %v1736 = vmul.f32 %v1733, %v1735
    %v1737 = vadd.f32 %v1733, %v1736
    %vm1738 = vweird.f32 %v1604
    %vm1739 = vweird.f32 %v1733
    %vm1740 = vmor %vm1738, %vm1739
    %v1741 = vsel %vm1740, %v1733, %v1737
    %v1742 = vand.u32 2147483647, %v1604
    %vm1743 = vcmp.eq.f32.partialorder %v1742, 8.507059e+37
    %v1744 = vand.u32 %v1604, 2147483648
    %v1745 = vor.u32 1.1754944e-38, %v1744
    %v1746 = vsel %vm1743, %v1745, %v1741
    %v1747 = vmul.f32 1.0, %v1746
    %v1748 = vrcp.pop %v1605
    %v1749 = vmul.f32 %v1605, %v1748
    %v1750 = vsub.f32 1.0, %v1749
    %v1751 = vmul.f32 %v1748, %v1750
    %v1752 = vadd.f32 %v1748, %v1751
    %vm1753 = vweird.f32 %v1605
    %vm1754 = vweird.f32 %v1748
    %vm1755 = vmor %vm1753, %vm1754
    %v1756 = vsel %vm1755, %v1748, %v1752
    %v1757 = vand.u32 2147483647, %v1605
    %vm1758 = vcmp.eq.f32.partialorder %v1757, 8.507059e+37
    %v1759 = vand.u32 %v1605, 2147483648
    %v1760 = vor.u32 1.1754944e-38, %v1759
    %v1761 = vsel %vm1758, %v1760, %v1756
    %v1762 = vmul.f32 1.0, %v1761
    %v1763 = vrcp.pop %v1606
    %v1764 = vmul.f32 %v1606, %v1763
    %v1765 = vsub.f32 1.0, %v1764
    %v1766 = vmul.f32 %v1763, %v1765
    %v1767 = vadd.f32 %v1763, %v1766
    %vm1768 = vweird.f32 %v1606
    %vm1769 = vweird.f32 %v1763
    %vm1770 = vmor %vm1768, %vm1769
    %v1771 = vsel %vm1770, %v1763, %v1767
    %v1772 = vand.u32 2147483647, %v1606
    %vm1773 = vcmp.eq.f32.partialorder %v1772, 8.507059e+37
    %v1774 = vand.u32 %v1606, 2147483648
    %v1775 = vor.u32 1.1754944e-38, %v1774
    %v1776 = vsel %vm1773, %v1775, %v1771
    %v1777 = vmul.f32 1.0, %v1776
    %v1778 = vrcp.pop %v1607
    %v1779 = vmul.f32 %v1607, %v1778
    %v1780 = vsub.f32 1.0, %v1779
    %v1781 = vmul.f32 %v1778, %v1780
    %v1782 = vadd.f32 %v1778, %v1781
    %vm1783 = vweird.f32 %v1607
    %vm1784 = vweird.f32 %v1778
    %vm1785 = vmor %vm1783, %vm1784
    %v1786 = vsel %vm1785, %v1778, %v1782
    %v1787 = vand.u32 2147483647, %v1607
    %vm1788 = vcmp.eq.f32.partialorder %v1787, 8.507059e+37
    %v1789 = vand.u32 %v1607, 2147483648
    %v1790 = vor.u32 1.1754944e-38, %v1789
    %v1791 = vsel %vm1788, %v1790, %v1786
    %v1792 = vmul.f32 1.0, %v1791
    %v1793 = vrcp.pop %v1608
    %v1794 = vmul.f32 %v1608, %v1793
    %v1795 = vsub.f32 1.0, %v1794
    %v1796 = vmul.f32 %v1793, %v1795
    %v1797 = vadd.f32 %v1793, %v1796
    %vm1798 = vweird.f32 %v1608
    %vm1799 = vweird.f32 %v1793
    %vm1800 = vmor %vm1798, %vm1799
    %v1801 = vsel %vm1800, %v1793, %v1797
    %v1802 = vand.u32 2147483647, %v1608
    %vm1803 = vcmp.eq.f32.partialorder %v1802, 8.507059e+37
    %v1804 = vand.u32 %v1608, 2147483648
    %v1805 = vor.u32 1.1754944e-38, %v1804
    %v1806 = vsel %vm1803, %v1805, %v1801
    %v1807 = vmul.f32 1.0, %v1806
    %v1808 = vrcp.pop %v1609
    %v1809 = vmul.f32 %v1609, %v1808
    %v1810 = vsub.f32 1.0, %v1809
    %v1811 = vmul.f32 %v1808, %v1810
    %v1812 = vadd.f32 %v1808, %v1811
    %vm1813 = vweird.f32 %v1609
    %vm1814 = vweird.f32 %v1808
    %vm1815 = vmor %vm1813, %vm1814
    %v1816 = vsel %vm1815, %v1808, %v1812
    %v1817 = vand.u32 2147483647, %v1609
    %vm1818 = vcmp.eq.f32.partialorder %v1817, 8.507059e+37
    %v1819 = vand.u32 %v1609, 2147483648
    %v1820 = vor.u32 1.1754944e-38, %v1819
    %v1821 = vsel %vm1818, %v1820, %v1816
    %v1822 = vmul.f32 1.0, %v1821
    %v1823 = vrcp.pop %v1610
    %v1824 = vmul.f32 %v1610, %v1823
    %v1825 = vsub.f32 1.0, %v1824
    %v1826 = vmul.f32 %v1823, %v1825
    %v1827 = vadd.f32 %v1823, %v1826
    %vm1828 = vweird.f32 %v1610
    %vm1829 = vweird.f32 %v1823
    %vm1830 = vmor %vm1828, %vm1829
    %v1831 = vsel %vm1830, %v1823, %v1827
    %v1832 = vand.u32 2147483647, %v1610
    %vm1833 = vcmp.eq.f32.partialorder %v1832, 8.507059e+37
    %v1834 = vand.u32 %v1610, 2147483648
    %v1835 = vor.u32 1.1754944e-38, %v1834
    %v1836 = vsel %vm1833, %v1835, %v1831
    %v1837 = vmul.f32 1.0, %v1836
    %v1838 = vrcp.pop %v1611
    %v1839 = vmul.f32 %v1611, %v1838
    %v1840 = vsub.f32 1.0, %v1839
    %v1841 = vmul.f32 %v1838, %v1840
    %v1842 = vadd.f32 %v1838, %v1841
    %vm1843 = vweird.f32 %v1611
    %vm1844 = vweird.f32 %v1838
    %vm1845 = vmor %vm1843, %vm1844
    %v1846 = vsel %vm1845, %v1838, %v1842
    %v1847 = vand.u32 2147483647, %v1611
    %vm1848 = vcmp.eq.f32.partialorder %v1847, 8.507059e+37
    %v1849 = vand.u32 %v1611, 2147483648
    %v1850 = vor.u32 1.1754944e-38, %v1849
    %v1851 = vsel %vm1848, %v1850, %v1846
    %v1852 = vmul.f32 1.0, %v1851
    %v1853 = vrcp.pop %v1612
    %v1854 = vmul.f32 %v1612, %v1853
    %v1855 = vsub.f32 1.0, %v1854
    %v1856 = vmul.f32 %v1853, %v1855
    %v1857 = vadd.f32 %v1853, %v1856
    %vm1858 = vweird.f32 %v1612
    %vm1859 = vweird.f32 %v1853
    %vm1860 = vmor %vm1858, %vm1859
    %v1861 = vsel %vm1860, %v1853, %v1857
    %v1862 = vand.u32 2147483647, %v1612
    %vm1863 = vcmp.eq.f32.partialorder %v1862, 8.507059e+37
    %v1864 = vand.u32 %v1612, 2147483648
    %v1865 = vor.u32 1.1754944e-38, %v1864
    %v1866 = vsel %vm1863, %v1865, %v1861
    %v1867 = vmul.f32 1.0, %v1866
    %v1868 = vmul.f32 %v1485, %v1627
    %v1869 = vmul.f32 %v1487, %v1642
    %v1870 = vmul.f32 %v1490, %v1657
    %v1871 = vmul.f32 %v1492, %v1672
    %v1872 = vmul.f32 %v1495, %v1687
    %v1873 = vmul.f32 %v1497, %v1702
    %v1874 = vmul.f32 %v1500, %v1717
    %v1875 = vmul.f32 %v1502, %v1732
    %v1876 = vmul.f32 %v1505, %v1747
    %v1877 = vmul.f32 %v1507, %v1762
    %v1878 = vmul.f32 %v1510, %v1777
    %v1879 = vmul.f32 %v1512, %v1792
    %v1880 = vmul.f32 %v1515, %v1807
    %v1881 = vmul.f32 %v1517, %v1822
    %v1882 = vmul.f32 %v1520, %v1837
    %v1883 = vmul.f32 %v1522, %v1852
    %v1884 = vmul.f32 %v1525, %v1867
    %v1885 = vpack.c.bf16 %v1869, %v1868
    %v1886 = vpack.c.bf16 %v1871, %v1870
    %v1887 = vpack.c.bf16 %v1873, %v1872
    %v1888 = vpack.c.bf16 %v1875, %v1874
    %v1889 = vpack.c.bf16 %v1877, %v1876
    %v1890 = vpack.c.bf16 %v1879, %v1878
    %v1891 = vpack.c.bf16 %v1881, %v1880
    %v1892 = vpack.c.bf16 %v1883, %v1882
    %v1893 = vpack.c.bf16 %v1884, %v1884
    %v1894 = vld [vmem:[%s11] sm:$0xf]
    %v1895 = vld [vmem:[%s11 + $0x4] sm:$0xf]
    %v1896 = vld [vmem:[%s11 + $0x8] sm:$0xf]
    %v1897 = vld [vmem:[%s11 + $0xc] sm:$0xf]
    %v1898 = vld [vmem:[%s11 + $0x10] sm:$0xf]
    %v1899 = vld [vmem:[%s11 + $0x14] sm:$0xf]
    %v1900 = vld [vmem:[%s11 + $0x18] sm:$0xf]
    %v1901 = vld [vmem:[%s11 + $0x1c] sm:$0xf]
    %v1902 = vld [vmem:[%s11 + $0x20] sm:$0xf]
    %v1903 = vld [vmem:[%s11 + $0x24] sm:$0xf]
    %v1904 = vld [vmem:[%s11 + $0x28] sm:$0xf]
    %v1905 = vld [vmem:[%s11 + $0x2c] sm:$0xf]
    %v1906 = vld [vmem:[%s11 + $0x30] sm:$0xf]
    %v1907 = vld [vmem:[%s11 + $0x34] sm:$0xf]
    %v1908 = vld [vmem:[%s11 + $0x38] sm:$0xf]
    %v1909 = vld [vmem:[%s11 + $0x3c] sm:$0xf]
    %v1910 = vld [vmem:[%s12] sm:$0x1]
    %v1912 = vperm.slane %v1910, 0
    %v1930 = vunpack.c.l.b16 %v1894
    %v1931 = vunpack.c.l.b16 %v1895
    %v1932 = vunpack.c.l.b16 %v1896
    %v1933 = vunpack.c.l.b16 %v1897
    %v1934 = vunpack.c.l.b16 %v1898
    %v1935 = vunpack.c.l.b16 %v1899
    %v1936 = vunpack.c.l.b16 %v1900
    %v1937 = vunpack.c.l.b16 %v1901
    %v1938 = vunpack.c.l.b16 %v1902
    %v1939 = vunpack.c.l.b16 %v1903
    %v1940 = vunpack.c.l.b16 %v1904
    %v1941 = vunpack.c.l.b16 %v1905
    %v1942 = vunpack.c.l.b16 %v1906
    %v1943 = vunpack.c.l.b16 %v1907
    %v1944 = vunpack.c.l.b16 %v1908
    %v1945 = vunpack.c.l.b16 %v1909
    %v1946 = vpack.c.b16 %v1931, %v1930
    %v1947 = vpack.c.b16 %v1933, %v1932
    %v1948 = vpack.c.b16 %v1935, %v1934
    %v1949 = vpack.c.b16 %v1937, %v1936
    %v1950 = vpack.c.b16 %v1939, %v1938
    %v1951 = vpack.c.b16 %v1941, %v1940
    %v1952 = vpack.c.b16 %v1943, %v1942
    %v1953 = vpack.c.b16 %v1945, %v1944
    %1962 = vmatpush.bf16.msra.mxu0 %v1953
    %1963 = vmatpush.bf16.msra.mxu0 %v1952
    %1964 = vmatpush.bf16.msra.mxu0 %v1951
    %1965 = vmatpush.bf16.msra.mxu0 %v1950
    %1966 = vmatpush.bf16.msra.mxu0 %v1949
    %1967 = vmatpush.bf16.msra.mxu0 %v1948
    %1968 = vmatpush.bf16.msra.mxu0 %v1947
    %1969 = vmatpush.bf16.msra.mxu0 %v1946
    %1970 = vmatmul.bf16.gmra.mxu0 %v1885
    %v1971 = vpop.f32.mrf.mxu0
    %v1972 = vadd.f32 %v1912, %v1971
    %v1973 = vpop.f32.mrf.mxu0
    %v1974 = vadd.f32 %v1912, %v1973
    %1975 = vmatmul.bf16.gmra.mxu0 %v1886
    %v1976 = vpop.f32.mrf.mxu0
    %v1977 = vadd.f32 %v1912, %v1976
    %v1978 = vpop.f32.mrf.mxu0
    %v1979 = vadd.f32 %v1912, %v1978
    %1980 = vmatmul.bf16.gmra.mxu0 %v1887
    %v1981 = vpop.f32.mrf.mxu0
    %v1982 = vadd.f32 %v1912, %v1981
    %v1983 = vpop.f32.mrf.mxu0
    %v1984 = vadd.f32 %v1912, %v1983
    %1985 = vmatmul.bf16.gmra.mxu0 %v1888
    %v1986 = vpop.f32.mrf.mxu0
    %v1987 = vadd.f32 %v1912, %v1986
    %v1988 = vpop.f32.mrf.mxu0
    %v1989 = vadd.f32 %v1912, %v1988
    %1990 = vmatmul.bf16.gmra.mxu0 %v1889
    %v1991 = vpop.f32.mrf.mxu0
    %v1992 = vadd.f32 %v1912, %v1991
    %v1993 = vpop.f32.mrf.mxu0
    %v1994 = vadd.f32 %v1912, %v1993
    %1995 = vmatmul.bf16.gmra.mxu0 %v1890
    %v1996 = vpop.f32.mrf.mxu0
    %v1997 = vadd.f32 %v1912, %v1996
    %v1998 = vpop.f32.mrf.mxu0
    %v1999 = vadd.f32 %v1912, %v1998
    %2000 = vmatmul.bf16.gmra.mxu0 %v1891
    %v2001 = vpop.f32.mrf.mxu0
    %v2002 = vadd.f32 %v1912, %v2001
    %v2003 = vpop.f32.mrf.mxu0
    %v2004 = vadd.f32 %v1912, %v2003
    %2005 = vmatmul.bf16.gmra.mxu0 %v1892
    %v2006 = vpop.f32.mrf.mxu0
    %v2007 = vadd.f32 %v1912, %v2006
    %v2008 = vpop.f32.mrf.mxu0
    %v2009 = vadd.f32 %v1912, %v2008
    %2010 = vmatmul.bf16.gmra.mxu0 %v1893
    %v2011 = vpop.f32.mrf.mxu0
    %v2012 = vadd.f32 %v1912, %v2011
    %v2013 = vpop.f32.mrf.mxu0
    %2014 = vdwg.mxu0
    %v2015 = vadd.f32 %v979, %v1972
    %v2016 = vadd.f32 %v980, %v1974
    %v2017 = vadd.f32 %v981, %v1977
    %v2018 = vadd.f32 %v982, %v1979
    %v2019 = vadd.f32 %v983, %v1982
    %v2020 = vadd.f32 %v984, %v1984
    %v2021 = vadd.f32 %v985, %v1987
    %v2022 = vadd.f32 %v986, %v1989
    %v2023 = vadd.f32 %v987, %v1992
    %v2024 = vadd.f32 %v988, %v1994
    %v2025 = vadd.f32 %v989, %v1997
    %v2026 = vadd.f32 %v990, %v1999
    %v2027 = vadd.f32 %v991, %v2002
    %v2028 = vadd.f32 %v992, %v2004
    %v2029 = vadd.f32 %v993, %v2007
    %v2030 = vadd.f32 %v994, %v2009
    %v2031 = vadd.f32 %v995, %v2012
    %2032 = vst.msk [vmem:[#allocation2] sm:$0xff] %vm333, %v2015
    %2033 = vst.msk [vmem:[#allocation2 + $0x8] sm:$0xff] %vm333, %v2016
    %2034 = vst.msk [vmem:[#allocation2 + $0x10] sm:$0xff] %vm333, %v2017
    %2035 = vst.msk [vmem:[#allocation2 + $0x18] sm:$0xff] %vm333, %v2018
    %2036 = vst.msk [vmem:[#allocation2 + $0x20] sm:$0xff] %vm333, %v2019
    %2037 = vst.msk [vmem:[#allocation2 + $0x28] sm:$0xff] %vm333, %v2020
    %2038 = vst.msk [vmem:[#allocation2 + $0x30] sm:$0xff] %vm333, %v2021
    %2039 = vst.msk [vmem:[#allocation2 + $0x38] sm:$0xff] %vm333, %v2022
    %2040 = vst.msk [vmem:[#allocation2 + $0x40] sm:$0xff] %vm333, %v2023
    %2041 = vst.msk [vmem:[#allocation2 + $0x48] sm:$0xff] %vm333, %v2024
    %2042 = vst.msk [vmem:[#allocation2 + $0x50] sm:$0xff] %vm333, %v2025
    %2043 = vst.msk [vmem:[#allocation2 + $0x58] sm:$0xff] %vm333, %v2026
    %2044 = vst.msk [vmem:[#allocation2 + $0x60] sm:$0xff] %vm333, %v2027
    %2045 = vst.msk [vmem:[#allocation2 + $0x68] sm:$0xff] %vm333, %v2028
    %2046 = vst.msk [vmem:[#allocation2 + $0x70] sm:$0xff] %vm333, %v2029
    %2047 = vst.msk [vmem:[#allocation2 + $0x78] sm:$0xff] %vm333, %v2030
    %2048 = vst.msk [vmem:[#allocation2 + $0x80] sm:$0xff] %vm333, %v2031
    // Predicated region
    $region54: #{residual_attention_block.5} parent=1 // pred_check
      _
    $region55: #{residual_attention_block.5} parent=1 // pred_check_branch
      %2050 = sbr.rel (0) target = $region57
    $region56: #{residual_attention_block.5} parent=1 // pred_region
      %2052 = vsyncadd [#allocation3], 0
      %s2053 = sshll.u32 [#allocation2], 4
      %s2054 = int_to_ptr.vmem [resolvable:$true] %s2053
      %s2055 = sshll.u32 %s13, 4
      %s2056 = int_to_ptr.hbm [resolvable:$true] %s2055
      %2061 = dma.vmem_to_hbm [thread:$0]  %s2054, 2176, %s2056, [#allocation3], 128, 128, 8
    $region57: #{residual_attention_block.5} parent=1 // pred_fallthru
      _
    // Predicated region
    $region58: #{residual_attention_block.5} parent=1 // pred_check
      _
    $region59: #{residual_attention_block.5} parent=1 // pred_check_branch
      %2063 = sbr.rel (0) target = $region61
    $region60: #{residual_attention_block.5} parent=1 // pred_region
      %2065 = dma.done [#allocation3], 2176
    $region61: #{residual_attention_block.5} parent=1 // pred_fallthru
      _
    %2066 = vsyncpa [#allocation3], 1

// kernel: residual_attention_block.4
$region0: #{residual_attention_block.4}
  #allocation0 [shape = 'u32[]', space=smem, size = 0x4, offset = 0x4, fixed_abs, tag = 'smem constant byte address 0x4 - core index']
  #allocation1 [shape = 'u32[72,128]{1,0:T(1,128)}', space=vmem, size = 0x9000, scoped, tag = 'internal scratch']
  %s0 = inlined_call_operand.vmem [shape: f32[17,8,32], index: 0, kind: input, shape index: {}]
  %s1 = inlined_call_operand.vmem [shape: f32[1,32], index: 1, kind: input, shape index: {}]
  %s2 = inlined_call_operand.vmem [shape: f32[1,32], index: 2, kind: input, shape index: {}]
  %s3 = inlined_call_operand.vmem [shape: bf16[32,96], index: 3, kind: input, shape index: {}]
  %s4 = inlined_call_operand.vmem [shape: f32[1,96], index: 4, kind: input, shape index: {}]
  %s5 = inlined_call_operand.vmem [shape: bf16[32,32], index: 5, kind: input, shape index: {}]
  %s6 = inlined_call_operand.vmem [shape: f32[1,32], index: 6, kind: input, shape index: {}]
  %s7 = inlined_call_operand.vmem [shape: f32[17,8,32], index: 7, kind: output, shape index: {}]
  %s8 = sld [smem:[#allocation0]]
  $region38: #{residual_attention_block.4} parent=0
    _
  %s10 = ssub.s32 1, %s8
  %s11 = scalar_select 0, %s10, %s8
  // Predicated region
  $region2: #{residual_attention_block.4} parent=0 // pred_check
    _
  $region3: #{residual_attention_block.4} parent=0 // pred_check_branch
    %13 = sbr.rel (0) target = $region5
  $region4: #{residual_attention_block.4} parent=0 // pred_region
    _
  $region5: #{residual_attention_block.4} parent=0 // pred_fallthru
    _
  // Predicated region
  $region6: #{residual_attention_block.4} parent=0 // pred_check
    _
  $region7: #{residual_attention_block.4} parent=0 // pred_check_branch
    %15 = sbr.rel (0) target = $region9
  $region8: #{residual_attention_block.4} parent=0 // pred_region
    _
  $region9: #{residual_attention_block.4} parent=0 // pred_fallthru
    _
  // Predicated region
  $region10: #{residual_attention_block.4} parent=0 // pred_check
    _
  $region11: #{residual_attention_block.4} parent=0 // pred_check_branch
    %17 = sbr.rel (0) target = $region13
  $region12: #{residual_attention_block.4} parent=0 // pred_region
    _
  $region13: #{residual_attention_block.4} parent=0 // pred_fallthru
    _
  // Predicated region
  $region14: #{residual_attention_block.4} parent=0 // pred_check
    _
  $region15: #{residual_attention_block.4} parent=0 // pred_check_branch
    %19 = sbr.rel (0) target = $region17
  $region16: #{residual_attention_block.4} parent=0 // pred_region
    _
  $region17: #{residual_attention_block.4} parent=0 // pred_fallthru
    _
  // Predicated region
  $region18: #{residual_attention_block.4} parent=0 // pred_check
    _
  $region19: #{residual_attention_block.4} parent=0 // pred_check_branch
    %21 = sbr.rel (0) target = $region21
  $region20: #{residual_attention_block.4} parent=0 // pred_region
    _
  $region21: #{residual_attention_block.4} parent=0 // pred_fallthru
    _
  // Predicated region
  $region22: #{residual_attention_block.4} parent=0 // pred_check
    _
  $region23: #{residual_attention_block.4} parent=0 // pred_check_branch
    %23 = sbr.rel (0) target = $region25
  $region24: #{residual_attention_block.4} parent=0 // pred_region
    _
  $region25: #{residual_attention_block.4} parent=0 // pred_fallthru
    _
  // Predicated region
  $region26: #{residual_attention_block.4} parent=0 // pred_check
    _
  $region27: #{residual_attention_block.4} parent=0 // pred_check_branch
    %25 = sbr.rel (0) target = $region29
  $region28: #{residual_attention_block.4} parent=0 // pred_region
    _
  $region29: #{residual_attention_block.4} parent=0 // pred_fallthru
    _
  %v27 = vld [vmem:[%s0] sm:$0xff]
  %v28 = vld [vmem:[%s0 + $0x8] sm:$0xff]
  %v29 = vld [vmem:[%s0 + $0x10] sm:$0xff]
  %v30 = vld [vmem:[%s0 + $0x18] sm:$0xff]
  %v31 = vld [vmem:[%s0 + $0x20] sm:$0xff]
  %v32 = vld [vmem:[%s0 + $0x28] sm:$0xff]
  %v33 = vld [vmem:[%s0 + $0x30] sm:$0xff]
  %v34 = vld [vmem:[%s0 + $0x38] sm:$0xff]
  %v35 = vld [vmem:[%s0 + $0x40] sm:$0xff]
  %v36 = vld [vmem:[%s0 + $0x48] sm:$0xff]
  %v37 = vld [vmem:[%s0 + $0x50] sm:$0xff]
  %v38 = vld [vmem:[%s0 + $0x58] sm:$0xff]
  %v39 = vld [vmem:[%s0 + $0x60] sm:$0xff]
  %v40 = vld [vmem:[%s0 + $0x68] sm:$0xff]
  %v41 = vld [vmem:[%s0 + $0x70] sm:$0xff]
  %v42 = vld [vmem:[%s0 + $0x78] sm:$0xff]
  %v43 = vld [vmem:[%s0 + $0x80] sm:$0xff]
  %vm44 = vcmask 261120
  %v45 = vsel %vm44, %v27, 0.0
  %46 = vadd.xlane.f32.xlu0 %v45
  %v47 = vpop.xlane.xlu0 %46
  %v48 = vsel %vm44, %v28, 0.0
  %49 = vadd.xlane.f32.xlu0 %v48
  %v50 = vpop.xlane.xlu0 %49
  %v51 = vsel %vm44, %v29, 0.0
  %52 = vadd.xlane.f32.xlu0 %v51
  %v53 = vpop.xlane.xlu0 %52
  %v54 = vsel %vm44, %v30, 0.0
  %55 = vadd.xlane.f32.xlu0 %v54
  %v56 = vpop.xlane.xlu0 %55
  %v57 = vsel %vm44, %v31, 0.0
  %58 = vadd.xlane.f32.xlu0 %v57
  %v59 = vpop.xlane.xlu0 %58
  %v60 = vsel %vm44, %v32, 0.0
  %61 = vadd.xlane.f32.xlu0 %v60
  %v62 = vpop.xlane.xlu0 %61
  %v63 = vsel %vm44, %v33, 0.0
  %64 = vadd.xlane.f32.xlu0 %v63
  %v65 = vpop.xlane.xlu0 %64
  %v66 = vsel %vm44, %v34, 0.0
  %67 = vadd.xlane.f32.xlu0 %v66
  %v68 = vpop.xlane.xlu0 %67
  %v69 = vsel %vm44, %v35, 0.0
  %70 = vadd.xlane.f32.xlu0 %v69
  %v71 = vpop.xlane.xlu0 %70
  %v72 = vsel %vm44, %v36, 0.0
  %73 = vadd.xlane.f32.xlu0 %v72
  %v74 = vpop.xlane.xlu0 %73
  %v75 = vsel %vm44, %v37, 0.0
  %76 = vadd.xlane.f32.xlu0 %v75
  %v77 = vpop.xlane.xlu0 %76
  %v78 = vsel %vm44, %v38, 0.0
  %79 = vadd.xlane.f32.xlu0 %v78
  %v80 = vpop.xlane.xlu0 %79
  %v81 = vsel %vm44, %v39, 0.0
  %82 = vadd.xlane.f32.xlu0 %v81
  %v83 = vpop.xlane.xlu0 %82
  %v84 = vsel %vm44, %v40, 0.0
  %85 = vadd.xlane.f32.xlu0 %v84
  %v86 = vpop.xlane.xlu0 %85
  %v87 = vsel %vm44, %v41, 0.0
  %88 = vadd.xlane.f32.xlu0 %v87
  %v89 = vpop.xlane.xlu0 %88
  %v90 = vsel %vm44, %v42, 0.0
  %91 = vadd.xlane.f32.xlu0 %v90
  %v92 = vpop.xlane.xlu0 %91
  %v93 = vsel %vm44, %v43, 0.0
  %94 = vadd.xlane.f32.xlu0 %v93
  %v95 = vpop.xlane.xlu0 %94
  %v96 = vrcp.pop 32.0
  %v97 = vmul.f32 32.0, %v96
  %v98 = vsub.f32 1.0, %v97
  %v99 = vmul.f32 %v96, %v98
  %v100 = vadd.f32 %v96, %v99
  %vm101 = vweird.f32 %v96
  %v102 = vsel %vm101, %v96, %v100
  %v103 = vmul.f32 %v47, %v102
  %v104 = vmul.f32 %v50, %v102
  %v105 = vmul.f32 %v53, %v102
  %v106 = vmul.f32 %v56, %v102
  %v107 = vmul.f32 %v59, %v102
  %v108 = vmul.f32 %v62, %v102
  %v109 = vmul.f32 %v65, %v102
  %v110 = vmul.f32 %v68, %v102
  %v111 = vmul.f32 %v71, %v102
  %v112 = vmul.f32 %v74, %v102
  %v113 = vmul.f32 %v77, %v102
  %v114 = vmul.f32 %v80, %v102
  %v115 = vmul.f32 %v83, %v102
  %v116 = vmul.f32 %v86, %v102
  %v117 = vmul.f32 %v89, %v102
  %v118 = vmul.f32 %v92, %v102
  %v119 = vmul.f32 %v95, %v102
  %v120 = vsub.f32 %v27, %v103
  %v121 = vsub.f32 %v28, %v104
  %v122 = vsub.f32 %v29, %v105
  %v123 = vsub.f32 %v30, %v106
  %v124 = vsub.f32 %v31, %v107
  %v125 = vsub.f32 %v32, %v108
  %v126 = vsub.f32 %v33, %v109
  %v127 = vsub.f32 %v34, %v110
  %v128 = vsub.f32 %v35, %v111
  %v129 = vsub.f32 %v36, %v112
  %v130 = vsub.f32 %v37, %v113
  %v131 = vsub.f32 %v38, %v114
  %v132 = vsub.f32 %v39, %v115
  %v133 = vsub.f32 %v40, %v116
  %v134 = vsub.f32 %v41, %v117
  %v135 = vsub.f32 %v42, %v118
  %v136 = vsub.f32 %v43, %v119
  %v137 = vmul.f32 %v120, %v120
  %v138 = vmul.f32 %v121, %v121
  %v139 = vmul.f32 %v122, %v122
  %v140 = vmul.f32 %v123, %v123
  %v141 = vmul.f32 %v124, %v124
  %v142 = vmul.f32 %v125, %v125
  %v143 = vmul.f32 %v126, %v126
  %v144 = vmul.f32 %v127, %v127
  %v145 = vmul.f32 %v128, %v128
  %v146 = vmul.f32 %v129, %v129
  %v147 = vmul.f32 %v130, %v130
  %v148 = vmul.f32 %v131, %v131
  %v149 = vmul.f32 %v132, %v132
  %v150 = vmul.f32 %v133, %v133
  %v151 = vmul.f32 %v134, %v134
  %v152 = vmul.f32 %v135, %v135
  %v153 = vmul.f32 %v136, %v136
  %v154 = vsel %vm44, %v137, 0.0
  %155 = vadd.xlane.f32.xlu0 %v154
  %v156 = vpop.xlane.xlu0 %155
  %v157 = vsel %vm44, %v138, 0.0
  %158 = vadd.xlane.f32.xlu0 %v157
  %v159 = vpop.xlane.xlu0 %158
  %v160 = vsel %vm44, %v139, 0.0
  %161 = vadd.xlane.f32.xlu0 %v160
  %v162 = vpop.xlane.xlu0 %161
  %v163 = vsel %vm44, %v140, 0.0
  %164 = vadd.xlane.f32.xlu0 %v163
  %v165 = vpop.xlane.xlu0 %164
  %v166 = vsel %vm44, %v141, 0.0
  %167 = vadd.xlane.f32.xlu0 %v166
  %v168 = vpop.xlane.xlu0 %167
  %v169 = vsel %vm44, %v142, 0.0
  %170 = vadd.xlane.f32.xlu0 %v169
  %v171 = vpop.xlane.xlu0 %170
  %v172 = vsel %vm44, %v143, 0.0
  %173 = vadd.xlane.f32.xlu0 %v172
  %v174 = vpop.xlane.xlu0 %173
  %v175 = vsel %vm44, %v144, 0.0
  %176 = vadd.xlane.f32.xlu0 %v175
  %v177 = vpop.xlane.xlu0 %176
  %v178 = vsel %vm44, %v145, 0.0
  %179 = vadd.xlane.f32.xlu0 %v178
  %v180 = vpop.xlane.xlu0 %179
  %v181 = vsel %vm44, %v146, 0.0
  %182 = vadd.xlane.f32.xlu0 %v181
  %v183 = vpop.xlane.xlu0 %182
  %v184 = vsel %vm44, %v147, 0.0
  %185 = vadd.xlane.f32.xlu0 %v184
  %v186 = vpop.xlane.xlu0 %185
  %v187 = vsel %vm44, %v148, 0.0
  %188 = vadd.xlane.f32.xlu0 %v187
  %v189 = vpop.xlane.xlu0 %188
  %v190 = vsel %vm44, %v149, 0.0
  %191 = vadd.xlane.f32.xlu0 %v190
  %v192 = vpop.xlane.xlu0 %191
  %v193 = vsel %vm44, %v150, 0.0
  %194 = vadd.xlane.f32.xlu0 %v193
  %v195 = vpop.xlane.xlu0 %194
  %v196 = vsel %vm44, %v151, 0.0
  %197 = vadd.xlane.f32.xlu0 %v196
  %v198 = vpop.xlane.xlu0 %197
  %v199 = vsel %vm44, %v152, 0.0
  %200 = vadd.xlane.f32.xlu0 %v199
  %v201 = vpop.xlane.xlu0 %200
  %v202 = vsel %vm44, %v153, 0.0
  %203 = vadd.xlane.f32.xlu0 %v202
  %v204 = vpop.xlane.xlu0 %203
  %v205 = vmul.f32 %v156, %v102
  %v206 = vmul.f32 %v159, %v102
  %v207 = vmul.f32 %v162, %v102
  %v208 = vmul.f32 %v165, %v102
  %v209 = vmul.f32 %v168, %v102
  %v210 = vmul.f32 %v171, %v102
  %v211 = vmul.f32 %v174, %v102
  %v212 = vmul.f32 %v177, %v102
  %v213 = vmul.f32 %v180, %v102
  %v214 = vmul.f32 %v183, %v102
  %v215 = vmul.f32 %v186, %v102
  %v216 = vmul.f32 %v189, %v102
  %v217 = vmul.f32 %v192, %v102
  %v218 = vmul.f32 %v195, %v102
  %v219 = vmul.f32 %v198, %v102
  %v220 = vmul.f32 %v201, %v102
  %v221 = vmul.f32 %v204, %v102
  %v222 = vadd.f32 %v205, 1e-05
  %v223 = vadd.f32 %v206, 1e-05
  %v224 = vadd.f32 %v207, 1e-05
  %v225 = vadd.f32 %v208, 1e-05
  %v226 = vadd.f32 %v209, 1e-05
  %v227 = vadd.f32 %v210, 1e-05
  %v228 = vadd.f32 %v211, 1e-05
  %v229 = vadd.f32 %v212, 1e-05
  %v230 = vadd.f32 %v213, 1e-05
  %v231 = vadd.f32 %v214, 1e-05
  %v232 = vadd.f32 %v215, 1e-05
  %v233 = vadd.f32 %v216, 1e-05
  %v234 = vadd.f32 %v217, 1e-05
  %v235 = vadd.f32 %v218, 1e-05
  %v236 = vadd.f32 %v219, 1e-05
  %v237 = vadd.f32 %v220, 1e-05
  %v238 = vadd.f32 %v221, 1e-05
  %v239 = vrsqrt.pop %v222
  %v240 = vmul.f32 %v239, %v222
  %v241 = vmul.f32 %v240, %v239
  %v242 = vmul.f32 0.5, %v241
  %v243 = vsub.f32 1.5, %v242
  %v244 = vmul.f32 %v239, %v243
  %vm245 = vweird.f32 %v222
  %vm246 = vweird.f32 %v239
  %vm247 = vmor %vm245, %vm246
  %v248 = vsel %vm247, %v239, %v244
  %v249 = vrsqrt.pop %v223
  %v250 = vmul.f32 %v249, %v223
  %v251 = vmul.f32 %v250, %v249
  %v252 = vmul.f32 0.5, %v251
  %v253 = vsub.f32 1.5, %v252
  %v254 = vmul.f32 %v249, %v253
  %vm255 = vweird.f32 %v223
  %vm256 = vweird.f32 %v249
  %vm257 = vmor %vm255, %vm256
  %v258 = vsel %vm257, %v249, %v254
  %v259 = vrsqrt.pop %v224
  %v260 = vmul.f32 %v259, %v224
  %v261 = vmul.f32 %v260, %v259
  %v262 = vmul.f32 0.5, %v261
  %v263 = vsub.f32 1.5, %v262
  %v264 = vmul.f32 %v259, %v263
  %vm265 = vweird.f32 %v224
  %vm266 = vweird.f32 %v259
  %vm267 = vmor %vm265, %vm266
  %v268 = vsel %vm267, %v259, %v264
  %v269 = vrsqrt.pop %v225
  %v270 = vmul.f32 %v269, %v225
  %v271 = vmul.f32 %v270, %v269
  %v272 = vmul.f32 0.5, %v271
  %v273 = vsub.f32 1.5, %v272
  %v274 = vmul.f32 %v269, %v273
  %vm275 = vweird.f32 %v225
  %vm276 = vweird.f32 %v269
  %vm277 = vmor %vm275, %vm276
  %v278 = vsel %vm277, %v269, %v274
  %v279 = vrsqrt.pop %v226
  %v280 = vmul.f32 %v279, %v226
  %v281 = vmul.f32 %v280, %v279
  %v282 = vmul.f32 0.5, %v281
  %v283 = vsub.f32 1.5, %v282
  %v284 = vmul.f32 %v279, %v283
  %vm285 = vweird.f32 %v226
  %vm286 = vweird.f32 %v279
  %vm287 = vmor %vm285, %vm286
  %v288 = vsel %vm287, %v279, %v284
  %v289 = vrsqrt.pop %v227
  %v290 = vmul.f32 %v289, %v227
  %v291 = vmul.f32 %v290, %v289
  %v292 = vmul.f32 0.5, %v291
  %v293 = vsub.f32 1.5, %v292
  %v294 = vmul.f32 %v289, %v293
  %vm295 = vweird.f32 %v227
  %vm296 = vweird.f32 %v289
  %vm297 = vmor %vm295, %vm296
  %v298 = vsel %vm297, %v289, %v294
  %v299 = vrsqrt.pop %v228
  %v300 = vmul.f32 %v299, %v228
  %v301 = vmul.f32 %v300, %v299
  %v302 = vmul.f32 0.5, %v301
  %v303 = vsub.f32 1.5, %v302
  %v304 = vmul.f32 %v299, %v303
  %vm305 = vweird.f32 %v228
  %vm306 = vweird.f32 %v299
  %vm307 = vmor %vm305, %vm306
  %v308 = vsel %vm307, %v299, %v304
  %v309 = vrsqrt.pop %v229
  %v310 = vmul.f32 %v309, %v229
  %v311 = vmul.f32 %v310, %v309
  %v312 = vmul.f32 0.5, %v311
  %v313 = vsub.f32 1.5, %v312
  %v314 = vmul.f32 %v309, %v313
  %vm315 = vweird.f32 %v229
  %vm316 = vweird.f32 %v309
  %vm317 = vmor %vm315, %vm316
  %v318 = vsel %vm317, %v309, %v314
  %v319 = vrsqrt.pop %v230
  %v320 = vmul.f32 %v319, %v230
  %v321 = vmul.f32 %v320, %v319
  %v322 = vmul.f32 0.5, %v321
  %v323 = vsub.f32 1.5, %v322
  %v324 = vmul.f32 %v319, %v323
  %vm325 = vweird.f32 %v230
  %vm326 = vweird.f32 %v319
  %vm327 = vmor %vm325, %vm326
  %v328 = vsel %vm327, %v319, %v324
  %v329 = vrsqrt.pop %v231
  %v330 = vmul.f32 %v329, %v231
  %v331 = vmul.f32 %v330, %v329
  %v332 = vmul.f32 0.5, %v331
  %v333 = vsub.f32 1.5, %v332
  %v334 = vmul.f32 %v329, %v333
  %vm335 = vweird.f32 %v231
  %vm336 = vweird.f32 %v329
  %vm337 = vmor %vm335, %vm336
  %v338 = vsel %vm337, %v329, %v334
  %v339 = vrsqrt.pop %v232
  %v340 = vmul.f32 %v339, %v232
  %v341 = vmul.f32 %v340, %v339
  %v342 = vmul.f32 0.5, %v341
  %v343 = vsub.f32 1.5, %v342
  %v344 = vmul.f32 %v339, %v343
  %vm345 = vweird.f32 %v232
  %vm346 = vweird.f32 %v339
  %vm347 = vmor %vm345, %vm346
  %v348 = vsel %vm347, %v339, %v344
  %v349 = vrsqrt.pop %v233
  %v350 = vmul.f32 %v349, %v233
  %v351 = vmul.f32 %v350, %v349
  %v352 = vmul.f32 0.5, %v351
  %v353 = vsub.f32 1.5, %v352
  %v354 = vmul.f32 %v349, %v353
  %vm355 = vweird.f32 %v233
  %vm356 = vweird.f32 %v349
  %vm357 = vmor %vm355, %vm356
  %v358 = vsel %vm357, %v349, %v354
  %v359 = vrsqrt.pop %v234
  %v360 = vmul.f32 %v359, %v234
  %v361 = vmul.f32 %v360, %v359
  %v362 = vmul.f32 0.5, %v361
  %v363 = vsub.f32 1.5, %v362
  %v364 = vmul.f32 %v359, %v363
  %vm365 = vweird.f32 %v234
  %vm366 = vweird.f32 %v359
  %vm367 = vmor %vm365, %vm366
  %v368 = vsel %vm367, %v359, %v364
  %v369 = vrsqrt.pop %v235
  %v370 = vmul.f32 %v369, %v235
  %v371 = vmul.f32 %v370, %v369
  %v372 = vmul.f32 0.5, %v371
  %v373 = vsub.f32 1.5, %v372
  %v374 = vmul.f32 %v369, %v373
  %vm375 = vweird.f32 %v235
  %vm376 = vweird.f32 %v369
  %vm377 = vmor %vm375, %vm376
  %v378 = vsel %vm377, %v369, %v374
  %v379 = vrsqrt.pop %v236
  %v380 = vmul.f32 %v379, %v236
  %v381 = vmul.f32 %v380, %v379
  %v382 = vmul.f32 0.5, %v381
  %v383 = vsub.f32 1.5, %v382
  %v384 = vmul.f32 %v379, %v383
  %vm385 = vweird.f32 %v236
  %vm386 = vweird.f32 %v379
  %vm387 = vmor %vm385, %vm386
  %v388 = vsel %vm387, %v379, %v384
  %v389 = vrsqrt.pop %v237
  %v390 = vmul.f32 %v389, %v237
  %v391 = vmul.f32 %v390, %v389
  %v392 = vmul.f32 0.5, %v391
  %v393 = vsub.f32 1.5, %v392
  %v394 = vmul.f32 %v389, %v393
  %vm395 = vweird.f32 %v237
  %vm396 = vweird.f32 %v389
  %vm397 = vmor %vm395, %vm396
  %v398 = vsel %vm397, %v389, %v394
  %v399 = vrsqrt.pop %v238
  %v400 = vmul.f32 %v399, %v238
  %v401 = vmul.f32 %v400, %v399
  %v402 = vmul.f32 0.5, %v401
  %v403 = vsub.f32 1.5, %v402
  %v404 = vmul.f32 %v399, %v403
  %vm405 = vweird.f32 %v238
  %vm406 = vweird.f32 %v399
  %vm407 = vmor %vm405, %vm406
  %v408 = vsel %vm407, %v399, %v404
  %v409 = vmul.f32 %v120, %v248
  %v410 = vmul.f32 %v121, %v258
  %v411 = vmul.f32 %v122, %v268
  %v412 = vmul.f32 %v123, %v278
  %v413 = vmul.f32 %v124, %v288
  %v414 = vmul.f32 %v125, %v298
  %v415 = vmul.f32 %v126, %v308
  %v416 = vmul.f32 %v127, %v318
  %v417 = vmul.f32 %v128, %v328
  %v418 = vmul.f32 %v129, %v338
  %v419 = vmul.f32 %v130, %v348
  %v420 = vmul.f32 %v131, %v358
  %v421 = vmul.f32 %v132, %v368
  %v422 = vmul.f32 %v133, %v378
  %v423 = vmul.f32 %v134, %v388
  %v424 = vmul.f32 %v135, %v398
  %v425 = vmul.f32 %v136, %v408
  %v426 = vld [vmem:[%s1] sm:$0x1]
  %v428 = vperm.slane %v426, 0
  %v430 = vmul.f32 %v409, %v428
  %v431 = vmul.f32 %v410, %v428
  %v432 = vmul.f32 %v411, %v428
  %v433 = vmul.f32 %v412, %v428
  %v434 = vmul.f32 %v413, %v428
  %v435 = vmul.f32 %v414, %v428
  %v436 = vmul.f32 %v415, %v428
  %v437 = vmul.f32 %v416, %v428
  %v438 = vmul.f32 %v417, %v428
  %v439 = vmul.f32 %v418, %v428
  %v440 = vmul.f32 %v419, %v428
  %v441 = vmul.f32 %v420, %v428
  %v442 = vmul.f32 %v421, %v428
  %v443 = vmul.f32 %v422, %v428
  %v444 = vmul.f32 %v423, %v428
  %v445 = vmul.f32 %v424, %v428
  %v446 = vmul.f32 %v425, %v428
  %v447 = vld [vmem:[%s2] sm:$0x1]
  %v449 = vperm.slane %v447, 0
  %v451 = vadd.f32 %v430, %v449
  %v452 = vadd.f32 %v431, %v449
  %v453 = vadd.f32 %v432, %v449
  %v454 = vadd.f32 %v433, %v449
  %v455 = vadd.f32 %v434, %v449
  %v456 = vadd.f32 %v435, %v449
  %v457 = vadd.f32 %v436, %v449
  %v458 = vadd.f32 %v437, %v449
  %v459 = vadd.f32 %v438, %v449
  %v460 = vadd.f32 %v439, %v449
  %v461 = vadd.f32 %v440, %v449
  %v462 = vadd.f32 %v441, %v449
  %v463 = vadd.f32 %v442, %v449
  %v464 = vadd.f32 %v443, %v449
  %v465 = vadd.f32 %v444, %v449
  %v466 = vadd.f32 %v445, %v449
  %v467 = vadd.f32 %v446, %v449
  %v468 = vpack.c.bf16 %v452, %v451
  %v469 = vpack.c.bf16 %v454, %v453
  %v470 = vpack.c.bf16 %v456, %v455
  %v471 = vpack.c.bf16 %v458, %v457
  %v472 = vpack.c.bf16 %v460, %v459
  %v473 = vpack.c.bf16 %v462, %v461
  %v474 = vpack.c.bf16 %v464, %v463
  %v475 = vpack.c.bf16 %v466, %v465
  %v476 = vpack.c.bf16 %v467, %v467
  %v477 = vld [vmem:[%s3] sm:$0xf]
  %v478 = vld [vmem:[%s3 + $0x4] sm:$0xf]
  %v479 = vld [vmem:[%s3 + $0x8] sm:$0xf]
  %v480 = vld [vmem:[%s3 + $0xc] sm:$0xf]
  %v481 = vld [vmem:[%s4] sm:$0x1]
  %v483 = vperm.slane %v481, 0
  %v489 = vunpack.c.l.b16 %v477
  %v490 = vunpack.c.l.b16 %v478
  %v491 = vunpack.c.l.b16 %v479
  %v492 = vunpack.c.l.b16 %v480
  %v493 = vpack.c.b16 %v490, %v489
  %v494 = vpack.c.b16 %v492, %v491
  %v498 = vsel %vm44, %v468, 0
  %v501 = vsel %vm44, %v469, 0
  %v504 = vsel %vm44, %v470, 0
  %v507 = vsel %vm44, %v471, 0
  %v510 = vsel %vm44, %v472, 0
  %v513 = vsel %vm44, %v473, 0
  %v516 = vsel %vm44, %v474, 0
  %v519 = vsel %vm44, %v475, 0
  %v522 = vsel %vm44, %v476, 0
  %524 = vmatpush.bf16.msra.mxu0 0
  %525 = vmatpush.bf16.msra.mxu0 0
  %526 = vmatpush.bf16.msra.mxu0 0
  %527 = vmatpush.bf16.msra.mxu0 0
  %528 = vmatpush.bf16.msra.mxu0 0
  %529 = vmatpush.bf16.msra.mxu0 0
  %530 = vmatpush.bf16.msra.mxu0 %v494
  %531 = vmatpush.bf16.msra.mxu0 %v493
  %532 = vmatmul.bf16.gmra.mxu0 %v498
  %v533 = vpop.f32.mrf.mxu0
  %v534 = vadd.f32 %v483, %v533
  %v535 = vpop.f32.mrf.mxu0
  %v536 = vadd.f32 %v483, %v535
  %537 = vmatmul.bf16.gmra.mxu0 %v501
  %v538 = vpop.f32.mrf.mxu0
  %v539 = vadd.f32 %v483, %v538
  %v540 = vpop.f32.mrf.mxu0
  %v541 = vadd.f32 %v483, %v540
  %542 = vmatmul.bf16.gmra.mxu0 %v504
  %v543 = vpop.f32.mrf.mxu0
  %v544 = vadd.f32 %v483, %v543
  %v545 = vpop.f32.mrf.mxu0
  %v546 = vadd.f32 %v483, %v545
  %547 = vmatmul.bf16.gmra.mxu0 %v507
  %v548 = vpop.f32.mrf.mxu0
  %v549 = vadd.f32 %v483, %v548
  %v550 = vpop.f32.mrf.mxu0
  %v551 = vadd.f32 %v483, %v550
  %552 = vmatmul.bf16.gmra.mxu0 %v510
  %v553 = vpop.f32.mrf.mxu0
  %v554 = vadd.f32 %v483, %v553
  %v555 = vpop.f32.mrf.mxu0
  %v556 = vadd.f32 %v483, %v555
  %557 = vmatmul.bf16.gmra.mxu0 %v513
  %v558 = vpop.f32.mrf.mxu0
  %v559 = vadd.f32 %v483, %v558
  %v560 = vpop.f32.mrf.mxu0
  %v561 = vadd.f32 %v483, %v560
  %562 = vmatmul.bf16.gmra.mxu0 %v516
  %v563 = vpop.f32.mrf.mxu0
  %v564 = vadd.f32 %v483, %v563
  %v565 = vpop.f32.mrf.mxu0
  %v566 = vadd.f32 %v483, %v565
  %567 = vmatmul.bf16.gmra.mxu0 %v519
  %v568 = vpop.f32.mrf.mxu0
  %v569 = vadd.f32 %v483, %v568
  %v570 = vpop.f32.mrf.mxu0
  %v571 = vadd.f32 %v483, %v570
  %572 = vmatmul.bf16.gmra.mxu0 %v522
  %v573 = vpop.f32.mrf.mxu0
  %v574 = vadd.f32 %v483, %v573
  %v575 = vpop.f32.mrf.mxu0
  %576 = vdwg.mxu0
  %v577 = vpack.c.bf16 %v534, %v534
  %v578 = vpack.c.bf16 %v536, %v536
  %v579 = vpack.c.bf16 %v539, %v539
  %v580 = vpack.c.bf16 %v541, %v541
  %v581 = vpack.c.bf16 %v544, %v544
  %v582 = vpack.c.bf16 %v546, %v546
  %v583 = vpack.c.bf16 %v549, %v549
  %v584 = vpack.c.bf16 %v551, %v551
  %v585 = vpack.c.bf16 %v554, %v554
  %v586 = vpack.c.bf16 %v556, %v556
  %v587 = vpack.c.bf16 %v559, %v559
  %v588 = vpack.c.bf16 %v561, %v561
  %v589 = vpack.c.bf16 %v564, %v564
  %v590 = vpack.c.bf16 %v566, %v566
  %v591 = vpack.c.bf16 %v569, %v569
  %v592 = vpack.c.bf16 %v571, %v571
  %v593 = vpack.c.bf16 %v574, %v574
  %v595 = vshrl.u32 %v577, 16
  %v597 = vrot.slane %v595, 4
  %v598 = vrot.slane %v597, 4
  %v600 = vshrl.u32 %v578, 16
  %v602 = vrot.slane %v600, 4
  %v603 = vrot.slane %v602, 4
  %v605 = vshrl.u32 %v579, 16
  %v607 = vrot.slane %v605, 4
  %v608 = vrot.slane %v607, 4
  %v610 = vshrl.u32 %v580, 16
  %v612 = vrot.slane %v610, 4
  %v613 = vrot.slane %v612, 4
  %v615 = vshrl.u32 %v581, 16
  %v617 = vrot.slane %v615, 4
  %v618 = vrot.slane %v617, 4
  %v620 = vshrl.u32 %v582, 16
  %v622 = vrot.slane %v620, 4
  %v623 = vrot.slane %v622, 4
  %v625 = vshrl.u32 %v583, 16
  %v627 = vrot.slane %v625, 4
  %v628 = vrot.slane %v627, 4
  %v630 = vshrl.u32 %v584, 16
  %v632 = vrot.slane %v630, 4
  %v633 = vrot.slane %v632, 4
  %v635 = vshrl.u32 %v585, 16
  %v637 = vrot.slane %v635, 4
  %v638 = vrot.slane %v637, 4
  %v640 = vshrl.u32 %v586, 16
  %v642 = vrot.slane %v640, 4
  %v643 = vrot.slane %v642, 4
  %v645 = vshrl.u32 %v587, 16
  %v647 = vrot.slane %v645, 4
  %v648 = vrot.slane %v647, 4
  %v650 = vshrl.u32 %v588, 16
  %v652 = vrot.slane %v650, 4
  %v653 = vrot.slane %v652, 4
  %v655 = vshrl.u32 %v589, 16
  %v657 = vrot.slane %v655, 4
  %v658 = vrot.slane %v657, 4
  %v660 = vshrl.u32 %v590, 16
  %v662 = vrot.slane %v660, 4
  %v663 = vrot.slane %v662, 4
  %v665 = vshrl.u32 %v591, 16
  %v667 = vrot.slane %v665, 4
  %v668 = vrot.slane %v667, 4
  %v670 = vshrl.u32 %v592, 16
  %v672 = vrot.slane %v670, 4
  %v673 = vrot.slane %v672, 4
  %v675 = vshrl.u32 %v593, 16
  %v677 = vrot.slane %v675, 4
  %v678 = vrot.slane %v677, 4
  %v696 = vrot.slane %v577, 5
  %v697 = vrot.slane %v696, 4
  %v698 = vrot.slane %v578, 5
  %v699 = vrot.slane %v698, 4
  %v700 = vrot.slane %v579, 5
  %v701 = vrot.slane %v700, 4
  %v702 = vrot.slane %v580, 5
  %v703 = vrot.slane %v702, 4
  %v704 = vrot.slane %v581, 5
  %v705 = vrot.slane %v704, 4
  %v706 = vrot.slane %v582, 5
  %v707 = vrot.slane %v706, 4
  %v708 = vrot.slane %v583, 5
  %v709 = vrot.slane %v708, 4
  %v710 = vrot.slane %v584, 5
  %v711 = vrot.slane %v710, 4
  %v712 = vrot.slane %v585, 5
  %v713 = vrot.slane %v712, 4
  %v714 = vrot.slane %v586, 5
  %v715 = vrot.slane %v714, 4
  %v716 = vrot.slane %v587, 5
  %v717 = vrot.slane %v716, 4
  %v718 = vrot.slane %v588, 5
  %v719 = vrot.slane %v718, 4
  %v720 = vrot.slane %v589, 5
  %v721 = vrot.slane %v720, 4
  %v722 = vrot.slane %v590, 5
  %v723 = vrot.slane %v722, 4
  %v724 = vrot.slane %v591, 5
  %v725 = vrot.slane %v724, 4
  %v726 = vrot.slane %v592, 5
  %v727 = vrot.slane %v726, 4
  %v728 = vrot.slane %v593, 5
  %v729 = vrot.slane %v728, 4
  %v730 = vrot.slane %v595, 5
  %v731 = vrot.slane %v730, 4
  %v732 = vrot.slane %v600, 5
  %v733 = vrot.slane %v732, 4
  %v734 = vrot.slane %v605, 5
  %v735 = vrot.slane %v734, 4
  %v736 = vrot.slane %v610, 5
  %v737 = vrot.slane %v736, 4
  %v738 = vrot.slane %v615, 5
  %v739 = vrot.slane %v738, 4
  %v740 = vrot.slane %v620, 5
  %v741 = vrot.slane %v740, 4
  %v742 = vrot.slane %v625, 5
  %v743 = vrot.slane %v742, 4
  %v744 = vrot.slane %v630, 5
  %v745 = vrot.slane %v744, 4
  %v746 = vrot.slane %v635, 5
  %v747 = vrot.slane %v746, 4
  %v748 = vrot.slane %v640, 5
  %v749 = vrot.slane %v748, 4
  %v750 = vrot.slane %v645, 5
  %v751 = vrot.slane %v750, 4
  %v752 = vrot.slane %v650, 5
  %v753 = vrot.slane %v752, 4
  %v754 = vrot.slane %v655, 5
  %v755 = vrot.slane %v754, 4
  %v756 = vrot.slane %v660, 5
  %v757 = vrot.slane %v756, 4
  %v758 = vrot.slane %v665, 5
  %v759 = vrot.slane %v758, 4
  %v760 = vrot.slane %v670, 5
  %v761 = vrot.slane %v760, 4
  %v762 = vrot.slane %v675, 5
  %v763 = vrot.slane %v762, 4
  %v764 = vrot.slane %v577, 6
  %v765 = vrot.slane %v764, 4
  %v766 = vrot.slane %v578, 6
  %v767 = vrot.slane %v766, 4
  %v768 = vrot.slane %v579, 6
  %v769 = vrot.slane %v768, 4
  %v770 = vrot.slane %v580, 6
  %v771 = vrot.slane %v770, 4
  %v772 = vrot.slane %v581, 6
  %v773 = vrot.slane %v772, 4
  %v774 = vrot.slane %v582, 6
  %v775 = vrot.slane %v774, 4
  %v776 = vrot.slane %v583, 6
  %v777 = vrot.slane %v776, 4
  %v778 = vrot.slane %v584, 6
  %v779 = vrot.slane %v778, 4
  %v780 = vrot.slane %v585, 6
  %v781 = vrot.slane %v780, 4
  %v782 = vrot.slane %v586, 6
  %v783 = vrot.slane %v782, 4
  %v784 = vrot.slane %v587, 6
  %v785 = vrot.slane %v784, 4
  %v786 = vrot.slane %v588, 6
  %v787 = vrot.slane %v786, 4
  %v788 = vrot.slane %v589, 6
  %v789 = vrot.slane %v788, 4
  %v790 = vrot.slane %v590, 6
  %v791 = vrot.slane %v790, 4
  %v792 = vrot.slane %v591, 6
  %v793 = vrot.slane %v792, 4
  %v794 = vrot.slane %v592, 6
  %v795 = vrot.slane %v794, 4
  %v796 = vrot.slane %v593, 6
  %v797 = vrot.slane %v796, 4
  %v798 = vrot.slane %v595, 6
  %v799 = vrot.slane %v798, 4
  %v800 = vrot.slane %v600, 6
  %v801 = vrot.slane %v800, 4
  %v802 = vrot.slane %v605, 6
  %v803 = vrot.slane %v802, 4
  %v804 = vrot.slane %v610, 6
  %v805 = vrot.slane %v804, 4
  %v806 = vrot.slane %v615, 6
  %v807 = vrot.slane %v806, 4
  %v808 = vrot.slane %v620, 6
  %v809 = vrot.slane %v808, 4
  %v810 = vrot.slane %v625, 6
  %v811 = vrot.slane %v810, 4
  %v812 = vrot.slane %v630, 6
  %v813 = vrot.slane %v812, 4
  %v814 = vrot.slane %v635, 6
  %v815 = vrot.slane %v814, 4
  %v816 = vrot.slane %v640, 6
  %v817 = vrot.slane %v816, 4
  %v818 = vrot.slane %v645, 6
  %v819 = vrot.slane %v818, 4
  %v820 = vrot.slane %v650, 6
  %v821 = vrot.slane %v820, 4
  %v822 = vrot.slane %v655, 6
  %v823 = vrot.slane %v822, 4
  %v824 = vrot.slane %v660, 6
  %v825 = vrot.slane %v824, 4
  %v826 = vrot.slane %v665, 6
  %v827 = vrot.slane %v826, 4
  %v828 = vrot.slane %v670, 6
  %v829 = vrot.slane %v828, 4
  %v830 = vrot.slane %v675, 6
  %v831 = vrot.slane %v830, 4
  %v832 = vrot.slane %v577, 7
  %v833 = vrot.slane %v832, 4
  %v834 = vrot.slane %v578, 7
  %v835 = vrot.slane %v834, 4
  %v836 = vrot.slane %v579, 7
  %v837 = vrot.slane %v836, 4
  %v838 = vrot.slane %v580, 7
  %v839 = vrot.slane %v838, 4
  %v840 = vrot.slane %v581, 7
  %v841 = vrot.slane %v840, 4
  %v842 = vrot.slane %v582, 7
  %v843 = vrot.slane %v842, 4
  %v844 = vrot.slane %v583, 7
  %v845 = vrot.slane %v844, 4
  %v846 = vrot.slane %v584, 7
  %v847 = vrot.slane %v846, 4
  %v848 = vrot.slane %v585, 7
  %v849 = vrot.slane %v848, 4
  %v850 = vrot.slane %v586, 7
  %v851 = vrot.slane %v850, 4
  %v852 = vrot.slane %v587, 7
  %v853 = vrot.slane %v852, 4
  %v854 = vrot.slane %v588, 7
  %v855 = vrot.slane %v854, 4
  %v856 = vrot.slane %v589, 7
  %v857 = vrot.slane %v856, 4
  %v858 = vrot.slane %v590, 7
  %v859 = vrot.slane %v858, 4
  %v860 = vrot.slane %v591, 7
  %v861 = vrot.slane %v860, 4
  %v862 = vrot.slane %v592, 7
  %v863 = vrot.slane %v862, 4
  %v864 = vrot.slane %v593, 7
  %v865 = vrot.slane %v864, 4
  %v866 = vrot.slane %v595, 7
  %v867 = vrot.slane %v866, 4
  %v868 = vrot.slane %v600, 7
  %v869 = vrot.slane %v868, 4
  %v870 = vrot.slane %v605, 7
  %v871 = vrot.slane %v870, 4
  %v872 = vrot.slane %v610, 7
  %v873 = vrot.slane %v872, 4
  %v874 = vrot.slane %v615, 7
  %v875 = vrot.slane %v874, 4
  %v876 = vrot.slane %v620, 7
  %v877 = vrot.slane %v876, 4
  %v878 = vrot.slane %v625, 7
  %v879 = vrot.slane %v878, 4
  %v880 = vrot.slane %v630, 7
  %v881 = vrot.slane %v880, 4
  %v882 = vrot.slane %v635, 7
  %v883 = vrot.slane %v882, 4
  %v884 = vrot.slane %v640, 7
  %v885 = vrot.slane %v884, 4
  %v886 = vrot.slane %v645, 7
  %v887 = vrot.slane %v886, 4
  %v888 = vrot.slane %v650, 7
  %v889 = vrot.slane %v888, 4
  %v890 = vrot.slane %v655, 7
  %v891 = vrot.slane %v890, 4
  %v892 = vrot.slane %v660, 7
  %v893 = vrot.slane %v892, 4
  %v894 = vrot.slane %v665, 7
  %v895 = vrot.slane %v894, 4
  %v896 = vrot.slane %v670, 7
  %v897 = vrot.slane %v896, 4
  %v898 = vrot.slane %v675, 7
  %v899 = vrot.slane %v898, 4
  %v900 = vunpack.c.l.b16 %v577
  %v901 = vunpack.c.l.b16 %v578
  %v902 = vunpack.c.l.b16 %v579
  %v903 = vunpack.c.l.b16 %v580
  %v904 = vunpack.c.l.b16 %v581
  %v905 = vunpack.c.l.b16 %v582
  %v906 = vunpack.c.l.b16 %v583
  %v907 = vunpack.c.l.b16 %v584
  %v908 = vunpack.c.l.b16 %v585
  %v909 = vunpack.c.l.b16 %v586
  %v910 = vunpack.c.l.b16 %v587
  %v911 = vunpack.c.l.b16 %v588
  %v912 = vunpack.c.l.b16 %v589
  %v913 = vunpack.c.l.b16 %v590
  %v914 = vunpack.c.l.b16 %v591
  %v915 = vunpack.c.l.b16 %v592
  %v916 = vunpack.c.l.b16 %v593
  %v917 = vpack.c.b16 %v900, %v900
  %v918 = vpack.c.b16 %v901, %v901
  %v919 = vpack.c.b16 %v902, %v902
  %v920 = vpack.c.b16 %v903, %v903
  %v921 = vpack.c.b16 %v904, %v904
  %v922 = vpack.c.b16 %v905, %v905
  %v923 = vpack.c.b16 %v906, %v906
  %v924 = vpack.c.b16 %v907, %v907
  %v925 = vpack.c.b16 %v908, %v908
  %v926 = vpack.c.b16 %v909, %v909
  %v927 = vpack.c.b16 %v910, %v910
  %v928 = vpack.c.b16 %v911, %v911
  %v929 = vpack.c.b16 %v912, %v912
  %v930 = vpack.c.b16 %v913, %v913
  %v931 = vpack.c.b16 %v914, %v914
  %v932 = vpack.c.b16 %v915, %v915
  %v933 = vpack.c.b16 %v916, %v916
  %v934 = vunpack.c.l.b16 %v917
  %v935 = vunpack.c.l.b16 %v918
  %v936 = vunpack.c.l.b16 %v919
  %v937 = vunpack.c.l.b16 %v920
  %v938 = vunpack.c.l.b16 %v921
  %v939 = vunpack.c.l.b16 %v922
  %v940 = vunpack.c.l.b16 %v923
  %v941 = vunpack.c.l.b16 %v924
  %v942 = vunpack.c.l.b16 %v925
  %v943 = vunpack.c.l.b16 %v926
  %v944 = vunpack.c.l.b16 %v927
  %v945 = vunpack.c.l.b16 %v928
  %v946 = vunpack.c.l.b16 %v929
  %v947 = vunpack.c.l.b16 %v930
  %v948 = vunpack.c.l.b16 %v931
  %v949 = vunpack.c.l.b16 %v932
  %v950 = vunpack.c.l.b16 %v933
  %v951 = vrot.slane %v935, 7
  %vm952 = vcmask 1041409
  %v953 = vsel %vm952, %v951, %v934
  %v954 = vrot.slane %v936, 6
  %vm955 = vcmask 1042434
  %v956 = vsel %vm955, %v954, %v953
  %v957 = vrot.slane %v937, 5
  %vm958 = vcmask 1043459
  %v959 = vsel %vm958, %v957, %v956
  %v960 = vrot.slane %v938, 4
  %vm961 = vcmask 1044484
  %v962 = vsel %vm961, %v960, %v959
  %v963 = vrot.slane %v939, 3
  %vm964 = vcmask 1045509
  %v965 = vsel %vm964, %v963, %v962
  %v966 = vrot.slane %v940, 2
  %vm967 = vcmask 1046534
  %v968 = vsel %vm967, %v966, %v965
  %v969 = vrot.slane %v941, 1
  %vm970 = vcmask 1047559
  %v971 = vsel %vm970, %v969, %v968
  %v972 = vrot.slane %v943, 7
  %v973 = vsel %vm952, %v972, %v942
  %v974 = vrot.slane %v944, 6
  %v975 = vsel %vm955, %v974, %v973
  %v976 = vrot.slane %v945, 5
  %v977 = vsel %vm958, %v976, %v975
  %v978 = vrot.slane %v946, 4
  %v979 = vsel %vm961, %v978, %v977
  %v980 = vrot.slane %v947, 3
  %v981 = vsel %vm964, %v980, %v979
  %v982 = vrot.slane %v948, 2
  %v983 = vsel %vm967, %v982, %v981
  %v984 = vrot.slane %v949, 1
  %v985 = vsel %vm970, %v984, %v983
  %v986 = vpack.c.b16 %v985, %v971
  %v987 = vpack.c.b16 %v950, %v950
  %988 = vrot.lane.b32.xlu0 %v986, 96
  %v989 = vpop.permute.xlu0 %988
  %990 = vrot.lane.b32.xlu0 %v987, 96
  %v991 = vpop.permute.xlu0 %990
  %vm992 = vcmask 64512
  %v994 = vsel %vm992, %v986, 0
  %v997 = vsel %vm992, %v987, 0
  %v1000 = vsel %vm992, %v989, 0
  %v1003 = vsel %vm992, %v991, 0
  %1005 = vmatpush.bf16.xpose.msra.mxu0 0
  %1006 = vmatpush.bf16.xpose.msra.mxu0 0
  %1007 = vmatpush.bf16.xpose.msra.mxu0 0
  %1008 = vmatpush.bf16.xpose.msra.mxu0 0
  %1009 = vmatpush.bf16.xpose.msra.mxu0 0
  %1010 = vmatpush.bf16.xpose.msra.mxu0 0
  %1011 = vmatpush.bf16.xpose.msra.mxu0 %v1003
  %1012 = vmatpush.bf16.xpose.msra.mxu0 %v1000
  %1013 = vmatmul.bf16.gmra.mxu0 %v994
  %v1014 = vpop.f32.mrf.mxu0
  %v1015 = vadd.f32 0.0, %v1014
  %v1016 = vpop.f32.mrf.mxu0
  %v1017 = vadd.f32 0.0, %v1016
  %1018 = vmatmul.bf16.gmra.mxu0 %v997
  %v1019 = vpop.f32.mrf.mxu0
  %v1020 = vadd.f32 0.0, %v1019
  %v1021 = vpop.f32.mrf.mxu0
  %1022 = vdwg.mxu0
  %v1023 = vunpack.c.l.b16 %v598
  %v1024 = vunpack.c.l.b16 %v603
  %v1025 = vunpack.c.l.b16 %v608
  %v1026 = vunpack.c.l.b16 %v613
  %v1027 = vunpack.c.l.b16 %v618
  %v1028 = vunpack.c.l.b16 %v623
  %v1029 = vunpack.c.l.b16 %v628
  %v1030 = vunpack.c.l.b16 %v633
  %v1031 = vunpack.c.l.b16 %v638
  %v1032 = vunpack.c.l.b16 %v643
  %v1033 = vunpack.c.l.b16 %v648
  %v1034 = vunpack.c.l.b16 %v653
  %v1035 = vunpack.c.l.b16 %v658
  %v1036 = vunpack.c.l.b16 %v663
  %v1037 = vunpack.c.l.b16 %v668
  %v1038 = vunpack.c.l.b16 %v673
  %v1039 = vunpack.c.l.b16 %v678
  %v1040 = vpack.c.b16 %v1023, %v1023
  %v1041 = vpack.c.b16 %v1024, %v1024
  %v1042 = vpack.c.b16 %v1025, %v1025
  %v1043 = vpack.c.b16 %v1026, %v1026
  %v1044 = vpack.c.b16 %v1027, %v1027
  %v1045 = vpack.c.b16 %v1028, %v1028
  %v1046 = vpack.c.b16 %v1029, %v1029
  %v1047 = vpack.c.b16 %v1030, %v1030
  %v1048 = vpack.c.b16 %v1031, %v1031
  %v1049 = vpack.c.b16 %v1032, %v1032
  %v1050 = vpack.c.b16 %v1033, %v1033
  %v1051 = vpack.c.b16 %v1034, %v1034
  %v1052 = vpack.c.b16 %v1035, %v1035
  %v1053 = vpack.c.b16 %v1036, %v1036
  %v1054 = vpack.c.b16 %v1037, %v1037
  %v1055 = vpack.c.b16 %v1038, %v1038
  %v1056 = vpack.c.b16 %v1039, %v1039
  %v1057 = vunpack.c.l.b16 %v1040
  %v1058 = vunpack.c.l.b16 %v1041
  %v1059 = vunpack.c.l.b16 %v1042
  %v1060 = vunpack.c.l.b16 %v1043
  %v1061 = vunpack.c.l.b16 %v1044
  %v1062 = vunpack.c.l.b16 %v1045
  %v1063 = vunpack.c.l.b16 %v1046
  %v1064 = vunpack.c.l.b16 %v1047
  %v1065 = vunpack.c.l.b16 %v1048
  %v1066 = vunpack.c.l.b16 %v1049
  %v1067 = vunpack.c.l.b16 %v1050
  %v1068 = vunpack.c.l.b16 %v1051
  %v1069 = vunpack.c.l.b16 %v1052
  %v1070 = vunpack.c.l.b16 %v1053
  %v1071 = vunpack.c.l.b16 %v1054
  %v1072 = vunpack.c.l.b16 %v1055
  %v1073 = vunpack.c.l.b16 %v1056
  %v1074 = vrot.slane %v1058, 7
  %v1075 = vsel %vm952, %v1074, %v1057
  %v1076 = vrot.slane %v1059, 6
  %v1077 = vsel %vm955, %v1076, %v1075
  %v1078 = vrot.slane %v1060, 5
  %v1079 = vsel %vm958, %v1078, %v1077
  %v1080 = vrot.slane %v1061, 4
  %v1081 = vsel %vm961, %v1080, %v1079
  %v1082 = vrot.slane %v1062, 3
  %v1083 = vsel %vm964, %v1082, %v1081
  %v1084 = vrot.slane %v1063, 2
  %v1085 = vsel %vm967, %v1084, %v1083
  %v1086 = vrot.slane %v1064, 1
  %v1087 = vsel %vm970, %v1086, %v1085
  %v1088 = vrot.slane %v1066, 7
  %v1089 = vsel %vm952, %v1088, %v1065
  %v1090 = vrot.slane %v1067, 6
  %v1091 = vsel %vm955, %v1090, %v1089
  %v1092 = vrot.slane %v1068, 5
  %v1093 = vsel %vm958, %v1092, %v1091
  %v1094 = vrot.slane %v1069, 4
  %v1095 = vsel %vm961, %v1094, %v1093
  %v1096 = vrot.slane %v1070, 3
  %v1097 = vsel %vm964, %v1096, %v1095
  %v1098 = vrot.slane %v1071, 2
  %v1099 = vsel %vm967, %v1098, %v1097
  %v1100 = vrot.slane %v1072, 1
  %v1101 = vsel %vm970, %v1100, %v1099
  %v1102 = vpack.c.b16 %v1101, %v1087
  %v1103 = vpack.c.b16 %v1073, %v1073
  %1104 = vrot.lane.b32.xlu0 %v1102, 96
  %v1105 = vpop.permute.xlu0 %1104
  %1106 = vrot.lane.b32.xlu0 %v1103, 96
  %v1107 = vpop.permute.xlu0 %1106
  %v1109 = vsel %vm992, %v1102, 0
  %v1112 = vsel %vm992, %v1103, 0
  %v1115 = vsel %vm992, %v1105, 0
  %v1118 = vsel %vm992, %v1107, 0
  %1120 = vmatpush.bf16.xpose.msra.mxu0 0
  %1121 = vmatpush.bf16.xpose.msra.mxu0 0
  %1122 = vmatpush.bf16.xpose.msra.mxu0 0
  %1123 = vmatpush.bf16.xpose.msra.mxu0 0
  %1124 = vmatpush.bf16.xpose.msra.mxu0 0
  %1125 = vmatpush.bf16.xpose.msra.mxu0 0
  %1126 = vmatpush.bf16.xpose.msra.mxu0 %v1118
  %1127 = vmatpush.bf16.xpose.msra.mxu0 %v1115
  %1128 = vmatmul.bf16.gmra.mxu0 %v1109
  %v1129 = vpop.f32.mrf.mxu0
  %v1130 = vadd.f32 0.0, %v1129
  %v1131 = vpop.f32.mrf.mxu0
  %v1132 = vadd.f32 0.0, %v1131
  %1133 = vmatmul.bf16.gmra.mxu0 %v1112
  %v1134 = vpop.f32.mrf.mxu0
  %v1135 = vadd.f32 0.0, %v1134
  %v1136 = vpop.f32.mrf.mxu0
  %1137 = vdwg.mxu0
  %v1138 = vunpack.c.l.b16 %v697
  %v1139 = vunpack.c.l.b16 %v699
  %v1140 = vunpack.c.l.b16 %v701
  %v1141 = vunpack.c.l.b16 %v703
  %v1142 = vunpack.c.l.b16 %v705
  %v1143 = vunpack.c.l.b16 %v707
  %v1144 = vunpack.c.l.b16 %v709
  %v1145 = vunpack.c.l.b16 %v711
  %v1146 = vunpack.c.l.b16 %v713
  %v1147 = vunpack.c.l.b16 %v715
  %v1148 = vunpack.c.l.b16 %v717
  %v1149 = vunpack.c.l.b16 %v719
  %v1150 = vunpack.c.l.b16 %v721
  %v1151 = vunpack.c.l.b16 %v723
  %v1152 = vunpack.c.l.b16 %v725
  %v1153 = vunpack.c.l.b16 %v727
  %v1154 = vunpack.c.l.b16 %v729
  %v1155 = vpack.c.b16 %v1138, %v1138
  %v1156 = vpack.c.b16 %v1139, %v1139
  %v1157 = vpack.c.b16 %v1140, %v1140
  %v1158 = vpack.c.b16 %v1141, %v1141
  %v1159 = vpack.c.b16 %v1142, %v1142
  %v1160 = vpack.c.b16 %v1143, %v1143
  %v1161 = vpack.c.b16 %v1144, %v1144
  %v1162 = vpack.c.b16 %v1145, %v1145
  %v1163 = vpack.c.b16 %v1146, %v1146
  %v1164 = vpack.c.b16 %v1147, %v1147
  %v1165 = vpack.c.b16 %v1148, %v1148
  %v1166 = vpack.c.b16 %v1149, %v1149
  %v1167 = vpack.c.b16 %v1150, %v1150
  %v1168 = vpack.c.b16 %v1151, %v1151
  %v1169 = vpack.c.b16 %v1152, %v1152
  %v1170 = vpack.c.b16 %v1153, %v1153
  %v1171 = vpack.c.b16 %v1154, %v1154
  %v1172 = vunpack.c.l.b16 %v1155
  %v1173 = vunpack.c.l.b16 %v1156
  %v1174 = vunpack.c.l.b16 %v1157
  %v1175 = vunpack.c.l.b16 %v1158
  %v1176 = vunpack.c.l.b16 %v1159
  %v1177 = vunpack.c.l.b16 %v1160
  %v1178 = vunpack.c.l.b16 %v1161
  %v1179 = vunpack.c.l.b16 %v1162
  %v1180 = vunpack.c.l.b16 %v1163
  %v1181 = vunpack.c.l.b16 %v1164
  %v1182 = vunpack.c.l.b16 %v1165
  %v1183 = vunpack.c.l.b16 %v1166
  %v1184 = vunpack.c.l.b16 %v1167
  %v1185 = vunpack.c.l.b16 %v1168
  %v1186 = vunpack.c.l.b16 %v1169
  %v1187 = vunpack.c.l.b16 %v1170
  %v1188 = vunpack.c.l.b16 %v1171
  %v1189 = vrot.slane %v1173, 7
  %v1190 = vsel %vm952, %v1189, %v1172
  %v1191 = vrot.slane %v1174, 6
  %v1192 = vsel %vm955, %v1191, %v1190
  %v1193 = vrot.slane %v1175, 5
  %v1194 = vsel %vm958, %v1193, %v1192
  %v1195 = vrot.slane %v1176, 4
  %v1196 = vsel %vm961, %v1195, %v1194
  %v1197 = vrot.slane %v1177, 3
  %v1198 = vsel %vm964, %v1197, %v1196
  %v1199 = vrot.slane %v1178, 2
  %v1200 = vsel %vm967, %v1199, %v1198
  %v1201 = vrot.slane %v1179, 1
  %v1202 = vsel %vm970, %v1201, %v1200
  %v1203 = vrot.slane %v1181, 7
  %v1204 = vsel %vm952, %v1203, %v1180
  %v1205 = vrot.slane %v1182, 6
  %v1206 = vsel %vm955, %v1205, %v1204
  %v1207 = vrot.slane %v1183, 5
  %v1208 = vsel %vm958, %v1207, %v1206
  %v1209 = vrot.slane %v1184, 4
  %v1210 = vsel %vm961, %v1209, %v1208
  %v1211 = vrot.slane %v1185, 3
  %v1212 = vsel %vm964, %v1211, %v1210
  %v1213 = vrot.slane %v1186, 2
  %v1214 = vsel %vm967, %v1213, %v1212
  %v1215 = vrot.slane %v1187, 1
  %v1216 = vsel %vm970, %v1215, %v1214
  %v1217 = vpack.c.b16 %v1216, %v1202
  %v1218 = vpack.c.b16 %v1188, %v1188
  %1219 = vrot.lane.b32.xlu0 %v1217, 96
  %v1220 = vpop.permute.xlu0 %1219
  %1221 = vrot.lane.b32.xlu0 %v1218, 96
  %v1222 = vpop.permute.xlu0 %1221
  %v1224 = vsel %vm992, %v1217, 0
  %v1227 = vsel %vm992, %v1218, 0
  %v1230 = vsel %vm992, %v1220, 0
  %v1233 = vsel %vm992, %v1222, 0
  %1235 = vmatpush.bf16.xpose.msra.mxu0 0
  %1236 = vmatpush.bf16.xpose.msra.mxu0 0
  %1237 = vmatpush.bf16.xpose.msra.mxu0 0
  %1238 = vmatpush.bf16.xpose.msra.mxu0 0
  %1239 = vmatpush.bf16.xpose.msra.mxu0 0
  %1240 = vmatpush.bf16.xpose.msra.mxu0 0
  %1241 = vmatpush.bf16.xpose.msra.mxu0 %v1233
  %1242 = vmatpush.bf16.xpose.msra.mxu0 %v1230
  %1243 = vmatmul.bf16.gmra.mxu0 %v1224
  %v1244 = vpop.f32.mrf.mxu0
  %v1245 = vadd.f32 0.0, %v1244
  %v1246 = vpop.f32.mrf.mxu0
  %v1247 = vadd.f32 0.0, %v1246
  %1248 = vmatmul.bf16.gmra.mxu0 %v1227
  %v1249 = vpop.f32.mrf.mxu0
  %v1250 = vadd.f32 0.0, %v1249
  %v1251 = vpop.f32.mrf.mxu0
  %1252 = vdwg.mxu0
  %v1253 = vunpack.c.l.b16 %v731
  %v1254 = vunpack.c.l.b16 %v733
  %v1255 = vunpack.c.l.b16 %v735
  %v1256 = vunpack.c.l.b16 %v737
  %v1257 = vunpack.c.l.b16 %v739
  %v1258 = vunpack.c.l.b16 %v741
  %v1259 = vunpack.c.l.b16 %v743
  %v1260 = vunpack.c.l.b16 %v745
  %v1261 = vunpack.c.l.b16 %v747
  %v1262 = vunpack.c.l.b16 %v749
  %v1263 = vunpack.c.l.b16 %v751
  %v1264 = vunpack.c.l.b16 %v753
  %v1265 = vunpack.c.l.b16 %v755
  %v1266 = vunpack.c.l.b16 %v757
  %v1267 = vunpack.c.l.b16 %v759
  %v1268 = vunpack.c.l.b16 %v761
  %v1269 = vunpack.c.l.b16 %v763
  %v1270 = vpack.c.b16 %v1253, %v1253
  %v1271 = vpack.c.b16 %v1254, %v1254
  %v1272 = vpack.c.b16 %v1255, %v1255
  %v1273 = vpack.c.b16 %v1256, %v1256
  %v1274 = vpack.c.b16 %v1257, %v1257
  %v1275 = vpack.c.b16 %v1258, %v1258
  %v1276 = vpack.c.b16 %v1259, %v1259
  %v1277 = vpack.c.b16 %v1260, %v1260
  %v1278 = vpack.c.b16 %v1261, %v1261
  %v1279 = vpack.c.b16 %v1262, %v1262
  %v1280 = vpack.c.b16 %v1263, %v1263
  %v1281 = vpack.c.b16 %v1264, %v1264
  %v1282 = vpack.c.b16 %v1265, %v1265
  %v1283 = vpack.c.b16 %v1266, %v1266
  %v1284 = vpack.c.b16 %v1267, %v1267
  %v1285 = vpack.c.b16 %v1268, %v1268
  %v1286 = vpack.c.b16 %v1269, %v1269
  %v1287 = vunpack.c.l.b16 %v1270
  %v1288 = vunpack.c.l.b16 %v1271
  %v1289 = vunpack.c.l.b16 %v1272
  %v1290 = vunpack.c.l.b16 %v1273
  %v1291 = vunpack.c.l.b16 %v1274
  %v1292 = vunpack.c.l.b16 %v1275
  %v1293 = vunpack.c.l.b16 %v1276
  %v1294 = vunpack.c.l.b16 %v1277
  %v1295 = vunpack.c.l.b16 %v1278
  %v1296 = vunpack.c.l.b16 %v1279
  %v1297 = vunpack.c.l.b16 %v1280
  %v1298 = vunpack.c.l.b16 %v1281
  %v1299 = vunpack.c.l.b16 %v1282
  %v1300 = vunpack.c.l.b16 %v1283
  %v1301 = vunpack.c.l.b16 %v1284
  %v1302 = vunpack.c.l.b16 %v1285
  %v1303 = vunpack.c.l.b16 %v1286
  %v1304 = vrot.slane %v1288, 7
  %v1305 = vsel %vm952, %v1304, %v1287
  %v1306 = vrot.slane %v1289, 6
  %v1307 = vsel %vm955, %v1306, %v1305
  %v1308 = vrot.slane %v1290, 5
  %v1309 = vsel %vm958, %v1308, %v1307
  %v1310 = vrot.slane %v1291, 4
  %v1311 = vsel %vm961, %v1310, %v1309
  %v1312 = vrot.slane %v1292, 3
  %v1313 = vsel %vm964, %v1312, %v1311
  %v1314 = vrot.slane %v1293, 2
  %v1315 = vsel %vm967, %v1314, %v1313
  %v1316 = vrot.slane %v1294, 1
  %v1317 = vsel %vm970, %v1316, %v1315
  %v1318 = vrot.slane %v1296, 7
  %v1319 = vsel %vm952, %v1318, %v1295
  %v1320 = vrot.slane %v1297, 6
  %v1321 = vsel %vm955, %v1320, %v1319
  %v1322 = vrot.slane %v1298, 5
  %v1323 = vsel %vm958, %v1322, %v1321
  %v1324 = vrot.slane %v1299, 4
  %v1325 = vsel %vm961, %v1324, %v1323
  %v1326 = vrot.slane %v1300, 3
  %v1327 = vsel %vm964, %v1326, %v1325
  %v1328 = vrot.slane %v1301, 2
  %v1329 = vsel %vm967, %v1328, %v1327
  %v1330 = vrot.slane %v1302, 1
  %v1331 = vsel %vm970, %v1330, %v1329
  %v1332 = vpack.c.b16 %v1331, %v1317
  %v1333 = vpack.c.b16 %v1303, %v1303
  %1334 = vrot.lane.b32.xlu0 %v1332, 96
  %v1335 = vpop.permute.xlu0 %1334
  %1336 = vrot.lane.b32.xlu0 %v1333, 96
  %v1337 = vpop.permute.xlu0 %1336
  %v1339 = vsel %vm992, %v1332, 0
  %v1342 = vsel %vm992, %v1333, 0
  %v1345 = vsel %vm992, %v1335, 0
  %v1348 = vsel %vm992, %v1337, 0
  %1350 = vmatpush.bf16.xpose.msra.mxu0 0
  %1351 = vmatpush.bf16.xpose.msra.mxu0 0
  %1352 = vmatpush.bf16.xpose.msra.mxu0 0
  %1353 = vmatpush.bf16.xpose.msra.mxu0 0
  %1354 = vmatpush.bf16.xpose.msra.mxu0 0
  %1355 = vmatpush.bf16.xpose.msra.mxu0 0
  %1356 = vmatpush.bf16.xpose.msra.mxu0 %v1348
  %1357 = vmatpush.bf16.xpose.msra.mxu0 %v1345
  %1358 = vmatmul.bf16.gmra.mxu0 %v1339
  %v1359 = vpop.f32.mrf.mxu0
  %v1360 = vadd.f32 0.0, %v1359
  %v1361 = vpop.f32.mrf.mxu0
  %v1362 = vadd.f32 0.0, %v1361
  %1363 = vmatmul.bf16.gmra.mxu0 %v1342
  %v1364 = vpop.f32.mrf.mxu0
  %v1365 = vadd.f32 0.0, %v1364
  %v1366 = vpop.f32.mrf.mxu0
  %1367 = vdwg.mxu0
  %v1368 = vunpack.c.l.b16 %v765
  %v1369 = vunpack.c.l.b16 %v767
  %v1370 = vunpack.c.l.b16 %v769
  %v1371 = vunpack.c.l.b16 %v771
  %v1372 = vunpack.c.l.b16 %v773
  %v1373 = vunpack.c.l.b16 %v775
  %v1374 = vunpack.c.l.b16 %v777
  %v1375 = vunpack.c.l.b16 %v779
  %v1376 = vunpack.c.l.b16 %v781
  %v1377 = vunpack.c.l.b16 %v783
  %v1378 = vunpack.c.l.b16 %v785
  %v1379 = vunpack.c.l.b16 %v787
  %v1380 = vunpack.c.l.b16 %v789
  %v1381 = vunpack.c.l.b16 %v791
  %v1382 = vunpack.c.l.b16 %v793
  %v1383 = vunpack.c.l.b16 %v795
  %v1384 = vunpack.c.l.b16 %v797
  %v1385 = vpack.c.b16 %v1368, %v1368
  %v1386 = vpack.c.b16 %v1369, %v1369
  %v1387 = vpack.c.b16 %v1370, %v1370
  %v1388 = vpack.c.b16 %v1371, %v1371
  %v1389 = vpack.c.b16 %v1372, %v1372
  %v1390 = vpack.c.b16 %v1373, %v1373
  %v1391 = vpack.c.b16 %v1374, %v1374
  %v1392 = vpack.c.b16 %v1375, %v1375
  %v1393 = vpack.c.b16 %v1376, %v1376
  %v1394 = vpack.c.b16 %v1377, %v1377
  %v1395 = vpack.c.b16 %v1378, %v1378
  %v1396 = vpack.c.b16 %v1379, %v1379
  %v1397 = vpack.c.b16 %v1380, %v1380
  %v1398 = vpack.c.b16 %v1381, %v1381
  %v1399 = vpack.c.b16 %v1382, %v1382
  %v1400 = vpack.c.b16 %v1383, %v1383
  %v1401 = vpack.c.b16 %v1384, %v1384
  %v1402 = vunpack.c.l.b16 %v1385
  %v1403 = vunpack.c.l.b16 %v1386
  %v1404 = vunpack.c.l.b16 %v1387
  %v1405 = vunpack.c.l.b16 %v1388
  %v1406 = vunpack.c.l.b16 %v1389
  %v1407 = vunpack.c.l.b16 %v1390
  %v1408 = vunpack.c.l.b16 %v1391
  %v1409 = vunpack.c.l.b16 %v1392
  %v1410 = vunpack.c.l.b16 %v1393
  %v1411 = vunpack.c.l.b16 %v1394
  %v1412 = vunpack.c.l.b16 %v1395
  %v1413 = vunpack.c.l.b16 %v1396
  %v1414 = vunpack.c.l.b16 %v1397
  %v1415 = vunpack.c.l.b16 %v1398
  %v1416 = vunpack.c.l.b16 %v1399
  %v1417 = vunpack.c.l.b16 %v1400
  %v1418 = vunpack.c.l.b16 %v1401
  %v1419 = vrot.slane %v1403, 7
  %v1420 = vsel %vm952, %v1419, %v1402
  %v1421 = vrot.slane %v1404, 6
  %v1422 = vsel %vm955, %v1421, %v1420
  %v1423 = vrot.slane %v1405, 5
  %v1424 = vsel %vm958, %v1423, %v1422
  %v1425 = vrot.slane %v1406, 4
  %v1426 = vsel %vm961, %v1425, %v1424
  %v1427 = vrot.slane %v1407, 3
  %v1428 = vsel %vm964, %v1427, %v1426
  %v1429 = vrot.slane %v1408, 2
  %v1430 = vsel %vm967, %v1429, %v1428
  %v1431 = vrot.slane %v1409, 1
  %v1432 = vsel %vm970, %v1431, %v1430
  %v1433 = vrot.slane %v1411, 7
  %v1434 = vsel %vm952, %v1433, %v1410
  %v1435 = vrot.slane %v1412, 6
  %v1436 = vsel %vm955, %v1435, %v1434
  %v1437 = vrot.slane %v1413, 5
  %v1438 = vsel %vm958, %v1437, %v1436
  %v1439 = vrot.slane %v1414, 4
  %v1440 = vsel %vm961, %v1439, %v1438
  %v1441 = vrot.slane %v1415, 3
  %v1442 = vsel %vm964, %v1441, %v1440
  %v1443 = vrot.slane %v1416, 2
  %v1444 = vsel %vm967, %v1443, %v1442
  %v1445 = vrot.slane %v1417, 1
  %v1446 = vsel %vm970, %v1445, %v1444
  %v1447 = vpack.c.b16 %v1446, %v1432
  %v1448 = vpack.c.b16 %v1418, %v1418
  %1449 = vrot.lane.b32.xlu0 %v1447, 96
  %v1450 = vpop.permute.xlu0 %1449
  %1451 = vrot.lane.b32.xlu0 %v1448, 96
  %v1452 = vpop.permute.xlu0 %1451
  %v1454 = vsel %vm992, %v1447, 0
  %v1457 = vsel %vm992, %v1448, 0
  %v1460 = vsel %vm992, %v1450, 0
  %v1463 = vsel %vm992, %v1452, 0
  %1465 = vmatpush.bf16.xpose.msra.mxu0 0
  %1466 = vmatpush.bf16.xpose.msra.mxu0 0
  %1467 = vmatpush.bf16.xpose.msra.mxu0 0
  %1468 = vmatpush.bf16.xpose.msra.mxu0 0
  %1469 = vmatpush.bf16.xpose.msra.mxu0 0
  %1470 = vmatpush.bf16.xpose.msra.mxu0 0
  %1471 = vmatpush.bf16.xpose.msra.mxu0 %v1463
  %1472 = vmatpush.bf16.xpose.msra.mxu0 %v1460
  %1473 = vmatmul.bf16.gmra.mxu0 %v1454
  %v1474 = vpop.f32.mrf.mxu0
  %v1475 = vadd.f32 0.0, %v1474
  %v1476 = vpop.f32.mrf.mxu0
  %v1477 = vadd.f32 0.0, %v1476
  %1478 = vmatmul.bf16.gmra.mxu0 %v1457
  %v1479 = vpop.f32.mrf.mxu0
  %v1480 = vadd.f32 0.0, %v1479
  %v1481 = vpop.f32.mrf.mxu0
  %1482 = vdwg.mxu0
  %v1483 = vunpack.c.l.b16 %v799
  %v1484 = vunpack.c.l.b16 %v801
  %v1485 = vunpack.c.l.b16 %v803
  %v1486 = vunpack.c.l.b16 %v805
  %v1487 = vunpack.c.l.b16 %v807
  %v1488 = vunpack.c.l.b16 %v809
  %v1489 = vunpack.c.l.b16 %v811
  %v1490 = vunpack.c.l.b16 %v813
  %v1491 = vunpack.c.l.b16 %v815
  %v1492 = vunpack.c.l.b16 %v817
  %v1493 = vunpack.c.l.b16 %v819
  %v1494 = vunpack.c.l.b16 %v821
  %v1495 = vunpack.c.l.b16 %v823
  %v1496 = vunpack.c.l.b16 %v825
  %v1497 = vunpack.c.l.b16 %v827
  %v1498 = vunpack.c.l.b16 %v829
  %v1499 = vunpack.c.l.b16 %v831
  %v1500 = vpack.c.b16 %v1483, %v1483
  %v1501 = vpack.c.b16 %v1484, %v1484
  %v1502 = vpack.c.b16 %v1485, %v1485
  %v1503 = vpack.c.b16 %v1486, %v1486
  %v1504 = vpack.c.b16 %v1487, %v1487
  %v1505 = vpack.c.b16 %v1488, %v1488
  %v1506 = vpack.c.b16 %v1489, %v1489
  %v1507 = vpack.c.b16 %v1490, %v1490
  %v1508 = vpack.c.b16 %v1491, %v1491
  %v1509 = vpack.c.b16 %v1492, %v1492
  %v1510 = vpack.c.b16 %v1493, %v1493
  %v1511 = vpack.c.b16 %v1494, %v1494
  %v1512 = vpack.c.b16 %v1495, %v1495
  %v1513 = vpack.c.b16 %v1496, %v1496
  %v1514 = vpack.c.b16 %v1497, %v1497
  %v1515 = vpack.c.b16 %v1498, %v1498
  %v1516 = vpack.c.b16 %v1499, %v1499
  %v1517 = vunpack.c.l.b16 %v1500
  %v1518 = vunpack.c.l.b16 %v1501
  %v1519 = vunpack.c.l.b16 %v1502
  %v1520 = vunpack.c.l.b16 %v1503
  %v1521 = vunpack.c.l.b16 %v1504
  %v1522 = vunpack.c.l.b16 %v1505
  %v1523 = vunpack.c.l.b16 %v1506
  %v1524 = vunpack.c.l.b16 %v1507
  %v1525 = vunpack.c.l.b16 %v1508
  %v1526 = vunpack.c.l.b16 %v1509
  %v1527 = vunpack.c.l.b16 %v1510
  %v1528 = vunpack.c.l.b16 %v1511
  %v1529 = vunpack.c.l.b16 %v1512
  %v1530 = vunpack.c.l.b16 %v1513
  %v1531 = vunpack.c.l.b16 %v1514
  %v1532 = vunpack.c.l.b16 %v1515
  %v1533 = vunpack.c.l.b16 %v1516
  %v1534 = vrot.slane %v1518, 7
  %v1535 = vsel %vm952, %v1534, %v1517
  %v1536 = vrot.slane %v1519, 6
  %v1537 = vsel %vm955, %v1536, %v1535
  %v1538 = vrot.slane %v1520, 5
  %v1539 = vsel %vm958, %v1538, %v1537
  %v1540 = vrot.slane %v1521, 4
  %v1541 = vsel %vm961, %v1540, %v1539
  %v1542 = vrot.slane %v1522, 3
  %v1543 = vsel %vm964, %v1542, %v1541
  %v1544 = vrot.slane %v1523, 2
  %v1545 = vsel %vm967, %v1544, %v1543
  %v1546 = vrot.slane %v1524, 1
  %v1547 = vsel %vm970, %v1546, %v1545
  %v1548 = vrot.slane %v1526, 7
  %v1549 = vsel %vm952, %v1548, %v1525
  %v1550 = vrot.slane %v1527, 6
  %v1551 = vsel %vm955, %v1550, %v1549
  %v1552 = vrot.slane %v1528, 5
  %v1553 = vsel %vm958, %v1552, %v1551
  %v1554 = vrot.slane %v1529, 4
  %v1555 = vsel %vm961, %v1554, %v1553
  %v1556 = vrot.slane %v1530, 3
  %v1557 = vsel %vm964, %v1556, %v1555
  %v1558 = vrot.slane %v1531, 2
  %v1559 = vsel %vm967, %v1558, %v1557
  %v1560 = vrot.slane %v1532, 1
  %v1561 = vsel %vm970, %v1560, %v1559
  %v1562 = vpack.c.b16 %v1561, %v1547
  %v1563 = vpack.c.b16 %v1533, %v1533
  %1564 = vrot.lane.b32.xlu0 %v1562, 96
  %v1565 = vpop.permute.xlu0 %1564
  %1566 = vrot.lane.b32.xlu0 %v1563, 96
  %v1567 = vpop.permute.xlu0 %1566
  %v1569 = vsel %vm992, %v1562, 0
  %v1572 = vsel %vm992, %v1563, 0
  %v1575 = vsel %vm992, %v1565, 0
  %v1578 = vsel %vm992, %v1567, 0
  %1580 = vmatpush.bf16.xpose.msra.mxu0 0
  %1581 = vmatpush.bf16.xpose.msra.mxu0 0
  %1582 = vmatpush.bf16.xpose.msra.mxu0 0
  %1583 = vmatpush.bf16.xpose.msra.mxu0 0
  %1584 = vmatpush.bf16.xpose.msra.mxu0 0
  %1585 = vmatpush.bf16.xpose.msra.mxu0 0
  %1586 = vmatpush.bf16.xpose.msra.mxu0 %v1578
  %1587 = vmatpush.bf16.xpose.msra.mxu0 %v1575
  %1588 = vmatmul.bf16.gmra.mxu0 %v1569
  %v1589 = vpop.f32.mrf.mxu0
  %v1590 = vadd.f32 0.0, %v1589
  %v1591 = vpop.f32.mrf.mxu0
  %v1592 = vadd.f32 0.0, %v1591
  %1593 = vmatmul.bf16.gmra.mxu0 %v1572
  %v1594 = vpop.f32.mrf.mxu0
  %v1595 = vadd.f32 0.0, %v1594
  %v1596 = vpop.f32.mrf.mxu0
  %1597 = vdwg.mxu0
  %v1598 = vunpack.c.l.b16 %v833
  %v1599 = vunpack.c.l.b16 %v835
  %v1600 = vunpack.c.l.b16 %v837
  %v1601 = vunpack.c.l.b16 %v839
  %v1602 = vunpack.c.l.b16 %v841
  %v1603 = vunpack.c.l.b16 %v843
  %v1604 = vunpack.c.l.b16 %v845
  %v1605 = vunpack.c.l.b16 %v847
  %v1606 = vunpack.c.l.b16 %v849
  %v1607 = vunpack.c.l.b16 %v851
  %v1608 = vunpack.c.l.b16 %v853
  %v1609 = vunpack.c.l.b16 %v855
  %v1610 = vunpack.c.l.b16 %v857
  %v1611 = vunpack.c.l.b16 %v859
  %v1612 = vunpack.c.l.b16 %v861
  %v1613 = vunpack.c.l.b16 %v863
  %v1614 = vunpack.c.l.b16 %v865
  %v1615 = vpack.c.b16 %v1598, %v1598
  %v1616 = vpack.c.b16 %v1599, %v1599
  %v1617 = vpack.c.b16 %v1600, %v1600
  %v1618 = vpack.c.b16 %v1601, %v1601
  %v1619 = vpack.c.b16 %v1602, %v1602
  %v1620 = vpack.c.b16 %v1603, %v1603
  %v1621 = vpack.c.b16 %v1604, %v1604
  %v1622 = vpack.c.b16 %v1605, %v1605
  %v1623 = vpack.c.b16 %v1606, %v1606
  %v1624 = vpack.c.b16 %v1607, %v1607
  %v1625 = vpack.c.b16 %v1608, %v1608
  %v1626 = vpack.c.b16 %v1609, %v1609
  %v1627 = vpack.c.b16 %v1610, %v1610
  %v1628 = vpack.c.b16 %v1611, %v1611
  %v1629 = vpack.c.b16 %v1612, %v1612
  %v1630 = vpack.c.b16 %v1613, %v1613
  %v1631 = vpack.c.b16 %v1614, %v1614
  %v1632 = vunpack.c.l.b16 %v1615
  %v1633 = vunpack.c.l.b16 %v1616
  %v1634 = vunpack.c.l.b16 %v1617
  %v1635 = vunpack.c.l.b16 %v1618
  %v1636 = vunpack.c.l.b16 %v1619
  %v1637 = vunpack.c.l.b16 %v1620
  %v1638 = vunpack.c.l.b16 %v1621
  %v1639 = vunpack.c.l.b16 %v1622
  %v1640 = vunpack.c.l.b16 %v1623
  %v1641 = vunpack.c.l.b16 %v1624
  %v1642 = vunpack.c.l.b16 %v1625
  %v1643 = vunpack.c.l.b16 %v1626
  %v1644 = vunpack.c.l.b16 %v1627
  %v1645 = vunpack.c.l.b16 %v1628
  %v1646 = vunpack.c.l.b16 %v1629
  %v1647 = vunpack.c.l.b16 %v1630
  %v1648 = vunpack.c.l.b16 %v1631
  %v1649 = vrot.slane %v1633, 7
  %v1650 = vsel %vm952, %v1649, %v1632
  %v1651 = vrot.slane %v1634, 6
  %v1652 = vsel %vm955, %v1651, %v1650
  %v1653 = vrot.slane %v1635, 5
  %v1654 = vsel %vm958, %v1653, %v1652
  %v1655 = vrot.slane %v1636, 4
  %v1656 = vsel %vm961, %v1655, %v1654
  %v1657 = vrot.slane %v1637, 3
  %v1658 = vsel %vm964, %v1657, %v1656
  %v1659 = vrot.slane %v1638, 2
  %v1660 = vsel %vm967, %v1659, %v1658
  %v1661 = vrot.slane %v1639, 1
  %v1662 = vsel %vm970, %v1661, %v1660
  %v1663 = vrot.slane %v1641, 7
  %v1664 = vsel %vm952, %v1663, %v1640
  %v1665 = vrot.slane %v1642, 6
  %v1666 = vsel %vm955, %v1665, %v1664
  %v1667 = vrot.slane %v1643, 5
  %v1668 = vsel %vm958, %v1667, %v1666
  %v1669 = vrot.slane %v1644, 4
  %v1670 = vsel %vm961, %v1669, %v1668
  %v1671 = vrot.slane %v1645, 3
  %v1672 = vsel %vm964, %v1671, %v1670
  %v1673 = vrot.slane %v1646, 2
  %v1674 = vsel %vm967, %v1673, %v1672
  %v1675 = vrot.slane %v1647, 1
  %v1676 = vsel %vm970, %v1675, %v1674
  %v1677 = vpack.c.b16 %v1676, %v1662
  %v1678 = vpack.c.b16 %v1648, %v1648
  %1679 = vrot.lane.b32.xlu0 %v1677, 96
  %v1680 = vpop.permute.xlu0 %1679
  %1681 = vrot.lane.b32.xlu0 %v1678, 96
  %v1682 = vpop.permute.xlu0 %1681
  %v1684 = vsel %vm992, %v1677, 0
  %v1687 = vsel %vm992, %v1678, 0
  %v1690 = vsel %vm992, %v1680, 0
  %v1693 = vsel %vm992, %v1682, 0
  %1695 = vmatpush.bf16.xpose.msra.mxu0 0
  %1696 = vmatpush.bf16.xpose.msra.mxu0 0
  %1697 = vmatpush.bf16.xpose.msra.mxu0 0
  %1698 = vmatpush.bf16.xpose.msra.mxu0 0
  %1699 = vmatpush.bf16.xpose.msra.mxu0 0
  %1700 = vmatpush.bf16.xpose.msra.mxu0 0
  %1701 = vmatpush.bf16.xpose.msra.mxu0 %v1693
  %1702 = vmatpush.bf16.xpose.msra.mxu0 %v1690
  %1703 = vmatmul.bf16.gmra.mxu0 %v1684
  %v1704 = vpop.f32.mrf.mxu0
  %v1705 = vadd.f32 0.0, %v1704
  %v1706 = vpop.f32.mrf.mxu0
  %v1707 = vadd.f32 0.0, %v1706
  %1708 = vmatmul.bf16.gmra.mxu0 %v1687
  %v1709 = vpop.f32.mrf.mxu0
  %v1710 = vadd.f32 0.0, %v1709
  %v1711 = vpop.f32.mrf.mxu0
  %1712 = vdwg.mxu0
  %v1713 = vunpack.c.l.b16 %v867
  %v1714 = vunpack.c.l.b16 %v869
  %v1715 = vunpack.c.l.b16 %v871
  %v1716 = vunpack.c.l.b16 %v873
  %v1717 = vunpack.c.l.b16 %v875
  %v1718 = vunpack.c.l.b16 %v877
  %v1719 = vunpack.c.l.b16 %v879
  %v1720 = vunpack.c.l.b16 %v881
  %v1721 = vunpack.c.l.b16 %v883
  %v1722 = vunpack.c.l.b16 %v885
  %v1723 = vunpack.c.l.b16 %v887
  %v1724 = vunpack.c.l.b16 %v889
  %v1725 = vunpack.c.l.b16 %v891
  %v1726 = vunpack.c.l.b16 %v893
  %v1727 = vunpack.c.l.b16 %v895
  %v1728 = vunpack.c.l.b16 %v897
  %v1729 = vunpack.c.l.b16 %v899
  %v1730 = vpack.c.b16 %v1713, %v1713
  %v1731 = vpack.c.b16 %v1714, %v1714
  %v1732 = vpack.c.b16 %v1715, %v1715
  %v1733 = vpack.c.b16 %v1716, %v1716
  %v1734 = vpack.c.b16 %v1717, %v1717
  %v1735 = vpack.c.b16 %v1718, %v1718
  %v1736 = vpack.c.b16 %v1719, %v1719
  %v1737 = vpack.c.b16 %v1720, %v1720
  %v1738 = vpack.c.b16 %v1721, %v1721
  %v1739 = vpack.c.b16 %v1722, %v1722
  %v1740 = vpack.c.b16 %v1723, %v1723
  %v1741 = vpack.c.b16 %v1724, %v1724
  %v1742 = vpack.c.b16 %v1725, %v1725
  %v1743 = vpack.c.b16 %v1726, %v1726
  %v1744 = vpack.c.b16 %v1727, %v1727
  %v1745 = vpack.c.b16 %v1728, %v1728
  %v1746 = vpack.c.b16 %v1729, %v1729
  %v1747 = vunpack.c.l.b16 %v1730
  %v1748 = vunpack.c.l.b16 %v1731
  %v1749 = vunpack.c.l.b16 %v1732
  %v1750 = vunpack.c.l.b16 %v1733
  %v1751 = vunpack.c.l.b16 %v1734
  %v1752 = vunpack.c.l.b16 %v1735
  %v1753 = vunpack.c.l.b16 %v1736
  %v1754 = vunpack.c.l.b16 %v1737
  %v1755 = vunpack.c.l.b16 %v1738
  %v1756 = vunpack.c.l.b16 %v1739
  %v1757 = vunpack.c.l.b16 %v1740
  %v1758 = vunpack.c.l.b16 %v1741
  %v1759 = vunpack.c.l.b16 %v1742
  %v1760 = vunpack.c.l.b16 %v1743
  %v1761 = vunpack.c.l.b16 %v1744
  %v1762 = vunpack.c.l.b16 %v1745
  %v1763 = vunpack.c.l.b16 %v1746
  %v1764 = vrot.slane %v1748, 7
  %v1765 = vsel %vm952, %v1764, %v1747
  %v1766 = vrot.slane %v1749, 6
  %v1767 = vsel %vm955, %v1766, %v1765
  %v1768 = vrot.slane %v1750, 5
  %v1769 = vsel %vm958, %v1768, %v1767
  %v1770 = vrot.slane %v1751, 4
  %v1771 = vsel %vm961, %v1770, %v1769
  %v1772 = vrot.slane %v1752, 3
  %v1773 = vsel %vm964, %v1772, %v1771
  %v1774 = vrot.slane %v1753, 2
  %v1775 = vsel %vm967, %v1774, %v1773
  %v1776 = vrot.slane %v1754, 1
  %v1777 = vsel %vm970, %v1776, %v1775
  %v1778 = vrot.slane %v1756, 7
  %v1779 = vsel %vm952, %v1778, %v1755
  %v1780 = vrot.slane %v1757, 6
  %v1781 = vsel %vm955, %v1780, %v1779
  %v1782 = vrot.slane %v1758, 5
  %v1783 = vsel %vm958, %v1782, %v1781
  %v1784 = vrot.slane %v1759, 4
  %v1785 = vsel %vm961, %v1784, %v1783
  %v1786 = vrot.slane %v1760, 3
  %v1787 = vsel %vm964, %v1786, %v1785
  %v1788 = vrot.slane %v1761, 2
  %v1789 = vsel %vm967, %v1788, %v1787
  %v1790 = vrot.slane %v1762, 1
  %v1791 = vsel %vm970, %v1790, %v1789
  %v1792 = vpack.c.b16 %v1791, %v1777
  %v1793 = vpack.c.b16 %v1763, %v1763
  %1794 = vrot.lane.b32.xlu0 %v1792, 96
  %v1795 = vpop.permute.xlu0 %1794
  %1796 = vrot.lane.b32.xlu0 %v1793, 96
  %v1797 = vpop.permute.xlu0 %1796
  %v1799 = vsel %vm992, %v1792, 0
  %v1802 = vsel %vm992, %v1793, 0
  %v1805 = vsel %vm992, %v1795, 0
  %v1808 = vsel %vm992, %v1797, 0
  %1810 = vmatpush.bf16.xpose.msra.mxu0 0
  %1811 = vmatpush.bf16.xpose.msra.mxu0 0
  %1812 = vmatpush.bf16.xpose.msra.mxu0 0
  %1813 = vmatpush.bf16.xpose.msra.mxu0 0
  %1814 = vmatpush.bf16.xpose.msra.mxu0 0
  %1815 = vmatpush.bf16.xpose.msra.mxu0 0
  %1816 = vmatpush.bf16.xpose.msra.mxu0 %v1808
  %1817 = vmatpush.bf16.xpose.msra.mxu0 %v1805
  %1818 = vmatmul.bf16.gmra.mxu0 %v1799
  %v1819 = vpop.f32.mrf.mxu0
  %v1820 = vadd.f32 0.0, %v1819
  %v1821 = vpop.f32.mrf.mxu0
  %v1822 = vadd.f32 0.0, %v1821
  %1823 = vmatmul.bf16.gmra.mxu0 %v1802
  %v1824 = vpop.f32.mrf.mxu0
  %v1825 = vadd.f32 0.0, %v1824
  %v1826 = vpop.f32.mrf.mxu0
  %1827 = vdwg.mxu0
  %vm1828 = vcmask 138240
  %v1829 = vsel %vm1828, %v1015, -inf
  %1830 = vmax.xlane.f32.xlu0 %v1829
  %v1831 = vpop.xlane.xlu0 %1830
  %v1832 = vsel %vm1828, %v1017, -inf
  %1833 = vmax.xlane.f32.xlu0 %v1832
  %v1834 = vpop.xlane.xlu0 %1833
  %vm1835 = vcmask 131072
  %v1836 = vsel %vm1835, %v1020, -inf
  %1837 = vmax.xlane.f32.xlu0 %v1836
  %v1838 = vpop.xlane.xlu0 %1837
  %v1839 = vsel %vm1828, %v1130, -inf
  %1840 = vmax.xlane.f32.xlu0 %v1839
  %v1841 = vpop.xlane.xlu0 %1840
  %v1842 = vsel %vm1828, %v1132, -inf
  %1843 = vmax.xlane.f32.xlu0 %v1842
  %v1844 = vpop.xlane.xlu0 %1843
  %v1845 = vsel %vm1835, %v1135, -inf
  %1846 = vmax.xlane.f32.xlu0 %v1845
  %v1847 = vpop.xlane.xlu0 %1846
  %v1848 = vsel %vm1828, %v1245, -inf
  %1849 = vmax.xlane.f32.xlu0 %v1848
  %v1850 = vpop.xlane.xlu0 %1849
  %v1851 = vsel %vm1828, %v1247, -inf
  %1852 = vmax.xlane.f32.xlu0 %v1851
  %v1853 = vpop.xlane.xlu0 %1852
  %v1854 = vsel %vm1835, %v1250, -inf
  %1855 = vmax.xlane.f32.xlu0 %v1854
  %v1856 = vpop.xlane.xlu0 %1855
  %v1857 = vsel %vm1828, %v1360, -inf
  %1858 = vmax.xlane.f32.xlu0 %v1857
  %v1859 = vpop.xlane.xlu0 %1858
  %v1860 = vsel %vm1828, %v1362, -inf
  %1861 = vmax.xlane.f32.xlu0 %v1860
  %v1862 = vpop.xlane.xlu0 %1861
  %v1863 = vsel %vm1835, %v1365, -inf
  %1864 = vmax.xlane.f32.xlu0 %v1863
  %v1865 = vpop.xlane.xlu0 %1864
  %v1866 = vsel %vm1828, %v1475, -inf
  %1867 = vmax.xlane.f32.xlu0 %v1866
  %v1868 = vpop.xlane.xlu0 %1867
  %v1869 = vsel %vm1828, %v1477, -inf
  %1870 = vmax.xlane.f32.xlu0 %v1869
  %v1871 = vpop.xlane.xlu0 %1870
  %v1872 = vsel %vm1835, %v1480, -inf
  %1873 = vmax.xlane.f32.xlu0 %v1872
  %v1874 = vpop.xlane.xlu0 %1873
  %v1875 = vsel %vm1828, %v1590, -inf
  %1876 = vmax.xlane.f32.xlu0 %v1875
  %v1877 = vpop.xlane.xlu0 %1876
  %v1878 = vsel %vm1828, %v1592, -inf
  %1879 = vmax.xlane.f32.xlu0 %v1878
  %v1880 = vpop.xlane.xlu0 %1879
  %v1881 = vsel %vm1835, %v1595, -inf
  %1882 = vmax.xlane.f32.xlu0 %v1881
  %v1883 = vpop.xlane.xlu0 %1882
  %v1884 = vsel %vm1828, %v1705, -inf
  %1885 = vmax.xlane.f32.xlu0 %v1884
  %v1886 = vpop.xlane.xlu0 %1885
  %v1887 = vsel %vm1828, %v1707, -inf
  %1888 = vmax.xlane.f32.xlu0 %v1887
  %v1889 = vpop.xlane.xlu0 %1888
  %v1890 = vsel %vm1835, %v1710, -inf
  %1891 = vmax.xlane.f32.xlu0 %v1890
  %v1892 = vpop.xlane.xlu0 %1891
  %v1893 = vsel %vm1828, %v1820, -inf
  %1894 = vmax.xlane.f32.xlu0 %v1893
  %v1895 = vpop.xlane.xlu0 %1894
  %v1896 = vsel %vm1828, %v1822, -inf
  %1897 = vmax.xlane.f32.xlu0 %v1896
  %v1898 = vpop.xlane.xlu0 %1897
  %v1899 = vsel %vm1835, %v1825, -inf
  %1900 = vmax.xlane.f32.xlu0 %v1899
  %v1901 = vpop.xlane.xlu0 %1900
  %v1902 = vsub.f32 %v1015, %v1831
  %v1903 = vsub.f32 %v1017, %v1834
  %v1904 = vsub.f32 %v1020, %v1838
  %v1905 = vsub.f32 %v1130, %v1841
  %v1906 = vsub.f32 %v1132, %v1844
  %v1907 = vsub.f32 %v1135, %v1847
  %v1908 = vsub.f32 %v1245, %v1850
  %v1909 = vsub.f32 %v1247, %v1853
  %v1910 = vsub.f32 %v1250, %v1856
  %v1911 = vsub.f32 %v1360, %v1859
  %v1912 = vsub.f32 %v1362, %v1862
  %v1913 = vsub.f32 %v1365, %v1865
  %v1914 = vsub.f32 %v1475, %v1868
  %v1915 = vsub.f32 %v1477, %v1871
  %v1916 = vsub.f32 %v1480, %v1874
  %v1917 = vsub.f32 %v1590, %v1877
  %v1918 = vsub.f32 %v1592, %v1880
  %v1919 = vsub.f32 %v1595, %v1883
  %v1920 = vsub.f32 %v1705, %v1886
  %v1921 = vsub.f32 %v1707, %v1889
  %v1922 = vsub.f32 %v1710, %v1892
  %v1923 = vsub.f32 %v1820, %v1895
  %v1924 = vsub.f32 %v1822, %v1898
  %v1925 = vsub.f32 %v1825, %v1901
  %v1926 = vmul.f32 %v1902, 1.442695
  %v1927 = vpow.pop %v1926
  %v1928 = vmul.f32 %v1903, 1.442695
  %v1929 = vpow.pop %v1928
  %v1930 = vmul.f32 %v1904, 1.442695
  %v1931 = vpow.pop %v1930
  %v1932 = vmul.f32 %v1905, 1.442695
  %v1933 = vpow.pop %v1932
  %v1934 = vmul.f32 %v1906, 1.442695
  %v1935 = vpow.pop %v1934
  %v1936 = vmul.f32 %v1907, 1.442695
  %v1937 = vpow.pop %v1936
  %v1938 = vmul.f32 %v1908, 1.442695
  %v1939 = vpow.pop %v1938
  %v1940 = vmul.f32 %v1909, 1.442695
  %v1941 = vpow.pop %v1940
  %v1942 = vmul.f32 %v1910, 1.442695
  %v1943 = vpow.pop %v1942
  %v1944 = vmul.f32 %v1911, 1.442695
  %v1945 = vpow.pop %v1944
  %v1946 = vmul.f32 %v1912, 1.442695
  %v1947 = vpow.pop %v1946
  %v1948 = vmul.f32 %v1913, 1.442695
  %v1949 = vpow.pop %v1948
  %v1950 = vmul.f32 %v1914, 1.442695
  %v1951 = vpow.pop %v1950
  %v1952 = vmul.f32 %v1915, 1.442695
  %v1953 = vpow.pop %v1952
  %v1954 = vmul.f32 %v1916, 1.442695
  %v1955 = vpow.pop %v1954
  %v1956 = vmul.f32 %v1917, 1.442695
  %v1957 = vpow.pop %v1956
  %v1958 = vmul.f32 %v1918, 1.442695
  %v1959 = vpow.pop %v1958
  %v1960 = vmul.f32 %v1919, 1.442695
  %v1961 = vpow.pop %v1960
  %v1962 = vmul.f32 %v1920, 1.442695
  %v1963 = vpow.pop %v1962
  %v1964 = vmul.f32 %v1921, 1.442695
  %v1965 = vpow.pop %v1964
  %v1966 = vmul.f32 %v1922, 1.442695
  %v1967 = vpow.pop %v1966
  %v1968 = vmul.f32 %v1923, 1.442695
  %v1969 = vpow.pop %v1968
  %v1970 = vmul.f32 %v1924, 1.442695
  %v1971 = vpow.pop %v1970
  %v1972 = vmul.f32 %v1925, 1.442695
  %v1973 = vpow.pop %v1972
  %v1974 = vsel %vm1828, %v1927, 0.0
  %1975 = vadd.xlane.f32.xlu0 %v1974
  %v1976 = vpop.xlane.xlu0 %1975
  %v1977 = vsel %vm1828, %v1929, 0.0
  %1978 = vadd.xlane.f32.xlu0 %v1977
  %v1979 = vpop.xlane.xlu0 %1978
  %v1980 = vsel %vm1835, %v1931, 0.0
  %1981 = vadd.xlane.f32.xlu0 %v1980
  %v1982 = vpop.xlane.xlu0 %1981
  %v1983 = vsel %vm1828, %v1933, 0.0
  %1984 = vadd.xlane.f32.xlu0 %v1983
  %v1985 = vpop.xlane.xlu0 %1984
  %v1986 = vsel %vm1828, %v1935, 0.0
  %1987 = vadd.xlane.f32.xlu0 %v1986
  %v1988 = vpop.xlane.xlu0 %1987
  %v1989 = vsel %vm1835, %v1937, 0.0
  %1990 = vadd.xlane.f32.xlu0 %v1989
  %v1991 = vpop.xlane.xlu0 %1990
  %v1992 = vsel %vm1828, %v1939, 0.0
  %1993 = vadd.xlane.f32.xlu0 %v1992
  %v1994 = vpop.xlane.xlu0 %1993
  %v1995 = vsel %vm1828, %v1941, 0.0
  %1996 = vadd.xlane.f32.xlu0 %v1995
  %v1997 = vpop.xlane.xlu0 %1996
  %v1998 = vsel %vm1835, %v1943, 0.0
  %1999 = vadd.xlane.f32.xlu0 %v1998
  %v2000 = vpop.xlane.xlu0 %1999
  %v2001 = vsel %vm1828, %v1945, 0.0
  %2002 = vadd.xlane.f32.xlu0 %v2001
  %v2003 = vpop.xlane.xlu0 %2002
  %v2004 = vsel %vm1828, %v1947, 0.0
  %2005 = vadd.xlane.f32.xlu0 %v2004
  %v2006 = vpop.xlane.xlu0 %2005
  %v2007 = vsel %vm1835, %v1949, 0.0
  %2008 = vadd.xlane.f32.xlu0 %v2007
  %v2009 = vpop.xlane.xlu0 %2008
  %v2010 = vsel %vm1828, %v1951, 0.0
  %2011 = vadd.xlane.f32.xlu0 %v2010
  %v2012 = vpop.xlane.xlu0 %2011
  %v2013 = vsel %vm1828, %v1953, 0.0
  %2014 = vadd.xlane.f32.xlu0 %v2013
  %v2015 = vpop.xlane.xlu0 %2014
  %v2016 = vsel %vm1835, %v1955, 0.0
  %2017 = vadd.xlane.f32.xlu0 %v2016
  %v2018 = vpop.xlane.xlu0 %2017
  %v2019 = vsel %vm1828, %v1957, 0.0
  %2020 = vadd.xlane.f32.xlu0 %v2019
  %v2021 = vpop.xlane.xlu0 %2020
  %v2022 = vsel %vm1828, %v1959, 0.0
  %2023 = vadd.xlane.f32.xlu0 %v2022
  %v2024 = vpop.xlane.xlu0 %2023
  %v2025 = vsel %vm1835, %v1961, 0.0
  %2026 = vadd.xlane.f32.xlu0 %v2025
  %v2027 = vpop.xlane.xlu0 %2026
  %v2028 = vsel %vm1828, %v1963, 0.0
  %2029 = vadd.xlane.f32.xlu0 %v2028
  %v2030 = vpop.xlane.xlu0 %2029
  %v2031 = vsel %vm1828, %v1965, 0.0
  %2032 = vadd.xlane.f32.xlu0 %v2031
  %v2033 = vpop.xlane.xlu0 %2032
  %v2034 = vsel %vm1835, %v1967, 0.0
  %2035 = vadd.xlane.f32.xlu0 %v2034
  %v2036 = vpop.xlane.xlu0 %2035
  %v2037 = vsel %vm1828, %v1969, 0.0
  %2038 = vadd.xlane.f32.xlu0 %v2037
  %v2039 = vpop.xlane.xlu0 %2038
  %v2040 = vsel %vm1828, %v1971, 0.0
  %2041 = vadd.xlane.f32.xlu0 %v2040
  %v2042 = vpop.xlane.xlu0 %2041
  %v2043 = vsel %vm1835, %v1973, 0.0
  %2044 = vadd.xlane.f32.xlu0 %v2043
  %v2045 = vpop.xlane.xlu0 %2044
  %v2046 = vrcp.pop %v1976
  %v2047 = vmul.f32 %v1976, %v2046
  %v2048 = vsub.f32 1.0, %v2047
  %v2049 = vmul.f32 %v2046, %v2048
  %v2050 = vadd.f32 %v2046, %v2049
  %vm2051 = vweird.f32 %v1976
  %vm2052 = vweird.f32 %v2046
  %vm2053 = vmor %vm2051, %vm2052
  %v2054 = vsel %vm2053, %v2046, %v2050
  %v2055 = vand.u32 2147483647, %v1976
  %vm2056 = vcmp.eq.f32.partialorder %v2055, 8.507059e+37
  %v2057 = vand.u32 %v1976, 2147483648
  %v2058 = vor.u32 1.1754944e-38, %v2057
  %v2059 = vsel %vm2056, %v2058, %v2054
  %v2060 = vmul.f32 %v1927, %v2059
  %v2061 = vrcp.pop %v1979
  %v2062 = vmul.f32 %v1979, %v2061
  %v2063 = vsub.f32 1.0, %v2062
  %v2064 = vmul.f32 %v2061, %v2063
  %v2065 = vadd.f32 %v2061, %v2064
  %vm2066 = vweird.f32 %v1979
  %vm2067 = vweird.f32 %v2061
  %vm2068 = vmor %vm2066, %vm2067
  %v2069 = vsel %vm2068, %v2061, %v2065
  %v2070 = vand.u32 2147483647, %v1979
  %vm2071 = vcmp.eq.f32.partialorder %v2070, 8.507059e+37
  %v2072 = vand.u32 %v1979, 2147483648
  %v2073 = vor.u32 1.1754944e-38, %v2072
  %v2074 = vsel %vm2071, %v2073, %v2069
  %v2075 = vmul.f32 %v1929, %v2074
  %v2076 = vrcp.pop %v1982
  %v2077 = vmul.f32 %v1982, %v2076
  %v2078 = vsub.f32 1.0, %v2077
  %v2079 = vmul.f32 %v2076, %v2078
  %v2080 = vadd.f32 %v2076, %v2079
  %vm2081 = vweird.f32 %v1982
  %vm2082 = vweird.f32 %v2076
  %vm2083 = vmor %vm2081, %vm2082
  %v2084 = vsel %vm2083, %v2076, %v2080
  %v2085 = vand.u32 2147483647, %v1982
  %vm2086 = vcmp.eq.f32.partialorder %v2085, 8.507059e+37
  %v2087 = vand.u32 %v1982, 2147483648
  %v2088 = vor.u32 1.1754944e-38, %v2087
  %v2089 = vsel %vm2086, %v2088, %v2084
  %v2090 = vmul.f32 %v1931, %v2089
  %v2091 = vrcp.pop %v1985
  %v2092 = vmul.f32 %v1985, %v2091
  %v2093 = vsub.f32 1.0, %v2092
  %v2094 = vmul.f32 %v2091, %v2093
  %v2095 = vadd.f32 %v2091, %v2094
  %vm2096 = vweird.f32 %v1985
  %vm2097 = vweird.f32 %v2091
  %vm2098 = vmor %vm2096, %vm2097
  %v2099 = vsel %vm2098, %v2091, %v2095
  %v2100 = vand.u32 2147483647, %v1985
  %vm2101 = vcmp.eq.f32.partialorder %v2100, 8.507059e+37
  %v2102 = vand.u32 %v1985, 2147483648
  %v2103 = vor.u32 1.1754944e-38, %v2102
  %v2104 = vsel %vm2101, %v2103, %v2099
  %v2105 = vmul.f32 %v1933, %v2104
  %v2106 = vrcp.pop %v1988
  %v2107 = vmul.f32 %v1988, %v2106
  %v2108 = vsub.f32 1.0, %v2107
  %v2109 = vmul.f32 %v2106, %v2108
  %v2110 = vadd.f32 %v2106, %v2109
  %vm2111 = vweird.f32 %v1988
  %vm2112 = vweird.f32 %v2106
  %vm2113 = vmor %vm2111, %vm2112
  %v2114 = vsel %vm2113, %v2106, %v2110
  %v2115 = vand.u32 2147483647, %v1988
  %vm2116 = vcmp.eq.f32.partialorder %v2115, 8.507059e+37
  %v2117 = vand.u32 %v1988, 2147483648
  %v2118 = vor.u32 1.1754944e-38, %v2117
  %v2119 = vsel %vm2116, %v2118, %v2114
  %v2120 = vmul.f32 %v1935, %v2119
  %v2121 = vrcp.pop %v1991
  %v2122 = vmul.f32 %v1991, %v2121
  %v2123 = vsub.f32 1.0, %v2122
  %v2124 = vmul.f32 %v2121, %v2123
  %v2125 = vadd.f32 %v2121, %v2124
  %vm2126 = vweird.f32 %v1991
  %vm2127 = vweird.f32 %v2121
  %vm2128 = vmor %vm2126, %vm2127
  %v2129 = vsel %vm2128, %v2121, %v2125
  %v2130 = vand.u32 2147483647, %v1991
  %vm2131 = vcmp.eq.f32.partialorder %v2130, 8.507059e+37
  %v2132 = vand.u32 %v1991, 2147483648
  %v2133 = vor.u32 1.1754944e-38, %v2132
  %v2134 = vsel %vm2131, %v2133, %v2129
  %v2135 = vmul.f32 %v1937, %v2134
  %v2136 = vrcp.pop %v1994
  %v2137 = vmul.f32 %v1994, %v2136
  %v2138 = vsub.f32 1.0, %v2137
  %v2139 = vmul.f32 %v2136, %v2138
  %v2140 = vadd.f32 %v2136, %v2139
  %vm2141 = vweird.f32 %v1994
  %vm2142 = vweird.f32 %v2136
  %vm2143 = vmor %vm2141, %vm2142
  %v2144 = vsel %vm2143, %v2136, %v2140
  %v2145 = vand.u32 2147483647, %v1994
  %vm2146 = vcmp.eq.f32.partialorder %v2145, 8.507059e+37
  %v2147 = vand.u32 %v1994, 2147483648
  %v2148 = vor.u32 1.1754944e-38, %v2147
  %v2149 = vsel %vm2146, %v2148, %v2144
  %v2150 = vmul.f32 %v1939, %v2149
  %v2151 = vrcp.pop %v1997
  %v2152 = vmul.f32 %v1997, %v2151
  %v2153 = vsub.f32 1.0, %v2152
  %v2154 = vmul.f32 %v2151, %v2153
  %v2155 = vadd.f32 %v2151, %v2154
  %vm2156 = vweird.f32 %v1997
  %vm2157 = vweird.f32 %v2151
  %vm2158 = vmor %vm2156, %vm2157
  %v2159 = vsel %vm2158, %v2151, %v2155
  %v2160 = vand.u32 2147483647, %v1997
  %vm2161 = vcmp.eq.f32.partialorder %v2160, 8.507059e+37
  %v2162 = vand.u32 %v1997, 2147483648
  %v2163 = vor.u32 1.1754944e-38, %v2162
  %v2164 = vsel %vm2161, %v2163, %v2159
  %v2165 = vmul.f32 %v1941, %v2164
  %v2166 = vrcp.pop %v2000
  %v2167 = vmul.f32 %v2000, %v2166
  %v2168 = vsub.f32 1.0, %v2167
  %v2169 = vmul.f32 %v2166, %v2168
  %v2170 = vadd.f32 %v2166, %v2169
  %vm2171 = vweird.f32 %v2000
  %vm2172 = vweird.f32 %v2166
  %vm2173 = vmor %vm2171, %vm2172
  %v2174 = vsel %vm2173, %v2166, %v2170
  %v2175 = vand.u32 2147483647, %v2000
  %vm2176 = vcmp.eq.f32.partialorder %v2175, 8.507059e+37
  %v2177 = vand.u32 %v2000, 2147483648
  %v2178 = vor.u32 1.1754944e-38, %v2177
  %v2179 = vsel %vm2176, %v2178, %v2174
  %v2180 = vmul.f32 %v1943, %v2179
  %v2181 = vrcp.pop %v2003
  %v2182 = vmul.f32 %v2003, %v2181
  %v2183 = vsub.f32 1.0, %v2182
  %v2184 = vmul.f32 %v2181, %v2183
  %v2185 = vadd.f32 %v2181, %v2184
  %vm2186 = vweird.f32 %v2003
  %vm2187 = vweird.f32 %v2181
  %vm2188 = vmor %vm2186, %vm2187
  %v2189 = vsel %vm2188, %v2181, %v2185
  %v2190 = vand.u32 2147483647, %v2003
  %vm2191 = vcmp.eq.f32.partialorder %v2190, 8.507059e+37
  %v2192 = vand.u32 %v2003, 2147483648
  %v2193 = vor.u32 1.1754944e-38, %v2192
  %v2194 = vsel %vm2191, %v2193, %v2189
  %v2195 = vmul.f32 %v1945, %v2194
  %v2196 = vrcp.pop %v2006
  %v2197 = vmul.f32 %v2006, %v2196
  %v2198 = vsub.f32 1.0, %v2197
  %v2199 = vmul.f32 %v2196, %v2198
  %v2200 = vadd.f32 %v2196, %v2199
  %vm2201 = vweird.f32 %v2006
  %vm2202 = vweird.f32 %v2196
  %vm2203 = vmor %vm2201, %vm2202
  %v2204 = vsel %vm2203, %v2196, %v2200
  %v2205 = vand.u32 2147483647, %v2006
  %vm2206 = vcmp.eq.f32.partialorder %v2205, 8.507059e+37
  %v2207 = vand.u32 %v2006, 2147483648
  %v2208 = vor.u32 1.1754944e-38, %v2207
  %v2209 = vsel %vm2206, %v2208, %v2204
  %v2210 = vmul.f32 %v1947, %v2209
  %v2211 = vrcp.pop %v2009
  %v2212 = vmul.f32 %v2009, %v2211
  %v2213 = vsub.f32 1.0, %v2212
  %v2214 = vmul.f32 %v2211, %v2213
  %v2215 = vadd.f32 %v2211, %v2214
  %vm2216 = vweird.f32 %v2009
  %vm2217 = vweird.f32 %v2211
  %vm2218 = vmor %vm2216, %vm2217
  %v2219 = vsel %vm2218, %v2211, %v2215
  %v2220 = vand.u32 2147483647, %v2009
  %vm2221 = vcmp.eq.f32.partialorder %v2220, 8.507059e+37
  %v2222 = vand.u32 %v2009, 2147483648
  %v2223 = vor.u32 1.1754944e-38, %v2222
  %v2224 = vsel %vm2221, %v2223, %v2219
  %v2225 = vmul.f32 %v1949, %v2224
  %v2226 = vrcp.pop %v2012
  %v2227 = vmul.f32 %v2012, %v2226
  %v2228 = vsub.f32 1.0, %v2227
  %v2229 = vmul.f32 %v2226, %v2228
  %v2230 = vadd.f32 %v2226, %v2229
  %vm2231 = vweird.f32 %v2012
  %vm2232 = vweird.f32 %v2226
  %vm2233 = vmor %vm2231, %vm2232
  %v2234 = vsel %vm2233, %v2226, %v2230
  %v2235 = vand.u32 2147483647, %v2012
  %vm2236 = vcmp.eq.f32.partialorder %v2235, 8.507059e+37
  %v2237 = vand.u32 %v2012, 2147483648
  %v2238 = vor.u32 1.1754944e-38, %v2237
  %v2239 = vsel %vm2236, %v2238, %v2234
  %v2240 = vmul.f32 %v1951, %v2239
  %v2241 = vrcp.pop %v2015
  %v2242 = vmul.f32 %v2015, %v2241
  %v2243 = vsub.f32 1.0, %v2242
  %v2244 = vmul.f32 %v2241, %v2243
  %v2245 = vadd.f32 %v2241, %v2244
  %vm2246 = vweird.f32 %v2015
  %vm2247 = vweird.f32 %v2241
  %vm2248 = vmor %vm2246, %vm2247
  %v2249 = vsel %vm2248, %v2241, %v2245
  %v2250 = vand.u32 2147483647, %v2015
  %vm2251 = vcmp.eq.f32.partialorder %v2250, 8.507059e+37
  %v2252 = vand.u32 %v2015, 2147483648
  %v2253 = vor.u32 1.1754944e-38, %v2252
  %v2254 = vsel %vm2251, %v2253, %v2249
  %v2255 = vmul.f32 %v1953, %v2254
  %v2256 = vrcp.pop %v2018
  %v2257 = vmul.f32 %v2018, %v2256
  %v2258 = vsub.f32 1.0, %v2257
  %v2259 = vmul.f32 %v2256, %v2258
  %v2260 = vadd.f32 %v2256, %v2259
  %vm2261 = vweird.f32 %v2018
  %vm2262 = vweird.f32 %v2256
  %vm2263 = vmor %vm2261, %vm2262
  %v2264 = vsel %vm2263, %v2256, %v2260
  %v2265 = vand.u32 2147483647, %v2018
  %vm2266 = vcmp.eq.f32.partialorder %v2265, 8.507059e+37
  %v2267 = vand.u32 %v2018, 2147483648
  %v2268 = vor.u32 1.1754944e-38, %v2267
  %v2269 = vsel %vm2266, %v2268, %v2264
  %v2270 = vmul.f32 %v1955, %v2269
  %v2271 = vrcp.pop %v2021
  %v2272 = vmul.f32 %v2021, %v2271
  %v2273 = vsub.f32 1.0, %v2272
  %v2274 = vmul.f32 %v2271, %v2273
  %v2275 = vadd.f32 %v2271, %v2274
  %vm2276 = vweird.f32 %v2021
  %vm2277 = vweird.f32 %v2271
  %vm2278 = vmor %vm2276, %vm2277
  %v2279 = vsel %vm2278, %v2271, %v2275
  %v2280 = vand.u32 2147483647, %v2021
  %vm2281 = vcmp.eq.f32.partialorder %v2280, 8.507059e+37
  %v2282 = vand.u32 %v2021, 2147483648
  %v2283 = vor.u32 1.1754944e-38, %v2282
  %v2284 = vsel %vm2281, %v2283, %v2279
  %v2285 = vmul.f32 %v1957, %v2284
  %v2286 = vrcp.pop %v2024
  %v2287 = vmul.f32 %v2024, %v2286
  %v2288 = vsub.f32 1.0, %v2287
  %v2289 = vmul.f32 %v2286, %v2288
  %v2290 = vadd.f32 %v2286, %v2289
  %vm2291 = vweird.f32 %v2024
  %vm2292 = vweird.f32 %v2286
  %vm2293 = vmor %vm2291, %vm2292
  %v2294 = vsel %vm2293, %v2286, %v2290
  %v2295 = vand.u32 2147483647, %v2024
  %vm2296 = vcmp.eq.f32.partialorder %v2295, 8.507059e+37
  %v2297 = vand.u32 %v2024, 2147483648
  %v2298 = vor.u32 1.1754944e-38, %v2297
  %v2299 = vsel %vm2296, %v2298, %v2294
  %v2300 = vmul.f32 %v1959, %v2299
  %v2301 = vrcp.pop %v2027
  %v2302 = vmul.f32 %v2027, %v2301
  %v2303 = vsub.f32 1.0, %v2302
  %v2304 = vmul.f32 %v2301, %v2303
  %v2305 = vadd.f32 %v2301, %v2304
  %vm2306 = vweird.f32 %v2027
  %vm2307 = vweird.f32 %v2301
  %vm2308 = vmor %vm2306, %vm2307
  %v2309 = vsel %vm2308, %v2301, %v2305
  %v2310 = vand.u32 2147483647, %v2027
  %vm2311 = vcmp.eq.f32.partialorder %v2310, 8.507059e+37
  %v2312 = vand.u32 %v2027, 2147483648
  %v2313 = vor.u32 1.1754944e-38, %v2312
  %v2314 = vsel %vm2311, %v2313, %v2309
  %v2315 = vmul.f32 %v1961, %v2314
  %v2316 = vrcp.pop %v2030
  %v2317 = vmul.f32 %v2030, %v2316
  %v2318 = vsub.f32 1.0, %v2317
  %v2319 = vmul.f32 %v2316, %v2318
  %v2320 = vadd.f32 %v2316, %v2319
  %vm2321 = vweird.f32 %v2030
  %vm2322 = vweird.f32 %v2316
  %vm2323 = vmor %vm2321, %vm2322
  %v2324 = vsel %vm2323, %v2316, %v2320
  %v2325 = vand.u32 2147483647, %v2030
  %vm2326 = vcmp.eq.f32.partialorder %v2325, 8.507059e+37
  %v2327 = vand.u32 %v2030, 2147483648
  %v2328 = vor.u32 1.1754944e-38, %v2327
  %v2329 = vsel %vm2326, %v2328, %v2324
  %v2330 = vmul.f32 %v1963, %v2329
  %v2331 = vrcp.pop %v2033
  %v2332 = vmul.f32 %v2033, %v2331
  %v2333 = vsub.f32 1.0, %v2332
  %v2334 = vmul.f32 %v2331, %v2333
  %v2335 = vadd.f32 %v2331, %v2334
  %vm2336 = vweird.f32 %v2033
  %vm2337 = vweird.f32 %v2331
  %vm2338 = vmor %vm2336, %vm2337
  %v2339 = vsel %vm2338, %v2331, %v2335
  %v2340 = vand.u32 2147483647, %v2033
  %vm2341 = vcmp.eq.f32.partialorder %v2340, 8.507059e+37
  %v2342 = vand.u32 %v2033, 2147483648
  %v2343 = vor.u32 1.1754944e-38, %v2342
  %v2344 = vsel %vm2341, %v2343, %v2339
  %v2345 = vmul.f32 %v1965, %v2344
  %v2346 = vrcp.pop %v2036
  %v2347 = vmul.f32 %v2036, %v2346
  %v2348 = vsub.f32 1.0, %v2347
  %v2349 = vmul.f32 %v2346, %v2348
  %v2350 = vadd.f32 %v2346, %v2349
  %vm2351 = vweird.f32 %v2036
  %vm2352 = vweird.f32 %v2346
  %vm2353 = vmor %vm2351, %vm2352
  %v2354 = vsel %vm2353, %v2346, %v2350
  %v2355 = vand.u32 2147483647, %v2036
  %vm2356 = vcmp.eq.f32.partialorder %v2355, 8.507059e+37
  %v2357 = vand.u32 %v2036, 2147483648
  %v2358 = vor.u32 1.1754944e-38, %v2357
  %v2359 = vsel %vm2356, %v2358, %v2354
  %v2360 = vmul.f32 %v1967, %v2359
  %v2361 = vrcp.pop %v2039
  %v2362 = vmul.f32 %v2039, %v2361
  %v2363 = vsub.f32 1.0, %v2362
  %v2364 = vmul.f32 %v2361, %v2363
  %v2365 = vadd.f32 %v2361, %v2364
  %vm2366 = vweird.f32 %v2039
  %vm2367 = vweird.f32 %v2361
  %vm2368 = vmor %vm2366, %vm2367
  %v2369 = vsel %vm2368, %v2361, %v2365
  %v2370 = vand.u32 2147483647, %v2039
  %vm2371 = vcmp.eq.f32.partialorder %v2370, 8.507059e+37
  %v2372 = vand.u32 %v2039, 2147483648
  %v2373 = vor.u32 1.1754944e-38, %v2372
  %v2374 = vsel %vm2371, %v2373, %v2369
  %v2375 = vmul.f32 %v1969, %v2374
  %v2376 = vrcp.pop %v2042
  %v2377 = vmul.f32 %v2042, %v2376
  %v2378 = vsub.f32 1.0, %v2377
  %v2379 = vmul.f32 %v2376, %v2378
  %v2380 = vadd.f32 %v2376, %v2379
  %vm2381 = vweird.f32 %v2042
  %vm2382 = vweird.f32 %v2376
  %vm2383 = vmor %vm2381, %vm2382
  %v2384 = vsel %vm2383, %v2376, %v2380
  %v2385 = vand.u32 2147483647, %v2042
  %vm2386 = vcmp.eq.f32.partialorder %v2385, 8.507059e+37
  %v2387 = vand.u32 %v2042, 2147483648
  %v2388 = vor.u32 1.1754944e-38, %v2387
  %v2389 = vsel %vm2386, %v2388, %v2384
  %v2390 = vmul.f32 %v1971, %v2389
  %v2391 = vrcp.pop %v2045
  %v2392 = vmul.f32 %v2045, %v2391
  %v2393 = vsub.f32 1.0, %v2392
  %v2394 = vmul.f32 %v2391, %v2393
  %v2395 = vadd.f32 %v2391, %v2394
  %vm2396 = vweird.f32 %v2045
  %vm2397 = vweird.f32 %v2391
  %vm2398 = vmor %vm2396, %vm2397
  %v2399 = vsel %vm2398, %v2391, %v2395
  %v2400 = vand.u32 2147483647, %v2045
  %vm2401 = vcmp.eq.f32.partialorder %v2400, 8.507059e+37
  %v2402 = vand.u32 %v2045, 2147483648
  %v2403 = vor.u32 1.1754944e-38, %v2402
  %v2404 = vsel %vm2401, %v2403, %v2399
  %v2405 = vmul.f32 %v1973, %v2404
  %v2406 = vpack.c.bf16 %v2060, %v2060
  %v2407 = vpack.c.bf16 %v2075, %v2075
  %v2408 = vpack.c.bf16 %v2090, %v2090
  %v2409 = vpack.c.bf16 %v2105, %v2105
  %v2410 = vpack.c.bf16 %v2120, %v2120
  %v2411 = vpack.c.bf16 %v2135, %v2135
  %v2412 = vpack.c.bf16 %v2150, %v2150
  %v2413 = vpack.c.bf16 %v2165, %v2165
  %v2414 = vpack.c.bf16 %v2180, %v2180
  %v2415 = vpack.c.bf16 %v2195, %v2195
  %v2416 = vpack.c.bf16 %v2210, %v2210
  %v2417 = vpack.c.bf16 %v2225, %v2225
  %v2418 = vpack.c.bf16 %v2240, %v2240
  %v2419 = vpack.c.bf16 %v2255, %v2255
  %v2420 = vpack.c.bf16 %v2270, %v2270
  %v2421 = vpack.c.bf16 %v2285, %v2285
  %v2422 = vpack.c.bf16 %v2300, %v2300
  %v2423 = vpack.c.bf16 %v2315, %v2315
  %v2424 = vpack.c.bf16 %v2330, %v2330
  %v2425 = vpack.c.bf16 %v2345, %v2345
  %v2426 = vpack.c.bf16 %v2360, %v2360
  %v2427 = vpack.c.bf16 %v2375, %v2375
  %v2428 = vpack.c.bf16 %v2390, %v2390
  %v2429 = vpack.c.bf16 %v2405, %v2405
  %v2433 = vunpack.c.l.b16 %v2406
  %v2434 = vunpack.c.l.b16 %v2407
  %v2435 = vunpack.c.l.b16 %v2408
  %v2436 = vpack.c.b16 %v2434, %v2433
  %v2437 = vpack.c.b16 %v2435, %v2435
  %2438 = vrot.lane.b32.xlu0 %v986, 64
  %v2439 = vpop.permute.xlu0 %2438
  %2440 = vrot.lane.b32.xlu0 %v987, 64
  %v2441 = vpop.permute.xlu0 %2440
  %v2444 = vsel %vm1828, %v2436, 0
  %v2447 = vsel %vm1828, %v2437, 0
  %vm2449 = vcmask 1040384
  %v2450 = vsel 0, 4294967295, 65535
  %v2451 = vsel %vm2449, %v2450, 0
  %v2453 = vand.u32 %v2441, %v2451
  %2455 = vmatpush.bf16.msra.mxu0 0
  %2456 = vmatpush.bf16.msra.mxu0 0
  %2457 = vmatpush.bf16.msra.mxu0 0
  %2458 = vmatpush.bf16.msra.mxu0 0
  %2459 = vmatpush.bf16.msra.mxu0 0
  %2460 = vmatpush.bf16.msra.mxu0 0
  %2461 = vmatpush.bf16.msra.mxu0 %v2453
  %2462 = vmatpush.bf16.msra.mxu0 %v2439
  %2463 = vmatmul.bf16.gmra.mxu0 %v2444
  %v2464 = vpop.f32.mrf.mxu0
  %v2465 = vadd.f32 0.0, %v2464
  %v2466 = vpop.f32.mrf.mxu0
  %v2467 = vadd.f32 0.0, %v2466
  %2468 = vmatmul.bf16.gmra.mxu0 %v2447
  %v2469 = vpop.f32.mrf.mxu0
  %v2470 = vadd.f32 0.0, %v2469
  %v2471 = vpop.f32.mrf.mxu0
  %2472 = vdwg.mxu0
  %v2476 = vunpack.c.l.b16 %v2409
  %v2477 = vunpack.c.l.b16 %v2410
  %v2478 = vunpack.c.l.b16 %v2411
  %v2479 = vpack.c.b16 %v2477, %v2476
  %v2480 = vpack.c.b16 %v2478, %v2478
  %2481 = vrot.lane.b32.xlu0 %v1102, 64
  %v2482 = vpop.permute.xlu0 %2481
  %2483 = vrot.lane.b32.xlu0 %v1103, 64
  %v2484 = vpop.permute.xlu0 %2483
  %v2487 = vsel %vm1828, %v2479, 0
  %v2490 = vsel %vm1828, %v2480, 0
  %v2493 = vand.u32 %v2484, %v2451
  %2495 = vmatpush.bf16.msra.mxu0 0
  %2496 = vmatpush.bf16.msra.mxu0 0
  %2497 = vmatpush.bf16.msra.mxu0 0
  %2498 = vmatpush.bf16.msra.mxu0 0
  %2499 = vmatpush.bf16.msra.mxu0 0
  %2500 = vmatpush.bf16.msra.mxu0 0
  %2501 = vmatpush.bf16.msra.mxu0 %v2493
  %2502 = vmatpush.bf16.msra.mxu0 %v2482
  %2503 = vmatmul.bf16.gmra.mxu0 %v2487
  %v2504 = vpop.f32.mrf.mxu0
  %v2505 = vadd.f32 0.0, %v2504
  %v2506 = vpop.f32.mrf.mxu0
  %v2507 = vadd.f32 0.0, %v2506
  %2508 = vmatmul.bf16.gmra.mxu0 %v2490
  %v2509 = vpop.f32.mrf.mxu0
  %v2510 = vadd.f32 0.0, %v2509
  %v2511 = vpop.f32.mrf.mxu0
  %2512 = vdwg.mxu0
  %v2516 = vunpack.c.l.b16 %v2412
  %v2517 = vunpack.c.l.b16 %v2413
  %v2518 = vunpack.c.l.b16 %v2414
  %v2519 = vpack.c.b16 %v2517, %v2516
  %v2520 = vpack.c.b16 %v2518, %v2518
  %2521 = vrot.lane.b32.xlu0 %v1217, 64
  %v2522 = vpop.permute.xlu0 %2521
  %2523 = vrot.lane.b32.xlu0 %v1218, 64
  %v2524 = vpop.permute.xlu0 %2523
  %v2527 = vsel %vm1828, %v2519, 0
  %v2530 = vsel %vm1828, %v2520, 0
  %v2533 = vand.u32 %v2524, %v2451
  %2535 = vmatpush.bf16.msra.mxu0 0
  %2536 = vmatpush.bf16.msra.mxu0 0
  %2537 = vmatpush.bf16.msra.mxu0 0
  %2538 = vmatpush.bf16.msra.mxu0 0
  %2539 = vmatpush.bf16.msra.mxu0 0
  %2540 = vmatpush.bf16.msra.mxu0 0
  %2541 = vmatpush.bf16.msra.mxu0 %v2533
  %2542 = vmatpush.bf16.msra.mxu0 %v2522
  %2543 = vmatmul.bf16.gmra.mxu0 %v2527
  %v2544 = vpop.f32.mrf.mxu0
  %v2545 = vadd.f32 0.0, %v2544
  %v2546 = vpop.f32.mrf.mxu0
  %v2547 = vadd.f32 0.0, %v2546
  %2548 = vmatmul.bf16.gmra.mxu0 %v2530
  %v2549 = vpop.f32.mrf.mxu0
  %v2550 = vadd.f32 0.0, %v2549
  %v2551 = vpop.f32.mrf.mxu0
  %2552 = vdwg.mxu0
  %v2556 = vunpack.c.l.b16 %v2415
  %v2557 = vunpack.c.l.b16 %v2416
  %v2558 = vunpack.c.l.b16 %v2417
  %v2559 = vpack.c.b16 %v2557, %v2556
  %v2560 = vpack.c.b16 %v2558, %v2558
  %2561 = vrot.lane.b32.xlu0 %v1332, 64
  %v2562 = vpop.permute.xlu0 %2561
  %2563 = vrot.lane.b32.xlu0 %v1333, 64
  %v2564 = vpop.permute.xlu0 %2563
  %v2567 = vsel %vm1828, %v2559, 0
  %v2570 = vsel %vm1828, %v2560, 0
  %v2573 = vand.u32 %v2564, %v2451
  %2575 = vmatpush.bf16.msra.mxu0 0
  %2576 = vmatpush.bf16.msra.mxu0 0
  %2577 = vmatpush.bf16.msra.mxu0 0
  %2578 = vmatpush.bf16.msra.mxu0 0
  %2579 = vmatpush.bf16.msra.mxu0 0
  %2580 = vmatpush.bf16.msra.mxu0 0
  %2581 = vmatpush.bf16.msra.mxu0 %v2573
  %2582 = vmatpush.bf16.msra.mxu0 %v2562
  %2583 = vmatmul.bf16.gmra.mxu0 %v2567
  %v2584 = vpop.f32.mrf.mxu0
  %v2585 = vadd.f32 0.0, %v2584
  %v2586 = vpop.f32.mrf.mxu0
  %v2587 = vadd.f32 0.0, %v2586
  %2588 = vmatmul.bf16.gmra.mxu0 %v2570
  %v2589 = vpop.f32.mrf.mxu0
  %v2590 = vadd.f32 0.0, %v2589
  %v2591 = vpop.f32.mrf.mxu0
  %2592 = vdwg.mxu0
  %v2596 = vunpack.c.l.b16 %v2418
  %v2597 = vunpack.c.l.b16 %v2419
  %v2598 = vunpack.c.l.b16 %v2420
  %v2599 = vpack.c.b16 %v2597, %v2596
  %v2600 = vpack.c.b16 %v2598, %v2598
  %2601 = vrot.lane.b32.xlu0 %v1447, 64
  %v2602 = vpop.permute.xlu0 %2601
  %2603 = vrot.lane.b32.xlu0 %v1448, 64
  %v2604 = vpop.permute.xlu0 %2603
  %v2607 = vsel %vm1828, %v2599, 0
  %v2610 = vsel %vm1828, %v2600, 0
  %v2613 = vand.u32 %v2604, %v2451
  %2615 = vmatpush.bf16.msra.mxu0 0
  %2616 = vmatpush.bf16.msra.mxu0 0
  %2617 = vmatpush.bf16.msra.mxu0 0
  %2618 = vmatpush.bf16.msra.mxu0 0
  %2619 = vmatpush.bf16.msra.mxu0 0
  %2620 = vmatpush.bf16.msra.mxu0 0
  %2621 = vmatpush.bf16.msra.mxu0 %v2613
  %2622 = vmatpush.bf16.msra.mxu0 %v2602
  %2623 = vmatmul.bf16.gmra.mxu0 %v2607
  %v2624 = vpop.f32.mrf.mxu0
  %v2625 = vadd.f32 0.0, %v2624
  %v2626 = vpop.f32.mrf.mxu0
  %v2627 = vadd.f32 0.0, %v2626
  %2628 = vmatmul.bf16.gmra.mxu0 %v2610
  %v2629 = vpop.f32.mrf.mxu0
  %v2630 = vadd.f32 0.0, %v2629
  %v2631 = vpop.f32.mrf.mxu0
  %2632 = vdwg.mxu0
  %v2636 = vunpack.c.l.b16 %v2421
  %v2637 = vunpack.c.l.b16 %v2422
  %v2638 = vunpack.c.l.b16 %v2423
  %v2639 = vpack.c.b16 %v2637, %v2636
  %v2640 = vpack.c.b16 %v2638, %v2638
  %2641 = vrot.lane.b32.xlu0 %v1562, 64
  %v2642 = vpop.permute.xlu0 %2641
  %2643 = vrot.lane.b32.xlu0 %v1563, 64
  %v2644 = vpop.permute.xlu0 %2643
  %v2647 = vsel %vm1828, %v2639, 0
  %v2650 = vsel %vm1828, %v2640, 0
  %v2653 = vand.u32 %v2644, %v2451
  %2655 = vmatpush.bf16.msra.mxu0 0
  %2656 = vmatpush.bf16.msra.mxu0 0
  %2657 = vmatpush.bf16.msra.mxu0 0
  %2658 = vmatpush.bf16.msra.mxu0 0
  %2659 = vmatpush.bf16.msra.mxu0 0
  %2660 = vmatpush.bf16.msra.mxu0 0
  %2661 = vmatpush.bf16.msra.mxu0 %v2653
  %2662 = vmatpush.bf16.msra.mxu0 %v2642
  %2663 = vmatmul.bf16.gmra.mxu0 %v2647
  %v2664 = vpop.f32.mrf.mxu0
  %v2665 = vadd.f32 0.0, %v2664
  %v2666 = vpop.f32.mrf.mxu0
  %v2667 = vadd.f32 0.0, %v2666
  %2668 = vmatmul.bf16.gmra.mxu0 %v2650
  %v2669 = vpop.f32.mrf.mxu0
  %v2670 = vadd.f32 0.0, %v2669
  %v2671 = vpop.f32.mrf.mxu0
  %2672 = vdwg.mxu0
  %v2676 = vunpack.c.l.b16 %v2424
  %v2677 = vunpack.c.l.b16 %v2425
  %v2678 = vunpack.c.l.b16 %v2426
  %v2679 = vpack.c.b16 %v2677, %v2676
  %v2680 = vpack.c.b16 %v2678, %v2678
  %2681 = vrot.lane.b32.xlu0 %v1677, 64
  %v2682 = vpop.permute.xlu0 %2681
  %2683 = vrot.lane.b32.xlu0 %v1678, 64
  %v2684 = vpop.permute.xlu0 %2683
  %v2687 = vsel %vm1828, %v2679, 0
  %v2690 = vsel %vm1828, %v2680, 0
  %v2693 = vand.u32 %v2684, %v2451
  %2695 = vmatpush.bf16.msra.mxu0 0
  %2696 = vmatpush.bf16.msra.mxu0 0
  %2697 = vmatpush.bf16.msra.mxu0 0
  %2698 = vmatpush.bf16.msra.mxu0 0
  %2699 = vmatpush.bf16.msra.mxu0 0
  %2700 = vmatpush.bf16.msra.mxu0 0
  %2701 = vmatpush.bf16.msra.mxu0 %v2693
  %2702 = vmatpush.bf16.msra.mxu0 %v2682
  %2703 = vmatmul.bf16.gmra.mxu0 %v2687
  %v2704 = vpop.f32.mrf.mxu0
  %v2705 = vadd.f32 0.0, %v2704
  %v2706 = vpop.f32.mrf.mxu0
  %v2707 = vadd.f32 0.0, %v2706
  %2708 = vmatmul.bf16.gmra.mxu0 %v2690
  %v2709 = vpop.f32.mrf.mxu0
  %v2710 = vadd.f32 0.0, %v2709
  %v2711 = vpop.f32.mrf.mxu0
  %2712 = vdwg.mxu0
  %v2716 = vunpack.c.l.b16 %v2427
  %v2717 = vunpack.c.l.b16 %v2428
  %v2718 = vunpack.c.l.b16 %v2429
  %v2719 = vpack.c.b16 %v2717, %v2716
  %v2720 = vpack.c.b16 %v2718, %v2718
  %2721 = vrot.lane.b32.xlu0 %v1792, 64
  %v2722 = vpop.permute.xlu0 %2721
  %2723 = vrot.lane.b32.xlu0 %v1793, 64
  %v2724 = vpop.permute.xlu0 %2723
  %v2727 = vsel %vm1828, %v2719, 0
  %v2730 = vsel %vm1828, %v2720, 0
  %v2733 = vand.u32 %v2724, %v2451
  %2735 = vmatpush.bf16.msra.mxu0 0
  %2736 = vmatpush.bf16.msra.mxu0 0
  %2737 = vmatpush.bf16.msra.mxu0 0
  %2738 = vmatpush.bf16.msra.mxu0 0
  %2739 = vmatpush.bf16.msra.mxu0 0
  %2740 = vmatpush.bf16.msra.mxu0 0
  %2741 = vmatpush.bf16.msra.mxu0 %v2733
  %2742 = vmatpush.bf16.msra.mxu0 %v2722
  %2743 = vmatmul.bf16.gmra.mxu0 %v2727
  %v2744 = vpop.f32.mrf.mxu0
  %v2745 = vadd.f32 0.0, %v2744
  %v2746 = vpop.f32.mrf.mxu0
  %v2747 = vadd.f32 0.0, %v2746
  %2748 = vmatmul.bf16.gmra.mxu0 %v2730
  %v2749 = vpop.f32.mrf.mxu0
  %v2750 = vadd.f32 0.0, %v2749
  %v2751 = vpop.f32.mrf.mxu0
  %2752 = vdwg.mxu0
  %2753 = vrot.lane.b32.xlu0 %v986, 120
  %v2754 = vpop.permute.xlu0 %2753
  %2755 = vrot.lane.b32.xlu0 %v987, 120
  %v2756 = vpop.permute.xlu0 %2755
  %2757 = vrot.lane.b32.xlu0 %v986, 88
  %v2758 = vpop.permute.xlu0 %2757
  %2759 = vrot.lane.b32.xlu0 %v987, 88
  %v2760 = vpop.permute.xlu0 %2759
  %v2762 = vsel %vm992, %v2754, 0
  %v2765 = vsel %vm992, %v2756, 0
  %v2768 = vsel %vm992, %v2758, 0
  %v2771 = vsel %vm992, %v2760, 0
  %2773 = vmatpush.bf16.xpose.msra.mxu0 0
  %2774 = vmatpush.bf16.xpose.msra.mxu0 0
  %2775 = vmatpush.bf16.xpose.msra.mxu0 0
  %2776 = vmatpush.bf16.xpose.msra.mxu0 0
  %2777 = vmatpush.bf16.xpose.msra.mxu0 0
  %2778 = vmatpush.bf16.xpose.msra.mxu0 0
  %2779 = vmatpush.bf16.xpose.msra.mxu0 %v2771
  %2780 = vmatpush.bf16.xpose.msra.mxu0 %v2768
  %2781 = vmatmul.bf16.gmra.mxu0 %v2762
  %v2782 = vpop.f32.mrf.mxu0
  %v2783 = vadd.f32 0.0, %v2782
  %v2784 = vpop.f32.mrf.mxu0
  %v2785 = vadd.f32 0.0, %v2784
  %2786 = vmatmul.bf16.gmra.mxu0 %v2765
  %v2787 = vpop.f32.mrf.mxu0
  %v2788 = vadd.f32 0.0, %v2787
  %v2789 = vpop.f32.mrf.mxu0
  %2790 = vdwg.mxu0
  %2791 = vrot.lane.b32.xlu0 %v1102, 120
  %v2792 = vpop.permute.xlu0 %2791
  %2793 = vrot.lane.b32.xlu0 %v1103, 120
  %v2794 = vpop.permute.xlu0 %2793
  %2795 = vrot.lane.b32.xlu0 %v1102, 88
  %v2796 = vpop.permute.xlu0 %2795
  %2797 = vrot.lane.b32.xlu0 %v1103, 88
  %v2798 = vpop.permute.xlu0 %2797
  %v2800 = vsel %vm992, %v2792, 0
  %v2803 = vsel %vm992, %v2794, 0
  %v2806 = vsel %vm992, %v2796, 0
  %v2809 = vsel %vm992, %v2798, 0
  %2811 = vmatpush.bf16.xpose.msra.mxu0 0
  %2812 = vmatpush.bf16.xpose.msra.mxu0 0
  %2813 = vmatpush.bf16.xpose.msra.mxu0 0
  %2814 = vmatpush.bf16.xpose.msra.mxu0 0
  %2815 = vmatpush.bf16.xpose.msra.mxu0 0
  %2816 = vmatpush.bf16.xpose.msra.mxu0 0
  %2817 = vmatpush.bf16.xpose.msra.mxu0 %v2809
  %2818 = vmatpush.bf16.xpose.msra.mxu0 %v2806
  %2819 = vmatmul.bf16.gmra.mxu0 %v2800
  %v2820 = vpop.f32.mrf.mxu0
  %v2821 = vadd.f32 0.0, %v2820
  %v2822 = vpop.f32.mrf.mxu0
  %v2823 = vadd.f32 0.0, %v2822
  %2824 = vmatmul.bf16.gmra.mxu0 %v2803
  %v2825 = vpop.f32.mrf.mxu0
  %v2826 = vadd.f32 0.0, %v2825
  %v2827 = vpop.f32.mrf.mxu0
  %2828 = vdwg.mxu0
  %2829 = vrot.lane.b32.xlu0 %v1217, 120
  %v2830 = vpop.permute.xlu0 %2829
  %2831 = vrot.lane.b32.xlu0 %v1218, 120
  %v2832 = vpop.permute.xlu0 %2831
  %2833 = vrot.lane.b32.xlu0 %v1217, 88
  %v2834 = vpop.permute.xlu0 %2833
  %2835 = vrot.lane.b32.xlu0 %v1218, 88
  %v2836 = vpop.permute.xlu0 %2835
  %v2838 = vsel %vm992, %v2830, 0
  %v2841 = vsel %vm992, %v2832, 0
  %v2844 = vsel %vm992, %v2834, 0
  %v2847 = vsel %vm992, %v2836, 0
  %2849 = vmatpush.bf16.xpose.msra.mxu0 0
  %2850 = vmatpush.bf16.xpose.msra.mxu0 0
  %2851 = vmatpush.bf16.xpose.msra.mxu0 0
  %2852 = vmatpush.bf16.xpose.msra.mxu0 0
  %2853 = vmatpush.bf16.xpose.msra.mxu0 0
  %2854 = vmatpush.bf16.xpose.msra.mxu0 0
  %2855 = vmatpush.bf16.xpose.msra.mxu0 %v2847
  %2856 = vmatpush.bf16.xpose.msra.mxu0 %v2844
  %2857 = vmatmul.bf16.gmra.mxu0 %v2838
  %v2858 = vpop.f32.mrf.mxu0
  %v2859 = vadd.f32 0.0, %v2858
  %v2860 = vpop.f32.mrf.mxu0
  %v2861 = vadd.f32 0.0, %v2860
  %2862 = vmatmul.bf16.gmra.mxu0 %v2841
  %v2863 = vpop.f32.mrf.mxu0
  %v2864 = vadd.f32 0.0, %v2863
  %v2865 = vpop.f32.mrf.mxu0
  %2866 = vdwg.mxu0
  %2867 = vrot.lane.b32.xlu0 %v1332, 120
  %v2868 = vpop.permute.xlu0 %2867
  %2869 = vrot.lane.b32.xlu0 %v1333, 120
  %v2870 = vpop.permute.xlu0 %2869
  %2871 = vrot.lane.b32.xlu0 %v1332, 88
  %v2872 = vpop.permute.xlu0 %2871
  %2873 = vrot.lane.b32.xlu0 %v1333, 88
  %v2874 = vpop.permute.xlu0 %2873
  %v2876 = vsel %vm992, %v2868, 0
  %v2879 = vsel %vm992, %v2870, 0
  %v2882 = vsel %vm992, %v2872, 0
  %v2885 = vsel %vm992, %v2874, 0
  %2887 = vmatpush.bf16.xpose.msra.mxu0 0
  %2888 = vmatpush.bf16.xpose.msra.mxu0 0
  %2889 = vmatpush.bf16.xpose.msra.mxu0 0
  %2890 = vmatpush.bf16.xpose.msra.mxu0 0
  %2891 = vmatpush.bf16.xpose.msra.mxu0 0
  %2892 = vmatpush.bf16.xpose.msra.mxu0 0
  %2893 = vmatpush.bf16.xpose.msra.mxu0 %v2885
  %2894 = vmatpush.bf16.xpose.msra.mxu0 %v2882
  %2895 = vmatmul.bf16.gmra.mxu0 %v2876
  %v2896 = vpop.f32.mrf.mxu0
  %v2897 = vadd.f32 0.0, %v2896
  %v2898 = vpop.f32.mrf.mxu0
  %v2899 = vadd.f32 0.0, %v2898
  %2900 = vmatmul.bf16.gmra.mxu0 %v2879
  %v2901 = vpop.f32.mrf.mxu0
  %v2902 = vadd.f32 0.0, %v2901
  %v2903 = vpop.f32.mrf.mxu0
  %2904 = vdwg.mxu0
  %2905 = vrot.lane.b32.xlu0 %v1447, 120
  %v2906 = vpop.permute.xlu0 %2905
  %2907 = vrot.lane.b32.xlu0 %v1448, 120
  %v2908 = vpop.permute.xlu0 %2907
  %2909 = vrot.lane.b32.xlu0 %v1447, 88
  %v2910 = vpop.permute.xlu0 %2909
  %2911 = vrot.lane.b32.xlu0 %v1448, 88
  %v2912 = vpop.permute.xlu0 %2911
  %v2914 = vsel %vm992, %v2906, 0
  %v2917 = vsel %vm992, %v2908, 0
  %v2920 = vsel %vm992, %v2910, 0
  %v2923 = vsel %vm992, %v2912, 0
  %2925 = vmatpush.bf16.xpose.msra.mxu0 0
  %2926 = vmatpush.bf16.xpose.msra.mxu0 0
  %2927 = vmatpush.bf16.xpose.msra.mxu0 0
  %2928 = vmatpush.bf16.xpose.msra.mxu0 0
  %2929 = vmatpush.bf16.xpose.msra.mxu0 0
  %2930 = vmatpush.bf16.xpose.msra.mxu0 0
  %2931 = vmatpush.bf16.xpose.msra.mxu0 %v2923
  %2932 = vmatpush.bf16.xpose.msra.mxu0 %v2920
  %2933 = vmatmul.bf16.gmra.mxu0 %v2914
  %v2934 = vpop.f32.mrf.mxu0
  %v2935 = vadd.f32 0.0, %v2934
  %v2936 = vpop.f32.mrf.mxu0
  %v2937 = vadd.f32 0.0, %v2936
  %2938 = vmatmul.bf16.gmra.mxu0 %v2917
  %v2939 = vpop.f32.mrf.mxu0
  %v2940 = vadd.f32 0.0, %v2939
  %v2941 = vpop.f32.mrf.mxu0
  %2942 = vdwg.mxu0
  %2943 = vrot.lane.b32.xlu0 %v1562, 120
  %v2944 = vpop.permute.xlu0 %2943
  %2945 = vrot.lane.b32.xlu0 %v1563, 120
  %v2946 = vpop.permute.xlu0 %2945
  %2947 = vrot.lane.b32.xlu0 %v1562, 88
  %v2948 = vpop.permute.xlu0 %2947
  %2949 = vrot.lane.b32.xlu0 %v1563, 88
  %v2950 = vpop.permute.xlu0 %2949
  %v2952 = vsel %vm992, %v2944, 0
  %v2955 = vsel %vm992, %v2946, 0
  %v2958 = vsel %vm992, %v2948, 0
  %v2961 = vsel %vm992, %v2950, 0
  %2963 = vmatpush.bf16.xpose.msra.mxu0 0
  %2964 = vmatpush.bf16.xpose.msra.mxu0 0
  %2965 = vmatpush.bf16.xpose.msra.mxu0 0
  %2966 = vmatpush.bf16.xpose.msra.mxu0 0
  %2967 = vmatpush.bf16.xpose.msra.mxu0 0
  %2968 = vmatpush.bf16.xpose.msra.mxu0 0
  %2969 = vmatpush.bf16.xpose.msra.mxu0 %v2961
  %2970 = vmatpush.bf16.xpose.msra.mxu0 %v2958
  %2971 = vmatmul.bf16.gmra.mxu0 %v2952
  %v2972 = vpop.f32.mrf.mxu0
  %v2973 = vadd.f32 0.0, %v2972
  %v2974 = vpop.f32.mrf.mxu0
  %v2975 = vadd.f32 0.0, %v2974
  %2976 = vmatmul.bf16.gmra.mxu0 %v2955
  %v2977 = vpop.f32.mrf.mxu0
  %v2978 = vadd.f32 0.0, %v2977
  %v2979 = vpop.f32.mrf.mxu0
  %2980 = vdwg.mxu0
  %2981 = vrot.lane.b32.xlu0 %v1677, 120
  %v2982 = vpop.permute.xlu0 %2981
  %2983 = vrot.lane.b32.xlu0 %v1678, 120
  %v2984 = vpop.permute.xlu0 %2983
  %2985 = vrot.lane.b32.xlu0 %v1677, 88
  %v2986 = vpop.permute.xlu0 %2985
  %2987 = vrot.lane.b32.xlu0 %v1678, 88
  %v2988 = vpop.permute.xlu0 %2987
  %v2990 = vsel %vm992, %v2982, 0
  %v2993 = vsel %vm992, %v2984, 0
  %v2996 = vsel %vm992, %v2986, 0
  %v2999 = vsel %vm992, %v2988, 0
  %3001 = vmatpush.bf16.xpose.msra.mxu0 0
  %3002 = vmatpush.bf16.xpose.msra.mxu0 0
  %3003 = vmatpush.bf16.xpose.msra.mxu0 0
  %3004 = vmatpush.bf16.xpose.msra.mxu0 0
  %3005 = vmatpush.bf16.xpose.msra.mxu0 0
  %3006 = vmatpush.bf16.xpose.msra.mxu0 0
  %3007 = vmatpush.bf16.xpose.msra.mxu0 %v2999
  %3008 = vmatpush.bf16.xpose.msra.mxu0 %v2996
  %3009 = vmatmul.bf16.gmra.mxu0 %v2990
  %v3010 = vpop.f32.mrf.mxu0
  %v3011 = vadd.f32 0.0, %v3010
  %v3012 = vpop.f32.mrf.mxu0
  %v3013 = vadd.f32 0.0, %v3012
  %3014 = vmatmul.bf16.gmra.mxu0 %v2993
  %v3015 = vpop.f32.mrf.mxu0
  %v3016 = vadd.f32 0.0, %v3015
  %v3017 = vpop.f32.mrf.mxu0
  %3018 = vdwg.mxu0
  %3019 = vrot.lane.b32.xlu0 %v1792, 120
  %v3020 = vpop.permute.xlu0 %3019
  %3021 = vrot.lane.b32.xlu0 %v1793, 120
  %v3022 = vpop.permute.xlu0 %3021
  %3023 = vrot.lane.b32.xlu0 %v1792, 88
  %v3024 = vpop.permute.xlu0 %3023
  %3025 = vrot.lane.b32.xlu0 %v1793, 88
  %v3026 = vpop.permute.xlu0 %3025
  %v3028 = vsel %vm992, %v3020, 0
  %v3031 = vsel %vm992, %v3022, 0
  %v3034 = vsel %vm992, %v3024, 0
  %v3037 = vsel %vm992, %v3026, 0
  %3039 = vmatpush.bf16.xpose.msra.mxu0 0
  %3040 = vmatpush.bf16.xpose.msra.mxu0 0
  %3041 = vmatpush.bf16.xpose.msra.mxu0 0
  %3042 = vmatpush.bf16.xpose.msra.mxu0 0
  %3043 = vmatpush.bf16.xpose.msra.mxu0 0
  %3044 = vmatpush.bf16.xpose.msra.mxu0 0
  %3045 = vmatpush.bf16.xpose.msra.mxu0 %v3037
  %3046 = vmatpush.bf16.xpose.msra.mxu0 %v3034
  %3047 = vmatmul.bf16.gmra.mxu0 %v3028
  %v3048 = vpop.f32.mrf.mxu0
  %v3049 = vadd.f32 0.0, %v3048
  %v3050 = vpop.f32.mrf.mxu0
  %v3051 = vadd.f32 0.0, %v3050
  %3052 = vmatmul.bf16.gmra.mxu0 %v3031
  %v3053 = vpop.f32.mrf.mxu0
  %v3054 = vadd.f32 0.0, %v3053
  %v3055 = vpop.f32.mrf.mxu0
  %3056 = vdwg.mxu0
  %v3057 = vsel %vm1828, %v2783, -inf
  %3058 = vmax.xlane.f32.xlu0 %v3057
  %v3059 = vpop.xlane.xlu0 %3058
  %v3060 = vsel %vm1828, %v2785, -inf
  %3061 = vmax.xlane.f32.xlu0 %v3060
  %v3062 = vpop.xlane.xlu0 %3061
  %v3063 = vsel %vm1835, %v2788, -inf
  %3064 = vmax.xlane.f32.xlu0 %v3063
  %v3065 = vpop.xlane.xlu0 %3064
  %v3066 = vsel %vm1828, %v2821, -inf
  %3067 = vmax.xlane.f32.xlu0 %v3066
  %v3068 = vpop.xlane.xlu0 %3067
  %v3069 = vsel %vm1828, %v2823, -inf
  %3070 = vmax.xlane.f32.xlu0 %v3069
  %v3071 = vpop.xlane.xlu0 %3070
  %v3072 = vsel %vm1835, %v2826, -inf
  %3073 = vmax.xlane.f32.xlu0 %v3072
  %v3074 = vpop.xlane.xlu0 %3073
  %v3075 = vsel %vm1828, %v2859, -inf
  %3076 = vmax.xlane.f32.xlu0 %v3075
  %v3077 = vpop.xlane.xlu0 %3076
  %v3078 = vsel %vm1828, %v2861, -inf
  %3079 = vmax.xlane.f32.xlu0 %v3078
  %v3080 = vpop.xlane.xlu0 %3079
  %v3081 = vsel %vm1835, %v2864, -inf
  %3082 = vmax.xlane.f32.xlu0 %v3081
  %v3083 = vpop.xlane.xlu0 %3082
  %v3084 = vsel %vm1828, %v2897, -inf
  %3085 = vmax.xlane.f32.xlu0 %v3084
  %v3086 = vpop.xlane.xlu0 %3085
  %v3087 = vsel %vm1828, %v2899, -inf
  %3088 = vmax.xlane.f32.xlu0 %v3087
  %v3089 = vpop.xlane.xlu0 %3088
  %v3090 = vsel %vm1835, %v2902, -inf
  %3091 = vmax.xlane.f32.xlu0 %v3090
  %v3092 = vpop.xlane.xlu0 %3091
  %v3093 = vsel %vm1828, %v2935, -inf
  %3094 = vmax.xlane.f32.xlu0 %v3093
  %v3095 = vpop.xlane.xlu0 %3094
  %v3096 = vsel %vm1828, %v2937, -inf
  %3097 = vmax.xlane.f32.xlu0 %v3096
  %v3098 = vpop.xlane.xlu0 %3097
  %v3099 = vsel %vm1835, %v2940, -inf
  %3100 = vmax.xlane.f32.xlu0 %v3099
  %v3101 = vpop.xlane.xlu0 %3100
  %v3102 = vsel %vm1828, %v2973, -inf
  %3103 = vmax.xlane.f32.xlu0 %v3102
  %v3104 = vpop.xlane.xlu0 %3103
  %v3105 = vsel %vm1828, %v2975, -inf
  %3106 = vmax.xlane.f32.xlu0 %v3105
  %v3107 = vpop.xlane.xlu0 %3106
  %v3108 = vsel %vm1835, %v2978, -inf
  %3109 = vmax.xlane.f32.xlu0 %v3108
  %v3110 = vpop.xlane.xlu0 %3109
  %v3111 = vsel %vm1828, %v3011, -inf
  %3112 = vmax.xlane.f32.xlu0 %v3111
  %v3113 = vpop.xlane.xlu0 %3112
  %v3114 = vsel %vm1828, %v3013, -inf
  %3115 = vmax.xlane.f32.xlu0 %v3114
  %v3116 = vpop.xlane.xlu0 %3115
  %v3117 = vsel %vm1835, %v3016, -inf
  %3118 = vmax.xlane.f32.xlu0 %v3117
  %v3119 = vpop.xlane.xlu0 %3118
  %v3120 = vsel %vm1828, %v3049, -inf
  %3121 = vmax.xlane.f32.xlu0 %v3120
  %v3122 = vpop.xlane.xlu0 %3121
  %v3123 = vsel %vm1828, %v3051, -inf
  %3124 = vmax.xlane.f32.xlu0 %v3123
  %v3125 = vpop.xlane.xlu0 %3124
  %v3126 = vsel %vm1835, %v3054, -inf
  %3127 = vmax.xlane.f32.xlu0 %v3126
  %v3128 = vpop.xlane.xlu0 %3127
  %v3129 = vsub.f32 %v2783, %v3059
  %v3130 = vsub.f32 %v2785, %v3062
  %v3131 = vsub.f32 %v2788, %v3065
  %v3132 = vsub.f32 %v2821, %v3068
  %v3133 = vsub.f32 %v2823, %v3071
  %v3134 = vsub.f32 %v2826, %v3074
  %v3135 = vsub.f32 %v2859, %v3077
  %v3136 = vsub.f32 %v2861, %v3080
  %v3137 = vsub.f32 %v2864, %v3083
  %v3138 = vsub.f32 %v2897, %v3086
  %v3139 = vsub.f32 %v2899, %v3089
  %v3140 = vsub.f32 %v2902, %v3092
  %v3141 = vsub.f32 %v2935, %v3095
  %v3142 = vsub.f32 %v2937, %v3098
  %v3143 = vsub.f32 %v2940, %v3101
  %v3144 = vsub.f32 %v2973, %v3104
  %v3145 = vsub.f32 %v2975, %v3107
  %v3146 = vsub.f32 %v2978, %v3110
  %v3147 = vsub.f32 %v3011, %v3113
  %v3148 = vsub.f32 %v3013, %v3116
  %v3149 = vsub.f32 %v3016, %v3119
  %v3150 = vsub.f32 %v3049, %v3122
  %v3151 = vsub.f32 %v3051, %v3125
  %v3152 = vsub.f32 %v3054, %v3128
  %v3153 = vmul.f32 %v3129, 1.442695
  %v3154 = vpow.pop %v3153
  %v3155 = vmul.f32 %v3130, 1.442695
  %v3156 = vpow.pop %v3155
  %v3157 = vmul.f32 %v3131, 1.442695
  %v3158 = vpow.pop %v3157
  %v3159 = vmul.f32 %v3132, 1.442695
  %v3160 = vpow.pop %v3159
  %v3161 = vmul.f32 %v3133, 1.442695
  %v3162 = vpow.pop %v3161
  %v3163 = vmul.f32 %v3134, 1.442695
  %v3164 = vpow.pop %v3163
  %v3165 = vmul.f32 %v3135, 1.442695
  %v3166 = vpow.pop %v3165
  %v3167 = vmul.f32 %v3136, 1.442695
  %v3168 = vpow.pop %v3167
  %v3169 = vmul.f32 %v3137, 1.442695
  %v3170 = vpow.pop %v3169
  %v3171 = vmul.f32 %v3138, 1.442695
  %v3172 = vpow.pop %v3171
  %v3173 = vmul.f32 %v3139, 1.442695
  %v3174 = vpow.pop %v3173
  %v3175 = vmul.f32 %v3140, 1.442695
  %v3176 = vpow.pop %v3175
  %v3177 = vmul.f32 %v3141, 1.442695
  %v3178 = vpow.pop %v3177
  %v3179 = vmul.f32 %v3142, 1.442695
  %v3180 = vpow.pop %v3179
  %v3181 = vmul.f32 %v3143, 1.442695
  %v3182 = vpow.pop %v3181
  %v3183 = vmul.f32 %v3144, 1.442695
  %v3184 = vpow.pop %v3183
  %v3185 = vmul.f32 %v3145, 1.442695
  %v3186 = vpow.pop %v3185
  %v3187 = vmul.f32 %v3146, 1.442695
  %v3188 = vpow.pop %v3187
  %v3189 = vmul.f32 %v3147, 1.442695
  %v3190 = vpow.pop %v3189
  %v3191 = vmul.f32 %v3148, 1.442695
  %v3192 = vpow.pop %v3191
  %v3193 = vmul.f32 %v3149, 1.442695
  %v3194 = vpow.pop %v3193
  %v3195 = vmul.f32 %v3150, 1.442695
  %v3196 = vpow.pop %v3195
  %v3197 = vmul.f32 %v3151, 1.442695
  %v3198 = vpow.pop %v3197
  %v3199 = vmul.f32 %v3152, 1.442695
  %v3200 = vpow.pop %v3199
  %v3201 = vsel %vm1828, %v3154, 0.0
  %3202 = vadd.xlane.f32.xlu0 %v3201
  %v3203 = vpop.xlane.xlu0 %3202
  %v3204 = vsel %vm1828, %v3156, 0.0
  %3205 = vadd.xlane.f32.xlu0 %v3204
  %v3206 = vpop.xlane.xlu0 %3205
  %v3207 = vsel %vm1835, %v3158, 0.0
  %3208 = vadd.xlane.f32.xlu0 %v3207
  %v3209 = vpop.xlane.xlu0 %3208
  %v3210 = vsel %vm1828, %v3160, 0.0
  %3211 = vadd.xlane.f32.xlu0 %v3210
  %v3212 = vpop.xlane.xlu0 %3211
  %v3213 = vsel %vm1828, %v3162, 0.0
  %3214 = vadd.xlane.f32.xlu0 %v3213
  %v3215 = vpop.xlane.xlu0 %3214
  %v3216 = vsel %vm1835, %v3164, 0.0
  %3217 = vadd.xlane.f32.xlu0 %v3216
  %v3218 = vpop.xlane.xlu0 %3217
  %v3219 = vsel %vm1828, %v3166, 0.0
  %3220 = vadd.xlane.f32.xlu0 %v3219
  %v3221 = vpop.xlane.xlu0 %3220
  %v3222 = vsel %vm1828, %v3168, 0.0
  %3223 = vadd.xlane.f32.xlu0 %v3222
  %v3224 = vpop.xlane.xlu0 %3223
  %v3225 = vsel %vm1835, %v3170, 0.0
  %3226 = vadd.xlane.f32.xlu0 %v3225
  %v3227 = vpop.xlane.xlu0 %3226
  %v3228 = vsel %vm1828, %v3172, 0.0
  %3229 = vadd.xlane.f32.xlu0 %v3228
  %v3230 = vpop.xlane.xlu0 %3229
  %v3231 = vsel %vm1828, %v3174, 0.0
  %3232 = vadd.xlane.f32.xlu0 %v3231
  %v3233 = vpop.xlane.xlu0 %3232
  %v3234 = vsel %vm1835, %v3176, 0.0
  %3235 = vadd.xlane.f32.xlu0 %v3234
  %v3236 = vpop.xlane.xlu0 %3235
  %v3237 = vsel %vm1828, %v3178, 0.0
  %3238 = vadd.xlane.f32.xlu0 %v3237
  %v3239 = vpop.xlane.xlu0 %3238
  %v3240 = vsel %vm1828, %v3180, 0.0
  %3241 = vadd.xlane.f32.xlu0 %v3240
  %v3242 = vpop.xlane.xlu0 %3241
  %v3243 = vsel %vm1835, %v3182, 0.0
  %3244 = vadd.xlane.f32.xlu0 %v3243
  %v3245 = vpop.xlane.xlu0 %3244
  %v3246 = vsel %vm1828, %v3184, 0.0
  %3247 = vadd.xlane.f32.xlu0 %v3246
  %v3248 = vpop.xlane.xlu0 %3247
  %v3249 = vsel %vm1828, %v3186, 0.0
  %3250 = vadd.xlane.f32.xlu0 %v3249
  %v3251 = vpop.xlane.xlu0 %3250
  %v3252 = vsel %vm1835, %v3188, 0.0
  %3253 = vadd.xlane.f32.xlu0 %v3252
  %v3254 = vpop.xlane.xlu0 %3253
  %v3255 = vsel %vm1828, %v3190, 0.0
  %3256 = vadd.xlane.f32.xlu0 %v3255
  %v3257 = vpop.xlane.xlu0 %3256
  %v3258 = vsel %vm1828, %v3192, 0.0
  %3259 = vadd.xlane.f32.xlu0 %v3258
  %v3260 = vpop.xlane.xlu0 %3259
  %v3261 = vsel %vm1835, %v3194, 0.0
  %3262 = vadd.xlane.f32.xlu0 %v3261
  %v3263 = vpop.xlane.xlu0 %3262
  %v3264 = vsel %vm1828, %v3196, 0.0
  %3265 = vadd.xlane.f32.xlu0 %v3264
  %v3266 = vpop.xlane.xlu0 %3265
  %v3267 = vsel %vm1828, %v3198, 0.0
  %3268 = vadd.xlane.f32.xlu0 %v3267
  %v3269 = vpop.xlane.xlu0 %3268
  %v3270 = vsel %vm1835, %v3200, 0.0
  %3271 = vadd.xlane.f32.xlu0 %v3270
  %v3272 = vpop.xlane.xlu0 %3271
  %v3273 = vrcp.pop %v3203
  %v3274 = vmul.f32 %v3203, %v3273
  %v3275 = vsub.f32 1.0, %v3274
  %v3276 = vmul.f32 %v3273, %v3275
  %v3277 = vadd.f32 %v3273, %v3276
  %vm3278 = vweird.f32 %v3203
  %vm3279 = vweird.f32 %v3273
  %vm3280 = vmor %vm3278, %vm3279
  %v3281 = vsel %vm3280, %v3273, %v3277
  %v3282 = vand.u32 2147483647, %v3203
  %vm3283 = vcmp.eq.f32.partialorder %v3282, 8.507059e+37
  %v3284 = vand.u32 %v3203, 2147483648
  %v3285 = vor.u32 1.1754944e-38, %v3284
  %v3286 = vsel %vm3283, %v3285, %v3281
  %v3287 = vmul.f32 %v3154, %v3286
  %v3288 = vrcp.pop %v3206
  %v3289 = vmul.f32 %v3206, %v3288
  %v3290 = vsub.f32 1.0, %v3289
  %v3291 = vmul.f32 %v3288, %v3290
  %v3292 = vadd.f32 %v3288, %v3291
  %vm3293 = vweird.f32 %v3206
  %vm3294 = vweird.f32 %v3288
  %vm3295 = vmor %vm3293, %vm3294
  %v3296 = vsel %vm3295, %v3288, %v3292
  %v3297 = vand.u32 2147483647, %v3206
  %vm3298 = vcmp.eq.f32.partialorder %v3297, 8.507059e+37
  %v3299 = vand.u32 %v3206, 2147483648
  %v3300 = vor.u32 1.1754944e-38, %v3299
  %v3301 = vsel %vm3298, %v3300, %v3296
  %v3302 = vmul.f32 %v3156, %v3301
  %v3303 = vrcp.pop %v3209
  %v3304 = vmul.f32 %v3209, %v3303
  %v3305 = vsub.f32 1.0, %v3304
  %v3306 = vmul.f32 %v3303, %v3305
  %v3307 = vadd.f32 %v3303, %v3306
  %vm3308 = vweird.f32 %v3209
  %vm3309 = vweird.f32 %v3303
  %vm3310 = vmor %vm3308, %vm3309
  %v3311 = vsel %vm3310, %v3303, %v3307
  %v3312 = vand.u32 2147483647, %v3209
  %vm3313 = vcmp.eq.f32.partialorder %v3312, 8.507059e+37
  %v3314 = vand.u32 %v3209, 2147483648
  %v3315 = vor.u32 1.1754944e-38, %v3314
  %v3316 = vsel %vm3313, %v3315, %v3311
  %v3317 = vmul.f32 %v3158, %v3316
  %v3318 = vrcp.pop %v3212
  %v3319 = vmul.f32 %v3212, %v3318
  %v3320 = vsub.f32 1.0, %v3319
  %v3321 = vmul.f32 %v3318, %v3320
  %v3322 = vadd.f32 %v3318, %v3321
  %vm3323 = vweird.f32 %v3212
  %vm3324 = vweird.f32 %v3318
  %vm3325 = vmor %vm3323, %vm3324
  %v3326 = vsel %vm3325, %v3318, %v3322
  %v3327 = vand.u32 2147483647, %v3212
  %vm3328 = vcmp.eq.f32.partialorder %v3327, 8.507059e+37
  %v3329 = vand.u32 %v3212, 2147483648
  %v3330 = vor.u32 1.1754944e-38, %v3329
  %v3331 = vsel %vm3328, %v3330, %v3326
  %v3332 = vmul.f32 %v3160, %v3331
  %v3333 = vrcp.pop %v3215
  %v3334 = vmul.f32 %v3215, %v3333
  %v3335 = vsub.f32 1.0, %v3334
  %v3336 = vmul.f32 %v3333, %v3335
  %v3337 = vadd.f32 %v3333, %v3336
  %vm3338 = vweird.f32 %v3215
  %vm3339 = vweird.f32 %v3333
  %vm3340 = vmor %vm3338, %vm3339
  %v3341 = vsel %vm3340, %v3333, %v3337
  %v3342 = vand.u32 2147483647, %v3215
  %vm3343 = vcmp.eq.f32.partialorder %v3342, 8.507059e+37
  %v3344 = vand.u32 %v3215, 2147483648
  %v3345 = vor.u32 1.1754944e-38, %v3344
  %v3346 = vsel %vm3343, %v3345, %v3341
  %v3347 = vmul.f32 %v3162, %v3346
  %v3348 = vrcp.pop %v3218
  %v3349 = vmul.f32 %v3218, %v3348
  %v3350 = vsub.f32 1.0, %v3349
  %v3351 = vmul.f32 %v3348, %v3350
  %v3352 = vadd.f32 %v3348, %v3351
  %vm3353 = vweird.f32 %v3218
  %vm3354 = vweird.f32 %v3348
  %vm3355 = vmor %vm3353, %vm3354
  %v3356 = vsel %vm3355, %v3348, %v3352
  %v3357 = vand.u32 2147483647, %v3218
  %vm3358 = vcmp.eq.f32.partialorder %v3357, 8.507059e+37
  %v3359 = vand.u32 %v3218, 2147483648
  %v3360 = vor.u32 1.1754944e-38, %v3359
  %v3361 = vsel %vm3358, %v3360, %v3356
  %v3362 = vmul.f32 %v3164, %v3361
  %v3363 = vrcp.pop %v3221
  %v3364 = vmul.f32 %v3221, %v3363
  %v3365 = vsub.f32 1.0, %v3364
  %v3366 = vmul.f32 %v3363, %v3365
  %v3367 = vadd.f32 %v3363, %v3366
  %vm3368 = vweird.f32 %v3221
  %vm3369 = vweird.f32 %v3363
  %vm3370 = vmor %vm3368, %vm3369
  %v3371 = vsel %vm3370, %v3363, %v3367
  %v3372 = vand.u32 2147483647, %v3221
  %vm3373 = vcmp.eq.f32.partialorder %v3372, 8.507059e+37
  %v3374 = vand.u32 %v3221, 2147483648
  %v3375 = vor.u32 1.1754944e-38, %v3374
  %v3376 = vsel %vm3373, %v3375, %v3371
  %v3377 = vmul.f32 %v3166, %v3376
  %v3378 = vrcp.pop %v3224
  %v3379 = vmul.f32 %v3224, %v3378
  %v3380 = vsub.f32 1.0, %v3379
  %v3381 = vmul.f32 %v3378, %v3380
  %v3382 = vadd.f32 %v3378, %v3381
  %vm3383 = vweird.f32 %v3224
  %vm3384 = vweird.f32 %v3378
  %vm3385 = vmor %vm3383, %vm3384
  %v3386 = vsel %vm3385, %v3378, %v3382
  %v3387 = vand.u32 2147483647, %v3224
  %vm3388 = vcmp.eq.f32.partialorder %v3387, 8.507059e+37
  %v3389 = vand.u32 %v3224, 2147483648
  %v3390 = vor.u32 1.1754944e-38, %v3389
  %v3391 = vsel %vm3388, %v3390, %v3386
  %v3392 = vmul.f32 %v3168, %v3391
  %v3393 = vrcp.pop %v3227
  %v3394 = vmul.f32 %v3227, %v3393
  %v3395 = vsub.f32 1.0, %v3394
  %v3396 = vmul.f32 %v3393, %v3395
  %v3397 = vadd.f32 %v3393, %v3396
  %vm3398 = vweird.f32 %v3227
  %vm3399 = vweird.f32 %v3393
  %vm3400 = vmor %vm3398, %vm3399
  %v3401 = vsel %vm3400, %v3393, %v3397
  %v3402 = vand.u32 2147483647, %v3227
  %vm3403 = vcmp.eq.f32.partialorder %v3402, 8.507059e+37
  %v3404 = vand.u32 %v3227, 2147483648
  %v3405 = vor.u32 1.1754944e-38, %v3404
  %v3406 = vsel %vm3403, %v3405, %v3401
  %v3407 = vmul.f32 %v3170, %v3406
  %v3408 = vrcp.pop %v3230
  %v3409 = vmul.f32 %v3230, %v3408
  %v3410 = vsub.f32 1.0, %v3409
  %v3411 = vmul.f32 %v3408, %v3410
  %v3412 = vadd.f32 %v3408, %v3411
  %vm3413 = vweird.f32 %v3230
  %vm3414 = vweird.f32 %v3408
  %vm3415 = vmor %vm3413, %vm3414
  %v3416 = vsel %vm3415, %v3408, %v3412
  %v3417 = vand.u32 2147483647, %v3230
  %vm3418 = vcmp.eq.f32.partialorder %v3417, 8.507059e+37
  %v3419 = vand.u32 %v3230, 2147483648
  %v3420 = vor.u32 1.1754944e-38, %v3419
  %v3421 = vsel %vm3418, %v3420, %v3416
  %v3422 = vmul.f32 %v3172, %v3421
  %v3423 = vrcp.pop %v3233
  %v3424 = vmul.f32 %v3233, %v3423
  %v3425 = vsub.f32 1.0, %v3424
  %v3426 = vmul.f32 %v3423, %v3425
  %v3427 = vadd.f32 %v3423, %v3426
  %vm3428 = vweird.f32 %v3233
  %vm3429 = vweird.f32 %v3423
  %vm3430 = vmor %vm3428, %vm3429
  %v3431 = vsel %vm3430, %v3423, %v3427
  %v3432 = vand.u32 2147483647, %v3233
  %vm3433 = vcmp.eq.f32.partialorder %v3432, 8.507059e+37
  %v3434 = vand.u32 %v3233, 2147483648
  %v3435 = vor.u32 1.1754944e-38, %v3434
  %v3436 = vsel %vm3433, %v3435, %v3431
  %v3437 = vmul.f32 %v3174, %v3436
  %v3438 = vrcp.pop %v3236
  %v3439 = vmul.f32 %v3236, %v3438
  %v3440 = vsub.f32 1.0, %v3439
  %v3441 = vmul.f32 %v3438, %v3440
  %v3442 = vadd.f32 %v3438, %v3441
  %vm3443 = vweird.f32 %v3236
  %vm3444 = vweird.f32 %v3438
  %vm3445 = vmor %vm3443, %vm3444
  %v3446 = vsel %vm3445, %v3438, %v3442
  %v3447 = vand.u32 2147483647, %v3236
  %vm3448 = vcmp.eq.f32.partialorder %v3447, 8.507059e+37
  %v3449 = vand.u32 %v3236, 2147483648
  %v3450 = vor.u32 1.1754944e-38, %v3449
  %v3451 = vsel %vm3448, %v3450, %v3446
  %v3452 = vmul.f32 %v3176, %v3451
  %v3453 = vrcp.pop %v3239
  %v3454 = vmul.f32 %v3239, %v3453
  %v3455 = vsub.f32 1.0, %v3454
  %v3456 = vmul.f32 %v3453, %v3455
  %v3457 = vadd.f32 %v3453, %v3456
  %vm3458 = vweird.f32 %v3239
  %vm3459 = vweird.f32 %v3453
  %vm3460 = vmor %vm3458, %vm3459
  %v3461 = vsel %vm3460, %v3453, %v3457
  %v3462 = vand.u32 2147483647, %v3239
  %vm3463 = vcmp.eq.f32.partialorder %v3462, 8.507059e+37
  %v3464 = vand.u32 %v3239, 2147483648
  %v3465 = vor.u32 1.1754944e-38, %v3464
  %v3466 = vsel %vm3463, %v3465, %v3461
  %v3467 = vmul.f32 %v3178, %v3466
  %v3468 = vrcp.pop %v3242
  %v3469 = vmul.f32 %v3242, %v3468
  %v3470 = vsub.f32 1.0, %v3469
  %v3471 = vmul.f32 %v3468, %v3470
  %v3472 = vadd.f32 %v3468, %v3471
  %vm3473 = vweird.f32 %v3242
  %vm3474 = vweird.f32 %v3468
  %vm3475 = vmor %vm3473, %vm3474
  %v3476 = vsel %vm3475, %v3468, %v3472
  %v3477 = vand.u32 2147483647, %v3242
  %vm3478 = vcmp.eq.f32.partialorder %v3477, 8.507059e+37
  %v3479 = vand.u32 %v3242, 2147483648
  %v3480 = vor.u32 1.1754944e-38, %v3479
  %v3481 = vsel %vm3478, %v3480, %v3476
  %v3482 = vmul.f32 %v3180, %v3481
  %v3483 = vrcp.pop %v3245
  %v3484 = vmul.f32 %v3245, %v3483
  %v3485 = vsub.f32 1.0, %v3484
  %v3486 = vmul.f32 %v3483, %v3485
  %v3487 = vadd.f32 %v3483, %v3486
  %vm3488 = vweird.f32 %v3245
  %vm3489 = vweird.f32 %v3483
  %vm3490 = vmor %vm3488, %vm3489
  %v3491 = vsel %vm3490, %v3483, %v3487
  %v3492 = vand.u32 2147483647, %v3245
  %vm3493 = vcmp.eq.f32.partialorder %v3492, 8.507059e+37
  %v3494 = vand.u32 %v3245, 2147483648
  %v3495 = vor.u32 1.1754944e-38, %v3494
  %v3496 = vsel %vm3493, %v3495, %v3491
  %v3497 = vmul.f32 %v3182, %v3496
  %v3498 = vrcp.pop %v3248
  %v3499 = vmul.f32 %v3248, %v3498
  %v3500 = vsub.f32 1.0, %v3499
  %v3501 = vmul.f32 %v3498, %v3500
  %v3502 = vadd.f32 %v3498, %v3501
  %vm3503 = vweird.f32 %v3248
  %vm3504 = vweird.f32 %v3498
  %vm3505 = vmor %vm3503, %vm3504
  %v3506 = vsel %vm3505, %v3498, %v3502
  %v3507 = vand.u32 2147483647, %v3248
  %vm3508 = vcmp.eq.f32.partialorder %v3507, 8.507059e+37
  %v3509 = vand.u32 %v3248, 2147483648
  %v3510 = vor.u32 1.1754944e-38, %v3509
  %v3511 = vsel %vm3508, %v3510, %v3506
  %v3512 = vmul.f32 %v3184, %v3511
  %v3513 = vrcp.pop %v3251
  %v3514 = vmul.f32 %v3251, %v3513
  %v3515 = vsub.f32 1.0, %v3514
  %v3516 = vmul.f32 %v3513, %v3515
  %v3517 = vadd.f32 %v3513, %v3516
  %vm3518 = vweird.f32 %v3251
  %vm3519 = vweird.f32 %v3513
  %vm3520 = vmor %vm3518, %vm3519
  %v3521 = vsel %vm3520, %v3513, %v3517
  %v3522 = vand.u32 2147483647, %v3251
  %vm3523 = vcmp.eq.f32.partialorder %v3522, 8.507059e+37
  %v3524 = vand.u32 %v3251, 2147483648
  %v3525 = vor.u32 1.1754944e-38, %v3524
  %v3526 = vsel %vm3523, %v3525, %v3521
  %v3527 = vmul.f32 %v3186, %v3526
  %v3528 = vrcp.pop %v3254
  %v3529 = vmul.f32 %v3254, %v3528
  %v3530 = vsub.f32 1.0, %v3529
  %v3531 = vmul.f32 %v3528, %v3530
  %v3532 = vadd.f32 %v3528, %v3531
  %vm3533 = vweird.f32 %v3254
  %vm3534 = vweird.f32 %v3528
  %vm3535 = vmor %vm3533, %vm3534
  %v3536 = vsel %vm3535, %v3528, %v3532
  %v3537 = vand.u32 2147483647, %v3254
  %vm3538 = vcmp.eq.f32.partialorder %v3537, 8.507059e+37
  %v3539 = vand.u32 %v3254, 2147483648
  %v3540 = vor.u32 1.1754944e-38, %v3539
  %v3541 = vsel %vm3538, %v3540, %v3536
  %v3542 = vmul.f32 %v3188, %v3541
  %v3543 = vrcp.pop %v3257
  %v3544 = vmul.f32 %v3257, %v3543
  %v3545 = vsub.f32 1.0, %v3544
  %v3546 = vmul.f32 %v3543, %v3545
  %v3547 = vadd.f32 %v3543, %v3546
  %vm3548 = vweird.f32 %v3257
  %vm3549 = vweird.f32 %v3543
  %vm3550 = vmor %vm3548, %vm3549
  %v3551 = vsel %vm3550, %v3543, %v3547
  %v3552 = vand.u32 2147483647, %v3257
  %vm3553 = vcmp.eq.f32.partialorder %v3552, 8.507059e+37
  %v3554 = vand.u32 %v3257, 2147483648
  %v3555 = vor.u32 1.1754944e-38, %v3554
  %v3556 = vsel %vm3553, %v3555, %v3551
  %v3557 = vmul.f32 %v3190, %v3556
  %v3558 = vrcp.pop %v3260
  %v3559 = vmul.f32 %v3260, %v3558
  %v3560 = vsub.f32 1.0, %v3559
  %v3561 = vmul.f32 %v3558, %v3560
  %v3562 = vadd.f32 %v3558, %v3561
  %vm3563 = vweird.f32 %v3260
  %vm3564 = vweird.f32 %v3558
  %vm3565 = vmor %vm3563, %vm3564
  %v3566 = vsel %vm3565, %v3558, %v3562
  %v3567 = vand.u32 2147483647, %v3260
  %vm3568 = vcmp.eq.f32.partialorder %v3567, 8.507059e+37
  %v3569 = vand.u32 %v3260, 2147483648
  %v3570 = vor.u32 1.1754944e-38, %v3569
  %v3571 = vsel %vm3568, %v3570, %v3566
  %v3572 = vmul.f32 %v3192, %v3571
  %v3573 = vrcp.pop %v3263
  %v3574 = vmul.f32 %v3263, %v3573
  %v3575 = vsub.f32 1.0, %v3574
  %v3576 = vmul.f32 %v3573, %v3575
  %v3577 = vadd.f32 %v3573, %v3576
  %vm3578 = vweird.f32 %v3263
  %vm3579 = vweird.f32 %v3573
  %vm3580 = vmor %vm3578, %vm3579
  %v3581 = vsel %vm3580, %v3573, %v3577
  %v3582 = vand.u32 2147483647, %v3263
  %vm3583 = vcmp.eq.f32.partialorder %v3582, 8.507059e+37
  %v3584 = vand.u32 %v3263, 2147483648
  %v3585 = vor.u32 1.1754944e-38, %v3584
  %v3586 = vsel %vm3583, %v3585, %v3581
  %v3587 = vmul.f32 %v3194, %v3586
  %v3588 = vrcp.pop %v3266
  %v3589 = vmul.f32 %v3266, %v3588
  %v3590 = vsub.f32 1.0, %v3589
  %v3591 = vmul.f32 %v3588, %v3590
  %v3592 = vadd.f32 %v3588, %v3591
  %vm3593 = vweird.f32 %v3266
  %vm3594 = vweird.f32 %v3588
  %vm3595 = vmor %vm3593, %vm3594
  %v3596 = vsel %vm3595, %v3588, %v3592
  %v3597 = vand.u32 2147483647, %v3266
  %vm3598 = vcmp.eq.f32.partialorder %v3597, 8.507059e+37
  %v3599 = vand.u32 %v3266, 2147483648
  %v3600 = vor.u32 1.1754944e-38, %v3599
  %v3601 = vsel %vm3598, %v3600, %v3596
  %v3602 = vmul.f32 %v3196, %v3601
  %v3603 = vrcp.pop %v3269
  %v3604 = vmul.f32 %v3269, %v3603
  %v3605 = vsub.f32 1.0, %v3604
  %v3606 = vmul.f32 %v3603, %v3605
  %v3607 = vadd.f32 %v3603, %v3606
  %vm3608 = vweird.f32 %v3269
  %vm3609 = vweird.f32 %v3603
  %vm3610 = vmor %vm3608, %vm3609
  %v3611 = vsel %vm3610, %v3603, %v3607
  %v3612 = vand.u32 2147483647, %v3269
  %vm3613 = vcmp.eq.f32.partialorder %v3612, 8.507059e+37
  %v3614 = vand.u32 %v3269, 2147483648
  %v3615 = vor.u32 1.1754944e-38, %v3614
  %v3616 = vsel %vm3613, %v3615, %v3611
  %v3617 = vmul.f32 %v3198, %v3616
  %v3618 = vrcp.pop %v3272
  %v3619 = vmul.f32 %v3272, %v3618
  %v3620 = vsub.f32 1.0, %v3619
  %v3621 = vmul.f32 %v3618, %v3620
  %v3622 = vadd.f32 %v3618, %v3621
  %vm3623 = vweird.f32 %v3272
  %vm3624 = vweird.f32 %v3618
  %vm3625 = vmor %vm3623, %vm3624
  %v3626 = vsel %vm3625, %v3618, %v3622
  %v3627 = vand.u32 2147483647, %v3272
  %vm3628 = vcmp.eq.f32.partialorder %v3627, 8.507059e+37
  %v3629 = vand.u32 %v3272, 2147483648
  %v3630 = vor.u32 1.1754944e-38, %v3629
  %v3631 = vsel %vm3628, %v3630, %v3626
  %v3632 = vmul.f32 %v3200, %v3631
  %v3633 = vpack.c.bf16 %v3287, %v3287
  %v3634 = vpack.c.bf16 %v3302, %v3302
  %v3635 = vpack.c.bf16 %v3317, %v3317
  %v3636 = vpack.c.bf16 %v3332, %v3332
  %v3637 = vpack.c.bf16 %v3347, %v3347
  %v3638 = vpack.c.bf16 %v3362, %v3362
  %v3639 = vpack.c.bf16 %v3377, %v3377
  %v3640 = vpack.c.bf16 %v3392, %v3392
  %v3641 = vpack.c.bf16 %v3407, %v3407
  %v3642 = vpack.c.bf16 %v3422, %v3422
  %v3643 = vpack.c.bf16 %v3437, %v3437
  %v3644 = vpack.c.bf16 %v3452, %v3452
  %v3645 = vpack.c.bf16 %v3467, %v3467
  %v3646 = vpack.c.bf16 %v3482, %v3482
  %v3647 = vpack.c.bf16 %v3497, %v3497
  %v3648 = vpack.c.bf16 %v3512, %v3512
  %v3649 = vpack.c.bf16 %v3527, %v3527
  %v3650 = vpack.c.bf16 %v3542, %v3542
  %v3651 = vpack.c.bf16 %v3557, %v3557
  %v3652 = vpack.c.bf16 %v3572, %v3572
  %v3653 = vpack.c.bf16 %v3587, %v3587
  %v3654 = vpack.c.bf16 %v3602, %v3602
  %v3655 = vpack.c.bf16 %v3617, %v3617
  %v3656 = vpack.c.bf16 %v3632, %v3632
  %v3660 = vunpack.c.l.b16 %v3633
  %v3661 = vunpack.c.l.b16 %v3634
  %v3662 = vunpack.c.l.b16 %v3635
  %v3663 = vpack.c.b16 %v3661, %v3660
  %v3664 = vpack.c.b16 %v3662, %v3662
  %3665 = vrot.lane.b32.xlu0 %v986, 56
  %v3666 = vpop.permute.xlu0 %3665
  %3667 = vrot.lane.b32.xlu0 %v987, 56
  %v3668 = vpop.permute.xlu0 %3667
  %v3671 = vsel %vm1828, %v3663, 0
  %v3674 = vsel %vm1828, %v3664, 0
  %v3677 = vand.u32 %v3668, %v2451
  %3679 = vmatpush.bf16.msra.mxu0 0
  %3680 = vmatpush.bf16.msra.mxu0 0
  %3681 = vmatpush.bf16.msra.mxu0 0
  %3682 = vmatpush.bf16.msra.mxu0 0
  %3683 = vmatpush.bf16.msra.mxu0 0
  %3684 = vmatpush.bf16.msra.mxu0 0
  %3685 = vmatpush.bf16.msra.mxu0 %v3677
  %3686 = vmatpush.bf16.msra.mxu0 %v3666
  %3687 = vmatmul.bf16.gmra.mxu0 %v3671
  %v3688 = vpop.f32.mrf.mxu0
  %v3689 = vadd.f32 0.0, %v3688
  %v3690 = vpop.f32.mrf.mxu0
  %v3691 = vadd.f32 0.0, %v3690
  %3692 = vmatmul.bf16.gmra.mxu0 %v3674
  %v3693 = vpop.f32.mrf.mxu0
  %v3694 = vadd.f32 0.0, %v3693
  %v3695 = vpop.f32.mrf.mxu0
  %3696 = vdwg.mxu0
  %v3700 = vunpack.c.l.b16 %v3636
  %v3701 = vunpack.c.l.b16 %v3637
  %v3702 = vunpack.c.l.b16 %v3638
  %v3703 = vpack.c.b16 %v3701, %v3700
  %v3704 = vpack.c.b16 %v3702, %v3702
  %3705 = vrot.lane.b32.xlu0 %v1102, 56
  %v3706 = vpop.permute.xlu0 %3705
  %3707 = vrot.lane.b32.xlu0 %v1103, 56
  %v3708 = vpop.permute.xlu0 %3707
  %v3711 = vsel %vm1828, %v3703, 0
  %v3714 = vsel %vm1828, %v3704, 0
  %v3717 = vand.u32 %v3708, %v2451
  %3719 = vmatpush.bf16.msra.mxu0 0
  %3720 = vmatpush.bf16.msra.mxu0 0
  %3721 = vmatpush.bf16.msra.mxu0 0
  %3722 = vmatpush.bf16.msra.mxu0 0
  %3723 = vmatpush.bf16.msra.mxu0 0
  %3724 = vmatpush.bf16.msra.mxu0 0
  %3725 = vmatpush.bf16.msra.mxu0 %v3717
  %3726 = vmatpush.bf16.msra.mxu0 %v3706
  %3727 = vmatmul.bf16.gmra.mxu0 %v3711
  %v3728 = vpop.f32.mrf.mxu0
  %v3729 = vadd.f32 0.0, %v3728
  %v3730 = vpop.f32.mrf.mxu0
  %v3731 = vadd.f32 0.0, %v3730
  %3732 = vmatmul.bf16.gmra.mxu0 %v3714
  %v3733 = vpop.f32.mrf.mxu0
  %v3734 = vadd.f32 0.0, %v3733
  %v3735 = vpop.f32.mrf.mxu0
  %3736 = vdwg.mxu0
  %v3740 = vunpack.c.l.b16 %v3639
  %v3741 = vunpack.c.l.b16 %v3640
  %v3742 = vunpack.c.l.b16 %v3641
  %v3743 = vpack.c.b16 %v3741, %v3740
  %v3744 = vpack.c.b16 %v3742, %v3742
  %3745 = vrot.lane.b32.xlu0 %v1217, 56
  %v3746 = vpop.permute.xlu0 %3745
  %3747 = vrot.lane.b32.xlu0 %v1218, 56
  %v3748 = vpop.permute.xlu0 %3747
  %v3751 = vsel %vm1828, %v3743, 0
  %v3754 = vsel %vm1828, %v3744, 0
  %v3757 = vand.u32 %v3748, %v2451
  %3759 = vmatpush.bf16.msra.mxu0 0
  %3760 = vmatpush.bf16.msra.mxu0 0
  %3761 = vmatpush.bf16.msra.mxu0 0
  %3762 = vmatpush.bf16.msra.mxu0 0
  %3763 = vmatpush.bf16.msra.mxu0 0
  %3764 = vmatpush.bf16.msra.mxu0 0
  %3765 = vmatpush.bf16.msra.mxu0 %v3757
  %3766 = vmatpush.bf16.msra.mxu0 %v3746
  %3767 = vmatmul.bf16.gmra.mxu0 %v3751
  %v3768 = vpop.f32.mrf.mxu0
  %v3769 = vadd.f32 0.0, %v3768
  %v3770 = vpop.f32.mrf.mxu0
  %v3771 = vadd.f32 0.0, %v3770
  %3772 = vmatmul.bf16.gmra.mxu0 %v3754
  %v3773 = vpop.f32.mrf.mxu0
  %v3774 = vadd.f32 0.0, %v3773
  %v3775 = vpop.f32.mrf.mxu0
  %3776 = vdwg.mxu0
  %v3780 = vunpack.c.l.b16 %v3642
  %v3781 = vunpack.c.l.b16 %v3643
  %v3782 = vunpack.c.l.b16 %v3644
  %v3783 = vpack.c.b16 %v3781, %v3780
  %v3784 = vpack.c.b16 %v3782, %v3782
  %3785 = vrot.lane.b32.xlu0 %v1332, 56
  %v3786 = vpop.permute.xlu0 %3785
  %3787 = vrot.lane.b32.xlu0 %v1333, 56
  %v3788 = vpop.permute.xlu0 %3787
  %v3791 = vsel %vm1828, %v3783, 0
  %v3794 = vsel %vm1828, %v3784, 0
  %v3797 = vand.u32 %v3788, %v2451
  %3799 = vmatpush.bf16.msra.mxu0 0
  %3800 = vmatpush.bf16.msra.mxu0 0
  %3801 = vmatpush.bf16.msra.mxu0 0
  %3802 = vmatpush.bf16.msra.mxu0 0
  %3803 = vmatpush.bf16.msra.mxu0 0
  %3804 = vmatpush.bf16.msra.mxu0 0
  %3805 = vmatpush.bf16.msra.mxu0 %v3797
  %3806 = vmatpush.bf16.msra.mxu0 %v3786
  %3807 = vmatmul.bf16.gmra.mxu0 %v3791
  %v3808 = vpop.f32.mrf.mxu0
  %v3809 = vadd.f32 0.0, %v3808
  %v3810 = vpop.f32.mrf.mxu0
  %v3811 = vadd.f32 0.0, %v3810
  %3812 = vmatmul.bf16.gmra.mxu0 %v3794
  %v3813 = vpop.f32.mrf.mxu0
  %v3814 = vadd.f32 0.0, %v3813
  %v3815 = vpop.f32.mrf.mxu0
  %3816 = vdwg.mxu0
  %v3820 = vunpack.c.l.b16 %v3645
  %v3821 = vunpack.c.l.b16 %v3646
  %v3822 = vunpack.c.l.b16 %v3647
  %v3823 = vpack.c.b16 %v3821, %v3820
  %v3824 = vpack.c.b16 %v3822, %v3822
  %3825 = vrot.lane.b32.xlu0 %v1447, 56
  %v3826 = vpop.permute.xlu0 %3825
  %3827 = vrot.lane.b32.xlu0 %v1448, 56
  %v3828 = vpop.permute.xlu0 %3827
  %v3831 = vsel %vm1828, %v3823, 0
  %v3834 = vsel %vm1828, %v3824, 0
  %v3837 = vand.u32 %v3828, %v2451
  %3839 = vmatpush.bf16.msra.mxu0 0
  %3840 = vmatpush.bf16.msra.mxu0 0
  %3841 = vmatpush.bf16.msra.mxu0 0
  %3842 = vmatpush.bf16.msra.mxu0 0
  %3843 = vmatpush.bf16.msra.mxu0 0
  %3844 = vmatpush.bf16.msra.mxu0 0
  %3845 = vmatpush.bf16.msra.mxu0 %v3837
  %3846 = vmatpush.bf16.msra.mxu0 %v3826
  %3847 = vmatmul.bf16.gmra.mxu0 %v3831
  %v3848 = vpop.f32.mrf.mxu0
  %v3849 = vadd.f32 0.0, %v3848
  %v3850 = vpop.f32.mrf.mxu0
  %v3851 = vadd.f32 0.0, %v3850
  %3852 = vmatmul.bf16.gmra.mxu0 %v3834
  %v3853 = vpop.f32.mrf.mxu0
  %v3854 = vadd.f32 0.0, %v3853
  %v3855 = vpop.f32.mrf.mxu0
  %3856 = vdwg.mxu0
  %v3860 = vunpack.c.l.b16 %v3648
  %v3861 = vunpack.c.l.b16 %v3649
  %v3862 = vunpack.c.l.b16 %v3650
  %v3863 = vpack.c.b16 %v3861, %v3860
  %v3864 = vpack.c.b16 %v3862, %v3862
  %3865 = vrot.lane.b32.xlu0 %v1562, 56
  %v3866 = vpop.permute.xlu0 %3865
  %3867 = vrot.lane.b32.xlu0 %v1563, 56
  %v3868 = vpop.permute.xlu0 %3867
  %v3871 = vsel %vm1828, %v3863, 0
  %v3874 = vsel %vm1828, %v3864, 0
  %v3877 = vand.u32 %v3868, %v2451
  %3879 = vmatpush.bf16.msra.mxu0 0
  %3880 = vmatpush.bf16.msra.mxu0 0
  %3881 = vmatpush.bf16.msra.mxu0 0
  %3882 = vmatpush.bf16.msra.mxu0 0
  %3883 = vmatpush.bf16.msra.mxu0 0
  %3884 = vmatpush.bf16.msra.mxu0 0
  %3885 = vmatpush.bf16.msra.mxu0 %v3877
  %3886 = vmatpush.bf16.msra.mxu0 %v3866
  %3887 = vmatmul.bf16.gmra.mxu0 %v3871
  %v3888 = vpop.f32.mrf.mxu0
  %v3889 = vadd.f32 0.0, %v3888
  %v3890 = vpop.f32.mrf.mxu0
  %v3891 = vadd.f32 0.0, %v3890
  %3892 = vmatmul.bf16.gmra.mxu0 %v3874
  %v3893 = vpop.f32.mrf.mxu0
  %v3894 = vadd.f32 0.0, %v3893
  %v3895 = vpop.f32.mrf.mxu0
  %3896 = vdwg.mxu0
  %v3900 = vunpack.c.l.b16 %v3651
  %v3901 = vunpack.c.l.b16 %v3652
  %v3902 = vunpack.c.l.b16 %v3653
  %v3903 = vpack.c.b16 %v3901, %v3900
  %v3904 = vpack.c.b16 %v3902, %v3902
  %3905 = vrot.lane.b32.xlu0 %v1677, 56
  %v3906 = vpop.permute.xlu0 %3905
  %3907 = vrot.lane.b32.xlu0 %v1678, 56
  %v3908 = vpop.permute.xlu0 %3907
  %v3911 = vsel %vm1828, %v3903, 0
  %v3914 = vsel %vm1828, %v3904, 0
  %v3917 = vand.u32 %v3908, %v2451
  %3919 = vmatpush.bf16.msra.mxu0 0
  %3920 = vmatpush.bf16.msra.mxu0 0
  %3921 = vmatpush.bf16.msra.mxu0 0
  %3922 = vmatpush.bf16.msra.mxu0 0
  %3923 = vmatpush.bf16.msra.mxu0 0
  %3924 = vmatpush.bf16.msra.mxu0 0
  %3925 = vmatpush.bf16.msra.mxu0 %v3917
  %3926 = vmatpush.bf16.msra.mxu0 %v3906
  %3927 = vmatmul.bf16.gmra.mxu0 %v3911
  %v3928 = vpop.f32.mrf.mxu0
  %v3929 = vadd.f32 0.0, %v3928
  %v3930 = vpop.f32.mrf.mxu0
  %v3931 = vadd.f32 0.0, %v3930
  %3932 = vmatmul.bf16.gmra.mxu0 %v3914
  %v3933 = vpop.f32.mrf.mxu0
  %v3934 = vadd.f32 0.0, %v3933
  %v3935 = vpop.f32.mrf.mxu0
  %3936 = vdwg.mxu0
  %v3940 = vunpack.c.l.b16 %v3654
  %v3941 = vunpack.c.l.b16 %v3655
  %v3942 = vunpack.c.l.b16 %v3656
  %v3943 = vpack.c.b16 %v3941, %v3940
  %v3944 = vpack.c.b16 %v3942, %v3942
  %3945 = vrot.lane.b32.xlu0 %v1792, 56
  %v3946 = vpop.permute.xlu0 %3945
  %3947 = vrot.lane.b32.xlu0 %v1793, 56
  %v3948 = vpop.permute.xlu0 %3947
  %v3951 = vsel %vm1828, %v3943, 0
  %v3954 = vsel %vm1828, %v3944, 0
  %v3957 = vand.u32 %v3948, %v2451
  %3959 = vmatpush.bf16.msra.mxu0 0
  %3960 = vmatpush.bf16.msra.mxu0 0
  %3961 = vmatpush.bf16.msra.mxu0 0
  %3962 = vmatpush.bf16.msra.mxu0 0
  %3963 = vmatpush.bf16.msra.mxu0 0
  %3964 = vmatpush.bf16.msra.mxu0 0
  %3965 = vmatpush.bf16.msra.mxu0 %v3957
  %3966 = vmatpush.bf16.msra.mxu0 %v3946
  %3967 = vmatmul.bf16.gmra.mxu0 %v3951
  %v3968 = vpop.f32.mrf.mxu0
  %v3969 = vadd.f32 0.0, %v3968
  %v3970 = vpop.f32.mrf.mxu0
  %v3971 = vadd.f32 0.0, %v3970
  %3972 = vmatmul.bf16.gmra.mxu0 %v3954
  %v3973 = vpop.f32.mrf.mxu0
  %v3974 = vadd.f32 0.0, %v3973
  %v3975 = vpop.f32.mrf.mxu0
  %3976 = vdwg.mxu0
  %3977 = vrot.lane.b32.xlu0 %v986, 112
  %v3978 = vpop.permute.xlu0 %3977
  %3979 = vrot.lane.b32.xlu0 %v987, 112
  %v3980 = vpop.permute.xlu0 %3979
  %3981 = vrot.lane.b32.xlu0 %v986, 80
  %v3982 = vpop.permute.xlu0 %3981
  %3983 = vrot.lane.b32.xlu0 %v987, 80
  %v3984 = vpop.permute.xlu0 %3983
  %v3986 = vsel %vm992, %v3978, 0
  %v3989 = vsel %vm992, %v3980, 0
  %v3992 = vsel %vm992, %v3982, 0
  %v3995 = vsel %vm992, %v3984, 0
  %3997 = vmatpush.bf16.xpose.msra.mxu0 0
  %3998 = vmatpush.bf16.xpose.msra.mxu0 0
  %3999 = vmatpush.bf16.xpose.msra.mxu0 0
  %4000 = vmatpush.bf16.xpose.msra.mxu0 0
  %4001 = vmatpush.bf16.xpose.msra.mxu0 0
  %4002 = vmatpush.bf16.xpose.msra.mxu0 0
  %4003 = vmatpush.bf16.xpose.msra.mxu0 %v3995
  %4004 = vmatpush.bf16.xpose.msra.mxu0 %v3992
  %4005 = vmatmul.bf16.gmra.mxu0 %v3986
  %v4006 = vpop.f32.mrf.mxu0
  %v4007 = vadd.f32 0.0, %v4006
  %v4008 = vpop.f32.mrf.mxu0
  %v4009 = vadd.f32 0.0, %v4008
  %4010 = vmatmul.bf16.gmra.mxu0 %v3989
  %v4011 = vpop.f32.mrf.mxu0
  %v4012 = vadd.f32 0.0, %v4011
  %v4013 = vpop.f32.mrf.mxu0
  %4014 = vdwg.mxu0
  %4015 = vrot.lane.b32.xlu0 %v1102, 112
  %v4016 = vpop.permute.xlu0 %4015
  %4017 = vrot.lane.b32.xlu0 %v1103, 112
  %v4018 = vpop.permute.xlu0 %4017
  %4019 = vrot.lane.b32.xlu0 %v1102, 80
  %v4020 = vpop.permute.xlu0 %4019
  %4021 = vrot.lane.b32.xlu0 %v1103, 80
  %v4022 = vpop.permute.xlu0 %4021
  %v4024 = vsel %vm992, %v4016, 0
  %v4027 = vsel %vm992, %v4018, 0
  %v4030 = vsel %vm992, %v4020, 0
  %v4033 = vsel %vm992, %v4022, 0
  %4035 = vmatpush.bf16.xpose.msra.mxu0 0
  %4036 = vmatpush.bf16.xpose.msra.mxu0 0
  %4037 = vmatpush.bf16.xpose.msra.mxu0 0
  %4038 = vmatpush.bf16.xpose.msra.mxu0 0
  %4039 = vmatpush.bf16.xpose.msra.mxu0 0
  %4040 = vmatpush.bf16.xpose.msra.mxu0 0
  %4041 = vmatpush.bf16.xpose.msra.mxu0 %v4033
  %4042 = vmatpush.bf16.xpose.msra.mxu0 %v4030
  %4043 = vmatmul.bf16.gmra.mxu0 %v4024
  %v4044 = vpop.f32.mrf.mxu0
  %v4045 = vadd.f32 0.0, %v4044
  %v4046 = vpop.f32.mrf.mxu0
  %v4047 = vadd.f32 0.0, %v4046
  %4048 = vmatmul.bf16.gmra.mxu0 %v4027
  %v4049 = vpop.f32.mrf.mxu0
  %v4050 = vadd.f32 0.0, %v4049
  %v4051 = vpop.f32.mrf.mxu0
  %4052 = vdwg.mxu0
  %4053 = vrot.lane.b32.xlu0 %v1217, 112
  %v4054 = vpop.permute.xlu0 %4053
  %4055 = vrot.lane.b32.xlu0 %v1218, 112
  %v4056 = vpop.permute.xlu0 %4055
  %4057 = vrot.lane.b32.xlu0 %v1217, 80
  %v4058 = vpop.permute.xlu0 %4057
  %4059 = vrot.lane.b32.xlu0 %v1218, 80
  %v4060 = vpop.permute.xlu0 %4059
  %v4062 = vsel %vm992, %v4054, 0
  %v4065 = vsel %vm992, %v4056, 0
  %v4068 = vsel %vm992, %v4058, 0
  %v4071 = vsel %vm992, %v4060, 0
  %4073 = vmatpush.bf16.xpose.msra.mxu0 0
  %4074 = vmatpush.bf16.xpose.msra.mxu0 0
  %4075 = vmatpush.bf16.xpose.msra.mxu0 0
  %4076 = vmatpush.bf16.xpose.msra.mxu0 0
  %4077 = vmatpush.bf16.xpose.msra.mxu0 0
  %4078 = vmatpush.bf16.xpose.msra.mxu0 0
  %4079 = vmatpush.bf16.xpose.msra.mxu0 %v4071
  %4080 = vmatpush.bf16.xpose.msra.mxu0 %v4068
  %4081 = vmatmul.bf16.gmra.mxu0 %v4062
  %v4082 = vpop.f32.mrf.mxu0
  %v4083 = vadd.f32 0.0, %v4082
  %v4084 = vpop.f32.mrf.mxu0
  %v4085 = vadd.f32 0.0, %v4084
  %4086 = vmatmul.bf16.gmra.mxu0 %v4065
  %v4087 = vpop.f32.mrf.mxu0
  %v4088 = vadd.f32 0.0, %v4087
  %v4089 = vpop.f32.mrf.mxu0
  %4090 = vdwg.mxu0
  %4091 = vrot.lane.b32.xlu0 %v1332, 112
  %v4092 = vpop.permute.xlu0 %4091
  %4093 = vrot.lane.b32.xlu0 %v1333, 112
  %v4094 = vpop.permute.xlu0 %4093
  %4095 = vrot.lane.b32.xlu0 %v1332, 80
  %v4096 = vpop.permute.xlu0 %4095
  %4097 = vrot.lane.b32.xlu0 %v1333, 80
  %v4098 = vpop.permute.xlu0 %4097
  %v4100 = vsel %vm992, %v4092, 0
  %v4103 = vsel %vm992, %v4094, 0
  %v4106 = vsel %vm992, %v4096, 0
  %v4109 = vsel %vm992, %v4098, 0
  %4111 = vmatpush.bf16.xpose.msra.mxu0 0
  %4112 = vmatpush.bf16.xpose.msra.mxu0 0
  %4113 = vmatpush.bf16.xpose.msra.mxu0 0
  %4114 = vmatpush.bf16.xpose.msra.mxu0 0
  %4115 = vmatpush.bf16.xpose.msra.mxu0 0
  %4116 = vmatpush.bf16.xpose.msra.mxu0 0
  %4117 = vmatpush.bf16.xpose.msra.mxu0 %v4109
  %4118 = vmatpush.bf16.xpose.msra.mxu0 %v4106
  %4119 = vmatmul.bf16.gmra.mxu0 %v4100
  %v4120 = vpop.f32.mrf.mxu0
  %v4121 = vadd.f32 0.0, %v4120
  %v4122 = vpop.f32.mrf.mxu0
  %v4123 = vadd.f32 0.0, %v4122
  %4124 = vmatmul.bf16.gmra.mxu0 %v4103
  %v4125 = vpop.f32.mrf.mxu0
  %v4126 = vadd.f32 0.0, %v4125
  %v4127 = vpop.f32.mrf.mxu0
  %4128 = vdwg.mxu0
  %4129 = vrot.lane.b32.xlu0 %v1447, 112
  %v4130 = vpop.permute.xlu0 %4129
  %4131 = vrot.lane.b32.xlu0 %v1448, 112
  %v4132 = vpop.permute.xlu0 %4131
  %4133 = vrot.lane.b32.xlu0 %v1447, 80
  %v4134 = vpop.permute.xlu0 %4133
  %4135 = vrot.lane.b32.xlu0 %v1448, 80
  %v4136 = vpop.permute.xlu0 %4135
  %v4138 = vsel %vm992, %v4130, 0
  %v4141 = vsel %vm992, %v4132, 0
  %v4144 = vsel %vm992, %v4134, 0
  %v4147 = vsel %vm992, %v4136, 0
  %4149 = vmatpush.bf16.xpose.msra.mxu0 0
  %4150 = vmatpush.bf16.xpose.msra.mxu0 0
  %4151 = vmatpush.bf16.xpose.msra.mxu0 0
  %4152 = vmatpush.bf16.xpose.msra.mxu0 0
  %4153 = vmatpush.bf16.xpose.msra.mxu0 0
  %4154 = vmatpush.bf16.xpose.msra.mxu0 0
  %4155 = vmatpush.bf16.xpose.msra.mxu0 %v4147
  %4156 = vmatpush.bf16.xpose.msra.mxu0 %v4144
  %4157 = vmatmul.bf16.gmra.mxu0 %v4138
  %v4158 = vpop.f32.mrf.mxu0
  %v4159 = vadd.f32 0.0, %v4158
  %v4160 = vpop.f32.mrf.mxu0
  %v4161 = vadd.f32 0.0, %v4160
  %4162 = vmatmul.bf16.gmra.mxu0 %v4141
  %v4163 = vpop.f32.mrf.mxu0
  %v4164 = vadd.f32 0.0, %v4163
  %v4165 = vpop.f32.mrf.mxu0
  %4166 = vdwg.mxu0
  %4167 = vrot.lane.b32.xlu0 %v1562, 112
  %v4168 = vpop.permute.xlu0 %4167
  %4169 = vrot.lane.b32.xlu0 %v1563, 112
  %v4170 = vpop.permute.xlu0 %4169
  %4171 = vrot.lane.b32.xlu0 %v1562, 80
  %v4172 = vpop.permute.xlu0 %4171
  %4173 = vrot.lane.b32.xlu0 %v1563, 80
  %v4174 = vpop.permute.xlu0 %4173
  %v4176 = vsel %vm992, %v4168, 0
  %v4179 = vsel %vm992, %v4170, 0
  %v4182 = vsel %vm992, %v4172, 0
  %v4185 = vsel %vm992, %v4174, 0
  %4187 = vmatpush.bf16.xpose.msra.mxu0 0
  %4188 = vmatpush.bf16.xpose.msra.mxu0 0
  %4189 = vmatpush.bf16.xpose.msra.mxu0 0
  %4190 = vmatpush.bf16.xpose.msra.mxu0 0
  %4191 = vmatpush.bf16.xpose.msra.mxu0 0
  %4192 = vmatpush.bf16.xpose.msra.mxu0 0
  %4193 = vmatpush.bf16.xpose.msra.mxu0 %v4185
  %4194 = vmatpush.bf16.xpose.msra.mxu0 %v4182
  %4195 = vmatmul.bf16.gmra.mxu0 %v4176
  %v4196 = vpop.f32.mrf.mxu0
  %v4197 = vadd.f32 0.0, %v4196
  %v4198 = vpop.f32.mrf.mxu0
  %v4199 = vadd.f32 0.0, %v4198
  %4200 = vmatmul.bf16.gmra.mxu0 %v4179
  %v4201 = vpop.f32.mrf.mxu0
  %v4202 = vadd.f32 0.0, %v4201
  %v4203 = vpop.f32.mrf.mxu0
  %4204 = vdwg.mxu0
  %4205 = vrot.lane.b32.xlu0 %v1677, 112
  %v4206 = vpop.permute.xlu0 %4205
  %4207 = vrot.lane.b32.xlu0 %v1678, 112
  %v4208 = vpop.permute.xlu0 %4207
  %4209 = vrot.lane.b32.xlu0 %v1677, 80
  %v4210 = vpop.permute.xlu0 %4209
  %4211 = vrot.lane.b32.xlu0 %v1678, 80
  %v4212 = vpop.permute.xlu0 %4211
  %v4214 = vsel %vm992, %v4206, 0
  %v4217 = vsel %vm992, %v4208, 0
  %v4220 = vsel %vm992, %v4210, 0
  %v4223 = vsel %vm992, %v4212, 0
  %4225 = vmatpush.bf16.xpose.msra.mxu0 0
  %4226 = vmatpush.bf16.xpose.msra.mxu0 0
  %4227 = vmatpush.bf16.xpose.msra.mxu0 0
  %4228 = vmatpush.bf16.xpose.msra.mxu0 0
  %4229 = vmatpush.bf16.xpose.msra.mxu0 0
  %4230 = vmatpush.bf16.xpose.msra.mxu0 0
  %4231 = vmatpush.bf16.xpose.msra.mxu0 %v4223
  %4232 = vmatpush.bf16.xpose.msra.mxu0 %v4220
  %4233 = vmatmul.bf16.gmra.mxu0 %v4214
  %v4234 = vpop.f32.mrf.mxu0
  %v4235 = vadd.f32 0.0, %v4234
  %v4236 = vpop.f32.mrf.mxu0
  %v4237 = vadd.f32 0.0, %v4236
  %4238 = vmatmul.bf16.gmra.mxu0 %v4217
  %v4239 = vpop.f32.mrf.mxu0
  %v4240 = vadd.f32 0.0, %v4239
  %v4241 = vpop.f32.mrf.mxu0
  %4242 = vdwg.mxu0
  %4243 = vrot.lane.b32.xlu0 %v1792, 112
  %v4244 = vpop.permute.xlu0 %4243
  %4245 = vrot.lane.b32.xlu0 %v1793, 112
  %v4246 = vpop.permute.xlu0 %4245
  %4247 = vrot.lane.b32.xlu0 %v1792, 80
  %v4248 = vpop.permute.xlu0 %4247
  %4249 = vrot.lane.b32.xlu0 %v1793, 80
  %v4250 = vpop.permute.xlu0 %4249
  %v4252 = vsel %vm992, %v4244, 0
  %v4255 = vsel %vm992, %v4246, 0
  %v4258 = vsel %vm992, %v4248, 0
  %v4261 = vsel %vm992, %v4250, 0
  %4263 = vmatpush.bf16.xpose.msra.mxu0 0
  %4264 = vmatpush.bf16.xpose.msra.mxu0 0
  %4265 = vmatpush.bf16.xpose.msra.mxu0 0
  %4266 = vmatpush.bf16.xpose.msra.mxu0 0
  %4267 = vmatpush.bf16.xpose.msra.mxu0 0
  %4268 = vmatpush.bf16.xpose.msra.mxu0 0
  %4269 = vmatpush.bf16.xpose.msra.mxu0 %v4261
  %4270 = vmatpush.bf16.xpose.msra.mxu0 %v4258
  %4271 = vmatmul.bf16.gmra.mxu0 %v4252
  %v4272 = vpop.f32.mrf.mxu0
  %v4273 = vadd.f32 0.0, %v4272
  %v4274 = vpop.f32.mrf.mxu0
  %v4275 = vadd.f32 0.0, %v4274
  %4276 = vmatmul.bf16.gmra.mxu0 %v4255
  %v4277 = vpop.f32.mrf.mxu0
  %v4278 = vadd.f32 0.0, %v4277
  %v4279 = vpop.f32.mrf.mxu0
  %4280 = vdwg.mxu0
  %v4281 = vsel %vm1828, %v4007, -inf
  %4282 = vmax.xlane.f32.xlu0 %v4281
  %v4283 = vpop.xlane.xlu0 %4282
  %v4284 = vsel %vm1828, %v4009, -inf
  %4285 = vmax.xlane.f32.xlu0 %v4284
  %v4286 = vpop.xlane.xlu0 %4285
  %v4287 = vsel %vm1835, %v4012, -inf
  %4288 = vmax.xlane.f32.xlu0 %v4287
  %v4289 = vpop.xlane.xlu0 %4288
  %v4290 = vsel %vm1828, %v4045, -inf
  %4291 = vmax.xlane.f32.xlu0 %v4290
  %v4292 = vpop.xlane.xlu0 %4291
  %v4293 = vsel %vm1828, %v4047, -inf
  %4294 = vmax.xlane.f32.xlu0 %v4293
  %v4295 = vpop.xlane.xlu0 %4294
  %v4296 = vsel %vm1835, %v4050, -inf
  %4297 = vmax.xlane.f32.xlu0 %v4296
  %v4298 = vpop.xlane.xlu0 %4297
  %v4299 = vsel %vm1828, %v4083, -inf
  %4300 = vmax.xlane.f32.xlu0 %v4299
  %v4301 = vpop.xlane.xlu0 %4300
  %v4302 = vsel %vm1828, %v4085, -inf
  %4303 = vmax.xlane.f32.xlu0 %v4302
  %v4304 = vpop.xlane.xlu0 %4303
  %v4305 = vsel %vm1835, %v4088, -inf
  %4306 = vmax.xlane.f32.xlu0 %v4305
  %v4307 = vpop.xlane.xlu0 %4306
  %v4308 = vsel %vm1828, %v4121, -inf
  %4309 = vmax.xlane.f32.xlu0 %v4308
  %v4310 = vpop.xlane.xlu0 %4309
  %v4311 = vsel %vm1828, %v4123, -inf
  %4312 = vmax.xlane.f32.xlu0 %v4311
  %v4313 = vpop.xlane.xlu0 %4312
  %v4314 = vsel %vm1835, %v4126, -inf
  %4315 = vmax.xlane.f32.xlu0 %v4314
  %v4316 = vpop.xlane.xlu0 %4315
  %v4317 = vsel %vm1828, %v4159, -inf
  %4318 = vmax.xlane.f32.xlu0 %v4317
  %v4319 = vpop.xlane.xlu0 %4318
  %v4320 = vsel %vm1828, %v4161, -inf
  %4321 = vmax.xlane.f32.xlu0 %v4320
  %v4322 = vpop.xlane.xlu0 %4321
  %v4323 = vsel %vm1835, %v4164, -inf
  %4324 = vmax.xlane.f32.xlu0 %v4323
  %v4325 = vpop.xlane.xlu0 %4324
  %v4326 = vsel %vm1828, %v4197, -inf
  %4327 = vmax.xlane.f32.xlu0 %v4326
  %v4328 = vpop.xlane.xlu0 %4327
  %v4329 = vsel %vm1828, %v4199, -inf
  %4330 = vmax.xlane.f32.xlu0 %v4329
  %v4331 = vpop.xlane.xlu0 %4330
  %v4332 = vsel %vm1835, %v4202, -inf
  %4333 = vmax.xlane.f32.xlu0 %v4332
  %v4334 = vpop.xlane.xlu0 %4333
  %v4335 = vsel %vm1828, %v4235, -inf
  %4336 = vmax.xlane.f32.xlu0 %v4335
  %v4337 = vpop.xlane.xlu0 %4336
  %v4338 = vsel %vm1828, %v4237, -inf
  %4339 = vmax.xlane.f32.xlu0 %v4338
  %v4340 = vpop.xlane.xlu0 %4339
  %v4341 = vsel %vm1835, %v4240, -inf
  %4342 = vmax.xlane.f32.xlu0 %v4341
  %v4343 = vpop.xlane.xlu0 %4342
  %v4344 = vsel %vm1828, %v4273, -inf
  %4345 = vmax.xlane.f32.xlu0 %v4344
  %v4346 = vpop.xlane.xlu0 %4345
  %v4347 = vsel %vm1828, %v4275, -inf
  %4348 = vmax.xlane.f32.xlu0 %v4347
  %v4349 = vpop.xlane.xlu0 %4348
  %v4350 = vsel %vm1835, %v4278, -inf
  %4351 = vmax.xlane.f32.xlu0 %v4350
  %v4352 = vpop.xlane.xlu0 %4351
  %v4353 = vsub.f32 %v4007, %v4283
  %v4354 = vsub.f32 %v4009, %v4286
  %v4355 = vsub.f32 %v4012, %v4289
  %v4356 = vsub.f32 %v4045, %v4292
  %v4357 = vsub.f32 %v4047, %v4295
  %v4358 = vsub.f32 %v4050, %v4298
  %v4359 = vsub.f32 %v4083, %v4301
  %v4360 = vsub.f32 %v4085, %v4304
  %v4361 = vsub.f32 %v4088, %v4307
  %v4362 = vsub.f32 %v4121, %v4310
  %v4363 = vsub.f32 %v4123, %v4313
  %v4364 = vsub.f32 %v4126, %v4316
  %v4365 = vsub.f32 %v4159, %v4319
  %v4366 = vsub.f32 %v4161, %v4322
  %v4367 = vsub.f32 %v4164, %v4325
  %v4368 = vsub.f32 %v4197, %v4328
  %v4369 = vsub.f32 %v4199, %v4331
  %v4370 = vsub.f32 %v4202, %v4334
  %v4371 = vsub.f32 %v4235, %v4337
  %v4372 = vsub.f32 %v4237, %v4340
  %v4373 = vsub.f32 %v4240, %v4343
  %v4374 = vsub.f32 %v4273, %v4346
  %v4375 = vsub.f32 %v4275, %v4349
  %v4376 = vsub.f32 %v4278, %v4352
  %v4377 = vmul.f32 %v4353, 1.442695
  %v4378 = vpow.pop %v4377
  %v4379 = vmul.f32 %v4354, 1.442695
  %v4380 = vpow.pop %v4379
  %v4381 = vmul.f32 %v4355, 1.442695
  %v4382 = vpow.pop %v4381
  %v4383 = vmul.f32 %v4356, 1.442695
  %v4384 = vpow.pop %v4383
  %v4385 = vmul.f32 %v4357, 1.442695
  %v4386 = vpow.pop %v4385
  %v4387 = vmul.f32 %v4358, 1.442695
  %v4388 = vpow.pop %v4387
  %v4389 = vmul.f32 %v4359, 1.442695
  %v4390 = vpow.pop %v4389
  %v4391 = vmul.f32 %v4360, 1.442695
  %v4392 = vpow.pop %v4391
  %v4393 = vmul.f32 %v4361, 1.442695
  %v4394 = vpow.pop %v4393
  %v4395 = vmul.f32 %v4362, 1.442695
  %v4396 = vpow.pop %v4395
  %v4397 = vmul.f32 %v4363, 1.442695
  %v4398 = vpow.pop %v4397
  %v4399 = vmul.f32 %v4364, 1.442695
  %v4400 = vpow.pop %v4399
  %v4401 = vmul.f32 %v4365, 1.442695
  %v4402 = vpow.pop %v4401
  %v4403 = vmul.f32 %v4366, 1.442695
  %v4404 = vpow.pop %v4403
  %v4405 = vmul.f32 %v4367, 1.442695
  %v4406 = vpow.pop %v4405
  %v4407 = vmul.f32 %v4368, 1.442695
  %v4408 = vpow.pop %v4407
  %v4409 = vmul.f32 %v4369, 1.442695
  %v4410 = vpow.pop %v4409
  %v4411 = vmul.f32 %v4370, 1.442695
  %v4412 = vpow.pop %v4411
  %v4413 = vmul.f32 %v4371, 1.442695
  %v4414 = vpow.pop %v4413
  %v4415 = vmul.f32 %v4372, 1.442695
  %v4416 = vpow.pop %v4415
  %v4417 = vmul.f32 %v4373, 1.442695
  %v4418 = vpow.pop %v4417
  %v4419 = vmul.f32 %v4374, 1.442695
  %v4420 = vpow.pop %v4419
  %v4421 = vmul.f32 %v4375, 1.442695
  %v4422 = vpow.pop %v4421
  %v4423 = vmul.f32 %v4376, 1.442695
  %v4424 = vpow.pop %v4423
  %v4425 = vsel %vm1828, %v4378, 0.0
  %4426 = vadd.xlane.f32.xlu0 %v4425
  %v4427 = vpop.xlane.xlu0 %4426
  %v4428 = vsel %vm1828, %v4380, 0.0
  %4429 = vadd.xlane.f32.xlu0 %v4428
  %v4430 = vpop.xlane.xlu0 %4429
  %v4431 = vsel %vm1835, %v4382, 0.0
  %4432 = vadd.xlane.f32.xlu0 %v4431
  %v4433 = vpop.xlane.xlu0 %4432
  %v4434 = vsel %vm1828, %v4384, 0.0
  %4435 = vadd.xlane.f32.xlu0 %v4434
  %v4436 = vpop.xlane.xlu0 %4435
  %v4437 = vsel %vm1828, %v4386, 0.0
  %4438 = vadd.xlane.f32.xlu0 %v4437
  %v4439 = vpop.xlane.xlu0 %4438
  %v4440 = vsel %vm1835, %v4388, 0.0
  %4441 = vadd.xlane.f32.xlu0 %v4440
  %v4442 = vpop.xlane.xlu0 %4441
  %v4443 = vsel %vm1828, %v4390, 0.0
  %4444 = vadd.xlane.f32.xlu0 %v4443
  %v4445 = vpop.xlane.xlu0 %4444
  %v4446 = vsel %vm1828, %v4392, 0.0
  %4447 = vadd.xlane.f32.xlu0 %v4446
  %v4448 = vpop.xlane.xlu0 %4447
  %v4449 = vsel %vm1835, %v4394, 0.0
  %4450 = vadd.xlane.f32.xlu0 %v4449
  %v4451 = vpop.xlane.xlu0 %4450
  %v4452 = vsel %vm1828, %v4396, 0.0
  %4453 = vadd.xlane.f32.xlu0 %v4452
  %v4454 = vpop.xlane.xlu0 %4453
  %v4455 = vsel %vm1828, %v4398, 0.0
  %4456 = vadd.xlane.f32.xlu0 %v4455
  %v4457 = vpop.xlane.xlu0 %4456
  %v4458 = vsel %vm1835, %v4400, 0.0
  %4459 = vadd.xlane.f32.xlu0 %v4458
  %v4460 = vpop.xlane.xlu0 %4459
  %v4461 = vsel %vm1828, %v4402, 0.0
  %4462 = vadd.xlane.f32.xlu0 %v4461
  %v4463 = vpop.xlane.xlu0 %4462
  %v4464 = vsel %vm1828, %v4404, 0.0
  %4465 = vadd.xlane.f32.xlu0 %v4464
  %v4466 = vpop.xlane.xlu0 %4465
  %v4467 = vsel %vm1835, %v4406, 0.0
  %4468 = vadd.xlane.f32.xlu0 %v4467
  %v4469 = vpop.xlane.xlu0 %4468
  %v4470 = vsel %vm1828, %v4408, 0.0
  %4471 = vadd.xlane.f32.xlu0 %v4470
  %v4472 = vpop.xlane.xlu0 %4471
  %v4473 = vsel %vm1828, %v4410, 0.0
  %4474 = vadd.xlane.f32.xlu0 %v4473
  %v4475 = vpop.xlane.xlu0 %4474
  %v4476 = vsel %vm1835, %v4412, 0.0
  %4477 = vadd.xlane.f32.xlu0 %v4476
  %v4478 = vpop.xlane.xlu0 %4477
  %v4479 = vsel %vm1828, %v4414, 0.0
  %4480 = vadd.xlane.f32.xlu0 %v4479
  %v4481 = vpop.xlane.xlu0 %4480
  %v4482 = vsel %vm1828, %v4416, 0.0
  %4483 = vadd.xlane.f32.xlu0 %v4482
  %v4484 = vpop.xlane.xlu0 %4483
  %v4485 = vsel %vm1835, %v4418, 0.0
  %4486 = vadd.xlane.f32.xlu0 %v4485
  %v4487 = vpop.xlane.xlu0 %4486
  %v4488 = vsel %vm1828, %v4420, 0.0
  %4489 = vadd.xlane.f32.xlu0 %v4488
  %v4490 = vpop.xlane.xlu0 %4489
  %v4491 = vsel %vm1828, %v4422, 0.0
  %4492 = vadd.xlane.f32.xlu0 %v4491
  %v4493 = vpop.xlane.xlu0 %4492
  %v4494 = vsel %vm1835, %v4424, 0.0
  %4495 = vadd.xlane.f32.xlu0 %v4494
  %v4496 = vpop.xlane.xlu0 %4495
  %v4497 = vrcp.pop %v4427
  %v4498 = vmul.f32 %v4427, %v4497
  %v4499 = vsub.f32 1.0, %v4498
  %v4500 = vmul.f32 %v4497, %v4499
  %v4501 = vadd.f32 %v4497, %v4500
  %vm4502 = vweird.f32 %v4427
  %vm4503 = vweird.f32 %v4497
  %vm4504 = vmor %vm4502, %vm4503
  %v4505 = vsel %vm4504, %v4497, %v4501
  %v4506 = vand.u32 2147483647, %v4427
  %vm4507 = vcmp.eq.f32.partialorder %v4506, 8.507059e+37
  %v4508 = vand.u32 %v4427, 2147483648
  %v4509 = vor.u32 1.1754944e-38, %v4508
  %v4510 = vsel %vm4507, %v4509, %v4505
  %v4511 = vmul.f32 %v4378, %v4510
  %v4512 = vrcp.pop %v4430
  %v4513 = vmul.f32 %v4430, %v4512
  %v4514 = vsub.f32 1.0, %v4513
  %v4515 = vmul.f32 %v4512, %v4514
  %v4516 = vadd.f32 %v4512, %v4515
  %vm4517 = vweird.f32 %v4430
  %vm4518 = vweird.f32 %v4512
  %vm4519 = vmor %vm4517, %vm4518
  %v4520 = vsel %vm4519, %v4512, %v4516
  %v4521 = vand.u32 2147483647, %v4430
  %vm4522 = vcmp.eq.f32.partialorder %v4521, 8.507059e+37
  %v4523 = vand.u32 %v4430, 2147483648
  %v4524 = vor.u32 1.1754944e-38, %v4523
  %v4525 = vsel %vm4522, %v4524, %v4520
  %v4526 = vmul.f32 %v4380, %v4525
  %v4527 = vrcp.pop %v4433
  %v4528 = vmul.f32 %v4433, %v4527
  %v4529 = vsub.f32 1.0, %v4528
  %v4530 = vmul.f32 %v4527, %v4529
  %v4531 = vadd.f32 %v4527, %v4530
  %vm4532 = vweird.f32 %v4433
  %vm4533 = vweird.f32 %v4527
  %vm4534 = vmor %vm4532, %vm4533
  %v4535 = vsel %vm4534, %v4527, %v4531
  %v4536 = vand.u32 2147483647, %v4433
  %vm4537 = vcmp.eq.f32.partialorder %v4536, 8.507059e+37
  %v4538 = vand.u32 %v4433, 2147483648
  %v4539 = vor.u32 1.1754944e-38, %v4538
  %v4540 = vsel %vm4537, %v4539, %v4535
  %v4541 = vmul.f32 %v4382, %v4540
  %v4542 = vrcp.pop %v4436
  %v4543 = vmul.f32 %v4436, %v4542
  %v4544 = vsub.f32 1.0, %v4543
  %v4545 = vmul.f32 %v4542, %v4544
  %v4546 = vadd.f32 %v4542, %v4545
  %vm4547 = vweird.f32 %v4436
  %vm4548 = vweird.f32 %v4542
  %vm4549 = vmor %vm4547, %vm4548
  %v4550 = vsel %vm4549, %v4542, %v4546
  %v4551 = vand.u32 2147483647, %v4436
  %vm4552 = vcmp.eq.f32.partialorder %v4551, 8.507059e+37
  %v4553 = vand.u32 %v4436, 2147483648
  %v4554 = vor.u32 1.1754944e-38, %v4553
  %v4555 = vsel %vm4552, %v4554, %v4550
  %v4556 = vmul.f32 %v4384, %v4555
  %v4557 = vrcp.pop %v4439
  %v4558 = vmul.f32 %v4439, %v4557
  %v4559 = vsub.f32 1.0, %v4558
  %v4560 = vmul.f32 %v4557, %v4559
  %v4561 = vadd.f32 %v4557, %v4560
  %vm4562 = vweird.f32 %v4439
  %vm4563 = vweird.f32 %v4557
  %vm4564 = vmor %vm4562, %vm4563
  %v4565 = vsel %vm4564, %v4557, %v4561
  %v4566 = vand.u32 2147483647, %v4439
  %vm4567 = vcmp.eq.f32.partialorder %v4566, 8.507059e+37
  %v4568 = vand.u32 %v4439, 2147483648
  %v4569 = vor.u32 1.1754944e-38, %v4568
  %v4570 = vsel %vm4567, %v4569, %v4565
  %v4571 = vmul.f32 %v4386, %v4570
  %v4572 = vrcp.pop %v4442
  %v4573 = vmul.f32 %v4442, %v4572
  %v4574 = vsub.f32 1.0, %v4573
  %v4575 = vmul.f32 %v4572, %v4574
  %v4576 = vadd.f32 %v4572, %v4575
  %vm4577 = vweird.f32 %v4442
  %vm4578 = vweird.f32 %v4572
  %vm4579 = vmor %vm4577, %vm4578
  %v4580 = vsel %vm4579, %v4572, %v4576
  %v4581 = vand.u32 2147483647, %v4442
  %vm4582 = vcmp.eq.f32.partialorder %v4581, 8.507059e+37
  %v4583 = vand.u32 %v4442, 2147483648
  %v4584 = vor.u32 1.1754944e-38, %v4583
  %v4585 = vsel %vm4582, %v4584, %v4580
  %v4586 = vmul.f32 %v4388, %v4585
  %v4587 = vrcp.pop %v4445
  %v4588 = vmul.f32 %v4445, %v4587
  %v4589 = vsub.f32 1.0, %v4588
  %v4590 = vmul.f32 %v4587, %v4589
  %v4591 = vadd.f32 %v4587, %v4590
  %vm4592 = vweird.f32 %v4445
  %vm4593 = vweird.f32 %v4587
  %vm4594 = vmor %vm4592, %vm4593
  %v4595 = vsel %vm4594, %v4587, %v4591
  %v4596 = vand.u32 2147483647, %v4445
  %vm4597 = vcmp.eq.f32.partialorder %v4596, 8.507059e+37
  %v4598 = vand.u32 %v4445, 2147483648
  %v4599 = vor.u32 1.1754944e-38, %v4598
  %v4600 = vsel %vm4597, %v4599, %v4595
  %v4601 = vmul.f32 %v4390, %v4600
  %v4602 = vrcp.pop %v4448
  %v4603 = vmul.f32 %v4448, %v4602
  %v4604 = vsub.f32 1.0, %v4603
  %v4605 = vmul.f32 %v4602, %v4604
  %v4606 = vadd.f32 %v4602, %v4605
  %vm4607 = vweird.f32 %v4448
  %vm4608 = vweird.f32 %v4602
  %vm4609 = vmor %vm4607, %vm4608
  %v4610 = vsel %vm4609, %v4602, %v4606
  %v4611 = vand.u32 2147483647, %v4448
  %vm4612 = vcmp.eq.f32.partialorder %v4611, 8.507059e+37
  %v4613 = vand.u32 %v4448, 2147483648
  %v4614 = vor.u32 1.1754944e-38, %v4613
  %v4615 = vsel %vm4612, %v4614, %v4610
  %v4616 = vmul.f32 %v4392, %v4615
  %v4617 = vrcp.pop %v4451
  %v4618 = vmul.f32 %v4451, %v4617
  %v4619 = vsub.f32 1.0, %v4618
  %v4620 = vmul.f32 %v4617, %v4619
  %v4621 = vadd.f32 %v4617, %v4620
  %vm4622 = vweird.f32 %v4451
  %vm4623 = vweird.f32 %v4617
  %vm4624 = vmor %vm4622, %vm4623
  %v4625 = vsel %vm4624, %v4617, %v4621
  %v4626 = vand.u32 2147483647, %v4451
  %vm4627 = vcmp.eq.f32.partialorder %v4626, 8.507059e+37
  %v4628 = vand.u32 %v4451, 2147483648
  %v4629 = vor.u32 1.1754944e-38, %v4628
  %v4630 = vsel %vm4627, %v4629, %v4625
  %v4631 = vmul.f32 %v4394, %v4630
  %v4632 = vrcp.pop %v4454
  %v4633 = vmul.f32 %v4454, %v4632
  %v4634 = vsub.f32 1.0, %v4633
  %v4635 = vmul.f32 %v4632, %v4634
  %v4636 = vadd.f32 %v4632, %v4635
  %vm4637 = vweird.f32 %v4454
  %vm4638 = vweird.f32 %v4632
  %vm4639 = vmor %vm4637, %vm4638
  %v4640 = vsel %vm4639, %v4632, %v4636
  %v4641 = vand.u32 2147483647, %v4454
  %vm4642 = vcmp.eq.f32.partialorder %v4641, 8.507059e+37
  %v4643 = vand.u32 %v4454, 2147483648
  %v4644 = vor.u32 1.1754944e-38, %v4643
  %v4645 = vsel %vm4642, %v4644, %v4640
  %v4646 = vmul.f32 %v4396, %v4645
  %v4647 = vrcp.pop %v4457
  %v4648 = vmul.f32 %v4457, %v4647
  %v4649 = vsub.f32 1.0, %v4648
  %v4650 = vmul.f32 %v4647, %v4649
  %v4651 = vadd.f32 %v4647, %v4650
  %vm4652 = vweird.f32 %v4457
  %vm4653 = vweird.f32 %v4647
  %vm4654 = vmor %vm4652, %vm4653
  %v4655 = vsel %vm4654, %v4647, %v4651
  %v4656 = vand.u32 2147483647, %v4457
  %vm4657 = vcmp.eq.f32.partialorder %v4656, 8.507059e+37
  %v4658 = vand.u32 %v4457, 2147483648
  %v4659 = vor.u32 1.1754944e-38, %v4658
  %v4660 = vsel %vm4657, %v4659, %v4655
  %v4661 = vmul.f32 %v4398, %v4660
  %v4662 = vrcp.pop %v4460
  %v4663 = vmul.f32 %v4460, %v4662
  %v4664 = vsub.f32 1.0, %v4663
  %v4665 = vmul.f32 %v4662, %v4664
  %v4666 = vadd.f32 %v4662, %v4665
  %vm4667 = vweird.f32 %v4460
  %vm4668 = vweird.f32 %v4662
  %vm4669 = vmor %vm4667, %vm4668
  %v4670 = vsel %vm4669, %v4662, %v4666
  %v4671 = vand.u32 2147483647, %v4460
  %vm4672 = vcmp.eq.f32.partialorder %v4671, 8.507059e+37
  %v4673 = vand.u32 %v4460, 2147483648
  %v4674 = vor.u32 1.1754944e-38, %v4673
  %v4675 = vsel %vm4672, %v4674, %v4670
  %v4676 = vmul.f32 %v4400, %v4675
  %v4677 = vrcp.pop %v4463
  %v4678 = vmul.f32 %v4463, %v4677
  %v4679 = vsub.f32 1.0, %v4678
  %v4680 = vmul.f32 %v4677, %v4679
  %v4681 = vadd.f32 %v4677, %v4680
  %vm4682 = vweird.f32 %v4463
  %vm4683 = vweird.f32 %v4677
  %vm4684 = vmor %vm4682, %vm4683
  %v4685 = vsel %vm4684, %v4677, %v4681
  %v4686 = vand.u32 2147483647, %v4463
  %vm4687 = vcmp.eq.f32.partialorder %v4686, 8.507059e+37
  %v4688 = vand.u32 %v4463, 2147483648
  %v4689 = vor.u32 1.1754944e-38, %v4688
  %v4690 = vsel %vm4687, %v4689, %v4685
  %v4691 = vmul.f32 %v4402, %v4690
  %v4692 = vrcp.pop %v4466
  %v4693 = vmul.f32 %v4466, %v4692
  %v4694 = vsub.f32 1.0, %v4693
  %v4695 = vmul.f32 %v4692, %v4694
  %v4696 = vadd.f32 %v4692, %v4695
  %vm4697 = vweird.f32 %v4466
  %vm4698 = vweird.f32 %v4692
  %vm4699 = vmor %vm4697, %vm4698
  %v4700 = vsel %vm4699, %v4692, %v4696
  %v4701 = vand.u32 2147483647, %v4466
  %vm4702 = vcmp.eq.f32.partialorder %v4701, 8.507059e+37
  %v4703 = vand.u32 %v4466, 2147483648
  %v4704 = vor.u32 1.1754944e-38, %v4703
  %v4705 = vsel %vm4702, %v4704, %v4700
  %v4706 = vmul.f32 %v4404, %v4705
  %v4707 = vrcp.pop %v4469
  %v4708 = vmul.f32 %v4469, %v4707
  %v4709 = vsub.f32 1.0, %v4708
  %v4710 = vmul.f32 %v4707, %v4709
  %v4711 = vadd.f32 %v4707, %v4710
  %vm4712 = vweird.f32 %v4469
  %vm4713 = vweird.f32 %v4707
  %vm4714 = vmor %vm4712, %vm4713
  %v4715 = vsel %vm4714, %v4707, %v4711
  %v4716 = vand.u32 2147483647, %v4469
  %vm4717 = vcmp.eq.f32.partialorder %v4716, 8.507059e+37
  %v4718 = vand.u32 %v4469, 2147483648
  %v4719 = vor.u32 1.1754944e-38, %v4718
  %v4720 = vsel %vm4717, %v4719, %v4715
  %v4721 = vmul.f32 %v4406, %v4720
  %v4722 = vrcp.pop %v4472
  %v4723 = vmul.f32 %v4472, %v4722
  %v4724 = vsub.f32 1.0, %v4723
  %v4725 = vmul.f32 %v4722, %v4724
  %v4726 = vadd.f32 %v4722, %v4725
  %vm4727 = vweird.f32 %v4472
  %vm4728 = vweird.f32 %v4722
  %vm4729 = vmor %vm4727, %vm4728
  %v4730 = vsel %vm4729, %v4722, %v4726
  %v4731 = vand.u32 2147483647, %v4472
  %vm4732 = vcmp.eq.f32.partialorder %v4731, 8.507059e+37
  %v4733 = vand.u32 %v4472, 2147483648
  %v4734 = vor.u32 1.1754944e-38, %v4733
  %v4735 = vsel %vm4732, %v4734, %v4730
  %v4736 = vmul.f32 %v4408, %v4735
  %v4737 = vrcp.pop %v4475
  %v4738 = vmul.f32 %v4475, %v4737
  %v4739 = vsub.f32 1.0, %v4738
  %v4740 = vmul.f32 %v4737, %v4739
  %v4741 = vadd.f32 %v4737, %v4740
  %vm4742 = vweird.f32 %v4475
  %vm4743 = vweird.f32 %v4737
  %vm4744 = vmor %vm4742, %vm4743
  %v4745 = vsel %vm4744, %v4737, %v4741
  %v4746 = vand.u32 2147483647, %v4475
  %vm4747 = vcmp.eq.f32.partialorder %v4746, 8.507059e+37
  %v4748 = vand.u32 %v4475, 2147483648
  %v4749 = vor.u32 1.1754944e-38, %v4748
  %v4750 = vsel %vm4747, %v4749, %v4745
  %v4751 = vmul.f32 %v4410, %v4750
  %v4752 = vrcp.pop %v4478
  %v4753 = vmul.f32 %v4478, %v4752
  %v4754 = vsub.f32 1.0, %v4753
  %v4755 = vmul.f32 %v4752, %v4754
  %v4756 = vadd.f32 %v4752, %v4755
  %vm4757 = vweird.f32 %v4478
  %vm4758 = vweird.f32 %v4752
  %vm4759 = vmor %vm4757, %vm4758
  %v4760 = vsel %vm4759, %v4752, %v4756
  %v4761 = vand.u32 2147483647, %v4478
  %vm4762 = vcmp.eq.f32.partialorder %v4761, 8.507059e+37
  %v4763 = vand.u32 %v4478, 2147483648
  %v4764 = vor.u32 1.1754944e-38, %v4763
  %v4765 = vsel %vm4762, %v4764, %v4760
  %v4766 = vmul.f32 %v4412, %v4765
  %v4767 = vrcp.pop %v4481
  %v4768 = vmul.f32 %v4481, %v4767
  %v4769 = vsub.f32 1.0, %v4768
  %v4770 = vmul.f32 %v4767, %v4769
  %v4771 = vadd.f32 %v4767, %v4770
  %vm4772 = vweird.f32 %v4481
  %vm4773 = vweird.f32 %v4767
  %vm4774 = vmor %vm4772, %vm4773
  %v4775 = vsel %vm4774, %v4767, %v4771
  %v4776 = vand.u32 2147483647, %v4481
  %vm4777 = vcmp.eq.f32.partialorder %v4776, 8.507059e+37
  %v4778 = vand.u32 %v4481, 2147483648
  %v4779 = vor.u32 1.1754944e-38, %v4778
  %v4780 = vsel %vm4777, %v4779, %v4775
  %v4781 = vmul.f32 %v4414, %v4780
  %v4782 = vrcp.pop %v4484
  %v4783 = vmul.f32 %v4484, %v4782
  %v4784 = vsub.f32 1.0, %v4783
  %v4785 = vmul.f32 %v4782, %v4784
  %v4786 = vadd.f32 %v4782, %v4785
  %vm4787 = vweird.f32 %v4484
  %vm4788 = vweird.f32 %v4782
  %vm4789 = vmor %vm4787, %vm4788
  %v4790 = vsel %vm4789, %v4782, %v4786
  %v4791 = vand.u32 2147483647, %v4484
  %vm4792 = vcmp.eq.f32.partialorder %v4791, 8.507059e+37
  %v4793 = vand.u32 %v4484, 2147483648
  %v4794 = vor.u32 1.1754944e-38, %v4793
  %v4795 = vsel %vm4792, %v4794, %v4790
  %v4796 = vmul.f32 %v4416, %v4795
  %v4797 = vrcp.pop %v4487
  %v4798 = vmul.f32 %v4487, %v4797
  %v4799 = vsub.f32 1.0, %v4798
  %v4800 = vmul.f32 %v4797, %v4799
  %v4801 = vadd.f32 %v4797, %v4800
  %vm4802 = vweird.f32 %v4487
  %vm4803 = vweird.f32 %v4797
  %vm4804 = vmor %vm4802, %vm4803
  %v4805 = vsel %vm4804, %v4797, %v4801
  %v4806 = vand.u32 2147483647, %v4487
  %vm4807 = vcmp.eq.f32.partialorder %v4806, 8.507059e+37
  %v4808 = vand.u32 %v4487, 2147483648
  %v4809 = vor.u32 1.1754944e-38, %v4808
  %v4810 = vsel %vm4807, %v4809, %v4805
  %v4811 = vmul.f32 %v4418, %v4810
  %v4812 = vrcp.pop %v4490
  %v4813 = vmul.f32 %v4490, %v4812
  %v4814 = vsub.f32 1.0, %v4813
  %v4815 = vmul.f32 %v4812, %v4814
  %v4816 = vadd.f32 %v4812, %v4815
  %vm4817 = vweird.f32 %v4490
  %vm4818 = vweird.f32 %v4812
  %vm4819 = vmor %vm4817, %vm4818
  %v4820 = vsel %vm4819, %v4812, %v4816
  %v4821 = vand.u32 2147483647, %v4490
  %vm4822 = vcmp.eq.f32.partialorder %v4821, 8.507059e+37
  %v4823 = vand.u32 %v4490, 2147483648
  %v4824 = vor.u32 1.1754944e-38, %v4823
  %v4825 = vsel %vm4822, %v4824, %v4820
  %v4826 = vmul.f32 %v4420, %v4825
  %v4827 = vrcp.pop %v4493
  %v4828 = vmul.f32 %v4493, %v4827
  %v4829 = vsub.f32 1.0, %v4828
  %v4830 = vmul.f32 %v4827, %v4829
  %v4831 = vadd.f32 %v4827, %v4830
  %vm4832 = vweird.f32 %v4493
  %vm4833 = vweird.f32 %v4827
  %vm4834 = vmor %vm4832, %vm4833
  %v4835 = vsel %vm4834, %v4827, %v4831
  %v4836 = vand.u32 2147483647, %v4493
  %vm4837 = vcmp.eq.f32.partialorder %v4836, 8.507059e+37
  %v4838 = vand.u32 %v4493, 2147483648
  %v4839 = vor.u32 1.1754944e-38, %v4838
  %v4840 = vsel %vm4837, %v4839, %v4835
  %v4841 = vmul.f32 %v4422, %v4840
  %v4842 = vrcp.pop %v4496
  %v4843 = vmul.f32 %v4496, %v4842
  %v4844 = vsub.f32 1.0, %v4843
  %v4845 = vmul.f32 %v4842, %v4844
  %v4846 = vadd.f32 %v4842, %v4845
  %vm4847 = vweird.f32 %v4496
  %vm4848 = vweird.f32 %v4842
  %vm4849 = vmor %vm4847, %vm4848
  %v4850 = vsel %vm4849, %v4842, %v4846
  %v4851 = vand.u32 2147483647, %v4496
  %vm4852 = vcmp.eq.f32.partialorder %v4851, 8.507059e+37
  %v4853 = vand.u32 %v4496, 2147483648
  %v4854 = vor.u32 1.1754944e-38, %v4853
  %v4855 = vsel %vm4852, %v4854, %v4850
  %v4856 = vmul.f32 %v4424, %v4855
  %v4857 = vpack.c.bf16 %v4511, %v4511
  %v4858 = vpack.c.bf16 %v4526, %v4526
  %v4859 = vpack.c.bf16 %v4541, %v4541
  %v4860 = vpack.c.bf16 %v4556, %v4556
  %v4861 = vpack.c.bf16 %v4571, %v4571
  %v4862 = vpack.c.bf16 %v4586, %v4586
  %v4863 = vpack.c.bf16 %v4601, %v4601
  %v4864 = vpack.c.bf16 %v4616, %v4616
  %v4865 = vpack.c.bf16 %v4631, %v4631
  %v4866 = vpack.c.bf16 %v4646, %v4646
  %v4867 = vpack.c.bf16 %v4661, %v4661
  %v4868 = vpack.c.bf16 %v4676, %v4676
  %v4869 = vpack.c.bf16 %v4691, %v4691
  %v4870 = vpack.c.bf16 %v4706, %v4706
  %v4871 = vpack.c.bf16 %v4721, %v4721
  %v4872 = vpack.c.bf16 %v4736, %v4736
  %v4873 = vpack.c.bf16 %v4751, %v4751
  %v4874 = vpack.c.bf16 %v4766, %v4766
  %v4875 = vpack.c.bf16 %v4781, %v4781
  %v4876 = vpack.c.bf16 %v4796, %v4796
  %v4877 = vpack.c.bf16 %v4811, %v4811
  %v4878 = vpack.c.bf16 %v4826, %v4826
  %v4879 = vpack.c.bf16 %v4841, %v4841
  %v4880 = vpack.c.bf16 %v4856, %v4856
  %v4884 = vunpack.c.l.b16 %v4857
  %v4885 = vunpack.c.l.b16 %v4858
  %v4886 = vunpack.c.l.b16 %v4859
  %v4887 = vpack.c.b16 %v4885, %v4884
  %v4888 = vpack.c.b16 %v4886, %v4886
  %4889 = vrot.lane.b32.xlu0 %v986, 48
  %v4890 = vpop.permute.xlu0 %4889
  %4891 = vrot.lane.b32.xlu0 %v987, 48
  %v4892 = vpop.permute.xlu0 %4891
  %v4895 = vsel %vm1828, %v4887, 0
  %v4898 = vsel %vm1828, %v4888, 0
  %v4901 = vand.u32 %v4892, %v2451
  %4903 = vmatpush.bf16.msra.mxu0 0
  %4904 = vmatpush.bf16.msra.mxu0 0
  %4905 = vmatpush.bf16.msra.mxu0 0
  %4906 = vmatpush.bf16.msra.mxu0 0
  %4907 = vmatpush.bf16.msra.mxu0 0
  %4908 = vmatpush.bf16.msra.mxu0 0
  %4909 = vmatpush.bf16.msra.mxu0 %v4901
  %4910 = vmatpush.bf16.msra.mxu0 %v4890
  %4911 = vmatmul.bf16.gmra.mxu0 %v4895
  %v4912 = vpop.f32.mrf.mxu0
  %v4913 = vadd.f32 0.0, %v4912
  %v4914 = vpop.f32.mrf.mxu0
  %v4915 = vadd.f32 0.0, %v4914
  %4916 = vmatmul.bf16.gmra.mxu0 %v4898
  %v4917 = vpop.f32.mrf.mxu0
  %v4918 = vadd.f32 0.0, %v4917
  %v4919 = vpop.f32.mrf.mxu0
  %4920 = vdwg.mxu0
  %v4924 = vunpack.c.l.b16 %v4860
  %v4925 = vunpack.c.l.b16 %v4861
  %v4926 = vunpack.c.l.b16 %v4862
  %v4927 = vpack.c.b16 %v4925, %v4924
  %v4928 = vpack.c.b16 %v4926, %v4926
  %4929 = vrot.lane.b32.xlu0 %v1102, 48
  %v4930 = vpop.permute.xlu0 %4929
  %4931 = vrot.lane.b32.xlu0 %v1103, 48
  %v4932 = vpop.permute.xlu0 %4931
  %v4935 = vsel %vm1828, %v4927, 0
  %v4938 = vsel %vm1828, %v4928, 0
  %v4941 = vand.u32 %v4932, %v2451
  %4943 = vmatpush.bf16.msra.mxu0 0
  %4944 = vmatpush.bf16.msra.mxu0 0
  %4945 = vmatpush.bf16.msra.mxu0 0
  %4946 = vmatpush.bf16.msra.mxu0 0
  %4947 = vmatpush.bf16.msra.mxu0 0
  %4948 = vmatpush.bf16.msra.mxu0 0
  %4949 = vmatpush.bf16.msra.mxu0 %v4941
  %4950 = vmatpush.bf16.msra.mxu0 %v4930
  %4951 = vmatmul.bf16.gmra.mxu0 %v4935
  %v4952 = vpop.f32.mrf.mxu0
  %v4953 = vadd.f32 0.0, %v4952
  %v4954 = vpop.f32.mrf.mxu0
  %v4955 = vadd.f32 0.0, %v4954
  %4956 = vmatmul.bf16.gmra.mxu0 %v4938
  %v4957 = vpop.f32.mrf.mxu0
  %v4958 = vadd.f32 0.0, %v4957
  %v4959 = vpop.f32.mrf.mxu0
  %4960 = vdwg.mxu0
  %v4964 = vunpack.c.l.b16 %v4863
  %v4965 = vunpack.c.l.b16 %v4864
  %v4966 = vunpack.c.l.b16 %v4865
  %v4967 = vpack.c.b16 %v4965, %v4964
  %v4968 = vpack.c.b16 %v4966, %v4966
  %4969 = vrot.lane.b32.xlu0 %v1217, 48
  %v4970 = vpop.permute.xlu0 %4969
  %4971 = vrot.lane.b32.xlu0 %v1218, 48
  %v4972 = vpop.permute.xlu0 %4971
  %v4975 = vsel %vm1828, %v4967, 0
  %v4978 = vsel %vm1828, %v4968, 0
  %v4981 = vand.u32 %v4972, %v2451
  %4983 = vmatpush.bf16.msra.mxu0 0
  %4984 = vmatpush.bf16.msra.mxu0 0
  %4985 = vmatpush.bf16.msra.mxu0 0
  %4986 = vmatpush.bf16.msra.mxu0 0
  %4987 = vmatpush.bf16.msra.mxu0 0
  %4988 = vmatpush.bf16.msra.mxu0 0
  %4989 = vmatpush.bf16.msra.mxu0 %v4981
  %4990 = vmatpush.bf16.msra.mxu0 %v4970
  %4991 = vmatmul.bf16.gmra.mxu0 %v4975
  %v4992 = vpop.f32.mrf.mxu0
  %v4993 = vadd.f32 0.0, %v4992
  %v4994 = vpop.f32.mrf.mxu0
  %v4995 = vadd.f32 0.0, %v4994
  %4996 = vmatmul.bf16.gmra.mxu0 %v4978
  %v4997 = vpop.f32.mrf.mxu0
  %v4998 = vadd.f32 0.0, %v4997
  %v4999 = vpop.f32.mrf.mxu0
  %5000 = vdwg.mxu0
  %v5004 = vunpack.c.l.b16 %v4866
  %v5005 = vunpack.c.l.b16 %v4867
  %v5006 = vunpack.c.l.b16 %v4868
  %v5007 = vpack.c.b16 %v5005, %v5004
  %v5008 = vpack.c.b16 %v5006, %v5006
  %5009 = vrot.lane.b32.xlu0 %v1332, 48
  %v5010 = vpop.permute.xlu0 %5009
  %5011 = vrot.lane.b32.xlu0 %v1333, 48
  %v5012 = vpop.permute.xlu0 %5011
  %v5015 = vsel %vm1828, %v5007, 0
  %v5018 = vsel %vm1828, %v5008, 0
  %v5021 = vand.u32 %v5012, %v2451
  %5023 = vmatpush.bf16.msra.mxu0 0
  %5024 = vmatpush.bf16.msra.mxu0 0
  %5025 = vmatpush.bf16.msra.mxu0 0
  %5026 = vmatpush.bf16.msra.mxu0 0
  %5027 = vmatpush.bf16.msra.mxu0 0
  %5028 = vmatpush.bf16.msra.mxu0 0
  %5029 = vmatpush.bf16.msra.mxu0 %v5021
  %5030 = vmatpush.bf16.msra.mxu0 %v5010
  %5031 = vmatmul.bf16.gmra.mxu0 %v5015
  %v5032 = vpop.f32.mrf.mxu0
  %v5033 = vadd.f32 0.0, %v5032
  %v5034 = vpop.f32.mrf.mxu0
  %v5035 = vadd.f32 0.0, %v5034
  %5036 = vmatmul.bf16.gmra.mxu0 %v5018
  %v5037 = vpop.f32.mrf.mxu0
  %v5038 = vadd.f32 0.0, %v5037
  %v5039 = vpop.f32.mrf.mxu0
  %5040 = vdwg.mxu0
  %v5044 = vunpack.c.l.b16 %v4869
  %v5045 = vunpack.c.l.b16 %v4870
  %v5046 = vunpack.c.l.b16 %v4871
  %v5047 = vpack.c.b16 %v5045, %v5044
  %v5048 = vpack.c.b16 %v5046, %v5046
  %5049 = vrot.lane.b32.xlu0 %v1447, 48
  %v5050 = vpop.permute.xlu0 %5049
  %5051 = vrot.lane.b32.xlu0 %v1448, 48
  %v5052 = vpop.permute.xlu0 %5051
  %v5055 = vsel %vm1828, %v5047, 0
  %v5058 = vsel %vm1828, %v5048, 0
  %v5061 = vand.u32 %v5052, %v2451
  %5063 = vmatpush.bf16.msra.mxu0 0
  %5064 = vmatpush.bf16.msra.mxu0 0
  %5065 = vmatpush.bf16.msra.mxu0 0
  %5066 = vmatpush.bf16.msra.mxu0 0
  %5067 = vmatpush.bf16.msra.mxu0 0
  %5068 = vmatpush.bf16.msra.mxu0 0
  %5069 = vmatpush.bf16.msra.mxu0 %v5061
  %5070 = vmatpush.bf16.msra.mxu0 %v5050
  %5071 = vmatmul.bf16.gmra.mxu0 %v5055
  %v5072 = vpop.f32.mrf.mxu0
  %v5073 = vadd.f32 0.0, %v5072
  %v5074 = vpop.f32.mrf.mxu0
  %v5075 = vadd.f32 0.0, %v5074
  %5076 = vmatmul.bf16.gmra.mxu0 %v5058
  %v5077 = vpop.f32.mrf.mxu0
  %v5078 = vadd.f32 0.0, %v5077
  %v5079 = vpop.f32.mrf.mxu0
  %5080 = vdwg.mxu0
  %v5084 = vunpack.c.l.b16 %v4872
  %v5085 = vunpack.c.l.b16 %v4873
  %v5086 = vunpack.c.l.b16 %v4874
  %v5087 = vpack.c.b16 %v5085, %v5084
  %v5088 = vpack.c.b16 %v5086, %v5086
  %5089 = vrot.lane.b32.xlu0 %v1562, 48
  %v5090 = vpop.permute.xlu0 %5089
  %5091 = vrot.lane.b32.xlu0 %v1563, 48
  %v5092 = vpop.permute.xlu0 %5091
  %v5095 = vsel %vm1828, %v5087, 0
  %v5098 = vsel %vm1828, %v5088, 0
  %v5101 = vand.u32 %v5092, %v2451
  %5103 = vmatpush.bf16.msra.mxu0 0
  %5104 = vmatpush.bf16.msra.mxu0 0
  %5105 = vmatpush.bf16.msra.mxu0 0
  %5106 = vmatpush.bf16.msra.mxu0 0
  %5107 = vmatpush.bf16.msra.mxu0 0
  %5108 = vmatpush.bf16.msra.mxu0 0
  %5109 = vmatpush.bf16.msra.mxu0 %v5101
  %5110 = vmatpush.bf16.msra.mxu0 %v5090
  %5111 = vmatmul.bf16.gmra.mxu0 %v5095
  %v5112 = vpop.f32.mrf.mxu0
  %v5113 = vadd.f32 0.0, %v5112
  %v5114 = vpop.f32.mrf.mxu0
  %v5115 = vadd.f32 0.0, %v5114
  %5116 = vmatmul.bf16.gmra.mxu0 %v5098
  %v5117 = vpop.f32.mrf.mxu0
  %v5118 = vadd.f32 0.0, %v5117
  %v5119 = vpop.f32.mrf.mxu0
  %5120 = vdwg.mxu0
  %v5124 = vunpack.c.l.b16 %v4875
  %v5125 = vunpack.c.l.b16 %v4876
  %v5126 = vunpack.c.l.b16 %v4877
  %v5127 = vpack.c.b16 %v5125, %v5124
  %v5128 = vpack.c.b16 %v5126, %v5126
  %5129 = vrot.lane.b32.xlu0 %v1677, 48
  %v5130 = vpop.permute.xlu0 %5129
  %5131 = vrot.lane.b32.xlu0 %v1678, 48
  %v5132 = vpop.permute.xlu0 %5131
  %v5135 = vsel %vm1828, %v5127, 0
  %v5138 = vsel %vm1828, %v5128, 0
  %v5141 = vand.u32 %v5132, %v2451
  %5143 = vmatpush.bf16.msra.mxu0 0
  %5144 = vmatpush.bf16.msra.mxu0 0
  %5145 = vmatpush.bf16.msra.mxu0 0
  %5146 = vmatpush.bf16.msra.mxu0 0
  %5147 = vmatpush.bf16.msra.mxu0 0
  %5148 = vmatpush.bf16.msra.mxu0 0
  %5149 = vmatpush.bf16.msra.mxu0 %v5141
  %5150 = vmatpush.bf16.msra.mxu0 %v5130
  %5151 = vmatmul.bf16.gmra.mxu0 %v5135
  %v5152 = vpop.f32.mrf.mxu0
  %v5153 = vadd.f32 0.0, %v5152
  %v5154 = vpop.f32.mrf.mxu0
  %v5155 = vadd.f32 0.0, %v5154
  %5156 = vmatmul.bf16.gmra.mxu0 %v5138
  %v5157 = vpop.f32.mrf.mxu0
  %v5158 = vadd.f32 0.0, %v5157
  %v5159 = vpop.f32.mrf.mxu0
  %5160 = vdwg.mxu0
  %v5164 = vunpack.c.l.b16 %v4878
  %v5165 = vunpack.c.l.b16 %v4879
  %v5166 = vunpack.c.l.b16 %v4880
  %v5167 = vpack.c.b16 %v5165, %v5164
  %v5168 = vpack.c.b16 %v5166, %v5166
  %5169 = vrot.lane.b32.xlu0 %v1792, 48
  %v5170 = vpop.permute.xlu0 %5169
  %5171 = vrot.lane.b32.xlu0 %v1793, 48
  %v5172 = vpop.permute.xlu0 %5171
  %v5175 = vsel %vm1828, %v5167, 0
  %v5178 = vsel %vm1828, %v5168, 0
  %v5181 = vand.u32 %v5172, %v2451
  %5183 = vmatpush.bf16.msra.mxu0 0
  %5184 = vmatpush.bf16.msra.mxu0 0
  %5185 = vmatpush.bf16.msra.mxu0 0
  %5186 = vmatpush.bf16.msra.mxu0 0
  %5187 = vmatpush.bf16.msra.mxu0 0
  %5188 = vmatpush.bf16.msra.mxu0 0
  %5189 = vmatpush.bf16.msra.mxu0 %v5181
  %5190 = vmatpush.bf16.msra.mxu0 %v5170
  %5191 = vmatmul.bf16.gmra.mxu0 %v5175
  %v5192 = vpop.f32.mrf.mxu0
  %v5193 = vadd.f32 0.0, %v5192
  %v5194 = vpop.f32.mrf.mxu0
  %v5195 = vadd.f32 0.0, %v5194
  %5196 = vmatmul.bf16.gmra.mxu0 %v5178
  %v5197 = vpop.f32.mrf.mxu0
  %v5198 = vadd.f32 0.0, %v5197
  %v5199 = vpop.f32.mrf.mxu0
  %5200 = vdwg.mxu0
  %5201 = vrot.lane.b32.xlu0 %v986, 104
  %v5202 = vpop.permute.xlu0 %5201
  %5203 = vrot.lane.b32.xlu0 %v987, 104
  %v5204 = vpop.permute.xlu0 %5203
  %5205 = vrot.lane.b32.xlu0 %v986, 72
  %v5206 = vpop.permute.xlu0 %5205
  %5207 = vrot.lane.b32.xlu0 %v987, 72
  %v5208 = vpop.permute.xlu0 %5207
  %v5210 = vsel %vm992, %v5202, 0
  %v5213 = vsel %vm992, %v5204, 0
  %v5216 = vsel %vm992, %v5206, 0
  %v5219 = vsel %vm992, %v5208, 0
  %5221 = vmatpush.bf16.xpose.msra.mxu0 0
  %5222 = vmatpush.bf16.xpose.msra.mxu0 0
  %5223 = vmatpush.bf16.xpose.msra.mxu0 0
  %5224 = vmatpush.bf16.xpose.msra.mxu0 0
  %5225 = vmatpush.bf16.xpose.msra.mxu0 0
  %5226 = vmatpush.bf16.xpose.msra.mxu0 0
  %5227 = vmatpush.bf16.xpose.msra.mxu0 %v5219
  %5228 = vmatpush.bf16.xpose.msra.mxu0 %v5216
  %5229 = vmatmul.bf16.gmra.mxu0 %v5210
  %v5230 = vpop.f32.mrf.mxu0
  %v5231 = vadd.f32 0.0, %v5230
  %v5232 = vpop.f32.mrf.mxu0
  %v5233 = vadd.f32 0.0, %v5232
  %5234 = vmatmul.bf16.gmra.mxu0 %v5213
  %v5235 = vpop.f32.mrf.mxu0
  %v5236 = vadd.f32 0.0, %v5235
  %v5237 = vpop.f32.mrf.mxu0
  %5238 = vdwg.mxu0
  %5239 = vrot.lane.b32.xlu0 %v1102, 104
  %v5240 = vpop.permute.xlu0 %5239
  %5241 = vrot.lane.b32.xlu0 %v1103, 104
  %v5242 = vpop.permute.xlu0 %5241
  %5243 = vrot.lane.b32.xlu0 %v1102, 72
  %v5244 = vpop.permute.xlu0 %5243
  %5245 = vrot.lane.b32.xlu0 %v1103, 72
  %v5246 = vpop.permute.xlu0 %5245
  %v5248 = vsel %vm992, %v5240, 0
  %v5251 = vsel %vm992, %v5242, 0
  %v5254 = vsel %vm992, %v5244, 0
  %v5257 = vsel %vm992, %v5246, 0
  %5259 = vmatpush.bf16.xpose.msra.mxu0 0
  %5260 = vmatpush.bf16.xpose.msra.mxu0 0
  %5261 = vmatpush.bf16.xpose.msra.mxu0 0
  %5262 = vmatpush.bf16.xpose.msra.mxu0 0
  %5263 = vmatpush.bf16.xpose.msra.mxu0 0
  %5264 = vmatpush.bf16.xpose.msra.mxu0 0
  %5265 = vmatpush.bf16.xpose.msra.mxu0 %v5257
  %5266 = vmatpush.bf16.xpose.msra.mxu0 %v5254
  %5267 = vmatmul.bf16.gmra.mxu0 %v5248
  %v5268 = vpop.f32.mrf.mxu0
  %v5269 = vadd.f32 0.0, %v5268
  %v5270 = vpop.f32.mrf.mxu0
  %v5271 = vadd.f32 0.0, %v5270
  %5272 = vmatmul.bf16.gmra.mxu0 %v5251
  %v5273 = vpop.f32.mrf.mxu0
  %v5274 = vadd.f32 0.0, %v5273
  %v5275 = vpop.f32.mrf.mxu0
  %5276 = vdwg.mxu0
  %5277 = vrot.lane.b32.xlu0 %v1217, 104
  %v5278 = vpop.permute.xlu0 %5277
  %5279 = vrot.lane.b32.xlu0 %v1218, 104
  %v5280 = vpop.permute.xlu0 %5279
  %5281 = vrot.lane.b32.xlu0 %v1217, 72
  %v5282 = vpop.permute.xlu0 %5281
  %5283 = vrot.lane.b32.xlu0 %v1218, 72
  %v5284 = vpop.permute.xlu0 %5283
  %v5286 = vsel %vm992, %v5278, 0
  %v5289 = vsel %vm992, %v5280, 0
  %v5292 = vsel %vm992, %v5282, 0
  %v5295 = vsel %vm992, %v5284, 0
  %5297 = vmatpush.bf16.xpose.msra.mxu0 0
  %5298 = vmatpush.bf16.xpose.msra.mxu0 0
  %5299 = vmatpush.bf16.xpose.msra.mxu0 0
  %5300 = vmatpush.bf16.xpose.msra.mxu0 0
  %5301 = vmatpush.bf16.xpose.msra.mxu0 0
  %5302 = vmatpush.bf16.xpose.msra.mxu0 0
  %5303 = vmatpush.bf16.xpose.msra.mxu0 %v5295
  %5304 = vmatpush.bf16.xpose.msra.mxu0 %v5292
  %5305 = vmatmul.bf16.gmra.mxu0 %v5286
  %v5306 = vpop.f32.mrf.mxu0
  %v5307 = vadd.f32 0.0, %v5306
  %v5308 = vpop.f32.mrf.mxu0
  %v5309 = vadd.f32 0.0, %v5308
  %5310 = vmatmul.bf16.gmra.mxu0 %v5289
  %v5311 = vpop.f32.mrf.mxu0
  %v5312 = vadd.f32 0.0, %v5311
  %v5313 = vpop.f32.mrf.mxu0
  %5314 = vdwg.mxu0
  %5315 = vrot.lane.b32.xlu0 %v1332, 104
  %v5316 = vpop.permute.xlu0 %5315
  %5317 = vrot.lane.b32.xlu0 %v1333, 104
  %v5318 = vpop.permute.xlu0 %5317
  %5319 = vrot.lane.b32.xlu0 %v1332, 72
  %v5320 = vpop.permute.xlu0 %5319
  %5321 = vrot.lane.b32.xlu0 %v1333, 72
  %v5322 = vpop.permute.xlu0 %5321
  %v5324 = vsel %vm992, %v5316, 0
  %v5327 = vsel %vm992, %v5318, 0
  %v5330 = vsel %vm992, %v5320, 0
  %v5333 = vsel %vm992, %v5322, 0
  %5335 = vmatpush.bf16.xpose.msra.mxu0 0
  %5336 = vmatpush.bf16.xpose.msra.mxu0 0
  %5337 = vmatpush.bf16.xpose.msra.mxu0 0
  %5338 = vmatpush.bf16.xpose.msra.mxu0 0
  %5339 = vmatpush.bf16.xpose.msra.mxu0 0
  %5340 = vmatpush.bf16.xpose.msra.mxu0 0
  %5341 = vmatpush.bf16.xpose.msra.mxu0 %v5333
  %5342 = vmatpush.bf16.xpose.msra.mxu0 %v5330
  %5343 = vmatmul.bf16.gmra.mxu0 %v5324
  %v5344 = vpop.f32.mrf.mxu0
  %v5345 = vadd.f32 0.0, %v5344
  %v5346 = vpop.f32.mrf.mxu0
  %v5347 = vadd.f32 0.0, %v5346
  %5348 = vmatmul.bf16.gmra.mxu0 %v5327
  %v5349 = vpop.f32.mrf.mxu0
  %v5350 = vadd.f32 0.0, %v5349
  %v5351 = vpop.f32.mrf.mxu0
  %5352 = vdwg.mxu0
  %5353 = vrot.lane.b32.xlu0 %v1447, 104
  %v5354 = vpop.permute.xlu0 %5353
  %5355 = vrot.lane.b32.xlu0 %v1448, 104
  %v5356 = vpop.permute.xlu0 %5355
  %5357 = vrot.lane.b32.xlu0 %v1447, 72
  %v5358 = vpop.permute.xlu0 %5357
  %5359 = vrot.lane.b32.xlu0 %v1448, 72
  %v5360 = vpop.permute.xlu0 %5359
  %v5362 = vsel %vm992, %v5354, 0
  %v5365 = vsel %vm992, %v5356, 0
  %v5368 = vsel %vm992, %v5358, 0
  %v5371 = vsel %vm992, %v5360, 0
  %5373 = vmatpush.bf16.xpose.msra.mxu0 0
  %5374 = vmatpush.bf16.xpose.msra.mxu0 0
  %5375 = vmatpush.bf16.xpose.msra.mxu0 0
  %5376 = vmatpush.bf16.xpose.msra.mxu0 0
  %5377 = vmatpush.bf16.xpose.msra.mxu0 0
  %5378 = vmatpush.bf16.xpose.msra.mxu0 0
  %5379 = vmatpush.bf16.xpose.msra.mxu0 %v5371
  %5380 = vmatpush.bf16.xpose.msra.mxu0 %v5368
  %5381 = vmatmul.bf16.gmra.mxu0 %v5362
  %v5382 = vpop.f32.mrf.mxu0
  %v5383 = vadd.f32 0.0, %v5382
  %v5384 = vpop.f32.mrf.mxu0
  %v5385 = vadd.f32 0.0, %v5384
  %5386 = vmatmul.bf16.gmra.mxu0 %v5365
  %v5387 = vpop.f32.mrf.mxu0
  %v5388 = vadd.f32 0.0, %v5387
  %v5389 = vpop.f32.mrf.mxu0
  %5390 = vdwg.mxu0
  %5391 = vrot.lane.b32.xlu0 %v1562, 104
  %v5392 = vpop.permute.xlu0 %5391
  %5393 = vrot.lane.b32.xlu0 %v1563, 104
  %v5394 = vpop.permute.xlu0 %5393
  %5395 = vrot.lane.b32.xlu0 %v1562, 72
  %v5396 = vpop.permute.xlu0 %5395
  %5397 = vrot.lane.b32.xlu0 %v1563, 72
  %v5398 = vpop.permute.xlu0 %5397
  %v5400 = vsel %vm992, %v5392, 0
  %v5403 = vsel %vm992, %v5394, 0
  %v5406 = vsel %vm992, %v5396, 0
  %v5409 = vsel %vm992, %v5398, 0
  %5411 = vmatpush.bf16.xpose.msra.mxu0 0
  %5412 = vmatpush.bf16.xpose.msra.mxu0 0
  %5413 = vmatpush.bf16.xpose.msra.mxu0 0
  %5414 = vmatpush.bf16.xpose.msra.mxu0 0
  %5415 = vmatpush.bf16.xpose.msra.mxu0 0
  %5416 = vmatpush.bf16.xpose.msra.mxu0 0
  %5417 = vmatpush.bf16.xpose.msra.mxu0 %v5409
  %5418 = vmatpush.bf16.xpose.msra.mxu0 %v5406
  %5419 = vmatmul.bf16.gmra.mxu0 %v5400
  %v5420 = vpop.f32.mrf.mxu0
  %v5421 = vadd.f32 0.0, %v5420
  %v5422 = vpop.f32.mrf.mxu0
  %v5423 = vadd.f32 0.0, %v5422
  %5424 = vmatmul.bf16.gmra.mxu0 %v5403
  %v5425 = vpop.f32.mrf.mxu0
  %v5426 = vadd.f32 0.0, %v5425
  %v5427 = vpop.f32.mrf.mxu0
  %5428 = vdwg.mxu0
  %5429 = vrot.lane.b32.xlu0 %v1677, 104
  %v5430 = vpop.permute.xlu0 %5429
  %5431 = vrot.lane.b32.xlu0 %v1678, 104
  %v5432 = vpop.permute.xlu0 %5431
  %5433 = vrot.lane.b32.xlu0 %v1677, 72
  %v5434 = vpop.permute.xlu0 %5433
  %5435 = vrot.lane.b32.xlu0 %v1678, 72
  %v5436 = vpop.permute.xlu0 %5435
  %v5438 = vsel %vm992, %v5430, 0
  %v5441 = vsel %vm992, %v5432, 0
  %v5444 = vsel %vm992, %v5434, 0
  %v5447 = vsel %vm992, %v5436, 0
  %5449 = vmatpush.bf16.xpose.msra.mxu0 0
  %5450 = vmatpush.bf16.xpose.msra.mxu0 0
  %5451 = vmatpush.bf16.xpose.msra.mxu0 0
  %5452 = vmatpush.bf16.xpose.msra.mxu0 0
  %5453 = vmatpush.bf16.xpose.msra.mxu0 0
  %5454 = vmatpush.bf16.xpose.msra.mxu0 0
  %5455 = vmatpush.bf16.xpose.msra.mxu0 %v5447
  %5456 = vmatpush.bf16.xpose.msra.mxu0 %v5444
  %5457 = vmatmul.bf16.gmra.mxu0 %v5438
  %v5458 = vpop.f32.mrf.mxu0
  %v5459 = vadd.f32 0.0, %v5458
  %v5460 = vpop.f32.mrf.mxu0
  %v5461 = vadd.f32 0.0, %v5460
  %5462 = vmatmul.bf16.gmra.mxu0 %v5441
  %v5463 = vpop.f32.mrf.mxu0
  %v5464 = vadd.f32 0.0, %v5463
  %v5465 = vpop.f32.mrf.mxu0
  %5466 = vdwg.mxu0
  %5467 = vrot.lane.b32.xlu0 %v1792, 104
  %v5468 = vpop.permute.xlu0 %5467
  %5469 = vrot.lane.b32.xlu0 %v1793, 104
  %v5470 = vpop.permute.xlu0 %5469
  %5471 = vrot.lane.b32.xlu0 %v1792, 72
  %v5472 = vpop.permute.xlu0 %5471
  %5473 = vrot.lane.b32.xlu0 %v1793, 72
  %v5474 = vpop.permute.xlu0 %5473
  %v5476 = vsel %vm992, %v5468, 0
  %v5479 = vsel %vm992, %v5470, 0
  %v5482 = vsel %vm992, %v5472, 0
  %v5485 = vsel %vm992, %v5474, 0
  %5487 = vmatpush.bf16.xpose.msra.mxu0 0
  %5488 = vmatpush.bf16.xpose.msra.mxu0 0
  %5489 = vmatpush.bf16.xpose.msra.mxu0 0
  %5490 = vmatpush.bf16.xpose.msra.mxu0 0
  %5491 = vmatpush.bf16.xpose.msra.mxu0 0
  %5492 = vmatpush.bf16.xpose.msra.mxu0 0
  %5493 = vmatpush.bf16.xpose.msra.mxu0 %v5485
  %5494 = vmatpush.bf16.xpose.msra.mxu0 %v5482
  %5495 = vmatmul.bf16.gmra.mxu0 %v5476
  %v5496 = vpop.f32.mrf.mxu0
  %v5497 = vadd.f32 0.0, %v5496
  %v5498 = vpop.f32.mrf.mxu0
  %v5499 = vadd.f32 0.0, %v5498
  %5500 = vmatmul.bf16.gmra.mxu0 %v5479
  %v5501 = vpop.f32.mrf.mxu0
  %v5502 = vadd.f32 0.0, %v5501
  %v5503 = vpop.f32.mrf.mxu0
  %5504 = vdwg.mxu0
  %v5505 = vsel %vm1828, %v5231, -inf
  %5506 = vmax.xlane.f32.xlu0 %v5505
  %v5507 = vpop.xlane.xlu0 %5506
  %v5508 = vsel %vm1828, %v5233, -inf
  %5509 = vmax.xlane.f32.xlu0 %v5508
  %v5510 = vpop.xlane.xlu0 %5509
  %v5511 = vsel %vm1835, %v5236, -inf
  %5512 = vmax.xlane.f32.xlu0 %v5511
  %v5513 = vpop.xlane.xlu0 %5512
  %v5514 = vsel %vm1828, %v5269, -inf
  %5515 = vmax.xlane.f32.xlu0 %v5514
  %v5516 = vpop.xlane.xlu0 %5515
  %v5517 = vsel %vm1828, %v5271, -inf
  %5518 = vmax.xlane.f32.xlu0 %v5517
  %v5519 = vpop.xlane.xlu0 %5518
  %v5520 = vsel %vm1835, %v5274, -inf
  %5521 = vmax.xlane.f32.xlu0 %v5520
  %v5522 = vpop.xlane.xlu0 %5521
  %v5523 = vsel %vm1828, %v5307, -inf
  %5524 = vmax.xlane.f32.xlu0 %v5523
  %v5525 = vpop.xlane.xlu0 %5524
  %v5526 = vsel %vm1828, %v5309, -inf
  %5527 = vmax.xlane.f32.xlu0 %v5526
  %v5528 = vpop.xlane.xlu0 %5527
  %v5529 = vsel %vm1835, %v5312, -inf
  %5530 = vmax.xlane.f32.xlu0 %v5529
  %v5531 = vpop.xlane.xlu0 %5530
  %v5532 = vsel %vm1828, %v5345, -inf
  %5533 = vmax.xlane.f32.xlu0 %v5532
  %v5534 = vpop.xlane.xlu0 %5533
  %v5535 = vsel %vm1828, %v5347, -inf
  %5536 = vmax.xlane.f32.xlu0 %v5535
  %v5537 = vpop.xlane.xlu0 %5536
  %v5538 = vsel %vm1835, %v5350, -inf
  %5539 = vmax.xlane.f32.xlu0 %v5538
  %v5540 = vpop.xlane.xlu0 %5539
  %v5541 = vsel %vm1828, %v5383, -inf
  %5542 = vmax.xlane.f32.xlu0 %v5541
  %v5543 = vpop.xlane.xlu0 %5542
  %v5544 = vsel %vm1828, %v5385, -inf
  %5545 = vmax.xlane.f32.xlu0 %v5544
  %v5546 = vpop.xlane.xlu0 %5545
  %v5547 = vsel %vm1835, %v5388, -inf
  %5548 = vmax.xlane.f32.xlu0 %v5547
  %v5549 = vpop.xlane.xlu0 %5548
  %v5550 = vsel %vm1828, %v5421, -inf
  %5551 = vmax.xlane.f32.xlu0 %v5550
  %v5552 = vpop.xlane.xlu0 %5551
  %v5553 = vsel %vm1828, %v5423, -inf
  %5554 = vmax.xlane.f32.xlu0 %v5553
  %v5555 = vpop.xlane.xlu0 %5554
  %v5556 = vsel %vm1835, %v5426, -inf
  %5557 = vmax.xlane.f32.xlu0 %v5556
  %v5558 = vpop.xlane.xlu0 %5557
  %v5559 = vsel %vm1828, %v5459, -inf
  %5560 = vmax.xlane.f32.xlu0 %v5559
  %v5561 = vpop.xlane.xlu0 %5560
  %v5562 = vsel %vm1828, %v5461, -inf
  %5563 = vmax.xlane.f32.xlu0 %v5562
  %v5564 = vpop.xlane.xlu0 %5563
  %v5565 = vsel %vm1835, %v5464, -inf
  %5566 = vmax.xlane.f32.xlu0 %v5565
  %v5567 = vpop.xlane.xlu0 %5566
  %v5568 = vsel %vm1828, %v5497, -inf
  %5569 = vmax.xlane.f32.xlu0 %v5568
  %v5570 = vpop.xlane.xlu0 %5569
  %v5571 = vsel %vm1828, %v5499, -inf
  %5572 = vmax.xlane.f32.xlu0 %v5571
  %v5573 = vpop.xlane.xlu0 %5572
  %v5574 = vsel %vm1835, %v5502, -inf
  %5575 = vmax.xlane.f32.xlu0 %v5574
  %v5576 = vpop.xlane.xlu0 %5575
  %v5577 = vsub.f32 %v5231, %v5507
  %v5578 = vsub.f32 %v5233, %v5510
  %v5579 = vsub.f32 %v5236, %v5513
  %v5580 = vsub.f32 %v5269, %v5516
  %v5581 = vsub.f32 %v5271, %v5519
  %v5582 = vsub.f32 %v5274, %v5522
  %v5583 = vsub.f32 %v5307, %v5525
  %v5584 = vsub.f32 %v5309, %v5528
  %v5585 = vsub.f32 %v5312, %v5531
  %v5586 = vsub.f32 %v5345, %v5534
  %v5587 = vsub.f32 %v5347, %v5537
  %v5588 = vsub.f32 %v5350, %v5540
  %v5589 = vsub.f32 %v5383, %v5543
  %v5590 = vsub.f32 %v5385, %v5546
  %v5591 = vsub.f32 %v5388, %v5549
  %v5592 = vsub.f32 %v5421, %v5552
  %v5593 = vsub.f32 %v5423, %v5555
  %v5594 = vsub.f32 %v5426, %v5558
  %v5595 = vsub.f32 %v5459, %v5561
  %v5596 = vsub.f32 %v5461, %v5564
  %v5597 = vsub.f32 %v5464, %v5567
  %v5598 = vsub.f32 %v5497, %v5570
  %v5599 = vsub.f32 %v5499, %v5573
  %v5600 = vsub.f32 %v5502, %v5576
  %v5601 = vmul.f32 %v5577, 1.442695
  %v5602 = vpow.pop %v5601
  %v5603 = vmul.f32 %v5578, 1.442695
  %v5604 = vpow.pop %v5603
  %v5605 = vmul.f32 %v5579, 1.442695
  %v5606 = vpow.pop %v5605
  %v5607 = vmul.f32 %v5580, 1.442695
  %v5608 = vpow.pop %v5607
  %v5609 = vmul.f32 %v5581, 1.442695
  %v5610 = vpow.pop %v5609
  %v5611 = vmul.f32 %v5582, 1.442695
  %v5612 = vpow.pop %v5611
  %v5613 = vmul.f32 %v5583, 1.442695
  %v5614 = vpow.pop %v5613
  %v5615 = vmul.f32 %v5584, 1.442695
  %v5616 = vpow.pop %v5615
  %v5617 = vmul.f32 %v5585, 1.442695
  %v5618 = vpow.pop %v5617
  %v5619 = vmul.f32 %v5586, 1.442695
  %v5620 = vpow.pop %v5619
  %v5621 = vmul.f32 %v5587, 1.442695
  %v5622 = vpow.pop %v5621
  %v5623 = vmul.f32 %v5588, 1.442695
  %v5624 = vpow.pop %v5623
  %v5625 = vmul.f32 %v5589, 1.442695
  %v5626 = vpow.pop %v5625
  %v5627 = vmul.f32 %v5590, 1.442695
  %v5628 = vpow.pop %v5627
  %v5629 = vmul.f32 %v5591, 1.442695
  %v5630 = vpow.pop %v5629
  %v5631 = vmul.f32 %v5592, 1.442695
  %v5632 = vpow.pop %v5631
  %v5633 = vmul.f32 %v5593, 1.442695
  %v5634 = vpow.pop %v5633
  %v5635 = vmul.f32 %v5594, 1.442695
  %v5636 = vpow.pop %v5635
  %v5637 = vmul.f32 %v5595, 1.442695
  %v5638 = vpow.pop %v5637
  %v5639 = vmul.f32 %v5596, 1.442695
  %v5640 = vpow.pop %v5639
  %v5641 = vmul.f32 %v5597, 1.442695
  %v5642 = vpow.pop %v5641
  %v5643 = vmul.f32 %v5598, 1.442695
  %v5644 = vpow.pop %v5643
  %v5645 = vmul.f32 %v5599, 1.442695
  %v5646 = vpow.pop %v5645
  %v5647 = vmul.f32 %v5600, 1.442695
  %v5648 = vpow.pop %v5647
  %v5649 = vsel %vm1828, %v5602, 0.0
  %5650 = vadd.xlane.f32.xlu0 %v5649
  %v5651 = vpop.xlane.xlu0 %5650
  %v5652 = vsel %vm1828, %v5604, 0.0
  %5653 = vadd.xlane.f32.xlu0 %v5652
  %v5654 = vpop.xlane.xlu0 %5653
  %v5655 = vsel %vm1835, %v5606, 0.0
  %5656 = vadd.xlane.f32.xlu0 %v5655
  %v5657 = vpop.xlane.xlu0 %5656
  %v5658 = vsel %vm1828, %v5608, 0.0
  %5659 = vadd.xlane.f32.xlu0 %v5658
  %v5660 = vpop.xlane.xlu0 %5659
  %v5661 = vsel %vm1828, %v5610, 0.0
  %5662 = vadd.xlane.f32.xlu0 %v5661
  %v5663 = vpop.xlane.xlu0 %5662
  %v5664 = vsel %vm1835, %v5612, 0.0
  %5665 = vadd.xlane.f32.xlu0 %v5664
  %v5666 = vpop.xlane.xlu0 %5665
  %v5667 = vsel %vm1828, %v5614, 0.0
  %5668 = vadd.xlane.f32.xlu0 %v5667
  %v5669 = vpop.xlane.xlu0 %5668
  %v5670 = vsel %vm1828, %v5616, 0.0
  %5671 = vadd.xlane.f32.xlu0 %v5670
  %v5672 = vpop.xlane.xlu0 %5671
  %v5673 = vsel %vm1835, %v5618, 0.0
  %5674 = vadd.xlane.f32.xlu0 %v5673
  %v5675 = vpop.xlane.xlu0 %5674
  %v5676 = vsel %vm1828, %v5620, 0.0
  %5677 = vadd.xlane.f32.xlu0 %v5676
  %v5678 = vpop.xlane.xlu0 %5677
  %v5679 = vsel %vm1828, %v5622, 0.0
  %5680 = vadd.xlane.f32.xlu0 %v5679
  %v5681 = vpop.xlane.xlu0 %5680
  %v5682 = vsel %vm1835, %v5624, 0.0
  %5683 = vadd.xlane.f32.xlu0 %v5682
  %v5684 = vpop.xlane.xlu0 %5683
  %v5685 = vsel %vm1828, %v5626, 0.0
  %5686 = vadd.xlane.f32.xlu0 %v5685
  %v5687 = vpop.xlane.xlu0 %5686
  %v5688 = vsel %vm1828, %v5628, 0.0
  %5689 = vadd.xlane.f32.xlu0 %v5688
  %v5690 = vpop.xlane.xlu0 %5689
  %v5691 = vsel %vm1835, %v5630, 0.0
  %5692 = vadd.xlane.f32.xlu0 %v5691
  %v5693 = vpop.xlane.xlu0 %5692
  %v5694 = vsel %vm1828, %v5632, 0.0
  %5695 = vadd.xlane.f32.xlu0 %v5694
  %v5696 = vpop.xlane.xlu0 %5695
  %v5697 = vsel %vm1828, %v5634, 0.0
  %5698 = vadd.xlane.f32.xlu0 %v5697
  %v5699 = vpop.xlane.xlu0 %5698
  %v5700 = vsel %vm1835, %v5636, 0.0
  %5701 = vadd.xlane.f32.xlu0 %v5700
  %v5702 = vpop.xlane.xlu0 %5701
  %v5703 = vsel %vm1828, %v5638, 0.0
  %5704 = vadd.xlane.f32.xlu0 %v5703
  %v5705 = vpop.xlane.xlu0 %5704
  %v5706 = vsel %vm1828, %v5640, 0.0
  %5707 = vadd.xlane.f32.xlu0 %v5706
  %v5708 = vpop.xlane.xlu0 %5707
  %v5709 = vsel %vm1835, %v5642, 0.0
  %5710 = vadd.xlane.f32.xlu0 %v5709
  %v5711 = vpop.xlane.xlu0 %5710
  %v5712 = vsel %vm1828, %v5644, 0.0
  %5713 = vadd.xlane.f32.xlu0 %v5712
  %v5714 = vpop.xlane.xlu0 %5713
  %v5715 = vsel %vm1828, %v5646, 0.0
  %5716 = vadd.xlane.f32.xlu0 %v5715
  %v5717 = vpop.xlane.xlu0 %5716
  %v5718 = vsel %vm1835, %v5648, 0.0
  %5719 = vadd.xlane.f32.xlu0 %v5718
  %v5720 = vpop.xlane.xlu0 %5719
  %v5721 = vrcp.pop %v5651
  %v5722 = vmul.f32 %v5651, %v5721
  %v5723 = vsub.f32 1.0, %v5722
  %v5724 = vmul.f32 %v5721, %v5723
  %v5725 = vadd.f32 %v5721, %v5724
  %vm5726 = vweird.f32 %v5651
  %vm5727 = vweird.f32 %v5721
  %vm5728 = vmor %vm5726, %vm5727
  %v5729 = vsel %vm5728, %v5721, %v5725
  %v5730 = vand.u32 2147483647, %v5651
  %vm5731 = vcmp.eq.f32.partialorder %v5730, 8.507059e+37
  %v5732 = vand.u32 %v5651, 2147483648
  %v5733 = vor.u32 1.1754944e-38, %v5732
  %v5734 = vsel %vm5731, %v5733, %v5729
  %v5735 = vmul.f32 %v5602, %v5734
  %v5736 = vrcp.pop %v5654
  %v5737 = vmul.f32 %v5654, %v5736
  %v5738 = vsub.f32 1.0, %v5737
  %v5739 = vmul.f32 %v5736, %v5738
  %v5740 = vadd.f32 %v5736, %v5739
  %vm5741 = vweird.f32 %v5654
  %vm5742 = vweird.f32 %v5736
  %vm5743 = vmor %vm5741, %vm5742
  %v5744 = vsel %vm5743, %v5736, %v5740
  %v5745 = vand.u32 2147483647, %v5654
  %vm5746 = vcmp.eq.f32.partialorder %v5745, 8.507059e+37
  %v5747 = vand.u32 %v5654, 2147483648
  %v5748 = vor.u32 1.1754944e-38, %v5747
  %v5749 = vsel %vm5746, %v5748, %v5744
  %v5750 = vmul.f32 %v5604, %v5749
  %v5751 = vrcp.pop %v5657
  %v5752 = vmul.f32 %v5657, %v5751
  %v5753 = vsub.f32 1.0, %v5752
  %v5754 = vmul.f32 %v5751, %v5753
  %v5755 = vadd.f32 %v5751, %v5754
  %vm5756 = vweird.f32 %v5657
  %vm5757 = vweird.f32 %v5751
  %vm5758 = vmor %vm5756, %vm5757
  %v5759 = vsel %vm5758, %v5751, %v5755
  %v5760 = vand.u32 2147483647, %v5657
  %vm5761 = vcmp.eq.f32.partialorder %v5760, 8.507059e+37
  %v5762 = vand.u32 %v5657, 2147483648
  %v5763 = vor.u32 1.1754944e-38, %v5762
  %v5764 = vsel %vm5761, %v5763, %v5759
  %v5765 = vmul.f32 %v5606, %v5764
  %v5766 = vrcp.pop %v5660
  %v5767 = vmul.f32 %v5660, %v5766
  %v5768 = vsub.f32 1.0, %v5767
  %v5769 = vmul.f32 %v5766, %v5768
  %v5770 = vadd.f32 %v5766, %v5769
  %vm5771 = vweird.f32 %v5660
  %vm5772 = vweird.f32 %v5766
  %vm5773 = vmor %vm5771, %vm5772
  %v5774 = vsel %vm5773, %v5766, %v5770
  %v5775 = vand.u32 2147483647, %v5660
  %vm5776 = vcmp.eq.f32.partialorder %v5775, 8.507059e+37
  %v5777 = vand.u32 %v5660, 2147483648
  %v5778 = vor.u32 1.1754944e-38, %v5777
  %v5779 = vsel %vm5776, %v5778, %v5774
  %v5780 = vmul.f32 %v5608, %v5779
  %v5781 = vrcp.pop %v5663
  %v5782 = vmul.f32 %v5663, %v5781
  %v5783 = vsub.f32 1.0, %v5782
  %v5784 = vmul.f32 %v5781, %v5783
  %v5785 = vadd.f32 %v5781, %v5784
  %vm5786 = vweird.f32 %v5663
  %vm5787 = vweird.f32 %v5781
  %vm5788 = vmor %vm5786, %vm5787
  %v5789 = vsel %vm5788, %v5781, %v5785
  %v5790 = vand.u32 2147483647, %v5663
  %vm5791 = vcmp.eq.f32.partialorder %v5790, 8.507059e+37
  %v5792 = vand.u32 %v5663, 2147483648
  %v5793 = vor.u32 1.1754944e-38, %v5792
  %v5794 = vsel %vm5791, %v5793, %v5789
  %v5795 = vmul.f32 %v5610, %v5794
  %v5796 = vrcp.pop %v5666
  %v5797 = vmul.f32 %v5666, %v5796
  %v5798 = vsub.f32 1.0, %v5797
  %v5799 = vmul.f32 %v5796, %v5798
  %v5800 = vadd.f32 %v5796, %v5799
  %vm5801 = vweird.f32 %v5666
  %vm5802 = vweird.f32 %v5796
  %vm5803 = vmor %vm5801, %vm5802
  %v5804 = vsel %vm5803, %v5796, %v5800
  %v5805 = vand.u32 2147483647, %v5666
  %vm5806 = vcmp.eq.f32.partialorder %v5805, 8.507059e+37
  %v5807 = vand.u32 %v5666, 2147483648
  %v5808 = vor.u32 1.1754944e-38, %v5807
  %v5809 = vsel %vm5806, %v5808, %v5804
  %v5810 = vmul.f32 %v5612, %v5809
  %v5811 = vrcp.pop %v5669
  %v5812 = vmul.f32 %v5669, %v5811
  %v5813 = vsub.f32 1.0, %v5812
  %v5814 = vmul.f32 %v5811, %v5813
  %v5815 = vadd.f32 %v5811, %v5814
  %vm5816 = vweird.f32 %v5669
  %vm5817 = vweird.f32 %v5811
  %vm5818 = vmor %vm5816, %vm5817
  %v5819 = vsel %vm5818, %v5811, %v5815
  %v5820 = vand.u32 2147483647, %v5669
  %vm5821 = vcmp.eq.f32.partialorder %v5820, 8.507059e+37
  %v5822 = vand.u32 %v5669, 2147483648
  %v5823 = vor.u32 1.1754944e-38, %v5822
  %v5824 = vsel %vm5821, %v5823, %v5819
  %v5825 = vmul.f32 %v5614, %v5824
  %v5826 = vrcp.pop %v5672
  %v5827 = vmul.f32 %v5672, %v5826
  %v5828 = vsub.f32 1.0, %v5827
  %v5829 = vmul.f32 %v5826, %v5828
  %v5830 = vadd.f32 %v5826, %v5829
  %vm5831 = vweird.f32 %v5672
  %vm5832 = vweird.f32 %v5826
  %vm5833 = vmor %vm5831, %vm5832
  %v5834 = vsel %vm5833, %v5826, %v5830
  %v5835 = vand.u32 2147483647, %v5672
  %vm5836 = vcmp.eq.f32.partialorder %v5835, 8.507059e+37
  %v5837 = vand.u32 %v5672, 2147483648
  %v5838 = vor.u32 1.1754944e-38, %v5837
  %v5839 = vsel %vm5836, %v5838, %v5834
  %v5840 = vmul.f32 %v5616, %v5839
  %v5841 = vrcp.pop %v5675
  %v5842 = vmul.f32 %v5675, %v5841
  %v5843 = vsub.f32 1.0, %v5842
  %v5844 = vmul.f32 %v5841, %v5843
  %v5845 = vadd.f32 %v5841, %v5844
  %vm5846 = vweird.f32 %v5675
  %vm5847 = vweird.f32 %v5841
  %vm5848 = vmor %vm5846, %vm5847
  %v5849 = vsel %vm5848, %v5841, %v5845
  %v5850 = vand.u32 2147483647, %v5675
  %vm5851 = vcmp.eq.f32.partialorder %v5850, 8.507059e+37
  %v5852 = vand.u32 %v5675, 2147483648
  %v5853 = vor.u32 1.1754944e-38, %v5852
  %v5854 = vsel %vm5851, %v5853, %v5849
  %v5855 = vmul.f32 %v5618, %v5854
  %v5856 = vrcp.pop %v5678
  %v5857 = vmul.f32 %v5678, %v5856
  %v5858 = vsub.f32 1.0, %v5857
  %v5859 = vmul.f32 %v5856, %v5858
  %v5860 = vadd.f32 %v5856, %v5859
  %vm5861 = vweird.f32 %v5678
  %vm5862 = vweird.f32 %v5856
  %vm5863 = vmor %vm5861, %vm5862
  %v5864 = vsel %vm5863, %v5856, %v5860
  %v5865 = vand.u32 2147483647, %v5678
  %vm5866 = vcmp.eq.f32.partialorder %v5865, 8.507059e+37
  %v5867 = vand.u32 %v5678, 2147483648
  %v5868 = vor.u32 1.1754944e-38, %v5867
  %v5869 = vsel %vm5866, %v5868, %v5864
  %v5870 = vmul.f32 %v5620, %v5869
  %v5871 = vrcp.pop %v5681
  %v5872 = vmul.f32 %v5681, %v5871
  %v5873 = vsub.f32 1.0, %v5872
  %v5874 = vmul.f32 %v5871, %v5873
  %v5875 = vadd.f32 %v5871, %v5874
  %vm5876 = vweird.f32 %v5681
  %vm5877 = vweird.f32 %v5871
  %vm5878 = vmor %vm5876, %vm5877
  %v5879 = vsel %vm5878, %v5871, %v5875
  %v5880 = vand.u32 2147483647, %v5681
  %vm5881 = vcmp.eq.f32.partialorder %v5880, 8.507059e+37
  %v5882 = vand.u32 %v5681, 2147483648
  %v5883 = vor.u32 1.1754944e-38, %v5882
  %v5884 = vsel %vm5881, %v5883, %v5879
  %v5885 = vmul.f32 %v5622, %v5884
  %v5886 = vrcp.pop %v5684
  %v5887 = vmul.f32 %v5684, %v5886
  %v5888 = vsub.f32 1.0, %v5887
  %v5889 = vmul.f32 %v5886, %v5888
  %v5890 = vadd.f32 %v5886, %v5889
  %vm5891 = vweird.f32 %v5684
  %vm5892 = vweird.f32 %v5886
  %vm5893 = vmor %vm5891, %vm5892
  %v5894 = vsel %vm5893, %v5886, %v5890
  %v5895 = vand.u32 2147483647, %v5684
  %vm5896 = vcmp.eq.f32.partialorder %v5895, 8.507059e+37
  %v5897 = vand.u32 %v5684, 2147483648
  %v5898 = vor.u32 1.1754944e-38, %v5897
  %v5899 = vsel %vm5896, %v5898, %v5894
  %v5900 = vmul.f32 %v5624, %v5899
  %v5901 = vrcp.pop %v5687
  %v5902 = vmul.f32 %v5687, %v5901
  %v5903 = vsub.f32 1.0, %v5902
  %v5904 = vmul.f32 %v5901, %v5903
  %v5905 = vadd.f32 %v5901, %v5904
  %vm5906 = vweird.f32 %v5687
  %vm5907 = vweird.f32 %v5901
  %vm5908 = vmor %vm5906, %vm5907
  %v5909 = vsel %vm5908, %v5901, %v5905
  %v5910 = vand.u32 2147483647, %v5687
  %vm5911 = vcmp.eq.f32.partialorder %v5910, 8.507059e+37
  %v5912 = vand.u32 %v5687, 2147483648
  %v5913 = vor.u32 1.1754944e-38, %v5912
  %v5914 = vsel %vm5911, %v5913, %v5909
  %v5915 = vmul.f32 %v5626, %v5914
  %v5916 = vrcp.pop %v5690
  %v5917 = vmul.f32 %v5690, %v5916
  %v5918 = vsub.f32 1.0, %v5917
  %v5919 = vmul.f32 %v5916, %v5918
  %v5920 = vadd.f32 %v5916, %v5919
  %vm5921 = vweird.f32 %v5690
  %vm5922 = vweird.f32 %v5916
  %vm5923 = vmor %vm5921, %vm5922
  %v5924 = vsel %vm5923, %v5916, %v5920
  %v5925 = vand.u32 2147483647, %v5690
  %vm5926 = vcmp.eq.f32.partialorder %v5925, 8.507059e+37
  %v5927 = vand.u32 %v5690, 2147483648
  %v5928 = vor.u32 1.1754944e-38, %v5927
  %v5929 = vsel %vm5926, %v5928, %v5924
  %v5930 = vmul.f32 %v5628, %v5929
  %v5931 = vrcp.pop %v5693
  %v5932 = vmul.f32 %v5693, %v5931
  %v5933 = vsub.f32 1.0, %v5932
  %v5934 = vmul.f32 %v5931, %v5933
  %v5935 = vadd.f32 %v5931, %v5934
  %vm5936 = vweird.f32 %v5693
  %vm5937 = vweird.f32 %v5931
  %vm5938 = vmor %vm5936, %vm5937
  %v5939 = vsel %vm5938, %v5931, %v5935
  %v5940 = vand.u32 2147483647, %v5693
  %vm5941 = vcmp.eq.f32.partialorder %v5940, 8.507059e+37
  %v5942 = vand.u32 %v5693, 2147483648
  %v5943 = vor.u32 1.1754944e-38, %v5942
  %v5944 = vsel %vm5941, %v5943, %v5939
  %v5945 = vmul.f32 %v5630, %v5944
  %v5946 = vrcp.pop %v5696
  %v5947 = vmul.f32 %v5696, %v5946
  %v5948 = vsub.f32 1.0, %v5947
  %v5949 = vmul.f32 %v5946, %v5948
  %v5950 = vadd.f32 %v5946, %v5949
  %vm5951 = vweird.f32 %v5696
  %vm5952 = vweird.f32 %v5946
  %vm5953 = vmor %vm5951, %vm5952
  %v5954 = vsel %vm5953, %v5946, %v5950
  %v5955 = vand.u32 2147483647, %v5696
  %vm5956 = vcmp.eq.f32.partialorder %v5955, 8.507059e+37
  %v5957 = vand.u32 %v5696, 2147483648
  %v5958 = vor.u32 1.1754944e-38, %v5957
  %v5959 = vsel %vm5956, %v5958, %v5954
  %v5960 = vmul.f32 %v5632, %v5959
  %v5961 = vrcp.pop %v5699
  %v5962 = vmul.f32 %v5699, %v5961
  %v5963 = vsub.f32 1.0, %v5962
  %v5964 = vmul.f32 %v5961, %v5963
  %v5965 = vadd.f32 %v5961, %v5964
  %vm5966 = vweird.f32 %v5699
  %vm5967 = vweird.f32 %v5961
  %vm5968 = vmor %vm5966, %vm5967
  %v5969 = vsel %vm5968, %v5961, %v5965
  %v5970 = vand.u32 2147483647, %v5699
  %vm5971 = vcmp.eq.f32.partialorder %v5970, 8.507059e+37
  %v5972 = vand.u32 %v5699, 2147483648
  %v5973 = vor.u32 1.1754944e-38, %v5972
  %v5974 = vsel %vm5971, %v5973, %v5969
  %v5975 = vmul.f32 %v5634, %v5974
  %v5976 = vrcp.pop %v5702
  %v5977 = vmul.f32 %v5702, %v5976
  %v5978 = vsub.f32 1.0, %v5977
  %v5979 = vmul.f32 %v5976, %v5978
  %v5980 = vadd.f32 %v5976, %v5979
  %vm5981 = vweird.f32 %v5702
  %vm5982 = vweird.f32 %v5976
  %vm5983 = vmor %vm5981, %vm5982
  %v5984 = vsel %vm5983, %v5976, %v5980
  %v5985 = vand.u32 2147483647, %v5702
  %vm5986 = vcmp.eq.f32.partialorder %v5985, 8.507059e+37
  %v5987 = vand.u32 %v5702, 2147483648
  %v5988 = vor.u32 1.1754944e-38, %v5987
  %v5989 = vsel %vm5986, %v5988, %v5984
  %v5990 = vmul.f32 %v5636, %v5989
  %v5991 = vrcp.pop %v5705
  %v5992 = vmul.f32 %v5705, %v5991
  %v5993 = vsub.f32 1.0, %v5992
  %v5994 = vmul.f32 %v5991, %v5993
  %v5995 = vadd.f32 %v5991, %v5994
  %vm5996 = vweird.f32 %v5705
  %vm5997 = vweird.f32 %v5991
  %vm5998 = vmor %vm5996, %vm5997
  %v5999 = vsel %vm5998, %v5991, %v5995
  %v6000 = vand.u32 2147483647, %v5705
  %vm6001 = vcmp.eq.f32.partialorder %v6000, 8.507059e+37
  %v6002 = vand.u32 %v5705, 2147483648
  %v6003 = vor.u32 1.1754944e-38, %v6002
  %v6004 = vsel %vm6001, %v6003, %v5999
  %v6005 = vmul.f32 %v5638, %v6004
  %v6006 = vrcp.pop %v5708
  %v6007 = vmul.f32 %v5708, %v6006
  %v6008 = vsub.f32 1.0, %v6007
  %v6009 = vmul.f32 %v6006, %v6008
  %v6010 = vadd.f32 %v6006, %v6009
  %vm6011 = vweird.f32 %v5708
  %vm6012 = vweird.f32 %v6006
  %vm6013 = vmor %vm6011, %vm6012
  %v6014 = vsel %vm6013, %v6006, %v6010
  %v6015 = vand.u32 2147483647, %v5708
  %vm6016 = vcmp.eq.f32.partialorder %v6015, 8.507059e+37
  %v6017 = vand.u32 %v5708, 2147483648
  %v6018 = vor.u32 1.1754944e-38, %v6017
  %v6019 = vsel %vm6016, %v6018, %v6014
  %v6020 = vmul.f32 %v5640, %v6019
  %v6021 = vrcp.pop %v5711
  %v6022 = vmul.f32 %v5711, %v6021
  %v6023 = vsub.f32 1.0, %v6022
  %v6024 = vmul.f32 %v6021, %v6023
  %v6025 = vadd.f32 %v6021, %v6024
  %vm6026 = vweird.f32 %v5711
  %vm6027 = vweird.f32 %v6021
  %vm6028 = vmor %vm6026, %vm6027
  %v6029 = vsel %vm6028, %v6021, %v6025
  %v6030 = vand.u32 2147483647, %v5711
  %vm6031 = vcmp.eq.f32.partialorder %v6030, 8.507059e+37
  %v6032 = vand.u32 %v5711, 2147483648
  %v6033 = vor.u32 1.1754944e-38, %v6032
  %v6034 = vsel %vm6031, %v6033, %v6029
  %v6035 = vmul.f32 %v5642, %v6034
  %v6036 = vrcp.pop %v5714
  %v6037 = vmul.f32 %v5714, %v6036
  %v6038 = vsub.f32 1.0, %v6037
  %v6039 = vmul.f32 %v6036, %v6038
  %v6040 = vadd.f32 %v6036, %v6039
  %vm6041 = vweird.f32 %v5714
  %vm6042 = vweird.f32 %v6036
  %vm6043 = vmor %vm6041, %vm6042
  %v6044 = vsel %vm6043, %v6036, %v6040
  %v6045 = vand.u32 2147483647, %v5714
  %vm6046 = vcmp.eq.f32.partialorder %v6045, 8.507059e+37
  %v6047 = vand.u32 %v5714, 2147483648
  %v6048 = vor.u32 1.1754944e-38, %v6047
  %v6049 = vsel %vm6046, %v6048, %v6044
  %v6050 = vmul.f32 %v5644, %v6049
  %v6051 = vrcp.pop %v5717
  %v6052 = vmul.f32 %v5717, %v6051
  %v6053 = vsub.f32 1.0, %v6052
  %v6054 = vmul.f32 %v6051, %v6053
  %v6055 = vadd.f32 %v6051, %v6054
  %vm6056 = vweird.f32 %v5717
  %vm6057 = vweird.f32 %v6051
  %vm6058 = vmor %vm6056, %vm6057
  %v6059 = vsel %vm6058, %v6051, %v6055
  %v6060 = vand.u32 2147483647, %v5717
  %vm6061 = vcmp.eq.f32.partialorder %v6060, 8.507059e+37
  %v6062 = vand.u32 %v5717, 2147483648
  %v6063 = vor.u32 1.1754944e-38, %v6062
  %v6064 = vsel %vm6061, %v6063, %v6059
  %v6065 = vmul.f32 %v5646, %v6064
  %v6066 = vrcp.pop %v5720
  %v6067 = vmul.f32 %v5720, %v6066
  %v6068 = vsub.f32 1.0, %v6067
  %v6069 = vmul.f32 %v6066, %v6068
  %v6070 = vadd.f32 %v6066, %v6069
  %vm6071 = vweird.f32 %v5720
  %vm6072 = vweird.f32 %v6066
  %vm6073 = vmor %vm6071, %vm6072
  %v6074 = vsel %vm6073, %v6066, %v6070
  %v6075 = vand.u32 2147483647, %v5720
  %vm6076 = vcmp.eq.f32.partialorder %v6075, 8.507059e+37
  %v6077 = vand.u32 %v5720, 2147483648
  %v6078 = vor.u32 1.1754944e-38, %v6077
  %v6079 = vsel %vm6076, %v6078, %v6074
  %v6080 = vmul.f32 %v5648, %v6079
  %v6081 = vpack.c.bf16 %v5735, %v5735
  %v6082 = vpack.c.bf16 %v5750, %v5750
  %v6083 = vpack.c.bf16 %v5765, %v5765
  %v6084 = vpack.c.bf16 %v5780, %v5780
  %v6085 = vpack.c.bf16 %v5795, %v5795
  %v6086 = vpack.c.bf16 %v5810, %v5810
  %v6087 = vpack.c.bf16 %v5825, %v5825
  %v6088 = vpack.c.bf16 %v5840, %v5840
  %v6089 = vpack.c.bf16 %v5855, %v5855
  %v6090 = vpack.c.bf16 %v5870, %v5870
  %v6091 = vpack.c.bf16 %v5885, %v5885
  %v6092 = vpack.c.bf16 %v5900, %v5900
  %v6093 = vpack.c.bf16 %v5915, %v5915
  %v6094 = vpack.c.bf16 %v5930, %v5930
  %v6095 = vpack.c.bf16 %v5945, %v5945
  %v6096 = vpack.c.bf16 %v5960, %v5960
  %v6097 = vpack.c.bf16 %v5975, %v5975
  %v6098 = vpack.c.bf16 %v5990, %v5990
  %v6099 = vpack.c.bf16 %v6005, %v6005
  %v6100 = vpack.c.bf16 %v6020, %v6020
  %v6101 = vpack.c.bf16 %v6035, %v6035
  %v6102 = vpack.c.bf16 %v6050, %v6050
  %v6103 = vpack.c.bf16 %v6065, %v6065
  %v6104 = vpack.c.bf16 %v6080, %v6080
  %v6108 = vunpack.c.l.b16 %v6081
  %v6109 = vunpack.c.l.b16 %v6082
  %v6110 = vunpack.c.l.b16 %v6083
  %v6111 = vpack.c.b16 %v6109, %v6108
  %v6112 = vpack.c.b16 %v6110, %v6110
  %6113 = vrot.lane.b32.xlu0 %v986, 40
  %v6114 = vpop.permute.xlu0 %6113
  %6115 = vrot.lane.b32.xlu0 %v987, 40
  %v6116 = vpop.permute.xlu0 %6115
  %v6119 = vsel %vm1828, %v6111, 0
  %v6122 = vsel %vm1828, %v6112, 0
  %v6125 = vand.u32 %v6116, %v2451
  %6127 = vmatpush.bf16.msra.mxu0 0
  %6128 = vmatpush.bf16.msra.mxu0 0
  %6129 = vmatpush.bf16.msra.mxu0 0
  %6130 = vmatpush.bf16.msra.mxu0 0
  %6131 = vmatpush.bf16.msra.mxu0 0
  %6132 = vmatpush.bf16.msra.mxu0 0
  %6133 = vmatpush.bf16.msra.mxu0 %v6125
  %6134 = vmatpush.bf16.msra.mxu0 %v6114
  %6135 = vmatmul.bf16.gmra.mxu0 %v6119
  %v6136 = vpop.f32.mrf.mxu0
  %v6137 = vadd.f32 0.0, %v6136
  %v6138 = vpop.f32.mrf.mxu0
  %v6139 = vadd.f32 0.0, %v6138
  %6140 = vmatmul.bf16.gmra.mxu0 %v6122
  %v6141 = vpop.f32.mrf.mxu0
  %v6142 = vadd.f32 0.0, %v6141
  %v6143 = vpop.f32.mrf.mxu0
  %6144 = vdwg.mxu0
  %v6148 = vunpack.c.l.b16 %v6084
  %v6149 = vunpack.c.l.b16 %v6085
  %v6150 = vunpack.c.l.b16 %v6086
  %v6151 = vpack.c.b16 %v6149, %v6148
  %v6152 = vpack.c.b16 %v6150, %v6150
  %6153 = vrot.lane.b32.xlu0 %v1102, 40
  %v6154 = vpop.permute.xlu0 %6153
  %6155 = vrot.lane.b32.xlu0 %v1103, 40
  %v6156 = vpop.permute.xlu0 %6155
  %v6159 = vsel %vm1828, %v6151, 0
  %v6162 = vsel %vm1828, %v6152, 0
  %v6165 = vand.u32 %v6156, %v2451
  %6167 = vmatpush.bf16.msra.mxu0 0
  %6168 = vmatpush.bf16.msra.mxu0 0
  %6169 = vmatpush.bf16.msra.mxu0 0
  %6170 = vmatpush.bf16.msra.mxu0 0
  %6171 = vmatpush.bf16.msra.mxu0 0
  %6172 = vmatpush.bf16.msra.mxu0 0
  %6173 = vmatpush.bf16.msra.mxu0 %v6165
  %6174 = vmatpush.bf16.msra.mxu0 %v6154
  %6175 = vmatmul.bf16.gmra.mxu0 %v6159
  %v6176 = vpop.f32.mrf.mxu0
  %v6177 = vadd.f32 0.0, %v6176
  %v6178 = vpop.f32.mrf.mxu0
  %v6179 = vadd.f32 0.0, %v6178
  %6180 = vmatmul.bf16.gmra.mxu0 %v6162
  %v6181 = vpop.f32.mrf.mxu0
  %v6182 = vadd.f32 0.0, %v6181
  %v6183 = vpop.f32.mrf.mxu0
  %6184 = vdwg.mxu0
  %v6188 = vunpack.c.l.b16 %v6087
  %v6189 = vunpack.c.l.b16 %v6088
  %v6190 = vunpack.c.l.b16 %v6089
  %v6191 = vpack.c.b16 %v6189, %v6188
  %v6192 = vpack.c.b16 %v6190, %v6190
  %6193 = vrot.lane.b32.xlu0 %v1217, 40
  %v6194 = vpop.permute.xlu0 %6193
  %6195 = vrot.lane.b32.xlu0 %v1218, 40
  %v6196 = vpop.permute.xlu0 %6195
  %v6199 = vsel %vm1828, %v6191, 0
  %v6202 = vsel %vm1828, %v6192, 0
  %v6205 = vand.u32 %v6196, %v2451
  %6207 = vmatpush.bf16.msra.mxu0 0
  %6208 = vmatpush.bf16.msra.mxu0 0
  %6209 = vmatpush.bf16.msra.mxu0 0
  %6210 = vmatpush.bf16.msra.mxu0 0
  %6211 = vmatpush.bf16.msra.mxu0 0
  %6212 = vmatpush.bf16.msra.mxu0 0
  %6213 = vmatpush.bf16.msra.mxu0 %v6205
  %6214 = vmatpush.bf16.msra.mxu0 %v6194
  %6215 = vmatmul.bf16.gmra.mxu0 %v6199
  %v6216 = vpop.f32.mrf.mxu0
  %v6217 = vadd.f32 0.0, %v6216
  %v6218 = vpop.f32.mrf.mxu0
  %v6219 = vadd.f32 0.0, %v6218
  %6220 = vmatmul.bf16.gmra.mxu0 %v6202
  %v6221 = vpop.f32.mrf.mxu0
  %v6222 = vadd.f32 0.0, %v6221
  %v6223 = vpop.f32.mrf.mxu0
  %6224 = vdwg.mxu0
  %v6228 = vunpack.c.l.b16 %v6090
  %v6229 = vunpack.c.l.b16 %v6091
  %v6230 = vunpack.c.l.b16 %v6092
  %v6231 = vpack.c.b16 %v6229, %v6228
  %v6232 = vpack.c.b16 %v6230, %v6230
  %6233 = vrot.lane.b32.xlu0 %v1332, 40
  %v6234 = vpop.permute.xlu0 %6233
  %6235 = vrot.lane.b32.xlu0 %v1333, 40
  %v6236 = vpop.permute.xlu0 %6235
  %v6239 = vsel %vm1828, %v6231, 0
  %v6242 = vsel %vm1828, %v6232, 0
  %v6245 = vand.u32 %v6236, %v2451
  %6247 = vmatpush.bf16.msra.mxu0 0
  %6248 = vmatpush.bf16.msra.mxu0 0
  %6249 = vmatpush.bf16.msra.mxu0 0
  %6250 = vmatpush.bf16.msra.mxu0 0
  %6251 = vmatpush.bf16.msra.mxu0 0
  %6252 = vmatpush.bf16.msra.mxu0 0
  %6253 = vmatpush.bf16.msra.mxu0 %v6245
  %6254 = vmatpush.bf16.msra.mxu0 %v6234
  %6255 = vmatmul.bf16.gmra.mxu0 %v6239
  %v6256 = vpop.f32.mrf.mxu0
  %v6257 = vadd.f32 0.0, %v6256
  %v6258 = vpop.f32.mrf.mxu0
  %v6259 = vadd.f32 0.0, %v6258
  %6260 = vmatmul.bf16.gmra.mxu0 %v6242
  %v6261 = vpop.f32.mrf.mxu0
  %v6262 = vadd.f32 0.0, %v6261
  %v6263 = vpop.f32.mrf.mxu0
  %6264 = vdwg.mxu0
  %v6268 = vunpack.c.l.b16 %v6093
  %v6269 = vunpack.c.l.b16 %v6094
  %v6270 = vunpack.c.l.b16 %v6095
  %v6271 = vpack.c.b16 %v6269, %v6268
  %v6272 = vpack.c.b16 %v6270, %v6270
  %6273 = vrot.lane.b32.xlu0 %v1447, 40
  %v6274 = vpop.permute.xlu0 %6273
  %6275 = vrot.lane.b32.xlu0 %v1448, 40
  %v6276 = vpop.permute.xlu0 %6275
  %v6279 = vsel %vm1828, %v6271, 0
  %v6282 = vsel %vm1828, %v6272, 0
  %v6285 = vand.u32 %v6276, %v2451
  %6287 = vmatpush.bf16.msra.mxu0 0
  %6288 = vmatpush.bf16.msra.mxu0 0
  %6289 = vmatpush.bf16.msra.mxu0 0
  %6290 = vmatpush.bf16.msra.mxu0 0
  %6291 = vmatpush.bf16.msra.mxu0 0
  %6292 = vmatpush.bf16.msra.mxu0 0
  %6293 = vmatpush.bf16.msra.mxu0 %v6285
  %6294 = vmatpush.bf16.msra.mxu0 %v6274
  %6295 = vmatmul.bf16.gmra.mxu0 %v6279
  %v6296 = vpop.f32.mrf.mxu0
  %v6297 = vadd.f32 0.0, %v6296
  %v6298 = vpop.f32.mrf.mxu0
  %v6299 = vadd.f32 0.0, %v6298
  %6300 = vmatmul.bf16.gmra.mxu0 %v6282
  %v6301 = vpop.f32.mrf.mxu0
  %v6302 = vadd.f32 0.0, %v6301
  %v6303 = vpop.f32.mrf.mxu0
  %6304 = vdwg.mxu0
  %v6308 = vunpack.c.l.b16 %v6096
  %v6309 = vunpack.c.l.b16 %v6097
  %v6310 = vunpack.c.l.b16 %v6098
  %v6311 = vpack.c.b16 %v6309, %v6308
  %v6312 = vpack.c.b16 %v6310, %v6310
  %6313 = vrot.lane.b32.xlu0 %v1562, 40
  %v6314 = vpop.permute.xlu0 %6313
  %6315 = vrot.lane.b32.xlu0 %v1563, 40
  %v6316 = vpop.permute.xlu0 %6315
  %v6319 = vsel %vm1828, %v6311, 0
  %v6322 = vsel %vm1828, %v6312, 0
  %v6325 = vand.u32 %v6316, %v2451
  %6327 = vmatpush.bf16.msra.mxu0 0
  %6328 = vmatpush.bf16.msra.mxu0 0
  %6329 = vmatpush.bf16.msra.mxu0 0
  %6330 = vmatpush.bf16.msra.mxu0 0
  %6331 = vmatpush.bf16.msra.mxu0 0
  %6332 = vmatpush.bf16.msra.mxu0 0
  %6333 = vmatpush.bf16.msra.mxu0 %v6325
  %6334 = vmatpush.bf16.msra.mxu0 %v6314
  %6335 = vmatmul.bf16.gmra.mxu0 %v6319
  %v6336 = vpop.f32.mrf.mxu0
  %v6337 = vadd.f32 0.0, %v6336
  %v6338 = vpop.f32.mrf.mxu0
  %v6339 = vadd.f32 0.0, %v6338
  %6340 = vmatmul.bf16.gmra.mxu0 %v6322
  %v6341 = vpop.f32.mrf.mxu0
  %v6342 = vadd.f32 0.0, %v6341
  %v6343 = vpop.f32.mrf.mxu0
  %6344 = vdwg.mxu0
  %v6348 = vunpack.c.l.b16 %v6099
  %v6349 = vunpack.c.l.b16 %v6100
  %v6350 = vunpack.c.l.b16 %v6101
  %v6351 = vpack.c.b16 %v6349, %v6348
  %v6352 = vpack.c.b16 %v6350, %v6350
  %6353 = vrot.lane.b32.xlu0 %v1677, 40
  %v6354 = vpop.permute.xlu0 %6353
  %6355 = vrot.lane.b32.xlu0 %v1678, 40
  %v6356 = vpop.permute.xlu0 %6355
  %v6359 = vsel %vm1828, %v6351, 0
  %v6362 = vsel %vm1828, %v6352, 0
  %v6365 = vand.u32 %v6356, %v2451
  %6367 = vmatpush.bf16.msra.mxu0 0
  %6368 = vmatpush.bf16.msra.mxu0 0
  %6369 = vmatpush.bf16.msra.mxu0 0
  %6370 = vmatpush.bf16.msra.mxu0 0
  %6371 = vmatpush.bf16.msra.mxu0 0
  %6372 = vmatpush.bf16.msra.mxu0 0
  %6373 = vmatpush.bf16.msra.mxu0 %v6365
  %6374 = vmatpush.bf16.msra.mxu0 %v6354
  %6375 = vmatmul.bf16.gmra.mxu0 %v6359
  %v6376 = vpop.f32.mrf.mxu0
  %v6377 = vadd.f32 0.0, %v6376
  %v6378 = vpop.f32.mrf.mxu0
  %v6379 = vadd.f32 0.0, %v6378
  %6380 = vmatmul.bf16.gmra.mxu0 %v6362
  %v6381 = vpop.f32.mrf.mxu0
  %v6382 = vadd.f32 0.0, %v6381
  %v6383 = vpop.f32.mrf.mxu0
  %6384 = vdwg.mxu0
  %v6388 = vunpack.c.l.b16 %v6102
  %v6389 = vunpack.c.l.b16 %v6103
  %v6390 = vunpack.c.l.b16 %v6104
  %v6391 = vpack.c.b16 %v6389, %v6388
  %v6392 = vpack.c.b16 %v6390, %v6390
  %6393 = vrot.lane.b32.xlu0 %v1792, 40
  %v6394 = vpop.permute.xlu0 %6393
  %6395 = vrot.lane.b32.xlu0 %v1793, 40
  %v6396 = vpop.permute.xlu0 %6395
  %v6399 = vsel %vm1828, %v6391, 0
  %v6402 = vsel %vm1828, %v6392, 0
  %v6405 = vand.u32 %v6396, %v2451
  %6407 = vmatpush.bf16.msra.mxu0 0
  %6408 = vmatpush.bf16.msra.mxu0 0
  %6409 = vmatpush.bf16.msra.mxu0 0
  %6410 = vmatpush.bf16.msra.mxu0 0
  %6411 = vmatpush.bf16.msra.mxu0 0
  %6412 = vmatpush.bf16.msra.mxu0 0
  %6413 = vmatpush.bf16.msra.mxu0 %v6405
  %6414 = vmatpush.bf16.msra.mxu0 %v6394
  %6415 = vmatmul.bf16.gmra.mxu0 %v6399
  %v6416 = vpop.f32.mrf.mxu0
  %v6417 = vadd.f32 0.0, %v6416
  %v6418 = vpop.f32.mrf.mxu0
  %v6419 = vadd.f32 0.0, %v6418
  %6420 = vmatmul.bf16.gmra.mxu0 %v6402
  %v6421 = vpop.f32.mrf.mxu0
  %v6422 = vadd.f32 0.0, %v6421
  %v6423 = vpop.f32.mrf.mxu0
  %6424 = vdwg.mxu0
  %6449 = vrot.lane.b32.xlu0 %v3689, 8
  %v6450 = vpop.permute.xlu0 %6449
  %6451 = vrot.lane.b32.xlu0 %v3691, 8
  %v6452 = vpop.permute.xlu0 %6451
  %6453 = vrot.lane.b32.xlu0 %v3694, 8
  %v6454 = vpop.permute.xlu0 %6453
  %6455 = vrot.lane.b32.xlu0 %v3729, 8
  %v6456 = vpop.permute.xlu0 %6455
  %6457 = vrot.lane.b32.xlu0 %v3731, 8
  %v6458 = vpop.permute.xlu0 %6457
  %6459 = vrot.lane.b32.xlu0 %v3734, 8
  %v6460 = vpop.permute.xlu0 %6459
  %6461 = vrot.lane.b32.xlu0 %v3769, 8
  %v6462 = vpop.permute.xlu0 %6461
  %6463 = vrot.lane.b32.xlu0 %v3771, 8
  %v6464 = vpop.permute.xlu0 %6463
  %6465 = vrot.lane.b32.xlu0 %v3774, 8
  %v6466 = vpop.permute.xlu0 %6465
  %6467 = vrot.lane.b32.xlu0 %v3809, 8
  %v6468 = vpop.permute.xlu0 %6467
  %6469 = vrot.lane.b32.xlu0 %v3811, 8
  %v6470 = vpop.permute.xlu0 %6469
  %6471 = vrot.lane.b32.xlu0 %v3814, 8
  %v6472 = vpop.permute.xlu0 %6471
  %6473 = vrot.lane.b32.xlu0 %v3849, 8
  %v6474 = vpop.permute.xlu0 %6473
  %6475 = vrot.lane.b32.xlu0 %v3851, 8
  %v6476 = vpop.permute.xlu0 %6475
  %6477 = vrot.lane.b32.xlu0 %v3854, 8
  %v6478 = vpop.permute.xlu0 %6477
  %6479 = vrot.lane.b32.xlu0 %v3889, 8
  %v6480 = vpop.permute.xlu0 %6479
  %6481 = vrot.lane.b32.xlu0 %v3891, 8
  %v6482 = vpop.permute.xlu0 %6481
  %6483 = vrot.lane.b32.xlu0 %v3894, 8
  %v6484 = vpop.permute.xlu0 %6483
  %6485 = vrot.lane.b32.xlu0 %v3929, 8
  %v6486 = vpop.permute.xlu0 %6485
  %6487 = vrot.lane.b32.xlu0 %v3931, 8
  %v6488 = vpop.permute.xlu0 %6487
  %6489 = vrot.lane.b32.xlu0 %v3934, 8
  %v6490 = vpop.permute.xlu0 %6489
  %6491 = vrot.lane.b32.xlu0 %v3969, 8
  %v6492 = vpop.permute.xlu0 %6491
  %6493 = vrot.lane.b32.xlu0 %v3971, 8
  %v6494 = vpop.permute.xlu0 %6493
  %6495 = vrot.lane.b32.xlu0 %v3974, 8
  %v6496 = vpop.permute.xlu0 %6495
  %6545 = vrot.lane.b32.xlu0 %v4913, 16
  %v6546 = vpop.permute.xlu0 %6545
  %6547 = vrot.lane.b32.xlu0 %v4915, 16
  %v6548 = vpop.permute.xlu0 %6547
  %6549 = vrot.lane.b32.xlu0 %v4918, 16
  %v6550 = vpop.permute.xlu0 %6549
  %6551 = vrot.lane.b32.xlu0 %v4953, 16
  %v6552 = vpop.permute.xlu0 %6551
  %6553 = vrot.lane.b32.xlu0 %v4955, 16
  %v6554 = vpop.permute.xlu0 %6553
  %6555 = vrot.lane.b32.xlu0 %v4958, 16
  %v6556 = vpop.permute.xlu0 %6555
  %6557 = vrot.lane.b32.xlu0 %v4993, 16
  %v6558 = vpop.permute.xlu0 %6557
  %6559 = vrot.lane.b32.xlu0 %v4995, 16
  %v6560 = vpop.permute.xlu0 %6559
  %6561 = vrot.lane.b32.xlu0 %v4998, 16
  %v6562 = vpop.permute.xlu0 %6561
  %6563 = vrot.lane.b32.xlu0 %v5033, 16
  %v6564 = vpop.permute.xlu0 %6563
  %6565 = vrot.lane.b32.xlu0 %v5035, 16
  %v6566 = vpop.permute.xlu0 %6565
  %6567 = vrot.lane.b32.xlu0 %v5038, 16
  %v6568 = vpop.permute.xlu0 %6567
  %6569 = vrot.lane.b32.xlu0 %v5073, 16
  %v6570 = vpop.permute.xlu0 %6569
  %6571 = vrot.lane.b32.xlu0 %v5075, 16
  %v6572 = vpop.permute.xlu0 %6571
  %6573 = vrot.lane.b32.xlu0 %v5078, 16
  %v6574 = vpop.permute.xlu0 %6573
  %6575 = vrot.lane.b32.xlu0 %v5113, 16
  %v6576 = vpop.permute.xlu0 %6575
  %6577 = vrot.lane.b32.xlu0 %v5115, 16
  %v6578 = vpop.permute.xlu0 %6577
  %6579 = vrot.lane.b32.xlu0 %v5118, 16
  %v6580 = vpop.permute.xlu0 %6579
  %6581 = vrot.lane.b32.xlu0 %v5153, 16
  %v6582 = vpop.permute.xlu0 %6581
  %6583 = vrot.lane.b32.xlu0 %v5155, 16
  %v6584 = vpop.permute.xlu0 %6583
  %6585 = vrot.lane.b32.xlu0 %v5158, 16
  %v6586 = vpop.permute.xlu0 %6585
  %6587 = vrot.lane.b32.xlu0 %v5193, 16
  %v6588 = vpop.permute.xlu0 %6587
  %6589 = vrot.lane.b32.xlu0 %v5195, 16
  %v6590 = vpop.permute.xlu0 %6589
  %6591 = vrot.lane.b32.xlu0 %v5198, 16
  %v6592 = vpop.permute.xlu0 %6591
  %6641 = vrot.lane.b32.xlu0 %v6137, 24
  %v6642 = vpop.permute.xlu0 %6641
  %6643 = vrot.lane.b32.xlu0 %v6139, 24
  %v6644 = vpop.permute.xlu0 %6643
  %6645 = vrot.lane.b32.xlu0 %v6142, 24
  %v6646 = vpop.permute.xlu0 %6645
  %6647 = vrot.lane.b32.xlu0 %v6177, 24
  %v6648 = vpop.permute.xlu0 %6647
  %6649 = vrot.lane.b32.xlu0 %v6179, 24
  %v6650 = vpop.permute.xlu0 %6649
  %6651 = vrot.lane.b32.xlu0 %v6182, 24
  %v6652 = vpop.permute.xlu0 %6651
  %6653 = vrot.lane.b32.xlu0 %v6217, 24
  %v6654 = vpop.permute.xlu0 %6653
  %6655 = vrot.lane.b32.xlu0 %v6219, 24
  %v6656 = vpop.permute.xlu0 %6655
  %6657 = vrot.lane.b32.xlu0 %v6222, 24
  %v6658 = vpop.permute.xlu0 %6657
  %6659 = vrot.lane.b32.xlu0 %v6257, 24
  %v6660 = vpop.permute.xlu0 %6659
  %6661 = vrot.lane.b32.xlu0 %v6259, 24
  %v6662 = vpop.permute.xlu0 %6661
  %6663 = vrot.lane.b32.xlu0 %v6262, 24
  %v6664 = vpop.permute.xlu0 %6663
  %6665 = vrot.lane.b32.xlu0 %v6297, 24
  %v6666 = vpop.permute.xlu0 %6665
  %6667 = vrot.lane.b32.xlu0 %v6299, 24
  %v6668 = vpop.permute.xlu0 %6667
  %6669 = vrot.lane.b32.xlu0 %v6302, 24
  %v6670 = vpop.permute.xlu0 %6669
  %6671 = vrot.lane.b32.xlu0 %v6337, 24
  %v6672 = vpop.permute.xlu0 %6671
  %6673 = vrot.lane.b32.xlu0 %v6339, 24
  %v6674 = vpop.permute.xlu0 %6673
  %6675 = vrot.lane.b32.xlu0 %v6342, 24
  %v6676 = vpop.permute.xlu0 %6675
  %6677 = vrot.lane.b32.xlu0 %v6377, 24
  %v6678 = vpop.permute.xlu0 %6677
  %6679 = vrot.lane.b32.xlu0 %v6379, 24
  %v6680 = vpop.permute.xlu0 %6679
  %6681 = vrot.lane.b32.xlu0 %v6382, 24
  %v6682 = vpop.permute.xlu0 %6681
  %6683 = vrot.lane.b32.xlu0 %v6417, 24
  %v6684 = vpop.permute.xlu0 %6683
  %6685 = vrot.lane.b32.xlu0 %v6419, 24
  %v6686 = vpop.permute.xlu0 %6685
  %6687 = vrot.lane.b32.xlu0 %v6422, 24
  %v6688 = vpop.permute.xlu0 %6687
  %v6713 = vsel %vm992, %v2465, %v6450
  %v6714 = vsel %vm992, %v2467, %v6452
  %v6715 = vsel %vm992, %v2470, %v6454
  %v6716 = vsel %vm992, %v2505, %v6456
  %v6717 = vsel %vm992, %v2507, %v6458
  %v6718 = vsel %vm992, %v2510, %v6460
  %v6719 = vsel %vm992, %v2545, %v6462
  %v6720 = vsel %vm992, %v2547, %v6464
  %v6721 = vsel %vm992, %v2550, %v6466
  %v6722 = vsel %vm992, %v2585, %v6468
  %v6723 = vsel %vm992, %v2587, %v6470
  %v6724 = vsel %vm992, %v2590, %v6472
  %v6725 = vsel %vm992, %v2625, %v6474
  %v6726 = vsel %vm992, %v2627, %v6476
  %v6727 = vsel %vm992, %v2630, %v6478
  %v6728 = vsel %vm992, %v2665, %v6480
  %v6729 = vsel %vm992, %v2667, %v6482
  %v6730 = vsel %vm992, %v2670, %v6484
  %v6731 = vsel %vm992, %v2705, %v6486
  %v6732 = vsel %vm992, %v2707, %v6488
  %v6733 = vsel %vm992, %v2710, %v6490
  %v6734 = vsel %vm992, %v2745, %v6492
  %v6735 = vsel %vm992, %v2747, %v6494
  %v6736 = vsel %vm992, %v2750, %v6496
  %vm6737 = vcmask 130048
  %v6738 = vsel %vm6737, %v6713, %v6546
  %v6739 = vsel %vm6737, %v6714, %v6548
  %v6740 = vsel %vm6737, %v6715, %v6550
  %v6741 = vsel %vm6737, %v6716, %v6552
  %v6742 = vsel %vm6737, %v6717, %v6554
  %v6743 = vsel %vm6737, %v6718, %v6556
  %v6744 = vsel %vm6737, %v6719, %v6558
  %v6745 = vsel %vm6737, %v6720, %v6560
  %v6746 = vsel %vm6737, %v6721, %v6562
  %v6747 = vsel %vm6737, %v6722, %v6564
  %v6748 = vsel %vm6737, %v6723, %v6566
  %v6749 = vsel %vm6737, %v6724, %v6568
  %v6750 = vsel %vm6737, %v6725, %v6570
  %v6751 = vsel %vm6737, %v6726, %v6572
  %v6752 = vsel %vm6737, %v6727, %v6574
  %v6753 = vsel %vm6737, %v6728, %v6576
  %v6754 = vsel %vm6737, %v6729, %v6578
  %v6755 = vsel %vm6737, %v6730, %v6580
  %v6756 = vsel %vm6737, %v6731, %v6582
  %v6757 = vsel %vm6737, %v6732, %v6584
  %v6758 = vsel %vm6737, %v6733, %v6586
  %v6759 = vsel %vm6737, %v6734, %v6588
  %v6760 = vsel %vm6737, %v6735, %v6590
  %v6761 = vsel %vm6737, %v6736, %v6592
  %vm6762 = vcmask 195584
  %v6763 = vsel %vm6762, %v6738, %v6642
  %v6764 = vsel %vm6762, %v6739, %v6644
  %v6765 = vsel %vm6762, %v6740, %v6646
  %v6766 = vsel %vm6762, %v6741, %v6648
  %v6767 = vsel %vm6762, %v6742, %v6650
  %v6768 = vsel %vm6762, %v6743, %v6652
  %v6769 = vsel %vm6762, %v6744, %v6654
  %v6770 = vsel %vm6762, %v6745, %v6656
  %v6771 = vsel %vm6762, %v6746, %v6658
  %v6772 = vsel %vm6762, %v6747, %v6660
  %v6773 = vsel %vm6762, %v6748, %v6662
  %v6774 = vsel %vm6762, %v6749, %v6664
  %v6775 = vsel %vm6762, %v6750, %v6666
  %v6776 = vsel %vm6762, %v6751, %v6668
  %v6777 = vsel %vm6762, %v6752, %v6670
  %v6778 = vsel %vm6762, %v6753, %v6672
  %v6779 = vsel %vm6762, %v6754, %v6674
  %v6780 = vsel %vm6762, %v6755, %v6676
  %v6781 = vsel %vm6762, %v6756, %v6678
  %v6782 = vsel %vm6762, %v6757, %v6680
  %v6783 = vsel %vm6762, %v6758, %v6682
  %v6784 = vsel %vm6762, %v6759, %v6684
  %v6785 = vsel %vm6762, %v6760, %v6686
  %v6786 = vsel %vm6762, %v6761, %v6688
  %v6811 = vrot.slane %v6763, 1
  %v6812 = vrot.slane %v6763, 2
  %v6813 = vrot.slane %v6763, 3
  %v6814 = vrot.slane %v6763, 4
  %v6815 = vrot.slane %v6763, 5
  %v6816 = vrot.slane %v6763, 6
  %v6817 = vrot.slane %v6763, 7
  %v6818 = vrot.slane %v6764, 1
  %v6819 = vrot.slane %v6764, 2
  %v6820 = vrot.slane %v6764, 3
  %v6821 = vrot.slane %v6764, 4
  %v6822 = vrot.slane %v6764, 5
  %v6823 = vrot.slane %v6764, 6
  %v6824 = vrot.slane %v6764, 7
  %v6825 = vrot.slane %v6766, 1
  %v6826 = vrot.slane %v6766, 2
  %v6827 = vrot.slane %v6766, 3
  %v6828 = vrot.slane %v6766, 4
  %v6829 = vrot.slane %v6766, 5
  %v6830 = vrot.slane %v6766, 6
  %v6831 = vrot.slane %v6766, 7
  %v6832 = vrot.slane %v6767, 1
  %v6833 = vrot.slane %v6767, 2
  %v6834 = vrot.slane %v6767, 3
  %v6835 = vrot.slane %v6767, 4
  %v6836 = vrot.slane %v6767, 5
  %v6837 = vrot.slane %v6767, 6
  %v6838 = vrot.slane %v6767, 7
  %v6839 = vrot.slane %v6769, 1
  %v6840 = vrot.slane %v6769, 2
  %v6841 = vrot.slane %v6769, 3
  %v6842 = vrot.slane %v6769, 4
  %v6843 = vrot.slane %v6769, 5
  %v6844 = vrot.slane %v6769, 6
  %v6845 = vrot.slane %v6769, 7
  %v6846 = vrot.slane %v6770, 1
  %v6847 = vrot.slane %v6770, 2
  %v6848 = vrot.slane %v6770, 3
  %v6849 = vrot.slane %v6770, 4
  %v6850 = vrot.slane %v6770, 5
  %v6851 = vrot.slane %v6770, 6
  %v6852 = vrot.slane %v6770, 7
  %v6853 = vrot.slane %v6772, 1
  %v6854 = vrot.slane %v6772, 2
  %v6855 = vrot.slane %v6772, 3
  %v6856 = vrot.slane %v6772, 4
  %v6857 = vrot.slane %v6772, 5
  %v6858 = vrot.slane %v6772, 6
  %v6859 = vrot.slane %v6772, 7
  %v6860 = vrot.slane %v6773, 1
  %v6861 = vrot.slane %v6773, 2
  %v6862 = vrot.slane %v6773, 3
  %v6863 = vrot.slane %v6773, 4
  %v6864 = vrot.slane %v6773, 5
  %v6865 = vrot.slane %v6773, 6
  %v6866 = vrot.slane %v6773, 7
  %v6867 = vrot.slane %v6775, 1
  %v6868 = vrot.slane %v6775, 2
  %v6869 = vrot.slane %v6775, 3
  %v6870 = vrot.slane %v6775, 4
  %v6871 = vrot.slane %v6775, 5
  %v6872 = vrot.slane %v6775, 6
  %v6873 = vrot.slane %v6775, 7
  %v6874 = vrot.slane %v6776, 1
  %v6875 = vrot.slane %v6776, 2
  %v6876 = vrot.slane %v6776, 3
  %v6877 = vrot.slane %v6776, 4
  %v6878 = vrot.slane %v6776, 5
  %v6879 = vrot.slane %v6776, 6
  %v6880 = vrot.slane %v6776, 7
  %v6881 = vrot.slane %v6778, 1
  %v6882 = vrot.slane %v6778, 2
  %v6883 = vrot.slane %v6778, 3
  %v6884 = vrot.slane %v6778, 4
  %v6885 = vrot.slane %v6778, 5
  %v6886 = vrot.slane %v6778, 6
  %v6887 = vrot.slane %v6778, 7
  %v6888 = vrot.slane %v6779, 1
  %v6889 = vrot.slane %v6779, 2
  %v6890 = vrot.slane %v6779, 3
  %v6891 = vrot.slane %v6779, 4
  %v6892 = vrot.slane %v6779, 5
  %v6893 = vrot.slane %v6779, 6
  %v6894 = vrot.slane %v6779, 7
  %v6895 = vrot.slane %v6781, 1
  %v6896 = vrot.slane %v6781, 2
  %v6897 = vrot.slane %v6781, 3
  %v6898 = vrot.slane %v6781, 4
  %v6899 = vrot.slane %v6781, 5
  %v6900 = vrot.slane %v6781, 6
  %v6901 = vrot.slane %v6781, 7
  %v6902 = vrot.slane %v6782, 1
  %v6903 = vrot.slane %v6782, 2
  %v6904 = vrot.slane %v6782, 3
  %v6905 = vrot.slane %v6782, 4
  %v6906 = vrot.slane %v6782, 5
  %v6907 = vrot.slane %v6782, 6
  %v6908 = vrot.slane %v6782, 7
  %v6909 = vrot.slane %v6784, 1
  %v6910 = vrot.slane %v6784, 2
  %v6911 = vrot.slane %v6784, 3
  %v6912 = vrot.slane %v6784, 4
  %v6913 = vrot.slane %v6784, 5
  %v6914 = vrot.slane %v6784, 6
  %v6915 = vrot.slane %v6784, 7
  %v6916 = vrot.slane %v6785, 1
  %v6917 = vrot.slane %v6785, 2
  %v6918 = vrot.slane %v6785, 3
  %v6919 = vrot.slane %v6785, 4
  %v6920 = vrot.slane %v6785, 5
  %v6921 = vrot.slane %v6785, 6
  %v6922 = vrot.slane %v6785, 7
  %6923 = vst [vmem:[#allocation1] ss:$9 sm:$0xff] %v6763
  %s6924 = scalar_lea.vmem [#allocation1], 1
  %6925 = vst [vmem:[%s6924] ss:$9 sm:$0xff] %v6811
  %s6926 = scalar_lea.vmem [#allocation1], 2
  %6927 = vst [vmem:[%s6926] ss:$9 sm:$0xff] %v6812
  %s6928 = scalar_lea.vmem [#allocation1], 3
  %6929 = vst [vmem:[%s6928] ss:$9 sm:$0xff] %v6813
  %s6930 = scalar_lea.vmem [#allocation1], 4
  %6931 = vst [vmem:[%s6930] ss:$9 sm:$0xff] %v6814
  %s6932 = scalar_lea.vmem [#allocation1], 5
  %6933 = vst [vmem:[%s6932] ss:$9 sm:$0xff] %v6815
  %s6934 = scalar_lea.vmem [#allocation1], 6
  %6935 = vst [vmem:[%s6934] ss:$9 sm:$0xff] %v6816
  %s6936 = scalar_lea.vmem [#allocation1], 7
  %6937 = vst [vmem:[%s6936] ss:$9 sm:$0xff] %v6817
  %v6938 = vld [vmem:[#allocation1] sm:$0xff]
  %6939 = vst [vmem:[#allocation1] ss:$9 sm:$0xff] %v6764
  %6940 = vst [vmem:[%s6924] ss:$9 sm:$0xff] %v6818
  %6941 = vst [vmem:[%s6926] ss:$9 sm:$0xff] %v6819
  %6942 = vst [vmem:[%s6928] ss:$9 sm:$0xff] %v6820
  %6943 = vst [vmem:[%s6930] ss:$9 sm:$0xff] %v6821
  %6944 = vst [vmem:[%s6932] ss:$9 sm:$0xff] %v6822
  %6945 = vst [vmem:[%s6934] ss:$9 sm:$0xff] %v6823
  %6946 = vst [vmem:[%s6936] ss:$9 sm:$0xff] %v6824
  %v6947 = vld [vmem:[#allocation1] sm:$0xff]
  %6948 = vst [vmem:[#allocation1] ss:$9 sm:$0xff] %v6765
  %6949 = vst [vmem:[%s6924] ss:$9 sm:$0xff] %v6766
  %6950 = vst [vmem:[%s6926] ss:$9 sm:$0xff] %v6825
  %6951 = vst [vmem:[%s6928] ss:$9 sm:$0xff] %v6826
  %6952 = vst [vmem:[%s6930] ss:$9 sm:$0xff] %v6827
  %6953 = vst [vmem:[%s6932] ss:$9 sm:$0xff] %v6828
  %6954 = vst [vmem:[%s6934] ss:$9 sm:$0xff] %v6829
  %6955 = vst [vmem:[%s6936] ss:$9 sm:$0xff] %v6830
  %v6956 = vld [vmem:[#allocation1] sm:$0xff]
  %6957 = vst [vmem:[#allocation1] ss:$9 sm:$0xff] %v6831
  %6958 = vst [vmem:[%s6924] ss:$9 sm:$0xff] %v6767
  %6959 = vst [vmem:[%s6926] ss:$9 sm:$0xff] %v6832
  %6960 = vst [vmem:[%s6928] ss:$9 sm:$0xff] %v6833
  %6961 = vst [vmem:[%s6930] ss:$9 sm:$0xff] %v6834
  %6962 = vst [vmem:[%s6932] ss:$9 sm:$0xff] %v6835
  %6963 = vst [vmem:[%s6934] ss:$9 sm:$0xff] %v6836
  %6964 = vst [vmem:[%s6936] ss:$9 sm:$0xff] %v6837
  %v6965 = vld [vmem:[#allocation1] sm:$0xff]
  %6966 = vst [vmem:[#allocation1] ss:$9 sm:$0xff] %v6838
  %6967 = vst [vmem:[%s6924] ss:$9 sm:$0xff] %v6768
  %6968 = vst [vmem:[%s6926] ss:$9 sm:$0xff] %v6769
  %6969 = vst [vmem:[%s6928] ss:$9 sm:$0xff] %v6839
  %6970 = vst [vmem:[%s6930] ss:$9 sm:$0xff] %v6840
  %6971 = vst [vmem:[%s6932] ss:$9 sm:$0xff] %v6841
  %6972 = vst [vmem:[%s6934] ss:$9 sm:$0xff] %v6842
  %6973 = vst [vmem:[%s6936] ss:$9 sm:$0xff] %v6843
  %v6974 = vld [vmem:[#allocation1] sm:$0xff]
  %6975 = vst [vmem:[#allocation1] ss:$9 sm:$0xff] %v6844
  %6976 = vst [vmem:[%s6924] ss:$9 sm:$0xff] %v6845
  %6977 = vst [vmem:[%s6926] ss:$9 sm:$0xff] %v6770
  %6978 = vst [vmem:[%s6928] ss:$9 sm:$0xff] %v6846
  %6979 = vst [vmem:[%s6930] ss:$9 sm:$0xff] %v6847
  %6980 = vst [vmem:[%s6932] ss:$9 sm:$0xff] %v6848
  %6981 = vst [vmem:[%s6934] ss:$9 sm:$0xff] %v6849
  %6982 = vst [vmem:[%s6936] ss:$9 sm:$0xff] %v6850
  %v6983 = vld [vmem:[#allocation1] sm:$0xff]
  %6984 = vst [vmem:[#allocation1] ss:$9 sm:$0xff] %v6851
  %6985 = vst [vmem:[%s6924] ss:$9 sm:$0xff] %v6852
  %6986 = vst [vmem:[%s6926] ss:$9 sm:$0xff] %v6771
  %6987 = vst [vmem:[%s6928] ss:$9 sm:$0xff] %v6772
  %6988 = vst [vmem:[%s6930] ss:$9 sm:$0xff] %v6853
  %6989 = vst [vmem:[%s6932] ss:$9 sm:$0xff] %v6854
  %6990 = vst [vmem:[%s6934] ss:$9 sm:$0xff] %v6855
  %6991 = vst [vmem:[%s6936] ss:$9 sm:$0xff] %v6856
  %v6992 = vld [vmem:[#allocation1] sm:$0xff]
  %6993 = vst [vmem:[#allocation1] ss:$9 sm:$0xff] %v6857
  %6994 = vst [vmem:[%s6924] ss:$9 sm:$0xff] %v6858
  %6995 = vst [vmem:[%s6926] ss:$9 sm:$0xff] %v6859
  %6996 = vst [vmem:[%s6928] ss:$9 sm:$0xff] %v6773
  %6997 = vst [vmem:[%s6930] ss:$9 sm:$0xff] %v6860
  %6998 = vst [vmem:[%s6932] ss:$9 sm:$0xff] %v6861
  %6999 = vst [vmem:[%s6934] ss:$9 sm:$0xff] %v6862
  %7000 = vst [vmem:[%s6936] ss:$9 sm:$0xff] %v6863
  %v7001 = vld [vmem:[#allocation1] sm:$0xff]
  %7002 = vst [vmem:[#allocation1] ss:$9 sm:$0xff] %v6864
  %7003 = vst [vmem:[%s6924] ss:$9 sm:$0xff] %v6865
  %7004 = vst [vmem:[%s6926] ss:$9 sm:$0xff] %v6866
  %7005 = vst [vmem:[%s6928] ss:$9 sm:$0xff] %v6774
  %7006 = vst [vmem:[%s6930] ss:$9 sm:$0xff] %v6775
  %7007 = vst [vmem:[%s6932] ss:$9 sm:$0xff] %v6867
  %7008 = vst [vmem:[%s6934] ss:$9 sm:$0xff] %v6868
  %7009 = vst [vmem:[%s6936] ss:$9 sm:$0xff] %v6869
  %v7010 = vld [vmem:[#allocation1] sm:$0xff]
  %7011 = vst [vmem:[#allocation1] ss:$9 sm:$0xff] %v6870
  %7012 = vst [vmem:[%s6924] ss:$9 sm:$0xff] %v6871
  %7013 = vst [vmem:[%s6926] ss:$9 sm:$0xff] %v6872
  %7014 = vst [vmem:[%s6928] ss:$9 sm:$0xff] %v6873
  %7015 = vst [vmem:[%s6930] ss:$9 sm:$0xff] %v6776
  %7016 = vst [vmem:[%s6932] ss:$9 sm:$0xff] %v6874
  %7017 = vst [vmem:[%s6934] ss:$9 sm:$0xff] %v6875
  %7018 = vst [vmem:[%s6936] ss:$9 sm:$0xff] %v6876
  %v7019 = vld [vmem:[#allocation1] sm:$0xff]
  %7020 = vst [vmem:[#allocation1] ss:$9 sm:$0xff] %v6877
  %7021 = vst [vmem:[%s6924] ss:$9 sm:$0xff] %v6878
  %7022 = vst [vmem:[%s6926] ss:$9 sm:$0xff] %v6879
  %7023 = vst [vmem:[%s6928] ss:$9 sm:$0xff] %v6880
  %7024 = vst [vmem:[%s6930] ss:$9 sm:$0xff] %v6777
  %7025 = vst [vmem:[%s6932] ss:$9 sm:$0xff] %v6778
  %7026 = vst [vmem:[%s6934] ss:$9 sm:$0xff] %v6881
  %7027 = vst [vmem:[%s6936] ss:$9 sm:$0xff] %v6882
  %v7028 = vld [vmem:[#allocation1] sm:$0xff]
  %7029 = vst [vmem:[#allocation1] ss:$9 sm:$0xff] %v6883
  %7030 = vst [vmem:[%s6924] ss:$9 sm:$0xff] %v6884
  %7031 = vst [vmem:[%s6926] ss:$9 sm:$0xff] %v6885
  %7032 = vst [vmem:[%s6928] ss:$9 sm:$0xff] %v6886
  %7033 = vst [vmem:[%s6930] ss:$9 sm:$0xff] %v6887
  %7034 = vst [vmem:[%s6932] ss:$9 sm:$0xff] %v6779
  %7035 = vst [vmem:[%s6934] ss:$9 sm:$0xff] %v6888
  %7036 = vst [vmem:[%s6936] ss:$9 sm:$0xff] %v6889
  %v7037 = vld [vmem:[#allocation1] sm:$0xff]
  %7038 = vst [vmem:[#allocation1] ss:$9 sm:$0xff] %v6890
  %7039 = vst [vmem:[%s6924] ss:$9 sm:$0xff] %v6891
  %7040 = vst [vmem:[%s6926] ss:$9 sm:$0xff] %v6892
  %7041 = vst [vmem:[%s6928] ss:$9 sm:$0xff] %v6893
  %7042 = vst [vmem:[%s6930] ss:$9 sm:$0xff] %v6894
  %7043 = vst [vmem:[%s6932] ss:$9 sm:$0xff] %v6780
  %7044 = vst [vmem:[%s6934] ss:$9 sm:$0xff] %v6781
  %7045 = vst [vmem:[%s6936] ss:$9 sm:$0xff] %v6895
  %v7046 = vld [vmem:[#allocation1] sm:$0xff]
  %7047 = vst [vmem:[#allocation1] ss:$9 sm:$0xff] %v6896
  %7048 = vst [vmem:[%s6924] ss:$9 sm:$0xff] %v6897
  %7049 = vst [vmem:[%s6926] ss:$9 sm:$0xff] %v6898
  %7050 = vst [vmem:[%s6928] ss:$9 sm:$0xff] %v6899
  %7051 = vst [vmem:[%s6930] ss:$9 sm:$0xff] %v6900
  %7052 = vst [vmem:[%s6932] ss:$9 sm:$0xff] %v6901
  %7053 = vst [vmem:[%s6934] ss:$9 sm:$0xff] %v6782
  %7054 = vst [vmem:[%s6936] ss:$9 sm:$0xff] %v6902
  %v7055 = vld [vmem:[#allocation1] sm:$0xff]
  %7056 = vst [vmem:[#allocation1] ss:$9 sm:$0xff] %v6903
  %7057 = vst [vmem:[%s6924] ss:$9 sm:$0xff] %v6904
  %7058 = vst [vmem:[%s6926] ss:$9 sm:$0xff] %v6905
  %7059 = vst [vmem:[%s6928] ss:$9 sm:$0xff] %v6906
  %7060 = vst [vmem:[%s6930] ss:$9 sm:$0xff] %v6907
  %7061 = vst [vmem:[%s6932] ss:$9 sm:$0xff] %v6908
  %7062 = vst [vmem:[%s6934] ss:$9 sm:$0xff] %v6783
  %7063 = vst [vmem:[%s6936] ss:$9 sm:$0xff] %v6784
  %v7064 = vld [vmem:[#allocation1] sm:$0xff]
  %7065 = vst [vmem:[#allocation1] ss:$9 sm:$0xff] %v6909
  %7066 = vst [vmem:[%s6924] ss:$9 sm:$0xff] %v6910
  %7067 = vst [vmem:[%s6926] ss:$9 sm:$0xff] %v6911
  %7068 = vst [vmem:[%s6928] ss:$9 sm:$0xff] %v6912
  %7069 = vst [vmem:[%s6930] ss:$9 sm:$0xff] %v6913
  %7070 = vst [vmem:[%s6932] ss:$9 sm:$0xff] %v6914
  %7071 = vst [vmem:[%s6934] ss:$9 sm:$0xff] %v6915
  %7072 = vst [vmem:[%s6936] ss:$9 sm:$0xff] %v6785
  %v7073 = vld [vmem:[#allocation1] sm:$0xff]
  %7074 = vst [vmem:[#allocation1] ss:$9 sm:$0xff] %v6916
  %7075 = vst [vmem:[%s6924] ss:$9 sm:$0xff] %v6917
  %7076 = vst [vmem:[%s6926] ss:$9 sm:$0xff] %v6918
  %7077 = vst [vmem:[%s6928] ss:$9 sm:$0xff] %v6919
  %7078 = vst [vmem:[%s6930] ss:$9 sm:$0xff] %v6920
  %7079 = vst [vmem:[%s6932] ss:$9 sm:$0xff] %v6921
  %7080 = vst [vmem:[%s6934] ss:$9 sm:$0xff] %v6922
  %7081 = vst [vmem:[%s6936] ss:$9 sm:$0xff] %v6786
  %v7082 = vld [vmem:[#allocation1] sm:$0xff]
  %v7100 = vpack.c.bf16 %v6947, %v6938
  %v7101 = vpack.c.bf16 %v6965, %v6956
  %v7102 = vpack.c.bf16 %v6983, %v6974
  %v7103 = vpack.c.bf16 %v7001, %v6992
  %v7104 = vpack.c.bf16 %v7019, %v7010
  %v7105 = vpack.c.bf16 %v7037, %v7028
  %v7106 = vpack.c.bf16 %v7055, %v7046
  %v7107 = vpack.c.bf16 %v7073, %v7064
  %v7108 = vpack.c.bf16 %v7082, %v7082
  %v7109 = vld [vmem:[%s5] sm:$0xf]
  %v7110 = vld [vmem:[%s5 + $0x4] sm:$0xf]
  %v7111 = vld [vmem:[%s5 + $0x8] sm:$0xf]
  %v7112 = vld [vmem:[%s5 + $0xc] sm:$0xf]
  %v7113 = vld [vmem:[%s6] sm:$0x1]
  %v7115 = vperm.slane %v7113, 0
  %v7121 = vunpack.c.l.b16 %v7109
  %v7122 = vunpack.c.l.b16 %v7110
  %v7123 = vunpack.c.l.b16 %v7111
  %v7124 = vunpack.c.l.b16 %v7112
  %v7125 = vpack.c.b16 %v7122, %v7121
  %v7126 = vpack.c.b16 %v7124, %v7123
  %v7130 = vsel %vm44, %v7100, 0
  %v7133 = vsel %vm44, %v7101, 0
  %v7136 = vsel %vm44, %v7102, 0
  %v7139 = vsel %vm44, %v7103, 0
  %v7142 = vsel %vm44, %v7104, 0
  %v7145 = vsel %vm44, %v7105, 0
  %v7148 = vsel %vm44, %v7106, 0
  %v7151 = vsel %vm44, %v7107, 0
  %v7154 = vsel %vm44, %v7108, 0
  %7156 = vmatpush.bf16.msra.mxu0 0
  %7157 = vmatpush.bf16.msra.mxu0 0
  %7158 = vmatpush.bf16.msra.mxu0 0
  %7159 = vmatpush.bf16.msra.mxu0 0
  %7160 = vmatpush.bf16.msra.mxu0 0
  %7161 = vmatpush.bf16.msra.mxu0 0
  %7162 = vmatpush.bf16.msra.mxu0 %v7126
  %7163 = vmatpush.bf16.msra.mxu0 %v7125
  %7164 = vmatmul.bf16.gmra.mxu0 %v7130
  %v7165 = vpop.f32.mrf.mxu0
  %v7166 = vadd.f32 %v7115, %v7165
  %v7167 = vpop.f32.mrf.mxu0
  %v7168 = vadd.f32 %v7115, %v7167
  %7169 = vmatmul.bf16.gmra.mxu0 %v7133
  %v7170 = vpop.f32.mrf.mxu0
  %v7171 = vadd.f32 %v7115, %v7170
  %v7172 = vpop.f32.mrf.mxu0
  %v7173 = vadd.f32 %v7115, %v7172
  %7174 = vmatmul.bf16.gmra.mxu0 %v7136
  %v7175 = vpop.f32.mrf.mxu0
  %v7176 = vadd.f32 %v7115, %v7175
  %v7177 = vpop.f32.mrf.mxu0
  %v7178 = vadd.f32 %v7115, %v7177
  %7179 = vmatmul.bf16.gmra.mxu0 %v7139
  %v7180 = vpop.f32.mrf.mxu0
  %v7181 = vadd.f32 %v7115, %v7180
  %v7182 = vpop.f32.mrf.mxu0
  %v7183 = vadd.f32 %v7115, %v7182
  %7184 = vmatmul.bf16.gmra.mxu0 %v7142
  %v7185 = vpop.f32.mrf.mxu0
  %v7186 = vadd.f32 %v7115, %v7185
  %v7187 = vpop.f32.mrf.mxu0
  %v7188 = vadd.f32 %v7115, %v7187
  %7189 = vmatmul.bf16.gmra.mxu0 %v7145
  %v7190 = vpop.f32.mrf.mxu0
  %v7191 = vadd.f32 %v7115, %v7190
  %v7192 = vpop.f32.mrf.mxu0
  %v7193 = vadd.f32 %v7115, %v7192
  %7194 = vmatmul.bf16.gmra.mxu0 %v7148
  %v7195 = vpop.f32.mrf.mxu0
  %v7196 = vadd.f32 %v7115, %v7195
  %v7197 = vpop.f32.mrf.mxu0
  %v7198 = vadd.f32 %v7115, %v7197
  %7199 = vmatmul.bf16.gmra.mxu0 %v7151
  %v7200 = vpop.f32.mrf.mxu0
  %v7201 = vadd.f32 %v7115, %v7200
  %v7202 = vpop.f32.mrf.mxu0
  %v7203 = vadd.f32 %v7115, %v7202
  %7204 = vmatmul.bf16.gmra.mxu0 %v7154
  %v7205 = vpop.f32.mrf.mxu0
  %v7206 = vadd.f32 %v7115, %v7205
  %v7207 = vpop.f32.mrf.mxu0
  %7208 = vdwg.mxu0
  %v7226 = vrot.slane %v7166, 1
  %v7227 = vrot.slane %v7166, 2
  %v7228 = vrot.slane %v7166, 3
  %v7229 = vrot.slane %v7166, 4
  %v7230 = vrot.slane %v7166, 5
  %v7231 = vrot.slane %v7166, 6
  %v7232 = vrot.slane %v7166, 7
  %v7233 = vrot.slane %v7168, 1
  %v7234 = vrot.slane %v7168, 2
  %v7235 = vrot.slane %v7168, 3
  %v7236 = vrot.slane %v7168, 4
  %v7237 = vrot.slane %v7168, 5
  %v7238 = vrot.slane %v7168, 6
  %v7239 = vrot.slane %v7168, 7
  %v7240 = vrot.slane %v7171, 1
  %v7241 = vrot.slane %v7171, 2
  %v7242 = vrot.slane %v7171, 3
  %v7243 = vrot.slane %v7171, 4
  %v7244 = vrot.slane %v7171, 5
  %v7245 = vrot.slane %v7171, 6
  %v7246 = vrot.slane %v7171, 7
  %v7247 = vrot.slane %v7173, 1
  %v7248 = vrot.slane %v7173, 2
  %v7249 = vrot.slane %v7173, 3
  %v7250 = vrot.slane %v7173, 4
  %v7251 = vrot.slane %v7173, 5
  %v7252 = vrot.slane %v7173, 6
  %v7253 = vrot.slane %v7173, 7
  %v7254 = vrot.slane %v7176, 1
  %v7255 = vrot.slane %v7176, 2
  %v7256 = vrot.slane %v7176, 3
  %v7257 = vrot.slane %v7176, 4
  %v7258 = vrot.slane %v7176, 5
  %v7259 = vrot.slane %v7176, 6
  %v7260 = vrot.slane %v7176, 7
  %v7261 = vrot.slane %v7178, 1
  %v7262 = vrot.slane %v7178, 2
  %v7263 = vrot.slane %v7178, 3
  %v7264 = vrot.slane %v7178, 4
  %v7265 = vrot.slane %v7178, 5
  %v7266 = vrot.slane %v7178, 6
  %v7267 = vrot.slane %v7178, 7
  %v7268 = vrot.slane %v7181, 1
  %v7269 = vrot.slane %v7181, 2
  %v7270 = vrot.slane %v7181, 3
  %v7271 = vrot.slane %v7181, 4
  %v7272 = vrot.slane %v7181, 5
  %v7273 = vrot.slane %v7181, 6
  %v7274 = vrot.slane %v7181, 7
  %v7275 = vrot.slane %v7183, 1
  %v7276 = vrot.slane %v7183, 2
  %v7277 = vrot.slane %v7183, 3
  %v7278 = vrot.slane %v7183, 4
  %v7279 = vrot.slane %v7183, 5
  %v7280 = vrot.slane %v7183, 6
  %v7281 = vrot.slane %v7183, 7
  %v7282 = vrot.slane %v7186, 1
  %v7283 = vrot.slane %v7186, 2
  %v7284 = vrot.slane %v7186, 3
  %v7285 = vrot.slane %v7186, 4
  %v7286 = vrot.slane %v7186, 5
  %v7287 = vrot.slane %v7186, 6
  %v7288 = vrot.slane %v7186, 7
  %v7289 = vrot.slane %v7188, 1
  %v7290 = vrot.slane %v7188, 2
  %v7291 = vrot.slane %v7188, 3
  %v7292 = vrot.slane %v7188, 4
  %v7293 = vrot.slane %v7188, 5
  %v7294 = vrot.slane %v7188, 6
  %v7295 = vrot.slane %v7188, 7
  %v7296 = vrot.slane %v7191, 1
  %v7297 = vrot.slane %v7191, 2
  %v7298 = vrot.slane %v7191, 3
  %v7299 = vrot.slane %v7191, 4
  %v7300 = vrot.slane %v7191, 5
  %v7301 = vrot.slane %v7191, 6
  %v7302 = vrot.slane %v7191, 7
  %v7303 = vrot.slane %v7193, 1
  %v7304 = vrot.slane %v7193, 2
  %v7305 = vrot.slane %v7193, 3
  %v7306 = vrot.slane %v7193, 4
  %v7307 = vrot.slane %v7193, 5
  %v7308 = vrot.slane %v7193, 6
  %v7309 = vrot.slane %v7193, 7
  %v7310 = vrot.slane %v7196, 1
  %v7311 = vrot.slane %v7196, 2
  %v7312 = vrot.slane %v7196, 3
  %v7313 = vrot.slane %v7196, 4
  %v7314 = vrot.slane %v7196, 5
  %v7315 = vrot.slane %v7196, 6
  %v7316 = vrot.slane %v7196, 7
  %v7317 = vrot.slane %v7198, 1
  %v7318 = vrot.slane %v7198, 2
  %v7319 = vrot.slane %v7198, 3
  %v7320 = vrot.slane %v7198, 4
  %v7321 = vrot.slane %v7198, 5
  %v7322 = vrot.slane %v7198, 6
  %v7323 = vrot.slane %v7198, 7
  %v7324 = vrot.slane %v7201, 1
  %v7325 = vrot.slane %v7201, 2
  %v7326 = vrot.slane %v7201, 3
  %v7327 = vrot.slane %v7201, 4
  %v7328 = vrot.slane %v7201, 5
  %v7329 = vrot.slane %v7201, 6
  %v7330 = vrot.slane %v7201, 7
  %v7331 = vrot.slane %v7203, 1
  %v7332 = vrot.slane %v7203, 2
  %v7333 = vrot.slane %v7203, 3
  %v7334 = vrot.slane %v7203, 4
  %v7335 = vrot.slane %v7203, 5
  %v7336 = vrot.slane %v7203, 6
  %v7337 = vrot.slane %v7203, 7
  %v7338 = vrot.slane %v7206, 1
  %v7339 = vrot.slane %v7206, 2
  %v7340 = vrot.slane %v7206, 3
  %v7341 = vrot.slane %v7206, 4
  %v7342 = vrot.slane %v7206, 5
  %v7343 = vrot.slane %v7206, 6
  %v7344 = vrot.slane %v7206, 7
  %v7359 = vperm.slane %v7240, 0
  %v7360 = vperm.slane %v7241, 0
  %v7361 = vperm.slane %v7242, 0
  %v7362 = vperm.slane %v7243, 0
  %v7363 = vperm.slane %v7244, 0
  %v7364 = vperm.slane %v7245, 0
  %v7365 = vperm.slane %v7246, 0
  %v7366 = vperm.slane %v7173, 0
  %v7367 = vperm.slane %v7247, 0
  %v7368 = vperm.slane %v7248, 0
  %v7369 = vperm.slane %v7249, 0
  %v7370 = vperm.slane %v7250, 0
  %v7371 = vperm.slane %v7251, 0
  %v7372 = vperm.slane %v7252, 0
  %v7373 = vperm.slane %v7253, 0
  %v7374 = vperm.slane %v7176, 0
  %v7375 = vperm.slane %v7254, 0
  %v7393 = vperm.slane %v7255, 0
  %v7394 = vperm.slane %v7256, 0
  %v7395 = vperm.slane %v7257, 0
  %v7396 = vperm.slane %v7258, 0
  %v7397 = vperm.slane %v7259, 0
  %v7398 = vperm.slane %v7260, 0
  %v7399 = vperm.slane %v7178, 0
  %v7400 = vperm.slane %v7261, 0
  %v7401 = vperm.slane %v7262, 0
  %v7402 = vperm.slane %v7263, 0
  %v7403 = vperm.slane %v7264, 0
  %v7404 = vperm.slane %v7265, 0
  %v7405 = vperm.slane %v7266, 0
  %v7406 = vperm.slane %v7267, 0
  %v7407 = vperm.slane %v7181, 0
  %v7408 = vperm.slane %v7268, 0
  %v7409 = vperm.slane %v7269, 0
  %v7427 = vperm.slane %v7270, 0
  %v7428 = vperm.slane %v7271, 0
  %v7429 = vperm.slane %v7272, 0
  %v7430 = vperm.slane %v7273, 0
  %v7431 = vperm.slane %v7274, 0
  %v7432 = vperm.slane %v7183, 0
  %v7433 = vperm.slane %v7275, 0
  %v7434 = vperm.slane %v7276, 0
  %v7435 = vperm.slane %v7277, 0
  %v7436 = vperm.slane %v7278, 0
  %v7437 = vperm.slane %v7279, 0
  %v7438 = vperm.slane %v7280, 0
  %v7439 = vperm.slane %v7281, 0
  %v7440 = vperm.slane %v7186, 0
  %v7441 = vperm.slane %v7282, 0
  %v7442 = vperm.slane %v7283, 0
  %v7443 = vperm.slane %v7284, 0
  %v7461 = vperm.slane %v7285, 0
  %v7462 = vperm.slane %v7286, 0
  %v7463 = vperm.slane %v7287, 0
  %v7464 = vperm.slane %v7288, 0
  %v7465 = vperm.slane %v7188, 0
  %v7466 = vperm.slane %v7289, 0
  %v7467 = vperm.slane %v7290, 0
  %v7468 = vperm.slane %v7291, 0
  %v7469 = vperm.slane %v7292, 0
  %v7470 = vperm.slane %v7293, 0
  %v7471 = vperm.slane %v7294, 0
  %v7472 = vperm.slane %v7295, 0
  %v7473 = vperm.slane %v7191, 0
  %v7474 = vperm.slane %v7296, 0
  %v7475 = vperm.slane %v7297, 0
  %v7476 = vperm.slane %v7298, 0
  %v7477 = vperm.slane %v7299, 0
  %v7495 = vperm.slane %v7300, 0
  %v7496 = vperm.slane %v7301, 0
  %v7497 = vperm.slane %v7302, 0
  %v7498 = vperm.slane %v7193, 0
  %v7499 = vperm.slane %v7303, 0
  %v7500 = vperm.slane %v7304, 0
  %v7501 = vperm.slane %v7305, 0
  %v7502 = vperm.slane %v7306, 0
  %v7503 = vperm.slane %v7307, 0
  %v7504 = vperm.slane %v7308, 0
  %v7505 = vperm.slane %v7309, 0
  %v7506 = vperm.slane %v7196, 0
  %v7507 = vperm.slane %v7310, 0
  %v7508 = vperm.slane %v7311, 0
  %v7509 = vperm.slane %v7312, 0
  %v7510 = vperm.slane %v7313, 0
  %v7511 = vperm.slane %v7314, 0
  %v7529 = vperm.slane %v7315, 0
  %v7530 = vperm.slane %v7316, 0
  %v7531 = vperm.slane %v7198, 0
  %v7532 = vperm.slane %v7317, 0
  %v7533 = vperm.slane %v7318, 0
  %v7534 = vperm.slane %v7319, 0
  %v7535 = vperm.slane %v7320, 0
  %v7536 = vperm.slane %v7321, 0
  %v7537 = vperm.slane %v7322, 0
  %v7538 = vperm.slane %v7323, 0
  %v7539 = vperm.slane %v7201, 0
  %v7540 = vperm.slane %v7324, 0
  %v7541 = vperm.slane %v7325, 0
  %v7542 = vperm.slane %v7326, 0
  %v7543 = vperm.slane %v7327, 0
  %v7544 = vperm.slane %v7328, 0
  %v7545 = vperm.slane %v7329, 0
  %v7563 = vperm.slane %v7330, 0
  %v7564 = vperm.slane %v7203, 0
  %v7565 = vperm.slane %v7331, 0
  %v7566 = vperm.slane %v7332, 0
  %v7567 = vperm.slane %v7333, 0
  %v7568 = vperm.slane %v7334, 0
  %v7569 = vperm.slane %v7335, 0
  %v7570 = vperm.slane %v7336, 0
  %v7571 = vperm.slane %v7337, 0
  %v7572 = vperm.slane %v7206, 0
  %v7573 = vperm.slane %v7338, 0
  %v7574 = vperm.slane %v7339, 0
  %v7575 = vperm.slane %v7340, 0
  %v7576 = vperm.slane %v7341, 0
  %v7577 = vperm.slane %v7342, 0
  %v7578 = vperm.slane %v7343, 0
  %v7579 = vperm.slane %v7344, 0
  %v7597 = vsel %vm2449, %v7166, %v7359
  %v7598 = vsel %vm2449, %v7226, %v7360
  %v7599 = vsel %vm2449, %v7227, %v7361
  %v7600 = vsel %vm2449, %v7228, %v7362
  %v7601 = vsel %vm2449, %v7229, %v7363
  %v7602 = vsel %vm2449, %v7230, %v7364
  %v7603 = vsel %vm2449, %v7231, %v7365
  %v7604 = vsel %vm2449, %v7232, %v7366
  %v7605 = vsel %vm2449, %v7168, %v7367
  %v7606 = vsel %vm2449, %v7233, %v7368
  %v7607 = vsel %vm2449, %v7234, %v7369
  %v7608 = vsel %vm2449, %v7235, %v7370
  %v7609 = vsel %vm2449, %v7236, %v7371
  %v7610 = vsel %vm2449, %v7237, %v7372
  %v7611 = vsel %vm2449, %v7238, %v7373
  %v7612 = vsel %vm2449, %v7239, %v7374
  %v7613 = vsel %vm2449, %v7171, %v7375
  %vm7614 = vcmask 1041408
  %v7615 = vsel %vm7614, %v7597, %v7393
  %v7616 = vsel %vm7614, %v7598, %v7394
  %v7617 = vsel %vm7614, %v7599, %v7395
  %v7618 = vsel %vm7614, %v7600, %v7396
  %v7619 = vsel %vm7614, %v7601, %v7397
  %v7620 = vsel %vm7614, %v7602, %v7398
  %v7621 = vsel %vm7614, %v7603, %v7399
  %v7622 = vsel %vm7614, %v7604, %v7400
  %v7623 = vsel %vm7614, %v7605, %v7401
  %v7624 = vsel %vm7614, %v7606, %v7402
  %v7625 = vsel %vm7614, %v7607, %v7403
  %v7626 = vsel %vm7614, %v7608, %v7404
  %v7627 = vsel %vm7614, %v7609, %v7405
  %v7628 = vsel %vm7614, %v7610, %v7406
  %v7629 = vsel %vm7614, %v7611, %v7407
  %v7630 = vsel %vm7614, %v7612, %v7408
  %v7631 = vsel %vm7614, %v7613, %v7409
  %vm7632 = vcmask 1042432
  %v7633 = vsel %vm7632, %v7615, %v7427
  %v7634 = vsel %vm7632, %v7616, %v7428
  %v7635 = vsel %vm7632, %v7617, %v7429
  %v7636 = vsel %vm7632, %v7618, %v7430
  %v7637 = vsel %vm7632, %v7619, %v7431
  %v7638 = vsel %vm7632, %v7620, %v7432
  %v7639 = vsel %vm7632, %v7621, %v7433
  %v7640 = vsel %vm7632, %v7622, %v7434
  %v7641 = vsel %vm7632, %v7623, %v7435
  %v7642 = vsel %vm7632, %v7624, %v7436
  %v7643 = vsel %vm7632, %v7625, %v7437
  %v7644 = vsel %vm7632, %v7626, %v7438
  %v7645 = vsel %vm7632, %v7627, %v7439
  %v7646 = vsel %vm7632, %v7628, %v7440
  %v7647 = vsel %vm7632, %v7629, %v7441
  %v7648 = vsel %vm7632, %v7630, %v7442
  %v7649 = vsel %vm7632, %v7631, %v7443
  %vm7650 = vcmask 1043456
  %v7651 = vsel %vm7650, %v7633, %v7461
  %v7652 = vsel %vm7650, %v7634, %v7462
  %v7653 = vsel %vm7650, %v7635, %v7463
  %v7654 = vsel %vm7650, %v7636, %v7464
  %v7655 = vsel %vm7650, %v7637, %v7465
  %v7656 = vsel %vm7650, %v7638, %v7466
  %v7657 = vsel %vm7650, %v7639, %v7467
  %v7658 = vsel %vm7650, %v7640, %v7468
  %v7659 = vsel %vm7650, %v7641, %v7469
  %v7660 = vsel %vm7650, %v7642, %v7470
  %v7661 = vsel %vm7650, %v7643, %v7471
  %v7662 = vsel %vm7650, %v7644, %v7472
  %v7663 = vsel %vm7650, %v7645, %v7473
  %v7664 = vsel %vm7650, %v7646, %v7474
  %v7665 = vsel %vm7650, %v7647, %v7475
  %v7666 = vsel %vm7650, %v7648, %v7476
  %v7667 = vsel %vm7650, %v7649, %v7477
  %vm7668 = vcmask 1044480
  %v7669 = vsel %vm7668, %v7651, %v7495
  %v7670 = vsel %vm7668, %v7652, %v7496
  %v7671 = vsel %vm7668, %v7653, %v7497
  %v7672 = vsel %vm7668, %v7654, %v7498
  %v7673 = vsel %vm7668, %v7655, %v7499
  %v7674 = vsel %vm7668, %v7656, %v7500
  %v7675 = vsel %vm7668, %v7657, %v7501
  %v7676 = vsel %vm7668, %v7658, %v7502
  %v7677 = vsel %vm7668, %v7659, %v7503
  %v7678 = vsel %vm7668, %v7660, %v7504
  %v7679 = vsel %vm7668, %v7661, %v7505
  %v7680 = vsel %vm7668, %v7662, %v7506
  %v7681 = vsel %vm7668, %v7663, %v7507
  %v7682 = vsel %vm7668, %v7664, %v7508
  %v7683 = vsel %vm7668, %v7665, %v7509
  %v7684 = vsel %vm7668, %v7666, %v7510
  %v7685 = vsel %vm7668, %v7667, %v7511
  %vm7686 = vcmask 1045504
  %v7687 = vsel %vm7686, %v7669, %v7529
  %v7688 = vsel %vm7686, %v7670, %v7530
  %v7689 = vsel %vm7686, %v7671, %v7531
  %v7690 = vsel %vm7686, %v7672, %v7532
  %v7691 = vsel %vm7686, %v7673, %v7533
  %v7692 = vsel %vm7686, %v7674, %v7534
  %v7693 = vsel %vm7686, %v7675, %v7535
  %v7694 = vsel %vm7686, %v7676, %v7536
  %v7695 = vsel %vm7686, %v7677, %v7537
  %v7696 = vsel %vm7686, %v7678, %v7538
  %v7697 = vsel %vm7686, %v7679, %v7539
  %v7698 = vsel %vm7686, %v7680, %v7540
  %v7699 = vsel %vm7686, %v7681, %v7541
  %v7700 = vsel %vm7686, %v7682, %v7542
  %v7701 = vsel %vm7686, %v7683, %v7543
  %v7702 = vsel %vm7686, %v7684, %v7544
  %v7703 = vsel %vm7686, %v7685, %v7545
  %vm7704 = vcmask 1046528
  %v7705 = vsel %vm7704, %v7687, %v7563
  %v7706 = vsel %vm7704, %v7688, %v7564
  %v7707 = vsel %vm7704, %v7689, %v7565
  %v7708 = vsel %vm7704, %v7690, %v7566
  %v7709 = vsel %vm7704, %v7691, %v7567
  %v7710 = vsel %vm7704, %v7692, %v7568
  %v7711 = vsel %vm7704, %v7693, %v7569
  %v7712 = vsel %vm7704, %v7694, %v7570
  %v7713 = vsel %vm7704, %v7695, %v7571
  %v7714 = vsel %vm7704, %v7696, %v7572
  %v7715 = vsel %vm7704, %v7697, %v7573
  %v7716 = vsel %vm7704, %v7698, %v7574
  %v7717 = vsel %vm7704, %v7699, %v7575
  %v7718 = vsel %vm7704, %v7700, %v7576
  %v7719 = vsel %vm7704, %v7701, %v7577
  %v7720 = vsel %vm7704, %v7702, %v7578
  %v7721 = vsel %vm7704, %v7703, %v7579
  %v7722 = vadd.f32 %v27, %v7705
  %v7723 = vadd.f32 %v28, %v7706
  %v7724 = vadd.f32 %v29, %v7707
  %v7725 = vadd.f32 %v30, %v7708
  %v7726 = vadd.f32 %v31, %v7709
  %v7727 = vadd.f32 %v32, %v7710
  %v7728 = vadd.f32 %v33, %v7711
  %v7729 = vadd.f32 %v34, %v7712
  %v7730 = vadd.f32 %v35, %v7713
  %v7731 = vadd.f32 %v36, %v7714
  %v7732 = vadd.f32 %v37, %v7715
  %v7733 = vadd.f32 %v38, %v7716
  %v7734 = vadd.f32 %v39, %v7717
  %v7735 = vadd.f32 %v40, %v7718
  %v7736 = vadd.f32 %v41, %v7719
  %v7737 = vadd.f32 %v42, %v7720
  %v7738 = vadd.f32 %v43, %v7721
  %7739 = vst.msk [vmem:[%s7] sm:$0xff] %vm44, %v7722
  %7740 = vst.msk [vmem:[%s7 + $0x8] sm:$0xff] %vm44, %v7723
  %7741 = vst.msk [vmem:[%s7 + $0x10] sm:$0xff] %vm44, %v7724
  %7742 = vst.msk [vmem:[%s7 + $0x18] sm:$0xff] %vm44, %v7725
  %7743 = vst.msk [vmem:[%s7 + $0x20] sm:$0xff] %vm44, %v7726
  %7744 = vst.msk [vmem:[%s7 + $0x28] sm:$0xff] %vm44, %v7727
  %7745 = vst.msk [vmem:[%s7 + $0x30] sm:$0xff] %vm44, %v7728
  %7746 = vst.msk [vmem:[%s7 + $0x38] sm:$0xff] %vm44, %v7729
  %7747 = vst.msk [vmem:[%s7 + $0x40] sm:$0xff] %vm44, %v7730
  %7748 = vst.msk [vmem:[%s7 + $0x48] sm:$0xff] %vm44, %v7731
  %7749 = vst.msk [vmem:[%s7 + $0x50] sm:$0xff] %vm44, %v7732
  %7750 = vst.msk [vmem:[%s7 + $0x58] sm:$0xff] %vm44, %v7733
  %7751 = vst.msk [vmem:[%s7 + $0x60] sm:$0xff] %vm44, %v7734
  %7752 = vst.msk [vmem:[%s7 + $0x68] sm:$0xff] %vm44, %v7735
  %7753 = vst.msk [vmem:[%s7 + $0x70] sm:$0xff] %vm44, %v7736
  %7754 = vst.msk [vmem:[%s7 + $0x78] sm:$0xff] %vm44, %v7737
  %7755 = vst.msk [vmem:[%s7 + $0x80] sm:$0xff] %vm44, %v7738
  // Predicated region
  $region30: #{residual_attention_block.4} parent=0 // pred_check
    _
  $region31: #{residual_attention_block.4} parent=0 // pred_check_branch
    %7757 = sbr.rel (0) target = $region33
  $region32: #{residual_attention_block.4} parent=0 // pred_region
    _
  $region33: #{residual_attention_block.4} parent=0 // pred_fallthru
    _
  // Predicated region
  $region34: #{residual_attention_block.4} parent=0 // pred_check
    _
  $region35: #{residual_attention_block.4} parent=0 // pred_check_branch
    %7759 = sbr.rel (0) target = $region37
  $region36: #{residual_attention_block.4} parent=0 // pred_region
    _
  $region37: #{residual_attention_block.4} parent=0 // pred_fallthru
    _

</llo_original>
